<compile_context>
chip_gen: v6e
topology: v6e:2x2x1
jax: 0.10.0
libtpu: 0.0.40
codegen_flags: <defaults>
</compile_context>

<pallas_src>
import numpy as np
import jax
import jax.numpy as jnp
from jax.experimental import pallas as pl
from jax.experimental.pallas import tpu as pltpu

# ---------------- module hyperparameters ----------------
NUM_SPHERICAL = 4
NUM_RADIAL = 6
CUTOFF = 5.0
ENV_EXPONENT = 5

_P = ENV_EXPONENT + 1                      # Envelope.p = 6
ENV_A = -(_P + 1) * (_P + 2) / 2.0         # -28
ENV_B = float(_P * (_P + 2))               #  48
ENV_C = -_P * (_P + 1) / 2.0               # -21

NK = NUM_SPHERICAL * NUM_RADIAL            # 24
TILE_T = 2048                              # triplets per grid step (lane axis)

K_SERIES = 12                              # Taylor terms for the small-x branch
C0 = 5                                     # first series-coef column in const table
NCONST = C0 + K_SERIES
CONST_LANES = 128                          # pad constant table to one lane group


# ------------- deterministic init (replaces sympy bessel_basis / real_sph_harm) -------------
def _sph_jn_np(n, x):
    """Spherical Bessel j_n(x) via upward recurrence (float64 numpy)."""
    x = np.asarray(x, dtype=np.float64)
    j0 = np.sin(x) / x
    if n == 0:
        return j0
    j1 = np.sin(x) / x ** 2 - np.cos(x) / x
    if n == 1:
        return j1
    jm1, jl = j0, j1
    for l in range(2, n + 1):
        jm1, jl = jl, (2 * l - 1) / x * jl - jm1
    return jl


def _jn_zeros(n, k):
    """First k roots of j_l for l=0..n-1 (bisection using root interlacing)."""
    zerosj = np.zeros((n, k), dtype=np.float64)
    zerosj[0] = np.arange(1, k + 1) * np.pi
    points = np.arange(1, k + n) * np.pi
    racines = np.zeros(k + n - 1, dtype=np.float64)
    for i in range(1, n):
        for j in range(k + n - 1 - i):
            a, b = points[j], points[j + 1]
            fa = _sph_jn_np(i, a)
            for _ in range(200):
                m = 0.5 * (a + b)
                fm = _sph_jn_np(i, m)
                if fa * fm <= 0.0:
                    b = m
                else:
                    a, fa = m, fm
            racines[j] = 0.5 * (a + b)
        points = racines.copy()
        zerosj[i, :k] = racines[:k]
    return zerosj


Z_ROOTS = _jn_zeros(NUM_SPHERICAL, NUM_RADIAL)                      # (n, k) Bessel frequencies
BESSEL_NORM = np.zeros((NUM_SPHERICAL, NUM_RADIAL), dtype=np.float64)
for _l in range(NUM_SPHERICAL):
    for _j in range(NUM_RADIAL):
        BESSEL_NORM[_l, _j] = 1.0 / np.sqrt(0.5 * _sph_jn_np(_l + 1, Z_ROOTS[_l, _j]) ** 2)

SPH_COEF = [float(np.sqrt((2 * l + 1) / (4.0 * np.pi))) for l in range(NUM_SPHERICAL)]

# Small-x Taylor series:  j_l(x) = x^l * sum_k SERIES_COEF[l,k] * (x^2)^k
# SERIES_COEF[l,k] = (-1/2)^k / (k! * (2l+1)!! * prod_{m=1..k}(2l+1+2m))
SERIES_COEF = np.zeros((NUM_SPHERICAL, K_SERIES), dtype=np.float64)
for _l in range(NUM_SPHERICAL):
    dfact = 1.0
    for _m in range(1, 2 * _l + 2, 2):
        dfact *= _m
    c = 1.0 / dfact
    SERIES_COEF[_l, 0] = c
    for _k in range(1, K_SERIES):
        c = c * (-0.5) / (_k * (2 * _l + 1 + 2 * _k))
        SERIES_COEF[_l, _k] = c

# Use the series below these x thresholds (per l); the 12-term series converges to
# <1e-7 rel there and the closed form is well conditioned above them.
SERIES_THRESH = [min(1.0 + 1.5 * l, 6.0) for l in range(NUM_SPHERICAL)]


def _build_const_table():
    """Per-row (l,j) constants, lane-padded: (NK, CONST_LANES) f32."""
    tab = np.zeros((NK, CONST_LANES), dtype=np.float32)
    for l in range(NUM_SPHERICAL):
        for j in range(NUM_RADIAL):
            r = l * NUM_RADIAL + j
            z = Z_ROOTS[l, j]
            tab[r, 0] = z                       # z_{l,j}
            tab[r, 1] = 1.0 / z                 # 1/z (exact constant -> exact 1/x)
            tab[r, 2] = BESSEL_NORM[l, j]       # normalizer
            tab[r, 3] = SERIES_THRESH[l]        # series/closed-form switch point
            tab[r, 4] = float(l)                # Bessel order / Legendre degree
            tab[r, C0:C0 + K_SERIES] = SERIES_COEF[l]
    return tab


_CONST_TAB = _build_const_table()


# ---------------- Pallas kernel ----------------
def _sbf_kernel(const_ref, io_ref, out_ref):
    # const_ref: (NK, CONST_LANES) resident per-row constants (same block every step)
    # io_ref:    (2, TILE)  row 0 = gathered dist/cutoff, row 1 = angle
    # out_ref:   (NK, TILE) lane-dense output, out[l*k+j, t]
    d = io_ref[0:1, :]          # (1, T)
    theta = io_ref[1:2, :]      # (1, T)

    z_col = const_ref[:, 0:1]       # (NK, 1)
    invz_col = const_ref[:, 1:2]
    nrm_col = const_ref[:, 2:3]
    thr_col = const_ref[:, 3:4]
    l_col = const_ref[:, 4:5]

    # 1/d: EUP approx seed + 2 Newton steps (output-facing via the 1/x envelope
    # term; reused as the only reciprocal in the Bessel recurrence).
    r = pl.reciprocal(d, approx=True)
    r = r * (2.0 - d * r)
    inv_d = r * (2.0 - d * r)

    # Envelope: 1/x + a*x^(p-1) + b*x^p + c*x^(p+1), p-1 = 5 (square & multiply)
    d2 = d * d
    d4 = d2 * d2
    xp0 = d4 * d
    xp1 = xp0 * d
    xp2 = xp1 * d
    env = inv_d + ENV_A * xp0 + ENV_B * xp1 + ENV_C * xp2            # (1, T)

    # Legendre polynomials P_l(cos theta); /l folded into Python constants.
    cos_t = jnp.cos(theta)
    P = [jnp.ones_like(cos_t), cos_t]
    for l in range(2, NUM_SPHERICAL):
        P.append(((2 * l - 1) * cos_t * P[l - 1] - (l - 1) * P[l - 2]) * (1.0 / l))

    # Bessel arguments for all NK=(l,j) rows at once.
    x = z_col * d                     # (NK, T)
    u = x * x
    inv_x = invz_col * inv_d          # exact 1/z times refined 1/d -> ~exact 1/x

    # --- closed-form / upward recurrence branch (well conditioned for x >= thresh_l)
    s = jnp.sin(x)
    c = jnp.cos(x)
    jcf = [s * inv_x]                                                 # j_0
    if NUM_SPHERICAL > 1:
        jcf.append((jcf[0] - c) * inv_x)                              # j_1
    for m in range(2, NUM_SPHERICAL):
        jcf.append((2 * m - 1) * inv_x * jcf[m - 1] - jcf[m - 2])     # upward recurrence

    # --- small-x power-series branch: j_l(x) = x^l * sum_k C[l,k] * (x^2)^k
    poly = const_ref[:, C0 + K_SERIES - 1:C0 + K_SERIES]              # (NK, 1)
    for k in range(K_SERIES - 2, -1, -1):
        poly = const_ref[:, C0 + k:C0 + k + 1] + u * poly             # Horner, (NK, T)
    xl = jnp.ones_like(x)                                             # x^l per row
    xpow = x
    for l in range(1, NUM_SPHERICAL):
        xl = jnp.where(l_col >= float(l), xpow, xl)
        if l + 1 < NUM_SPHERICAL:
            xpow = xpow * x
    j_series = xl * poly

    # Per-row selection of the Bessel order / Legendre degree (l = row // NUM_RADIAL).
    jl = jcf[NUM_SPHERICAL - 1]
    cbf = SPH_COEF[NUM_SPHERICAL - 1] * P[NUM_SPHERICAL - 1]
    for l in range(NUM_SPHERICAL - 2, -1, -1):
        sel = l_col < (l + 0.5)
        jl = jnp.where(sel, jcf[l], jl)
        cbf = jnp.where(sel, SPH_COEF[l] * P[l], cbf)
    jl = jnp.where(x < thr_col, j_series, jl)                         # stable small-x path

    # out[l*k+j, t] = norm[l,j] * j_l(z*d) * env(d) * cbf_l(theta)
    out_ref[...] = (nrm_col * jl * env * cbf).astype(out_ref.dtype)


# ---------------- wrapper ----------------
def _round_up(n, m):
    return ((n + m - 1) // m) * m


def _pick_tiling(T, tile_t):
    """Choose lane-tile size: big to amortize per-step overhead, but keep the
    grid >= 2 whenever there is enough work so both v7x TensorCores are fed
    (harmless on single-core v5e/v6e)."""
    t128 = max(1, _round_up(T, 128) // 128)           # 128-lane groups of triplets
    groups = min(max(1, tile_t // 128), t128)
    if t128 >= 2 and groups == t128:
        groups = (t128 + 1) // 2
    tile = groups * 128
    t_pad = _round_up(t128, groups) * 128
    return tile, t_pad


def spherical_basis_layer(dist, angle, idx_kj, *, tile_t=TILE_T):
    """dist: (E,) f32, angle: (T,) f32, idx_kj: (T,) int32 -> (T, n*k) f32."""
    T = int(angle.shape[0])
    # Gather is glue: rbf is elementwise in dist, so gathering dist first and
    # recomputing per-triplet is exactly equivalent to rbf[idx_kj].
    dist_g = (dist.astype(jnp.float32) / CUTOFF)[idx_kj]              # (T,)
    angle_f = angle.astype(jnp.float32)                               # (T,)

    tile, t_pad = _pick_tiling(T, tile_t)
    pad = t_pad - T
    if pad:
        # benign padding values (d=0.5, theta=1.0): finite everywhere, sliced off
        dist_g = jnp.concatenate([dist_g, jnp.full((pad,), 0.5, jnp.float32)])
        angle_f = jnp.concatenate([angle_f, jnp.full((pad,), 1.0, jnp.float32)])

    packed = jnp.stack([dist_g, angle_f], axis=0)                     # (2, t_pad), T on lanes
    const_tab = jnp.asarray(_CONST_TAB)                               # (NK, CONST_LANES)

    out_nk_t = pl.pallas_call(
        _sbf_kernel,
        out_shape=jax.ShapeDtypeStruct((NK, t_pad), jnp.float32),
        grid=(t_pad // tile,),
        in_specs=[
            pl.BlockSpec((NK, CONST_LANES), lambda i: (0, 0)),  # resident constants (1 DMA)
            pl.BlockSpec((2, tile), lambda i: (0, i)),          # packed dist+angle
        ],
        out_specs=pl.BlockSpec((NK, tile), lambda i: (0, i)),
        compiler_params=pltpu.CompilerParams(
            dimension_semantics=("parallel",)),
    )(const_tab, packed)

    # TODO(synk): in a full DimeNet pipeline the consumer matmul should contract
    # against this lane-dense (NK, T) layout directly; the transpose below only
    # restores the module's (T, n*k) contract for the standalone layer.
    return out_nk_t.T[:T]


# ---------------- pure-numpy reference (same math, float64) ----------------
def _reference(dist, angle, idx_kj):
    d = np.asarray(dist, np.float64) / CUTOFF
    env = 1.0 / d + ENV_A * d ** (_P - 1) + ENV_B * d ** _P + ENV_C * d ** (_P + 1)
    rbf = np.zeros((d.shape[0], NUM_SPHERICAL, NUM_RADIAL))
    for l in range(NUM_SPHERICAL):
        for j in range(NUM_RADIAL):
            rbf[:, l, j] = BESSEL_NORM[l, j] * _sph_jn_np(l, Z_ROOTS[l, j] * d)
    rbf = env[:, None, None] * rbf
    ct = np.cos(np.asarray(angle, np.float64))
    P = [np.ones_like(ct), ct]
    for l in range(2, NUM_SPHERICAL):
        P.append(((2 * l - 1) * ct * P[l - 1] - (l - 1) * P[l - 2]) / l)
    cbf = np.stack([SPH_COEF[l] * P[l] for l in range(NUM_SPHERICAL)], axis=1)
    out = rbf[np.asarray(idx_kj)] * cbf[:, :, None]
    return out.reshape(-1, NK)


if __name__ == "__main__":
    key = jax.random.PRNGKey(0)
    k1, k2, k3 = jax.random.split(key, 3)

    E = 64     # number of edges (dist entries)
    T = 2048   # number of triplets (angle / idx_kj entries) -> grid of 2 tiles of 1024

    dist = jax.random.uniform(k1, (E,), jnp.float32, minval=0.5, maxval=CUTOFF)
    angle = jax.random.uniform(k2, (T,), jnp.float32,
                               minval=0.05, maxval=float(np.pi) - 0.05)
    idx_kj = jax.random.randint(k3, (T,), 0, E, dtype=jnp.int32)

    out = spherical_basis_layer(dist, angle, idx_kj)
    out = jax.block_until_ready(out)

    ref = _reference(np.asarray(dist), np.asarray(angle), np.asarray(idx_kj))
    np.testing.assert_allclose(np.asarray(out), ref, rtol=1e-3, atol=1e-3)

    print("KERNEL_OK")
</pallas_src>

<mosaic_0001>
module attributes {stable_mosaic.version = 11 : i64} {
  func.func @_sbf_kernel(%arg0: i32, %arg1: memref<24x128xf32, #tpu.memory_space<vmem>>, %arg2: memref<2x1024xf32, #tpu.memory_space<vmem>>, %arg3: memref<24x1024xf32, #tpu.memory_space<vmem>>) attributes {dimension_semantics = [#tpu.dimension_semantics<parallel>], iteration_bounds = array<i64: 2>, scalar_prefetch = 0 : i64, scratch_operands = 0 : i64, tpu.core_type = #tpu.core_type<tc>, window_params = [{pipeline_mode = #tpu.pipeline_mode<synchronous>, transform_indices = @transform_0, window_bounds = array<i64: 24, 128>}, {transform_indices = @transform_1, window_bounds = array<i64: 2, 1024>}, {transform_indices = @transform_2, window_bounds = array<i64: 24, 1024>}]} {
    %c0 = arith.constant 0 : index
    %c0_0 = arith.constant 0 : index
    %0 = vector.load %arg2[%c0, %c0_0] : memref<2x1024xf32, #tpu.memory_space<vmem>>, vector<1x1024xf32>
    %c1 = arith.constant 1 : index
    %c0_1 = arith.constant 0 : index
    %1 = vector.load %arg2[%c1, %c0_1] : memref<2x1024xf32, #tpu.memory_space<vmem>>, vector<1x1024xf32>
    %c0_2 = arith.constant 0 : index
    %c0_3 = arith.constant 0 : index
    %2 = vector.load %arg1[%c0_2, %c0_3] : memref<24x128xf32, #tpu.memory_space<vmem>>, vector<24x1xf32>
    %c0_4 = arith.constant 0 : index
    %c1_5 = arith.constant 1 : index
    %3 = vector.load %arg1[%c0_4, %c1_5] : memref<24x128xf32, #tpu.memory_space<vmem>>, vector<24x1xf32>
    %c0_6 = arith.constant 0 : index
    %c2 = arith.constant 2 : index
    %4 = vector.load %arg1[%c0_6, %c2] : memref<24x128xf32, #tpu.memory_space<vmem>>, vector<24x1xf32>
    %c0_7 = arith.constant 0 : index
    %c3 = arith.constant 3 : index
    %5 = vector.load %arg1[%c0_7, %c3] : memref<24x128xf32, #tpu.memory_space<vmem>>, vector<24x1xf32>
    %c0_8 = arith.constant 0 : index
    %c4 = arith.constant 4 : index
    %6 = vector.load %arg1[%c0_8, %c4] : memref<24x128xf32, #tpu.memory_space<vmem>>, vector<24x1xf32>
    %7 = tpu.reciprocal %0 {approx = true} : vector<1x1024xf32> -> vector<1x1024xf32>
    %8 = arith.mulf %0, %7 : vector<1x1024xf32>
    %cst = arith.constant 2.000000e+00 : f32
    %9 = vector.broadcast %cst : f32 to vector<1x1024xf32>
    %10 = arith.subf %9, %8 : vector<1x1024xf32>
    %11 = arith.mulf %7, %10 : vector<1x1024xf32>
    %12 = arith.mulf %0, %11 : vector<1x1024xf32>
    %cst_9 = arith.constant 2.000000e+00 : f32
    %13 = vector.broadcast %cst_9 : f32 to vector<1x1024xf32>
    %14 = arith.subf %13, %12 : vector<1x1024xf32>
    %15 = arith.mulf %11, %14 : vector<1x1024xf32>
    %16 = arith.mulf %0, %0 : vector<1x1024xf32>
    %17 = arith.mulf %16, %16 : vector<1x1024xf32>
    %18 = arith.mulf %17, %0 : vector<1x1024xf32>
    %19 = arith.mulf %18, %0 : vector<1x1024xf32>
    %20 = arith.mulf %19, %0 : vector<1x1024xf32>
    %cst_10 = arith.constant -2.800000e+01 : f32
    %21 = vector.broadcast %cst_10 : f32 to vector<1x1024xf32>
    %22 = arith.mulf %21, %18 : vector<1x1024xf32>
    %23 = arith.addf %15, %22 : vector<1x1024xf32>
    %cst_11 = arith.constant 4.800000e+01 : f32
    %24 = vector.broadcast %cst_11 : f32 to vector<1x1024xf32>
    %25 = arith.mulf %24, %19 : vector<1x1024xf32>
    %26 = arith.addf %23, %25 : vector<1x1024xf32>
    %cst_12 = arith.constant -2.100000e+01 : f32
    %27 = vector.broadcast %cst_12 : f32 to vector<1x1024xf32>
    %28 = arith.mulf %27, %20 : vector<1x1024xf32>
    %29 = arith.addf %26, %28 : vector<1x1024xf32>
    %30 = math.cos %1 : vector<1x1024xf32>
    %cst_13 = arith.constant 1.000000e+00 : f32
    %31 = vector.broadcast %cst_13 : f32 to vector<1x1024xf32>
    %cst_14 = arith.constant 3.000000e+00 : f32
    %32 = vector.broadcast %cst_14 : f32 to vector<1x1024xf32>
    %33 = arith.mulf %32, %30 : vector<1x1024xf32>
    %34 = arith.mulf %33, %30 : vector<1x1024xf32>
    %cst_15 = arith.constant 1.000000e+00 : f32
    %35 = vector.broadcast %cst_15 : f32 to vector<1x1024xf32>
    %36 = arith.mulf %35, %31 : vector<1x1024xf32>
    %37 = arith.subf %34, %36 : vector<1x1024xf32>
    %cst_16 = arith.constant 5.000000e-01 : f32
    %38 = vector.broadcast %cst_16 : f32 to vector<1x1024xf32>
    %39 = arith.mulf %37, %38 : vector<1x1024xf32>
    %cst_17 = arith.constant 5.000000e+00 : f32
    %40 = vector.broadcast %cst_17 : f32 to vector<1x1024xf32>
    %41 = arith.mulf %40, %30 : vector<1x1024xf32>
    %42 = arith.mulf %41, %39 : vector<1x1024xf32>
    %cst_18 = arith.constant 2.000000e+00 : f32
    %43 = vector.broadcast %cst_18 : f32 to vector<1x1024xf32>
    %44 = arith.mulf %43, %30 : vector<1x1024xf32>
    %45 = arith.subf %42, %44 : vector<1x1024xf32>
    %cst_19 = arith.constant 0.333333343 : f32
    %46 = vector.broadcast %cst_19 : f32 to vector<1x1024xf32>
    %47 = arith.mulf %45, %46 : vector<1x1024xf32>
    %48 = vector.broadcast %2 : vector<24x1xf32> to vector<24x1024xf32>
    %49 = vector.broadcast %0 : vector<1x1024xf32> to vector<24x1024xf32>
    %50 = arith.mulf %48, %49 : vector<24x1024xf32>
    %51 = arith.mulf %50, %50 : vector<24x1024xf32>
    %52 = vector.broadcast %3 : vector<24x1xf32> to vector<24x1024xf32>
    %53 = vector.broadcast %15 : vector<1x1024xf32> to vector<24x1024xf32>
    %54 = arith.mulf %52, %53 : vector<24x1024xf32>
    %55 = math.sin %50 : vector<24x1024xf32>
    %56 = math.cos %50 : vector<24x1024xf32>
    %57 = arith.mulf %55, %54 : vector<24x1024xf32>
    %58 = arith.subf %57, %56 : vector<24x1024xf32>
    %59 = arith.mulf %58, %54 : vector<24x1024xf32>
    %cst_20 = arith.constant 3.000000e+00 : f32
    %60 = vector.broadcast %cst_20 : f32 to vector<24x1024xf32>
    %61 = arith.mulf %60, %54 : vector<24x1024xf32>
    %62 = arith.mulf %61, %59 : vector<24x1024xf32>
    %63 = arith.subf %62, %57 : vector<24x1024xf32>
    %cst_21 = arith.constant 5.000000e+00 : f32
    %64 = vector.broadcast %cst_21 : f32 to vector<24x1024xf32>
    %65 = arith.mulf %64, %54 : vector<24x1024xf32>
    %66 = arith.mulf %65, %63 : vector<24x1024xf32>
    %67 = arith.subf %66, %59 : vector<24x1024xf32>
    %c0_22 = arith.constant 0 : index
    %c16 = arith.constant 16 : index
    %68 = vector.load %arg1[%c0_22, %c16] : memref<24x128xf32, #tpu.memory_space<vmem>>, vector<24x1xf32>
    %c0_23 = arith.constant 0 : index
    %c15 = arith.constant 15 : index
    %69 = vector.load %arg1[%c0_23, %c15] : memref<24x128xf32, #tpu.memory_space<vmem>>, vector<24x1xf32>
    %70 = vector.broadcast %68 : vector<24x1xf32> to vector<24x1024xf32>
    %71 = arith.mulf %51, %70 : vector<24x1024xf32>
    %72 = vector.broadcast %69 : vector<24x1xf32> to vector<24x1024xf32>
    %73 = arith.addf %72, %71 : vector<24x1024xf32>
    %c0_24 = arith.constant 0 : index
    %c14 = arith.constant 14 : index
    %74 = vector.load %arg1[%c0_24, %c14] : memref<24x128xf32, #tpu.memory_space<vmem>>, vector<24x1xf32>
    %75 = arith.mulf %51, %73 : vector<24x1024xf32>
    %76 = vector.broadcast %74 : vector<24x1xf32> to vector<24x1024xf32>
    %77 = arith.addf %76, %75 : vector<24x1024xf32>
    %c0_25 = arith.constant 0 : index
    %c13 = arith.constant 13 : index
    %78 = vector.load %arg1[%c0_25, %c13] : memref<24x128xf32, #tpu.memory_space<vmem>>, vector<24x1xf32>
    %79 = arith.mulf %51, %77 : vector<24x1024xf32>
    %80 = vector.broadcast %78 : vector<24x1xf32> to vector<24x1024xf32>
    %81 = arith.addf %80, %79 : vector<24x1024xf32>
    %c0_26 = arith.constant 0 : index
    %c12 = arith.constant 12 : index
    %82 = vector.load %arg1[%c0_26, %c12] : memref<24x128xf32, #tpu.memory_space<vmem>>, vector<24x1xf32>
    %83 = arith.mulf %51, %81 : vector<24x1024xf32>
    %84 = vector.broadcast %82 : vector<24x1xf32> to vector<24x1024xf32>
    %85 = arith.addf %84, %83 : vector<24x1024xf32>
    %c0_27 = arith.constant 0 : index
    %c11 = arith.constant 11 : index
    %86 = vector.load %arg1[%c0_27, %c11] : memref<24x128xf32, #tpu.memory_space<vmem>>, vector<24x1xf32>
    %87 = arith.mulf %51, %85 : vector<24x1024xf32>
    %88 = vector.broadcast %86 : vector<24x1xf32> to vector<24x1024xf32>
    %89 = arith.addf %88, %87 : vector<24x1024xf32>
    %c0_28 = arith.constant 0 : index
    %c10 = arith.constant 10 : index
    %90 = vector.load %arg1[%c0_28, %c10] : memref<24x128xf32, #tpu.memory_space<vmem>>, vector<24x1xf32>
    %91 = arith.mulf %51, %89 : vector<24x1024xf32>
    %92 = vector.broadcast %90 : vector<24x1xf32> to vector<24x1024xf32>
    %93 = arith.addf %92, %91 : vector<24x1024xf32>
    %c0_29 = arith.constant 0 : index
    %c9 = arith.constant 9 : index
    %94 = vector.load %arg1[%c0_29, %c9] : memref<24x128xf32, #tpu.memory_space<vmem>>, vector<24x1xf32>
    %95 = arith.mulf %51, %93 : vector<24x1024xf32>
    %96 = vector.broadcast %94 : vector<24x1xf32> to vector<24x1024xf32>
    %97 = arith.addf %96, %95 : vector<24x1024xf32>
    %c0_30 = arith.constant 0 : index
    %c8 = arith.constant 8 : index
    %98 = vector.load %arg1[%c0_30, %c8] : memref<24x128xf32, #tpu.memory_space<vmem>>, vector<24x1xf32>
    %99 = arith.mulf %51, %97 : vector<24x1024xf32>
    %100 = vector.broadcast %98 : vector<24x1xf32> to vector<24x1024xf32>
    %101 = arith.addf %100, %99 : vector<24x1024xf32>
    %c0_31 = arith.constant 0 : index
    %c7 = arith.constant 7 : index
    %102 = vector.load %arg1[%c0_31, %c7] : memref<24x128xf32, #tpu.memory_space<vmem>>, vector<24x1xf32>
    %103 = arith.mulf %51, %101 : vector<24x1024xf32>
    %104 = vector.broadcast %102 : vector<24x1xf32> to vector<24x1024xf32>
    %105 = arith.addf %104, %103 : vector<24x1024xf32>
    %c0_32 = arith.constant 0 : index
    %c6 = arith.constant 6 : index
    %106 = vector.load %arg1[%c0_32, %c6] : memref<24x128xf32, #tpu.memory_space<vmem>>, vector<24x1xf32>
    %107 = arith.mulf %51, %105 : vector<24x1024xf32>
    %108 = vector.broadcast %106 : vector<24x1xf32> to vector<24x1024xf32>
    %109 = arith.addf %108, %107 : vector<24x1024xf32>
    %c0_33 = arith.constant 0 : index
    %c5 = arith.constant 5 : index
    %110 = vector.load %arg1[%c0_33, %c5] : memref<24x128xf32, #tpu.memory_space<vmem>>, vector<24x1xf32>
    %111 = arith.mulf %51, %109 : vector<24x1024xf32>
    %112 = vector.broadcast %110 : vector<24x1xf32> to vector<24x1024xf32>
    %113 = arith.addf %112, %111 : vector<24x1024xf32>
    %cst_34 = arith.constant 1.000000e+00 : f32
    %114 = vector.broadcast %cst_34 : f32 to vector<24x1024xf32>
    %cst_35 = arith.constant 1.000000e+00 : f32
    %115 = vector.broadcast %cst_35 : f32 to vector<24x1xf32>
    %116 = arith.cmpf oge, %6, %115 : vector<24x1xf32>
    %117 = vector.shape_cast %116 : vector<24x1xi1> to vector<24x1xi1>
    %118 = vector.broadcast %117 : vector<24x1xi1> to vector<24x1024xi1>
    %119 = arith.select %118, %50, %114 : vector<24x1024xi1>, vector<24x1024xf32>
    %120 = arith.mulf %50, %50 : vector<24x1024xf32>
    %cst_36 = arith.constant 2.000000e+00 : f32
    %121 = vector.broadcast %cst_36 : f32 to vector<24x1xf32>
    %122 = arith.cmpf oge, %6, %121 : vector<24x1xf32>
    %123 = vector.shape_cast %122 : vector<24x1xi1> to vector<24x1xi1>
    %124 = vector.broadcast %123 : vector<24x1xi1> to vector<24x1024xi1>
    %125 = arith.select %124, %120, %119 : vector<24x1024xi1>, vector<24x1024xf32>
    %126 = arith.mulf %120, %50 : vector<24x1024xf32>
    %cst_37 = arith.constant 3.000000e+00 : f32
    %127 = vector.broadcast %cst_37 : f32 to vector<24x1xf32>
    %128 = arith.cmpf oge, %6, %127 : vector<24x1xf32>
    %129 = vector.shape_cast %128 : vector<24x1xi1> to vector<24x1xi1>
    %130 = vector.broadcast %129 : vector<24x1xi1> to vector<24x1024xi1>
    %131 = arith.select %130, %126, %125 : vector<24x1024xi1>, vector<24x1024xf32>
    %132 = arith.mulf %131, %113 : vector<24x1024xf32>
    %cst_38 = arith.constant 0.746352672 : f32
    %133 = vector.broadcast %cst_38 : f32 to vector<1x1024xf32>
    %134 = arith.mulf %133, %47 : vector<1x1024xf32>
    %cst_39 = arith.constant 2.500000e+00 : f32
    %135 = vector.broadcast %cst_39 : f32 to vector<24x1xf32>
    %136 = arith.cmpf olt, %6, %135 : vector<24x1xf32>
    %137 = vector.shape_cast %136 : vector<24x1xi1> to vector<24x1xi1>
    %138 = vector.broadcast %137 : vector<24x1xi1> to vector<24x1024xi1>
    %139 = arith.select %138, %63, %67 : vector<24x1024xi1>, vector<24x1024xf32>
    %cst_40 = arith.constant 0.63078314 : f32
    %140 = vector.broadcast %cst_40 : f32 to vector<1x1024xf32>
    %141 = arith.mulf %140, %39 : vector<1x1024xf32>
    %142 = vector.shape_cast %136 : vector<24x1xi1> to vector<24x1xi1>
    %143 = vector.broadcast %142 : vector<24x1xi1> to vector<24x1024xi1>
    %144 = vector.shape_cast %141 : vector<1x1024xf32> to vector<1x1024xf32>
    %145 = vector.broadcast %144 : vector<1x1024xf32> to vector<24x1024xf32>
    %146 = vector.shape_cast %134 : vector<1x1024xf32> to vector<1x1024xf32>
    %147 = vector.broadcast %146 : vector<1x1024xf32> to vector<24x1024xf32>
    %148 = arith.select %143, %145, %147 : vector<24x1024xi1>, vector<24x1024xf32>
    %cst_41 = arith.constant 1.500000e+00 : f32
    %149 = vector.broadcast %cst_41 : f32 to vector<24x1xf32>
    %150 = arith.cmpf olt, %6, %149 : vector<24x1xf32>
    %151 = vector.shape_cast %150 : vector<24x1xi1> to vector<24x1xi1>
    %152 = vector.broadcast %151 : vector<24x1xi1> to vector<24x1024xi1>
    %153 = arith.select %152, %59, %139 : vector<24x1024xi1>, vector<24x1024xf32>
    %cst_42 = arith.constant 0.488602519 : f32
    %154 = vector.broadcast %cst_42 : f32 to vector<1x1024xf32>
    %155 = arith.mulf %154, %30 : vector<1x1024xf32>
    %156 = vector.shape_cast %150 : vector<24x1xi1> to vector<24x1xi1>
    %157 = vector.broadcast %156 : vector<24x1xi1> to vector<24x1024xi1>
    %158 = vector.shape_cast %155 : vector<1x1024xf32> to vector<1x1024xf32>
    %159 = vector.broadcast %158 : vector<1x1024xf32> to vector<24x1024xf32>
    %160 = arith.select %157, %159, %148 : vector<24x1024xi1>, vector<24x1024xf32>
    %cst_43 = arith.constant 5.000000e-01 : f32
    %161 = vector.broadcast %cst_43 : f32 to vector<24x1xf32>
    %162 = arith.cmpf olt, %6, %161 : vector<24x1xf32>
    %163 = vector.shape_cast %162 : vector<24x1xi1> to vector<24x1xi1>
    %164 = vector.broadcast %163 : vector<24x1xi1> to vector<24x1024xi1>
    %165 = arith.select %164, %57, %153 : vector<24x1024xi1>, vector<24x1024xf32>
    %cst_44 = arith.constant 0.282094806 : f32
    %166 = vector.broadcast %cst_44 : f32 to vector<1x1024xf32>
    %167 = arith.mulf %166, %31 : vector<1x1024xf32>
    %168 = vector.shape_cast %162 : vector<24x1xi1> to vector<24x1xi1>
    %169 = vector.broadcast %168 : vector<24x1xi1> to vector<24x1024xi1>
    %170 = vector.shape_cast %167 : vector<1x1024xf32> to vector<1x1024xf32>
    %171 = vector.broadcast %170 : vector<1x1024xf32> to vector<24x1024xf32>
    %172 = arith.select %169, %171, %160 : vector<24x1024xi1>, vector<24x1024xf32>
    %173 = vector.broadcast %5 : vector<24x1xf32> to vector<24x1024xf32>
    %174 = arith.cmpf olt, %50, %173 : vector<24x1024xf32>
    %175 = arith.select %174, %132, %165 : vector<24x1024xi1>, vector<24x1024xf32>
    %176 = vector.broadcast %4 : vector<24x1xf32> to vector<24x1024xf32>
    %177 = arith.mulf %176, %175 : vector<24x1024xf32>
    %178 = vector.broadcast %29 : vector<1x1024xf32> to vector<24x1024xf32>
    %179 = arith.mulf %177, %178 : vector<24x1024xf32>
    %180 = arith.mulf %179, %172 : vector<24x1024xf32>
    %c0_45 = arith.constant 0 : index
    %c0_46 = arith.constant 0 : index
    %181 = vector.load %arg3[%c0_45, %c0_46] : memref<24x1024xf32, #tpu.memory_space<vmem>>, vector<24x1024xf32>
    tpu.vector_store %arg3[%c0_45, %c0_46], %180 {strides = array<i32>} : memref<24x1024xf32, #tpu.memory_space<vmem>>, vector<24x1024xf32>,
    return
  }
  func.func @transform_0(%arg0: i32) -> (i32, i32) {
    %c0_i32 = arith.constant 0 : i32
    %c0_i32_0 = arith.constant 0 : i32
    %c0_i32_1 = arith.constant 0 : i32
    return %c0_i32, %c0_i32_0 : i32, i32
  }
  func.func @transform_1(%arg0: i32) -> (i32, i32) {
    %c0_i32 = arith.constant 0 : i32
    %c0_i32_0 = arith.constant 0 : i32
    return %c0_i32, %arg0 : i32, i32
  }
  func.func @transform_2(%arg0: i32) -> (i32, i32) {
    %c0_i32 = arith.constant 0 : i32
    %c0_i32_0 = arith.constant 0 : i32
    return %c0_i32, %arg0 : i32, i32
  }
}

</mosaic_0001>

<llo_original>
// kernel: tpu_custom_call.1
$region0: #{tpu_custom_call.1}
  #allocation0 [shape = 'u32[]', space=smem, size = 0x4, offset = 0x4, fixed_abs, tag = 'smem constant byte address 0x4 - core index']
  #allocation1 [shape = 'u32[144,128]{1,0:T(1,128)}', space=vmem, size = 0x12000, scoped, tag = 'internal scratch']
  %s0 = inlined_call_operand.hbm [shape: f32[24,128], index: 0, kind: input, shape index: {}]
  %s1 = inlined_call_operand.hbm [shape: f32[2,2048], index: 1, kind: input, shape index: {}]
  %s2 = inlined_call_operand.hbm [shape: f32[24,2048], index: 2, kind: output, shape index: {}]
  %s3 = sld [smem:[#allocation0]]
  $region49: #{tpu_custom_call.1} parent=0
    _
  %s5 = ssub.s32 1, %s3
  %s6 = scalar_select 0, %s5, %s3
  $region1: #{tpu_custom_call.1} parent=0
    #allocation2 [shape = 'u8[12288]{0}', space=vmem, size = 0x3000, scoped, tag = 'input window, operand 0, single buffered']
    #allocation3 [shape = 's32[2]{0}', space=sflag, size = 0x8, scoped, tag = 'scoped memory for tpu_custom_call.1']
    #allocation4 [shape = 's32[2]{0}', space=sflag, size = 0x8, scoped, tag = 'scoped memory for tpu_custom_call.1']
    #allocation5 [shape = 'u8[16384]{0}', space=vmem, size = 0x4000, scoped, tag = 'input window, operand 1']
    #allocation6 [shape = 's32[2]{0}', space=sflag, size = 0x8, scoped, tag = 'scoped memory for tpu_custom_call.1']
    #allocation7 [shape = 'u8[196608]{0}', space=vmem, size = 0x30000, scoped, tag = 'output window, operand 0']
    %7 = vsyncpa [#allocation3], 0
    %8 = vsyncpa [#allocation6], 0
    %s9 = scalar_lea.sflag [#allocation6], 1
    %10 = vsyncpa %s9, 0
    %11 = vsyncpa [#allocation4], 0
    %s12 = scalar_lea.sflag [#allocation4], 1
    %13 = vsyncpa %s12, 0
    loop: start=0, step=1, limit=4
    $region2: #{tpu_custom_call.1} parent=1 // loop_pre_header
      _
    $region3: #{tpu_custom_call.1} parent=1 // loop_header
      %s15 = sphi 0, %s19
      %p16 = scmp.ge.s32.totalorder %s15, 4
      %s23 = sphi 0, %s23
      %s25 = sphi 0, %s23
      %s26 = sphi 0, %s25
      %s40 = sphi 0, %s26
      %s46 = sphi 0, %s48
      %s49 = sphi 0, %s46
      %s50 = sphi 0, %s49
      %s66 = sphi 0, %s50
      %s72 = sphi 0, %s74
      %s75 = sphi 0, %s72
      %s76 = sphi 0, %s75
      %s92 = sphi 0, %s76
    $region4: #{tpu_custom_call.1} parent=1 // loop_header_branch
      %18 = sbr.rel (%p16) target = $region8
    $region5: #{tpu_custom_call.1} parent=1 // loop_body
      %s20 = ssub.s32 %s15, 1
      %s21 = ssub.s32 %s15, 2
      %s22 = sadd.s32 %s15, 1
      %s24 = sadd.s32 %s23, 1
      %p27 = scmp.eq.s32.totalorder %s15, 1
      %p28 = scmp.ne.s32.totalorder %s23, %s25
      %p29 = scmp.eq.s32.totalorder %s15, 0
      %p30 = por %p28, %p29
      %p31 = scmp.ne.s32.totalorder %s23, %s25
      %p32 = scmp.eq.s32.totalorder %s20, 1
      %p33 = por %p31, %p32
      %p34 = scmp.ne.s32.totalorder %s25, %s26
      %p35 = scmp.eq.s32.totalorder %s20, 0
      %p36 = por %p34, %p35
      %p37 = scmp.ne.s32.totalorder %s25, %s26
      %p38 = scmp.eq.s32.totalorder %s21, 1
      %p39 = por %p37, %p38
      %p41 = scmp.ne.s32.totalorder %s26, %s40
      %p42 = scmp.eq.s32.totalorder %s21, 0
      %p43 = por %p41, %p42
      %s44 = ssub.s32 %s15, %s22
      %p45 = scmp.eq.s32.totalorder %s44, 0
      %s47 = sadd.s32 %s46, 1
      %s48 = scalar_select %p45, %s46, %s47
      %p51 = pneg %p45
      %p52 = scmp.eq.s32.totalorder %s15, 1
      %p53 = por %p51, %p52
      %p54 = scmp.ne.s32.totalorder %s46, %s49
      %p55 = scmp.eq.s32.totalorder %s15, 0
      %p56 = por %p54, %p55
      %p57 = scmp.ne.s32.totalorder %s46, %s49
      %p58 = scmp.eq.s32.totalorder %s20, 1
      %p59 = por %p57, %p58
      %p60 = scmp.ne.s32.totalorder %s49, %s50
      %p61 = scmp.eq.s32.totalorder %s20, 0
      %p62 = por %p60, %p61
      %p63 = scmp.ne.s32.totalorder %s49, %s50
      %p64 = scmp.eq.s32.totalorder %s21, 1
      %p65 = por %p63, %p64
      %p67 = scmp.ne.s32.totalorder %s50, %s66
      %p68 = scmp.eq.s32.totalorder %s21, 0
      %p69 = por %p67, %p68
      %s70 = ssub.s32 %s15, %s22
      %p71 = scmp.eq.s32.totalorder %s70, 0
      %s73 = sadd.s32 %s72, 1
      %s74 = scalar_select %p71, %s72, %s73
      %p77 = pneg %p71
      %p78 = scmp.eq.s32.totalorder %s15, 1
      %p79 = por %p77, %p78
      %p80 = scmp.ne.s32.totalorder %s72, %s75
      %p81 = scmp.eq.s32.totalorder %s15, 0
      %p82 = por %p80, %p81
      %p83 = scmp.ne.s32.totalorder %s72, %s75
      %p84 = scmp.eq.s32.totalorder %s20, 1
      %p85 = por %p83, %p84
      %p86 = scmp.ne.s32.totalorder %s75, %s76
      %p87 = scmp.eq.s32.totalorder %s20, 0
      %p88 = por %p86, %p87
      %p89 = scmp.ne.s32.totalorder %s75, %s76
      %p90 = scmp.eq.s32.totalorder %s21, 1
      %p91 = por %p89, %p90
      %p93 = scmp.ne.s32.totalorder %s76, %s92
      %p94 = scmp.eq.s32.totalorder %s21, 0
      %p95 = por %p93, %p94
      %p96 = scmp.le.s32.totalorder 1, %s15
      %p97 = scmp.lt.s32.totalorder %s15, 3
      %p98 = pnand %p96, %p97
      %p99 = pneg %p98
      // Predicated region
      $region9: #{tpu_custom_call.1} parent=5 // pred_check
        _
      $region10: #{tpu_custom_call.1} parent=5 // pred_check_branch
        %101 = sbr.rel (%p98) target = $region12
      $region11: #{tpu_custom_call.1} parent=5 // pred_region
        %s102 = ssub.s32 %s15, 1
        // Predicated region
        $region13: #{tpu_custom_call.1} parent=11 // pred_check
          %p103 = pneg %p36
        $region14: #{tpu_custom_call.1} parent=11 // pred_check_branch
          %105 = sbr.rel (%p103) target = $region16
        $region15: #{tpu_custom_call.1} parent=11 // pred_region
          %s107 = ssub.s32 384, 384
          %108 = vsyncadd [#allocation3], %s107
          %s109 = sshll.u32 [#allocation2], 4
          %s110 = int_to_ptr.vmem [resolvable:$true] %s109
          %115 = dma.hbm_to_vmem [thread:$0]  %s0, 384, %s110, [#allocation3], 128, 128, 8
        $region16: #{tpu_custom_call.1} parent=11 // pred_fallthru
          _
      $region12: #{tpu_custom_call.1} parent=5 // pred_fallthru
        _
      %p116 = scmp.lt.s32.totalorder %s15, 2
      // Predicated region
      $region17: #{tpu_custom_call.1} parent=5 // pred_check
        %p117 = pneg %p116
      $region18: #{tpu_custom_call.1} parent=5 // pred_check_branch
        %119 = sbr.rel (%p117) target = $region20
      $region19: #{tpu_custom_call.1} parent=5 // pred_region
        // Predicated region
        $region21: #{tpu_custom_call.1} parent=19 // pred_check
          %p120 = pneg %p56
        $region22: #{tpu_custom_call.1} parent=19 // pred_check_branch
          %122 = sbr.rel (%p120) target = $region24
        $region23: #{tpu_custom_call.1} parent=19 // pred_region
          %s123 = sand.u32 %s46, 1
          %s124 = scalar_lea.sflag [#allocation6], %s123
          %s125 = sand.u32 %s46, 1
          %s126 = smul.addr %s125, 16
          %s127 = scalar_lea.vmem [#allocation5], %s126
          %s128 = smul.u32 8, %s15
          %s130 = ssub.s32 256, 256
          %131 = vsyncadd %s124, %s130
          %s132 = smul.addr %s128, 32
          %s133 = scalar_lea.hbm %s1, %s132
          %s135 = sshll.u32 %s127, 4
          %s136 = int_to_ptr.vmem [resolvable:$true] %s135
          %138 = dma.hbm_to_vmem [thread:$0]  %s133, 256, %s136, %s124
        $region24: #{tpu_custom_call.1} parent=19 // pred_fallthru
          _
      $region20: #{tpu_custom_call.1} parent=5 // pred_fallthru
        _
      %p139 = scmp.le.s32.totalorder 1, %s15
      %p140 = scmp.lt.s32.totalorder %s15, 3
      %p141 = pnand %p139, %p140
      %p142 = pneg %p141
      // Predicated region
      $region25: #{tpu_custom_call.1} parent=5 // pred_check
        _
      $region26: #{tpu_custom_call.1} parent=5 // pred_check_branch
        %144 = sbr.rel (%p141) target = $region28
      $region27: #{tpu_custom_call.1} parent=5 // pred_region
        %s145 = ssub.s32 %s15, 1
        // Predicated region
        $region29: #{tpu_custom_call.1} parent=27 // pred_check
          %p146 = pneg %p36
        $region30: #{tpu_custom_call.1} parent=27 // pred_check_branch
          %148 = sbr.rel (%p146) target = $region32
        $region31: #{tpu_custom_call.1} parent=27 // pred_region
          %149 = dma.done [#allocation3], 384
        $region32: #{tpu_custom_call.1} parent=27 // pred_fallthru
          _
        %s150 = sand.u32 %s49, 1
        %s151 = scalar_lea.sflag [#allocation6], %s150
        %s152 = sand.u32 %s49, 1
        %s153 = smul.addr %s152, 16
        %s154 = scalar_lea.vmem [#allocation5], %s153
        // Predicated region
        $region33: #{tpu_custom_call.1} parent=27 // pred_check
          %p155 = pneg %p62
        $region34: #{tpu_custom_call.1} parent=27 // pred_check_branch
          %157 = sbr.rel (%p155) target = $region36
        $region35: #{tpu_custom_call.1} parent=27 // pred_region
          %158 = dma.done %s151, 256
        $region36: #{tpu_custom_call.1} parent=27 // pred_fallthru
          _
        %p159 = pneg %p36
        %p160 = pneg %p33
        %s161 = sand.u32 %s49, 1
        %s162 = scalar_lea.sflag [#allocation6], %s161
        %s163 = sand.u32 %s49, 1
        %s164 = smul.addr %s163, 16
        %s165 = scalar_lea.vmem [#allocation5], %s164
        %p166 = pneg %p62
        %p167 = pneg %p59
        %p168 = pneg %p88
        %p169 = pneg %p85
        %s170 = sand.u32 %s75, 1
        %s171 = scalar_lea.sflag [#allocation4], %s170
        %s172 = sand.u32 %s75, 1
        %s173 = smul.addr %s172, 192
        %s174 = scalar_lea.vmem [#allocation7], %s173
        %s175 = smul.u32 8, %s20
        %s176 = smul.u32 8, %s20
        %v177 = vld [vmem:[%s154] ss:$2 sm:$0xff]
        %s178 = scalar_lea.vmem %s154, 1 [#allocation5]
        %v179 = vld [vmem:[%s178] ss:$2 sm:$0xff]
        %v180 = vld [vmem:[#allocation2] sm:$0xff]
        %v181 = vld [vmem:[#allocation2 + $0x8] sm:$0xff]
        %v182 = vld [vmem:[#allocation2 + $0x10] sm:$0xff]
        %v183 = vrcp.pop %v177
        %v184 = vmul.f32 %v177, %v183
        %v185 = vsub.f32 2.0, %v184
        %v186 = vmul.f32 %v183, %v185
        %v187 = vmul.f32 %v177, %v186
        %v188 = vsub.f32 2.0, %v187
        %v189 = vmul.f32 %v186, %v188
        %v190 = vmul.f32 %v177, %v177
        %v191 = vmul.f32 %v190, %v190
        %v192 = vmul.f32 %v191, %v177
        %v193 = vmul.f32 %v192, %v177
        %v194 = vmul.f32 %v193, %v177
        %v195 = vmul.f32 %v192, -28.0
        %v196 = vadd.f32 %v189, %v195
        %v197 = vmul.f32 %v193, 48.0
        %v198 = vadd.f32 %v196, %v197
        %v199 = vmul.f32 %v194, -21.0
        %v200 = vadd.f32 %v198, %v199
        %v201 = vand.u32 2147483647, %v179
        %vm202 = vcmp.le.f32.partialorder %v201, 0.7853982
        %vm203 = vcmp.lt.s32.totalorder %v179, 0
        %v204 = vand.u32 %v179, 2139095040
        %v205 = vshrl.u32 %v204, 23
        %v206 = vsub.s32 %v205, 127
        %v207 = vand.u32 2147483647, %v179
        %v208 = vand.u32 %v207, 8388607
        %v209 = vor.u32 %v208, 8388608
        %v210 = vsub.s32 0, %v209
        %v211 = vadd.s32 %v206, 1
        %vm212 = vcmp.gt.s32.totalorder %v211, 0
        %v213 = vsel %vm212, %v211, 0
        %v214 = vshrl.u32 %v213, 5
        %v215 = vand.u32 %v213, 31
        %v216 = vsub.s32 32, %v215
        %v217 = vshrl.u32 683565275, %v216
        %v218 = vshll.u32 683565275, %v215
        %v219 = vshrl.u32 2475754826, %v216
        %v220 = vor.u32 %v218, %v219
        %v221 = vshll.u32 2475754826, %v215
        %v222 = vshrl.u32 2131351028, %v216
        %v223 = vor.u32 %v221, %v222
        %v224 = vshll.u32 2131351028, %v215
        %v225 = vshrl.u32 2102212464, %v216
        %v226 = vor.u32 %v224, %v225
        %v227 = vshll.u32 2102212464, %v215
        %v228 = vshrl.u32 920167782, %v216
        %v229 = vor.u32 %v227, %v228
        %v230 = vshll.u32 920167782, %v215
        %v231 = vshrl.u32 1326507024, %v216
        %v232 = vor.u32 %v230, %v231
        %vm233 = vcmp.lt.s32.totalorder %v214, 1
        %vm234 = vcmp.lt.s32.totalorder %v214, 2
        %vm235 = vcmp.lt.s32.totalorder %v214, 3
        %vm236 = vcmp.lt.s32.totalorder %v214, 4
        %v237 = vsel %vm233, %v217, %v220
        %v238 = vsel %vm236, %v226, 2102212464
        %v239 = vsel %vm235, %v223, %v238
        %v240 = vsel %vm234, %v237, %v239
        %v241 = vsel %vm233, %v220, %v223
        %v242 = vsel %vm236, %v229, 920167782
        %v243 = vsel %vm235, %v226, %v242
        %v244 = vsel %vm234, %v241, %v243
        %v245 = vsel %vm233, %v223, %v226
        %v246 = vsel %vm236, %v232, 1326507024
        %v247 = vsel %vm235, %v229, %v246
        %v248 = vsel %vm234, %v245, %v247
        %v249 = vshll.u32 %v209, 8
        %v250 = vmul.u32.u64.compose %v249, %v248
        %v251 = vextract.low.u32 %v250
        %v252 = vextract.high.u32 %v250
        %v253 = vmul.u32.u64.compose %v249, %v244
        %v254 = vextract.low.u32 %v253
        %v255 = vextract.high.u32 %v253
        %v256 = vmul.u32 %v249, %v240
        %v257 = vadd.s32 %v252, %v254
        %vm258 = vc.u32 %v252, %v254
        %v259 = vadd.s32 %v255, 1
        %v260 = vsel %vm258, %v259, %v255
        %v261 = vadd.s32 %v256, %v260
        %v262 = vadd.s32 %v261, 536870912
        %v263 = vshrl.u32 %v262, 30
        %v264 = vshll.u32 %v263, 30
        %v265 = vsub.s32 %v261, %v264
        %vm266 = vcmp.lt.s32.totalorder %v265, 0
        %v267 = vsub.s32 0, %v265
        %v268 = vsel %vm266, %v267, %v265
        %v269 = vclz %v268
        %v270 = vsub.s32 %v269, 2
        %vm271 = vcmp.gt.s32.totalorder 0, %v270
        %v272 = vsel %vm271, 0, %v270
        %v273 = vsub.s32 32, %v272
        %v274 = vshll.u32 %v265, %v272
        %v275 = vshrl.u32 %v257, %v273
        %v276 = vor.u32 %v274, %v275
        %v277 = vsub.s32 4294967266, %v272
        %v278 = vadd.s32 %v277, 127
        %v279 = vshll.u32 %v278, 23
        %v280 = vor.u32 4788187, %v279
        %v281 = vand.u32 2147483647, %v280
        %v283 = vcvt.s32.f32 %v276
        %v284 = vmul.f32 %v283, %v281
        %v285 = vxor.u32 %v284, 2147483648
        %v286 = vsel %vm203, %v285, %v284
        %v287 = vsub.s32 4, %v263
        %v288 = vsel %vm203, %v287, %v263
        %v289 = vsel %vm202, %v179, %v286
        %v290 = vsel %vm202, 0, %v288
        %v291 = vcosq.f32.pop %v289
        %v292 = vsinq.f32.pop %v289
        %vm293 = vweird.f32 %v179
        %v294 = vand.u32 %v290, 3
        %vm295 = vcmp.lt.s32.totalorder %v294, 2
        %vm296 = vcmp.eq.s32.totalorder %v294, 0
        %v297 = vxor.u32 %v292, 2147483648
        %v298 = vsel %vm296, %v291, %v297
        %vm299 = vcmp.eq.s32.totalorder %v294, 2
        %v300 = vxor.u32 %v291, 2147483648
        %v301 = vsel %vm299, %v300, %v292
        %v302 = vsel %vm295, %v298, %v301
        %v303 = vsel %vm293, nan, %v302
        %v304 = vmul.f32 %v303, 3.0
        %v305 = vmul.f32 %v304, %v303
        %v306 = vsub.f32 %v305, 1.0
        %v307 = vmul.f32 %v306, 0.5
        %v308 = vmul.f32 %v303, 5.0
        %v309 = vmul.f32 %v308, %v307
        %v310 = vmul.f32 %v303, 2.0
        %v311 = vsub.f32 %v309, %v310
        %v312 = vmul.f32 %v311, 0.33333334
        %314 = vset.pattern.permute.xlu0 0
        %315 = vperm.xlu0 %314, %v180
        %v316 = vpop.permute.xlu0 %315
        %319 = vset.pattern.permute.xlu0 0
        %320 = vperm.xlu0 %319, %v181
        %v321 = vpop.permute.xlu0 %320
        %324 = vset.pattern.permute.xlu0 0
        %325 = vperm.xlu0 %324, %v182
        %v326 = vpop.permute.xlu0 %325
        %v329 = vlaneseq
        %v330 = vshrl.u32 %v329, 7
        %v331 = vsub.s32 0, %v330
        %v332 = vrot.slane %v177, %v331
        %v333 = vlaneseq
        %v334 = vshrl.u32 %v333, 7
        %v335 = vsub.s32 1, %v334
        %v336 = vrot.slane %v177, %v335
        %v337 = vlaneseq
        %v338 = vshrl.u32 %v337, 7
        %v339 = vsub.s32 2, %v338
        %v340 = vrot.slane %v177, %v339
        %v341 = vlaneseq
        %v342 = vshrl.u32 %v341, 7
        %v343 = vsub.s32 3, %v342
        %v344 = vrot.slane %v177, %v343
        %v345 = vlaneseq
        %v346 = vshrl.u32 %v345, 7
        %v347 = vsub.s32 4, %v346
        %v348 = vrot.slane %v177, %v347
        %v349 = vlaneseq
        %v350 = vshrl.u32 %v349, 7
        %v351 = vsub.s32 5, %v350
        %v352 = vrot.slane %v177, %v351
        %v353 = vlaneseq
        %v354 = vshrl.u32 %v353, 7
        %v355 = vsub.s32 6, %v354
        %v356 = vrot.slane %v177, %v355
        %v357 = vlaneseq
        %v358 = vshrl.u32 %v357, 7
        %v359 = vsub.s32 7, %v358
        %v360 = vrot.slane %v177, %v359
        %v369 = vmul.f32 %v316, %v332
        %v370 = vmul.f32 %v316, %v336
        %v371 = vmul.f32 %v316, %v340
        %v372 = vmul.f32 %v316, %v344
        %v373 = vmul.f32 %v316, %v348
        %v374 = vmul.f32 %v316, %v352
        %v375 = vmul.f32 %v316, %v356
        %v376 = vmul.f32 %v316, %v360
        %v377 = vmul.f32 %v321, %v332
        %v378 = vmul.f32 %v321, %v336
        %v379 = vmul.f32 %v321, %v340
        %v380 = vmul.f32 %v321, %v344
        %v381 = vmul.f32 %v321, %v348
        %v382 = vmul.f32 %v321, %v352
        %v383 = vmul.f32 %v321, %v356
        %v384 = vmul.f32 %v321, %v360
        %v385 = vmul.f32 %v326, %v332
        %v386 = vmul.f32 %v326, %v336
        %v387 = vmul.f32 %v326, %v340
        %v388 = vmul.f32 %v326, %v344
        %v389 = vmul.f32 %v326, %v348
        %v390 = vmul.f32 %v326, %v352
        %v391 = vmul.f32 %v326, %v356
        %v392 = vmul.f32 %v326, %v360
        %v393 = vmul.f32 %v369, %v369
        %v394 = vmul.f32 %v370, %v370
        %v395 = vmul.f32 %v371, %v371
        %v396 = vmul.f32 %v372, %v372
        %v397 = vmul.f32 %v373, %v373
        %v398 = vmul.f32 %v374, %v374
        %v399 = vmul.f32 %v375, %v375
        %v400 = vmul.f32 %v376, %v376
        %v401 = vmul.f32 %v377, %v377
        %v402 = vmul.f32 %v378, %v378
        %v403 = vmul.f32 %v379, %v379
        %v404 = vmul.f32 %v380, %v380
        %v405 = vmul.f32 %v381, %v381
        %v406 = vmul.f32 %v382, %v382
        %v407 = vmul.f32 %v383, %v383
        %v408 = vmul.f32 %v384, %v384
        %v409 = vmul.f32 %v385, %v385
        %v410 = vmul.f32 %v386, %v386
        %v411 = vmul.f32 %v387, %v387
        %v412 = vmul.f32 %v388, %v388
        %v413 = vmul.f32 %v389, %v389
        %v414 = vmul.f32 %v390, %v390
        %v415 = vmul.f32 %v391, %v391
        %v416 = vmul.f32 %v392, %v392
        %417 = vset.pattern.permute.xlu0 1
        %418 = vperm.xlu0 %417, %v180
        %v419 = vpop.permute.xlu0 %418
        %421 = vset.pattern.permute.xlu0 1
        %422 = vperm.xlu0 %421, %v181
        %v423 = vpop.permute.xlu0 %422
        %425 = vset.pattern.permute.xlu0 1
        %426 = vperm.xlu0 %425, %v182
        %v427 = vpop.permute.xlu0 %426
        %v430 = vlaneseq
        %v431 = vshrl.u32 %v430, 7
        %v432 = vsub.s32 0, %v431
        %v433 = vrot.slane %v189, %v432
        %v434 = vlaneseq
        %v435 = vshrl.u32 %v434, 7
        %v436 = vsub.s32 1, %v435
        %v437 = vrot.slane %v189, %v436
        %v438 = vlaneseq
        %v439 = vshrl.u32 %v438, 7
        %v440 = vsub.s32 2, %v439
        %v441 = vrot.slane %v189, %v440
        %v442 = vlaneseq
        %v443 = vshrl.u32 %v442, 7
        %v444 = vsub.s32 3, %v443
        %v445 = vrot.slane %v189, %v444
        %v446 = vlaneseq
        %v447 = vshrl.u32 %v446, 7
        %v448 = vsub.s32 4, %v447
        %v449 = vrot.slane %v189, %v448
        %v450 = vlaneseq
        %v451 = vshrl.u32 %v450, 7
        %v452 = vsub.s32 5, %v451
        %v453 = vrot.slane %v189, %v452
        %v454 = vlaneseq
        %v455 = vshrl.u32 %v454, 7
        %v456 = vsub.s32 6, %v455
        %v457 = vrot.slane %v189, %v456
        %v458 = vlaneseq
        %v459 = vshrl.u32 %v458, 7
        %v460 = vsub.s32 7, %v459
        %v461 = vrot.slane %v189, %v460
        %v470 = vmul.f32 %v419, %v433
        %v471 = vmul.f32 %v419, %v437
        %v472 = vmul.f32 %v419, %v441
        %v473 = vmul.f32 %v419, %v445
        %v474 = vmul.f32 %v419, %v449
        %v475 = vmul.f32 %v419, %v453
        %v476 = vmul.f32 %v419, %v457
        %v477 = vmul.f32 %v419, %v461
        %v478 = vmul.f32 %v423, %v433
        %v479 = vmul.f32 %v423, %v437
        %v480 = vmul.f32 %v423, %v441
        %v481 = vmul.f32 %v423, %v445
        %v482 = vmul.f32 %v423, %v449
        %v483 = vmul.f32 %v423, %v453
        %v484 = vmul.f32 %v423, %v457
        %v485 = vmul.f32 %v423, %v461
        %v486 = vmul.f32 %v427, %v433
        %v487 = vmul.f32 %v427, %v437
        %v488 = vmul.f32 %v427, %v441
        %v489 = vmul.f32 %v427, %v445
        %v490 = vmul.f32 %v427, %v449
        %v491 = vmul.f32 %v427, %v453
        %v492 = vmul.f32 %v427, %v457
        %v493 = vmul.f32 %v427, %v461
        %v494 = vand.u32 2147483647, %v369
        %vm495 = vcmp.le.f32.partialorder %v494, 0.7853982
        %vm496 = vcmp.lt.s32.totalorder %v369, 0
        %v497 = vand.u32 %v369, 2139095040
        %v498 = vshrl.u32 %v497, 23
        %v499 = vsub.s32 %v498, 127
        %v500 = vand.u32 2147483647, %v369
        %v501 = vand.u32 %v500, 8388607
        %v502 = vor.u32 %v501, 8388608
        %v503 = vsub.s32 0, %v502
        %v504 = vadd.s32 %v499, 1
        %vm505 = vcmp.gt.s32.totalorder %v504, 0
        %v506 = vsel %vm505, %v504, 0
        %v507 = vshrl.u32 %v506, 5
        %v508 = vand.u32 %v506, 31
        %v509 = vsub.s32 32, %v508
        %v510 = vshrl.u32 683565275, %v509
        %v511 = vshll.u32 683565275, %v508
        %v512 = vshrl.u32 2475754826, %v509
        %v513 = vor.u32 %v511, %v512
        %v514 = vshll.u32 2475754826, %v508
        %v515 = vshrl.u32 2131351028, %v509
        %v516 = vor.u32 %v514, %v515
        %v517 = vshll.u32 2131351028, %v508
        %v518 = vshrl.u32 2102212464, %v509
        %v519 = vor.u32 %v517, %v518
        %v520 = vshll.u32 2102212464, %v508
        %v521 = vshrl.u32 920167782, %v509
        %v522 = vor.u32 %v520, %v521
        %v523 = vshll.u32 920167782, %v508
        %v524 = vshrl.u32 1326507024, %v509
        %v525 = vor.u32 %v523, %v524
        %vm526 = vcmp.lt.s32.totalorder %v507, 1
        %vm527 = vcmp.lt.s32.totalorder %v507, 2
        %vm528 = vcmp.lt.s32.totalorder %v507, 3
        %vm529 = vcmp.lt.s32.totalorder %v507, 4
        %v530 = vsel %vm526, %v510, %v513
        %v531 = vsel %vm529, %v519, 2102212464
        %v532 = vsel %vm528, %v516, %v531
        %v533 = vsel %vm527, %v530, %v532
        %v534 = vsel %vm526, %v513, %v516
        %v535 = vsel %vm529, %v522, 920167782
        %v536 = vsel %vm528, %v519, %v535
        %v537 = vsel %vm527, %v534, %v536
        %v538 = vsel %vm526, %v516, %v519
        %v539 = vsel %vm529, %v525, 1326507024
        %v540 = vsel %vm528, %v522, %v539
        %v541 = vsel %vm527, %v538, %v540
        %v542 = vshll.u32 %v502, 8
        %v543 = vmul.u32.u64.compose %v542, %v541
        %v544 = vextract.low.u32 %v543
        %v545 = vextract.high.u32 %v543
        %v546 = vmul.u32.u64.compose %v542, %v537
        %v547 = vextract.low.u32 %v546
        %v548 = vextract.high.u32 %v546
        %v549 = vmul.u32 %v542, %v533
        %v550 = vadd.s32 %v545, %v547
        %vm551 = vc.u32 %v545, %v547
        %v552 = vadd.s32 %v548, 1
        %v553 = vsel %vm551, %v552, %v548
        %v554 = vadd.s32 %v549, %v553
        %v555 = vadd.s32 %v554, 536870912
        %v556 = vshrl.u32 %v555, 30
        %v557 = vshll.u32 %v556, 30
        %v558 = vsub.s32 %v554, %v557
        %vm559 = vcmp.lt.s32.totalorder %v558, 0
        %v560 = vsub.s32 0, %v558
        %v561 = vsel %vm559, %v560, %v558
        %v562 = vclz %v561
        %v563 = vsub.s32 %v562, 2
        %vm564 = vcmp.gt.s32.totalorder 0, %v563
        %v565 = vsel %vm564, 0, %v563
        %v566 = vsub.s32 32, %v565
        %v567 = vshll.u32 %v558, %v565
        %v568 = vshrl.u32 %v550, %v566
        %v569 = vor.u32 %v567, %v568
        %v570 = vsub.s32 4294967266, %v565
        %v571 = vadd.s32 %v570, 127
        %v572 = vshll.u32 %v571, 23
        %v573 = vor.u32 4788187, %v572
        %v574 = vand.u32 2147483647, %v573
        %v576 = vcvt.s32.f32 %v569
        %v577 = vmul.f32 %v576, %v574
        %v578 = vxor.u32 %v577, 2147483648
        %v579 = vsel %vm496, %v578, %v577
        %v580 = vsub.s32 4, %v556
        %v581 = vsel %vm496, %v580, %v556
        %v582 = vsel %vm495, %v369, %v579
        %v583 = vsel %vm495, 0, %v581
        %v584 = vcosq.f32.pop %v582
        %v585 = vsinq.f32.pop %v582
        %vm586 = vweird.f32 %v369
        %v587 = vadd.s32 %v583, 3
        %v588 = vand.u32 %v587, 3
        %vm589 = vcmp.lt.s32.totalorder %v588, 2
        %vm590 = vcmp.eq.s32.totalorder %v588, 0
        %v591 = vxor.u32 %v585, 2147483648
        %v592 = vsel %vm590, %v584, %v591
        %vm593 = vcmp.eq.s32.totalorder %v588, 2
        %v594 = vxor.u32 %v584, 2147483648
        %v595 = vsel %vm593, %v594, %v585
        %v596 = vsel %vm589, %v592, %v595
        %v597 = vsel %vm586, nan, %v596
        %v598 = vand.u32 2147483647, %v370
        %vm599 = vcmp.le.f32.partialorder %v598, 0.7853982
        %vm600 = vcmp.lt.s32.totalorder %v370, 0
        %v601 = vand.u32 %v370, 2139095040
        %v602 = vshrl.u32 %v601, 23
        %v603 = vsub.s32 %v602, 127
        %v604 = vand.u32 2147483647, %v370
        %v605 = vand.u32 %v604, 8388607
        %v606 = vor.u32 %v605, 8388608
        %v607 = vsub.s32 0, %v606
        %v608 = vadd.s32 %v603, 1
        %vm609 = vcmp.gt.s32.totalorder %v608, 0
        %v610 = vsel %vm609, %v608, 0
        %v611 = vshrl.u32 %v610, 5
        %v612 = vand.u32 %v610, 31
        %v613 = vsub.s32 32, %v612
        %v614 = vshrl.u32 683565275, %v613
        %v615 = vshll.u32 683565275, %v612
        %v616 = vshrl.u32 2475754826, %v613
        %v617 = vor.u32 %v615, %v616
        %v618 = vshll.u32 2475754826, %v612
        %v619 = vshrl.u32 2131351028, %v613
        %v620 = vor.u32 %v618, %v619
        %v621 = vshll.u32 2131351028, %v612
        %v622 = vshrl.u32 2102212464, %v613
        %v623 = vor.u32 %v621, %v622
        %v624 = vshll.u32 2102212464, %v612
        %v625 = vshrl.u32 920167782, %v613
        %v626 = vor.u32 %v624, %v625
        %v627 = vshll.u32 920167782, %v612
        %v628 = vshrl.u32 1326507024, %v613
        %v629 = vor.u32 %v627, %v628
        %vm630 = vcmp.lt.s32.totalorder %v611, 1
        %vm631 = vcmp.lt.s32.totalorder %v611, 2
        %vm632 = vcmp.lt.s32.totalorder %v611, 3
        %vm633 = vcmp.lt.s32.totalorder %v611, 4
        %v634 = vsel %vm630, %v614, %v617
        %v635 = vsel %vm633, %v623, 2102212464
        %v636 = vsel %vm632, %v620, %v635
        %v637 = vsel %vm631, %v634, %v636
        %v638 = vsel %vm630, %v617, %v620
        %v639 = vsel %vm633, %v626, 920167782
        %v640 = vsel %vm632, %v623, %v639
        %v641 = vsel %vm631, %v638, %v640
        %v642 = vsel %vm630, %v620, %v623
        %v643 = vsel %vm633, %v629, 1326507024
        %v644 = vsel %vm632, %v626, %v643
        %v645 = vsel %vm631, %v642, %v644
        %v646 = vshll.u32 %v606, 8
        %v647 = vmul.u32.u64.compose %v646, %v645
        %v648 = vextract.low.u32 %v647
        %v649 = vextract.high.u32 %v647
        %v650 = vmul.u32.u64.compose %v646, %v641
        %v651 = vextract.low.u32 %v650
        %v652 = vextract.high.u32 %v650
        %v653 = vmul.u32 %v646, %v637
        %v654 = vadd.s32 %v649, %v651
        %vm655 = vc.u32 %v649, %v651
        %v656 = vadd.s32 %v652, 1
        %v657 = vsel %vm655, %v656, %v652
        %v658 = vadd.s32 %v653, %v657
        %v659 = vadd.s32 %v658, 536870912
        %v660 = vshrl.u32 %v659, 30
        %v661 = vshll.u32 %v660, 30
        %v662 = vsub.s32 %v658, %v661
        %vm663 = vcmp.lt.s32.totalorder %v662, 0
        %v664 = vsub.s32 0, %v662
        %v665 = vsel %vm663, %v664, %v662
        %v666 = vclz %v665
        %v667 = vsub.s32 %v666, 2
        %vm668 = vcmp.gt.s32.totalorder 0, %v667
        %v669 = vsel %vm668, 0, %v667
        %v670 = vsub.s32 32, %v669
        %v671 = vshll.u32 %v662, %v669
        %v672 = vshrl.u32 %v654, %v670
        %v673 = vor.u32 %v671, %v672
        %v674 = vsub.s32 4294967266, %v669
        %v675 = vadd.s32 %v674, 127
        %v676 = vshll.u32 %v675, 23
        %v677 = vor.u32 4788187, %v676
        %v678 = vand.u32 2147483647, %v677
        %v680 = vcvt.s32.f32 %v673
        %v681 = vmul.f32 %v680, %v678
        %v682 = vxor.u32 %v681, 2147483648
        %v683 = vsel %vm600, %v682, %v681
        %v684 = vsub.s32 4, %v660
        %v685 = vsel %vm600, %v684, %v660
        %v686 = vsel %vm599, %v370, %v683
        %v687 = vsel %vm599, 0, %v685
        %v688 = vcosq.f32.pop %v686
        %v689 = vsinq.f32.pop %v686
        %vm690 = vweird.f32 %v370
        %v691 = vadd.s32 %v687, 3
        %v692 = vand.u32 %v691, 3
        %vm693 = vcmp.lt.s32.totalorder %v692, 2
        %vm694 = vcmp.eq.s32.totalorder %v692, 0
        %v695 = vxor.u32 %v689, 2147483648
        %v696 = vsel %vm694, %v688, %v695
        %vm697 = vcmp.eq.s32.totalorder %v692, 2
        %v698 = vxor.u32 %v688, 2147483648
        %v699 = vsel %vm697, %v698, %v689
        %v700 = vsel %vm693, %v696, %v699
        %v701 = vsel %vm690, nan, %v700
        %v702 = vand.u32 2147483647, %v371
        %vm703 = vcmp.le.f32.partialorder %v702, 0.7853982
        %vm704 = vcmp.lt.s32.totalorder %v371, 0
        %v705 = vand.u32 %v371, 2139095040
        %v706 = vshrl.u32 %v705, 23
        %v707 = vsub.s32 %v706, 127
        %v708 = vand.u32 2147483647, %v371
        %v709 = vand.u32 %v708, 8388607
        %v710 = vor.u32 %v709, 8388608
        %v711 = vsub.s32 0, %v710
        %v712 = vadd.s32 %v707, 1
        %vm713 = vcmp.gt.s32.totalorder %v712, 0
        %v714 = vsel %vm713, %v712, 0
        %v715 = vshrl.u32 %v714, 5
        %v716 = vand.u32 %v714, 31
        %v717 = vsub.s32 32, %v716
        %v718 = vshrl.u32 683565275, %v717
        %v719 = vshll.u32 683565275, %v716
        %v720 = vshrl.u32 2475754826, %v717
        %v721 = vor.u32 %v719, %v720
        %v722 = vshll.u32 2475754826, %v716
        %v723 = vshrl.u32 2131351028, %v717
        %v724 = vor.u32 %v722, %v723
        %v725 = vshll.u32 2131351028, %v716
        %v726 = vshrl.u32 2102212464, %v717
        %v727 = vor.u32 %v725, %v726
        %v728 = vshll.u32 2102212464, %v716
        %v729 = vshrl.u32 920167782, %v717
        %v730 = vor.u32 %v728, %v729
        %v731 = vshll.u32 920167782, %v716
        %v732 = vshrl.u32 1326507024, %v717
        %v733 = vor.u32 %v731, %v732
        %vm734 = vcmp.lt.s32.totalorder %v715, 1
        %vm735 = vcmp.lt.s32.totalorder %v715, 2
        %vm736 = vcmp.lt.s32.totalorder %v715, 3
        %vm737 = vcmp.lt.s32.totalorder %v715, 4
        %v738 = vsel %vm734, %v718, %v721
        %v739 = vsel %vm737, %v727, 2102212464
        %v740 = vsel %vm736, %v724, %v739
        %v741 = vsel %vm735, %v738, %v740
        %v742 = vsel %vm734, %v721, %v724
        %v743 = vsel %vm737, %v730, 920167782
        %v744 = vsel %vm736, %v727, %v743
        %v745 = vsel %vm735, %v742, %v744
        %v746 = vsel %vm734, %v724, %v727
        %v747 = vsel %vm737, %v733, 1326507024
        %v748 = vsel %vm736, %v730, %v747
        %v749 = vsel %vm735, %v746, %v748
        %v750 = vshll.u32 %v710, 8
        %v751 = vmul.u32.u64.compose %v750, %v749
        %v752 = vextract.low.u32 %v751
        %v753 = vextract.high.u32 %v751
        %v754 = vmul.u32.u64.compose %v750, %v745
        %v755 = vextract.low.u32 %v754
        %v756 = vextract.high.u32 %v754
        %v757 = vmul.u32 %v750, %v741
        %v758 = vadd.s32 %v753, %v755
        %vm759 = vc.u32 %v753, %v755
        %v760 = vadd.s32 %v756, 1
        %v761 = vsel %vm759, %v760, %v756
        %v762 = vadd.s32 %v757, %v761
        %v763 = vadd.s32 %v762, 536870912
        %v764 = vshrl.u32 %v763, 30
        %v765 = vshll.u32 %v764, 30
        %v766 = vsub.s32 %v762, %v765
        %vm767 = vcmp.lt.s32.totalorder %v766, 0
        %v768 = vsub.s32 0, %v766
        %v769 = vsel %vm767, %v768, %v766
        %v770 = vclz %v769
        %v771 = vsub.s32 %v770, 2
        %vm772 = vcmp.gt.s32.totalorder 0, %v771
        %v773 = vsel %vm772, 0, %v771
        %v774 = vsub.s32 32, %v773
        %v775 = vshll.u32 %v766, %v773
        %v776 = vshrl.u32 %v758, %v774
        %v777 = vor.u32 %v775, %v776
        %v778 = vsub.s32 4294967266, %v773
        %v779 = vadd.s32 %v778, 127
        %v780 = vshll.u32 %v779, 23
        %v781 = vor.u32 4788187, %v780
        %v782 = vand.u32 2147483647, %v781
        %v784 = vcvt.s32.f32 %v777
        %v785 = vmul.f32 %v784, %v782
        %v786 = vxor.u32 %v785, 2147483648
        %v787 = vsel %vm704, %v786, %v785
        %v788 = vsub.s32 4, %v764
        %v789 = vsel %vm704, %v788, %v764
        %v790 = vsel %vm703, %v371, %v787
        %v791 = vsel %vm703, 0, %v789
        %v792 = vcosq.f32.pop %v790
        %v793 = vsinq.f32.pop %v790
        %vm794 = vweird.f32 %v371
        %v795 = vadd.s32 %v791, 3
        %v796 = vand.u32 %v795, 3
        %vm797 = vcmp.lt.s32.totalorder %v796, 2
        %vm798 = vcmp.eq.s32.totalorder %v796, 0
        %v799 = vxor.u32 %v793, 2147483648
        %v800 = vsel %vm798, %v792, %v799
        %vm801 = vcmp.eq.s32.totalorder %v796, 2
        %v802 = vxor.u32 %v792, 2147483648
        %v803 = vsel %vm801, %v802, %v793
        %v804 = vsel %vm797, %v800, %v803
        %v805 = vsel %vm794, nan, %v804
        %v806 = vand.u32 2147483647, %v372
        %vm807 = vcmp.le.f32.partialorder %v806, 0.7853982
        %vm808 = vcmp.lt.s32.totalorder %v372, 0
        %v809 = vand.u32 %v372, 2139095040
        %v810 = vshrl.u32 %v809, 23
        %v811 = vsub.s32 %v810, 127
        %v812 = vand.u32 2147483647, %v372
        %v813 = vand.u32 %v812, 8388607
        %v814 = vor.u32 %v813, 8388608
        %v815 = vsub.s32 0, %v814
        %v816 = vadd.s32 %v811, 1
        %vm817 = vcmp.gt.s32.totalorder %v816, 0
        %v818 = vsel %vm817, %v816, 0
        %v819 = vshrl.u32 %v818, 5
        %v820 = vand.u32 %v818, 31
        %v821 = vsub.s32 32, %v820
        %v822 = vshrl.u32 683565275, %v821
        %v823 = vshll.u32 683565275, %v820
        %v824 = vshrl.u32 2475754826, %v821
        %v825 = vor.u32 %v823, %v824
        %v826 = vshll.u32 2475754826, %v820
        %v827 = vshrl.u32 2131351028, %v821
        %v828 = vor.u32 %v826, %v827
        %v829 = vshll.u32 2131351028, %v820
        %v830 = vshrl.u32 2102212464, %v821
        %v831 = vor.u32 %v829, %v830
        %v832 = vshll.u32 2102212464, %v820
        %v833 = vshrl.u32 920167782, %v821
        %v834 = vor.u32 %v832, %v833
        %v835 = vshll.u32 920167782, %v820
        %v836 = vshrl.u32 1326507024, %v821
        %v837 = vor.u32 %v835, %v836
        %vm838 = vcmp.lt.s32.totalorder %v819, 1
        %vm839 = vcmp.lt.s32.totalorder %v819, 2
        %vm840 = vcmp.lt.s32.totalorder %v819, 3
        %vm841 = vcmp.lt.s32.totalorder %v819, 4
        %v842 = vsel %vm838, %v822, %v825
        %v843 = vsel %vm841, %v831, 2102212464
        %v844 = vsel %vm840, %v828, %v843
        %v845 = vsel %vm839, %v842, %v844
        %v846 = vsel %vm838, %v825, %v828
        %v847 = vsel %vm841, %v834, 920167782
        %v848 = vsel %vm840, %v831, %v847
        %v849 = vsel %vm839, %v846, %v848
        %v850 = vsel %vm838, %v828, %v831
        %v851 = vsel %vm841, %v837, 1326507024
        %v852 = vsel %vm840, %v834, %v851
        %v853 = vsel %vm839, %v850, %v852
        %v854 = vshll.u32 %v814, 8
        %v855 = vmul.u32.u64.compose %v854, %v853
        %v856 = vextract.low.u32 %v855
        %v857 = vextract.high.u32 %v855
        %v858 = vmul.u32.u64.compose %v854, %v849
        %v859 = vextract.low.u32 %v858
        %v860 = vextract.high.u32 %v858
        %v861 = vmul.u32 %v854, %v845
        %v862 = vadd.s32 %v857, %v859
        %vm863 = vc.u32 %v857, %v859
        %v864 = vadd.s32 %v860, 1
        %v865 = vsel %vm863, %v864, %v860
        %v866 = vadd.s32 %v861, %v865
        %v867 = vadd.s32 %v866, 536870912
        %v868 = vshrl.u32 %v867, 30
        %v869 = vshll.u32 %v868, 30
        %v870 = vsub.s32 %v866, %v869
        %vm871 = vcmp.lt.s32.totalorder %v870, 0
        %v872 = vsub.s32 0, %v870
        %v873 = vsel %vm871, %v872, %v870
        %v874 = vclz %v873
        %v875 = vsub.s32 %v874, 2
        %vm876 = vcmp.gt.s32.totalorder 0, %v875
        %v877 = vsel %vm876, 0, %v875
        %v878 = vsub.s32 32, %v877
        %v879 = vshll.u32 %v870, %v877
        %v880 = vshrl.u32 %v862, %v878
        %v881 = vor.u32 %v879, %v880
        %v882 = vsub.s32 4294967266, %v877
        %v883 = vadd.s32 %v882, 127
        %v884 = vshll.u32 %v883, 23
        %v885 = vor.u32 4788187, %v884
        %v886 = vand.u32 2147483647, %v885
        %v888 = vcvt.s32.f32 %v881
        %v889 = vmul.f32 %v888, %v886
        %v890 = vxor.u32 %v889, 2147483648
        %v891 = vsel %vm808, %v890, %v889
        %v892 = vsub.s32 4, %v868
        %v893 = vsel %vm808, %v892, %v868
        %v894 = vsel %vm807, %v372, %v891
        %v895 = vsel %vm807, 0, %v893
        %v896 = vcosq.f32.pop %v894
        %v897 = vsinq.f32.pop %v894
        %vm898 = vweird.f32 %v372
        %v899 = vadd.s32 %v895, 3
        %v900 = vand.u32 %v899, 3
        %vm901 = vcmp.lt.s32.totalorder %v900, 2
        %vm902 = vcmp.eq.s32.totalorder %v900, 0
        %v903 = vxor.u32 %v897, 2147483648
        %v904 = vsel %vm902, %v896, %v903
        %vm905 = vcmp.eq.s32.totalorder %v900, 2
        %v906 = vxor.u32 %v896, 2147483648
        %v907 = vsel %vm905, %v906, %v897
        %v908 = vsel %vm901, %v904, %v907
        %v909 = vsel %vm898, nan, %v908
        %v910 = vand.u32 2147483647, %v373
        %vm911 = vcmp.le.f32.partialorder %v910, 0.7853982
        %vm912 = vcmp.lt.s32.totalorder %v373, 0
        %v913 = vand.u32 %v373, 2139095040
        %v914 = vshrl.u32 %v913, 23
        %v915 = vsub.s32 %v914, 127
        %v916 = vand.u32 2147483647, %v373
        %v917 = vand.u32 %v916, 8388607
        %v918 = vor.u32 %v917, 8388608
        %v919 = vsub.s32 0, %v918
        %v920 = vadd.s32 %v915, 1
        %vm921 = vcmp.gt.s32.totalorder %v920, 0
        %v922 = vsel %vm921, %v920, 0
        %v923 = vshrl.u32 %v922, 5
        %v924 = vand.u32 %v922, 31
        %v925 = vsub.s32 32, %v924
        %v926 = vshrl.u32 683565275, %v925
        %v927 = vshll.u32 683565275, %v924
        %v928 = vshrl.u32 2475754826, %v925
        %v929 = vor.u32 %v927, %v928
        %v930 = vshll.u32 2475754826, %v924
        %v931 = vshrl.u32 2131351028, %v925
        %v932 = vor.u32 %v930, %v931
        %v933 = vshll.u32 2131351028, %v924
        %v934 = vshrl.u32 2102212464, %v925
        %v935 = vor.u32 %v933, %v934
        %v936 = vshll.u32 2102212464, %v924
        %v937 = vshrl.u32 920167782, %v925
        %v938 = vor.u32 %v936, %v937
        %v939 = vshll.u32 920167782, %v924
        %v940 = vshrl.u32 1326507024, %v925
        %v941 = vor.u32 %v939, %v940
        %vm942 = vcmp.lt.s32.totalorder %v923, 1
        %vm943 = vcmp.lt.s32.totalorder %v923, 2
        %vm944 = vcmp.lt.s32.totalorder %v923, 3
        %vm945 = vcmp.lt.s32.totalorder %v923, 4
        %v946 = vsel %vm942, %v926, %v929
        %v947 = vsel %vm945, %v935, 2102212464
        %v948 = vsel %vm944, %v932, %v947
        %v949 = vsel %vm943, %v946, %v948
        %v950 = vsel %vm942, %v929, %v932
        %v951 = vsel %vm945, %v938, 920167782
        %v952 = vsel %vm944, %v935, %v951
        %v953 = vsel %vm943, %v950, %v952
        %v954 = vsel %vm942, %v932, %v935
        %v955 = vsel %vm945, %v941, 1326507024
        %v956 = vsel %vm944, %v938, %v955
        %v957 = vsel %vm943, %v954, %v956
        %v958 = vshll.u32 %v918, 8
        %v959 = vmul.u32.u64.compose %v958, %v957
        %v960 = vextract.low.u32 %v959
        %v961 = vextract.high.u32 %v959
        %v962 = vmul.u32.u64.compose %v958, %v953
        %v963 = vextract.low.u32 %v962
        %v964 = vextract.high.u32 %v962
        %v965 = vmul.u32 %v958, %v949
        %v966 = vadd.s32 %v961, %v963
        %vm967 = vc.u32 %v961, %v963
        %v968 = vadd.s32 %v964, 1
        %v969 = vsel %vm967, %v968, %v964
        %v970 = vadd.s32 %v965, %v969
        %v971 = vadd.s32 %v970, 536870912
        %v972 = vshrl.u32 %v971, 30
        %v973 = vshll.u32 %v972, 30
        %v974 = vsub.s32 %v970, %v973
        %vm975 = vcmp.lt.s32.totalorder %v974, 0
        %v976 = vsub.s32 0, %v974
        %v977 = vsel %vm975, %v976, %v974
        %v978 = vclz %v977
        %v979 = vsub.s32 %v978, 2
        %vm980 = vcmp.gt.s32.totalorder 0, %v979
        %v981 = vsel %vm980, 0, %v979
        %v982 = vsub.s32 32, %v981
        %v983 = vshll.u32 %v974, %v981
        %v984 = vshrl.u32 %v966, %v982
        %v985 = vor.u32 %v983, %v984
        %v986 = vsub.s32 4294967266, %v981
        %v987 = vadd.s32 %v986, 127
        %v988 = vshll.u32 %v987, 23
        %v989 = vor.u32 4788187, %v988
        %v990 = vand.u32 2147483647, %v989
        %v992 = vcvt.s32.f32 %v985
        %v993 = vmul.f32 %v992, %v990
        %v994 = vxor.u32 %v993, 2147483648
        %v995 = vsel %vm912, %v994, %v993
        %v996 = vsub.s32 4, %v972
        %v997 = vsel %vm912, %v996, %v972
        %v998 = vsel %vm911, %v373, %v995
        %v999 = vsel %vm911, 0, %v997
        %v1000 = vcosq.f32.pop %v998
        %v1001 = vsinq.f32.pop %v998
        %vm1002 = vweird.f32 %v373
        %v1003 = vadd.s32 %v999, 3
        %v1004 = vand.u32 %v1003, 3
        %vm1005 = vcmp.lt.s32.totalorder %v1004, 2
        %vm1006 = vcmp.eq.s32.totalorder %v1004, 0
        %v1007 = vxor.u32 %v1001, 2147483648
        %v1008 = vsel %vm1006, %v1000, %v1007
        %vm1009 = vcmp.eq.s32.totalorder %v1004, 2
        %v1010 = vxor.u32 %v1000, 2147483648
        %v1011 = vsel %vm1009, %v1010, %v1001
        %v1012 = vsel %vm1005, %v1008, %v1011
        %v1013 = vsel %vm1002, nan, %v1012
        %v1014 = vand.u32 2147483647, %v374
        %vm1015 = vcmp.le.f32.partialorder %v1014, 0.7853982
        %vm1016 = vcmp.lt.s32.totalorder %v374, 0
        %v1017 = vand.u32 %v374, 2139095040
        %v1018 = vshrl.u32 %v1017, 23
        %v1019 = vsub.s32 %v1018, 127
        %v1020 = vand.u32 2147483647, %v374
        %v1021 = vand.u32 %v1020, 8388607
        %v1022 = vor.u32 %v1021, 8388608
        %v1023 = vsub.s32 0, %v1022
        %v1024 = vadd.s32 %v1019, 1
        %vm1025 = vcmp.gt.s32.totalorder %v1024, 0
        %v1026 = vsel %vm1025, %v1024, 0
        %v1027 = vshrl.u32 %v1026, 5
        %v1028 = vand.u32 %v1026, 31
        %v1029 = vsub.s32 32, %v1028
        %v1030 = vshrl.u32 683565275, %v1029
        %v1031 = vshll.u32 683565275, %v1028
        %v1032 = vshrl.u32 2475754826, %v1029
        %v1033 = vor.u32 %v1031, %v1032
        %v1034 = vshll.u32 2475754826, %v1028
        %v1035 = vshrl.u32 2131351028, %v1029
        %v1036 = vor.u32 %v1034, %v1035
        %v1037 = vshll.u32 2131351028, %v1028
        %v1038 = vshrl.u32 2102212464, %v1029
        %v1039 = vor.u32 %v1037, %v1038
        %v1040 = vshll.u32 2102212464, %v1028
        %v1041 = vshrl.u32 920167782, %v1029
        %v1042 = vor.u32 %v1040, %v1041
        %v1043 = vshll.u32 920167782, %v1028
        %v1044 = vshrl.u32 1326507024, %v1029
        %v1045 = vor.u32 %v1043, %v1044
        %vm1046 = vcmp.lt.s32.totalorder %v1027, 1
        %vm1047 = vcmp.lt.s32.totalorder %v1027, 2
        %vm1048 = vcmp.lt.s32.totalorder %v1027, 3
        %vm1049 = vcmp.lt.s32.totalorder %v1027, 4
        %v1050 = vsel %vm1046, %v1030, %v1033
        %v1051 = vsel %vm1049, %v1039, 2102212464
        %v1052 = vsel %vm1048, %v1036, %v1051
        %v1053 = vsel %vm1047, %v1050, %v1052
        %v1054 = vsel %vm1046, %v1033, %v1036
        %v1055 = vsel %vm1049, %v1042, 920167782
        %v1056 = vsel %vm1048, %v1039, %v1055
        %v1057 = vsel %vm1047, %v1054, %v1056
        %v1058 = vsel %vm1046, %v1036, %v1039
        %v1059 = vsel %vm1049, %v1045, 1326507024
        %v1060 = vsel %vm1048, %v1042, %v1059
        %v1061 = vsel %vm1047, %v1058, %v1060
        %v1062 = vshll.u32 %v1022, 8
        %v1063 = vmul.u32.u64.compose %v1062, %v1061
        %v1064 = vextract.low.u32 %v1063
        %v1065 = vextract.high.u32 %v1063
        %v1066 = vmul.u32.u64.compose %v1062, %v1057
        %v1067 = vextract.low.u32 %v1066
        %v1068 = vextract.high.u32 %v1066
        %v1069 = vmul.u32 %v1062, %v1053
        %v1070 = vadd.s32 %v1065, %v1067
        %vm1071 = vc.u32 %v1065, %v1067
        %v1072 = vadd.s32 %v1068, 1
        %v1073 = vsel %vm1071, %v1072, %v1068
        %v1074 = vadd.s32 %v1069, %v1073
        %v1075 = vadd.s32 %v1074, 536870912
        %v1076 = vshrl.u32 %v1075, 30
        %v1077 = vshll.u32 %v1076, 30
        %v1078 = vsub.s32 %v1074, %v1077
        %vm1079 = vcmp.lt.s32.totalorder %v1078, 0
        %v1080 = vsub.s32 0, %v1078
        %v1081 = vsel %vm1079, %v1080, %v1078
        %v1082 = vclz %v1081
        %v1083 = vsub.s32 %v1082, 2
        %vm1084 = vcmp.gt.s32.totalorder 0, %v1083
        %v1085 = vsel %vm1084, 0, %v1083
        %v1086 = vsub.s32 32, %v1085
        %v1087 = vshll.u32 %v1078, %v1085
        %v1088 = vshrl.u32 %v1070, %v1086
        %v1089 = vor.u32 %v1087, %v1088
        %v1090 = vsub.s32 4294967266, %v1085
        %v1091 = vadd.s32 %v1090, 127
        %v1092 = vshll.u32 %v1091, 23
        %v1093 = vor.u32 4788187, %v1092
        %v1094 = vand.u32 2147483647, %v1093
        %v1096 = vcvt.s32.f32 %v1089
        %v1097 = vmul.f32 %v1096, %v1094
        %v1098 = vxor.u32 %v1097, 2147483648
        %v1099 = vsel %vm1016, %v1098, %v1097
        %v1100 = vsub.s32 4, %v1076
        %v1101 = vsel %vm1016, %v1100, %v1076
        %v1102 = vsel %vm1015, %v374, %v1099
        %v1103 = vsel %vm1015, 0, %v1101
        %v1104 = vcosq.f32.pop %v1102
        %v1105 = vsinq.f32.pop %v1102
        %vm1106 = vweird.f32 %v374
        %v1107 = vadd.s32 %v1103, 3
        %v1108 = vand.u32 %v1107, 3
        %vm1109 = vcmp.lt.s32.totalorder %v1108, 2
        %vm1110 = vcmp.eq.s32.totalorder %v1108, 0
        %v1111 = vxor.u32 %v1105, 2147483648
        %v1112 = vsel %vm1110, %v1104, %v1111
        %vm1113 = vcmp.eq.s32.totalorder %v1108, 2
        %v1114 = vxor.u32 %v1104, 2147483648
        %v1115 = vsel %vm1113, %v1114, %v1105
        %v1116 = vsel %vm1109, %v1112, %v1115
        %v1117 = vsel %vm1106, nan, %v1116
        %v1118 = vand.u32 2147483647, %v375
        %vm1119 = vcmp.le.f32.partialorder %v1118, 0.7853982
        %vm1120 = vcmp.lt.s32.totalorder %v375, 0
        %v1121 = vand.u32 %v375, 2139095040
        %v1122 = vshrl.u32 %v1121, 23
        %v1123 = vsub.s32 %v1122, 127
        %v1124 = vand.u32 2147483647, %v375
        %v1125 = vand.u32 %v1124, 8388607
        %v1126 = vor.u32 %v1125, 8388608
        %v1127 = vsub.s32 0, %v1126
        %v1128 = vadd.s32 %v1123, 1
        %vm1129 = vcmp.gt.s32.totalorder %v1128, 0
        %v1130 = vsel %vm1129, %v1128, 0
        %v1131 = vshrl.u32 %v1130, 5
        %v1132 = vand.u32 %v1130, 31
        %v1133 = vsub.s32 32, %v1132
        %v1134 = vshrl.u32 683565275, %v1133
        %v1135 = vshll.u32 683565275, %v1132
        %v1136 = vshrl.u32 2475754826, %v1133
        %v1137 = vor.u32 %v1135, %v1136
        %v1138 = vshll.u32 2475754826, %v1132
        %v1139 = vshrl.u32 2131351028, %v1133
        %v1140 = vor.u32 %v1138, %v1139
        %v1141 = vshll.u32 2131351028, %v1132
        %v1142 = vshrl.u32 2102212464, %v1133
        %v1143 = vor.u32 %v1141, %v1142
        %v1144 = vshll.u32 2102212464, %v1132
        %v1145 = vshrl.u32 920167782, %v1133
        %v1146 = vor.u32 %v1144, %v1145
        %v1147 = vshll.u32 920167782, %v1132
        %v1148 = vshrl.u32 1326507024, %v1133
        %v1149 = vor.u32 %v1147, %v1148
        %vm1150 = vcmp.lt.s32.totalorder %v1131, 1
        %vm1151 = vcmp.lt.s32.totalorder %v1131, 2
        %vm1152 = vcmp.lt.s32.totalorder %v1131, 3
        %vm1153 = vcmp.lt.s32.totalorder %v1131, 4
        %v1154 = vsel %vm1150, %v1134, %v1137
        %v1155 = vsel %vm1153, %v1143, 2102212464
        %v1156 = vsel %vm1152, %v1140, %v1155
        %v1157 = vsel %vm1151, %v1154, %v1156
        %v1158 = vsel %vm1150, %v1137, %v1140
        %v1159 = vsel %vm1153, %v1146, 920167782
        %v1160 = vsel %vm1152, %v1143, %v1159
        %v1161 = vsel %vm1151, %v1158, %v1160
        %v1162 = vsel %vm1150, %v1140, %v1143
        %v1163 = vsel %vm1153, %v1149, 1326507024
        %v1164 = vsel %vm1152, %v1146, %v1163
        %v1165 = vsel %vm1151, %v1162, %v1164
        %v1166 = vshll.u32 %v1126, 8
        %v1167 = vmul.u32.u64.compose %v1166, %v1165
        %v1168 = vextract.low.u32 %v1167
        %v1169 = vextract.high.u32 %v1167
        %v1170 = vmul.u32.u64.compose %v1166, %v1161
        %v1171 = vextract.low.u32 %v1170
        %v1172 = vextract.high.u32 %v1170
        %v1173 = vmul.u32 %v1166, %v1157
        %v1174 = vadd.s32 %v1169, %v1171
        %vm1175 = vc.u32 %v1169, %v1171
        %v1176 = vadd.s32 %v1172, 1
        %v1177 = vsel %vm1175, %v1176, %v1172
        %v1178 = vadd.s32 %v1173, %v1177
        %v1179 = vadd.s32 %v1178, 536870912
        %v1180 = vshrl.u32 %v1179, 30
        %v1181 = vshll.u32 %v1180, 30
        %v1182 = vsub.s32 %v1178, %v1181
        %vm1183 = vcmp.lt.s32.totalorder %v1182, 0
        %v1184 = vsub.s32 0, %v1182
        %v1185 = vsel %vm1183, %v1184, %v1182
        %v1186 = vclz %v1185
        %v1187 = vsub.s32 %v1186, 2
        %vm1188 = vcmp.gt.s32.totalorder 0, %v1187
        %v1189 = vsel %vm1188, 0, %v1187
        %v1190 = vsub.s32 32, %v1189
        %v1191 = vshll.u32 %v1182, %v1189
        %v1192 = vshrl.u32 %v1174, %v1190
        %v1193 = vor.u32 %v1191, %v1192
        %v1194 = vsub.s32 4294967266, %v1189
        %v1195 = vadd.s32 %v1194, 127
        %v1196 = vshll.u32 %v1195, 23
        %v1197 = vor.u32 4788187, %v1196
        %v1198 = vand.u32 2147483647, %v1197
        %v1200 = vcvt.s32.f32 %v1193
        %v1201 = vmul.f32 %v1200, %v1198
        %v1202 = vxor.u32 %v1201, 2147483648
        %v1203 = vsel %vm1120, %v1202, %v1201
        %v1204 = vsub.s32 4, %v1180
        %v1205 = vsel %vm1120, %v1204, %v1180
        %v1206 = vsel %vm1119, %v375, %v1203
        %v1207 = vsel %vm1119, 0, %v1205
        %v1208 = vcosq.f32.pop %v1206
        %v1209 = vsinq.f32.pop %v1206
        %vm1210 = vweird.f32 %v375
        %v1211 = vadd.s32 %v1207, 3
        %v1212 = vand.u32 %v1211, 3
        %vm1213 = vcmp.lt.s32.totalorder %v1212, 2
        %vm1214 = vcmp.eq.s32.totalorder %v1212, 0
        %v1215 = vxor.u32 %v1209, 2147483648
        %v1216 = vsel %vm1214, %v1208, %v1215
        %vm1217 = vcmp.eq.s32.totalorder %v1212, 2
        %v1218 = vxor.u32 %v1208, 2147483648
        %v1219 = vsel %vm1217, %v1218, %v1209
        %v1220 = vsel %vm1213, %v1216, %v1219
        %v1221 = vsel %vm1210, nan, %v1220
        %v1222 = vand.u32 2147483647, %v376
        %vm1223 = vcmp.le.f32.partialorder %v1222, 0.7853982
        %vm1224 = vcmp.lt.s32.totalorder %v376, 0
        %v1225 = vand.u32 %v376, 2139095040
        %v1226 = vshrl.u32 %v1225, 23
        %v1227 = vsub.s32 %v1226, 127
        %v1228 = vand.u32 2147483647, %v376
        %v1229 = vand.u32 %v1228, 8388607
        %v1230 = vor.u32 %v1229, 8388608
        %v1231 = vsub.s32 0, %v1230
        %v1232 = vadd.s32 %v1227, 1
        %vm1233 = vcmp.gt.s32.totalorder %v1232, 0
        %v1234 = vsel %vm1233, %v1232, 0
        %v1235 = vshrl.u32 %v1234, 5
        %v1236 = vand.u32 %v1234, 31
        %v1237 = vsub.s32 32, %v1236
        %v1238 = vshrl.u32 683565275, %v1237
        %v1239 = vshll.u32 683565275, %v1236
        %v1240 = vshrl.u32 2475754826, %v1237
        %v1241 = vor.u32 %v1239, %v1240
        %v1242 = vshll.u32 2475754826, %v1236
        %v1243 = vshrl.u32 2131351028, %v1237
        %v1244 = vor.u32 %v1242, %v1243
        %v1245 = vshll.u32 2131351028, %v1236
        %v1246 = vshrl.u32 2102212464, %v1237
        %v1247 = vor.u32 %v1245, %v1246
        %v1248 = vshll.u32 2102212464, %v1236
        %v1249 = vshrl.u32 920167782, %v1237
        %v1250 = vor.u32 %v1248, %v1249
        %v1251 = vshll.u32 920167782, %v1236
        %v1252 = vshrl.u32 1326507024, %v1237
        %v1253 = vor.u32 %v1251, %v1252
        %vm1254 = vcmp.lt.s32.totalorder %v1235, 1
        %vm1255 = vcmp.lt.s32.totalorder %v1235, 2
        %vm1256 = vcmp.lt.s32.totalorder %v1235, 3
        %vm1257 = vcmp.lt.s32.totalorder %v1235, 4
        %v1258 = vsel %vm1254, %v1238, %v1241
        %v1259 = vsel %vm1257, %v1247, 2102212464
        %v1260 = vsel %vm1256, %v1244, %v1259
        %v1261 = vsel %vm1255, %v1258, %v1260
        %v1262 = vsel %vm1254, %v1241, %v1244
        %v1263 = vsel %vm1257, %v1250, 920167782
        %v1264 = vsel %vm1256, %v1247, %v1263
        %v1265 = vsel %vm1255, %v1262, %v1264
        %v1266 = vsel %vm1254, %v1244, %v1247
        %v1267 = vsel %vm1257, %v1253, 1326507024
        %v1268 = vsel %vm1256, %v1250, %v1267
        %v1269 = vsel %vm1255, %v1266, %v1268
        %v1270 = vshll.u32 %v1230, 8
        %v1271 = vmul.u32.u64.compose %v1270, %v1269
        %v1272 = vextract.low.u32 %v1271
        %v1273 = vextract.high.u32 %v1271
        %v1274 = vmul.u32.u64.compose %v1270, %v1265
        %v1275 = vextract.low.u32 %v1274
        %v1276 = vextract.high.u32 %v1274
        %v1277 = vmul.u32 %v1270, %v1261
        %v1278 = vadd.s32 %v1273, %v1275
        %vm1279 = vc.u32 %v1273, %v1275
        %v1280 = vadd.s32 %v1276, 1
        %v1281 = vsel %vm1279, %v1280, %v1276
        %v1282 = vadd.s32 %v1277, %v1281
        %v1283 = vadd.s32 %v1282, 536870912
        %v1284 = vshrl.u32 %v1283, 30
        %v1285 = vshll.u32 %v1284, 30
        %v1286 = vsub.s32 %v1282, %v1285
        %vm1287 = vcmp.lt.s32.totalorder %v1286, 0
        %v1288 = vsub.s32 0, %v1286
        %v1289 = vsel %vm1287, %v1288, %v1286
        %v1290 = vclz %v1289
        %v1291 = vsub.s32 %v1290, 2
        %vm1292 = vcmp.gt.s32.totalorder 0, %v1291
        %v1293 = vsel %vm1292, 0, %v1291
        %v1294 = vsub.s32 32, %v1293
        %v1295 = vshll.u32 %v1286, %v1293
        %v1296 = vshrl.u32 %v1278, %v1294
        %v1297 = vor.u32 %v1295, %v1296
        %v1298 = vsub.s32 4294967266, %v1293
        %v1299 = vadd.s32 %v1298, 127
        %v1300 = vshll.u32 %v1299, 23
        %v1301 = vor.u32 4788187, %v1300
        %v1302 = vand.u32 2147483647, %v1301
        %v1304 = vcvt.s32.f32 %v1297
        %v1305 = vmul.f32 %v1304, %v1302
        %v1306 = vxor.u32 %v1305, 2147483648
        %v1307 = vsel %vm1224, %v1306, %v1305
        %v1308 = vsub.s32 4, %v1284
        %v1309 = vsel %vm1224, %v1308, %v1284
        %v1310 = vsel %vm1223, %v376, %v1307
        %v1311 = vsel %vm1223, 0, %v1309
        %v1312 = vcosq.f32.pop %v1310
        %v1313 = vsinq.f32.pop %v1310
        %vm1314 = vweird.f32 %v376
        %v1315 = vadd.s32 %v1311, 3
        %v1316 = vand.u32 %v1315, 3
        %vm1317 = vcmp.lt.s32.totalorder %v1316, 2
        %vm1318 = vcmp.eq.s32.totalorder %v1316, 0
        %v1319 = vxor.u32 %v1313, 2147483648
        %v1320 = vsel %vm1318, %v1312, %v1319
        %vm1321 = vcmp.eq.s32.totalorder %v1316, 2
        %v1322 = vxor.u32 %v1312, 2147483648
        %v1323 = vsel %vm1321, %v1322, %v1313
        %v1324 = vsel %vm1317, %v1320, %v1323
        %v1325 = vsel %vm1314, nan, %v1324
        %v1326 = vand.u32 2147483647, %v377
        %vm1327 = vcmp.le.f32.partialorder %v1326, 0.7853982
        %vm1328 = vcmp.lt.s32.totalorder %v377, 0
        %v1329 = vand.u32 %v377, 2139095040
        %v1330 = vshrl.u32 %v1329, 23
        %v1331 = vsub.s32 %v1330, 127
        %v1332 = vand.u32 2147483647, %v377
        %v1333 = vand.u32 %v1332, 8388607
        %v1334 = vor.u32 %v1333, 8388608
        %v1335 = vsub.s32 0, %v1334
        %v1336 = vadd.s32 %v1331, 1
        %vm1337 = vcmp.gt.s32.totalorder %v1336, 0
        %v1338 = vsel %vm1337, %v1336, 0
        %v1339 = vshrl.u32 %v1338, 5
        %v1340 = vand.u32 %v1338, 31
        %v1341 = vsub.s32 32, %v1340
        %v1342 = vshrl.u32 683565275, %v1341
        %v1343 = vshll.u32 683565275, %v1340
        %v1344 = vshrl.u32 2475754826, %v1341
        %v1345 = vor.u32 %v1343, %v1344
        %v1346 = vshll.u32 2475754826, %v1340
        %v1347 = vshrl.u32 2131351028, %v1341
        %v1348 = vor.u32 %v1346, %v1347
        %v1349 = vshll.u32 2131351028, %v1340
        %v1350 = vshrl.u32 2102212464, %v1341
        %v1351 = vor.u32 %v1349, %v1350
        %v1352 = vshll.u32 2102212464, %v1340
        %v1353 = vshrl.u32 920167782, %v1341
        %v1354 = vor.u32 %v1352, %v1353
        %v1355 = vshll.u32 920167782, %v1340
        %v1356 = vshrl.u32 1326507024, %v1341
        %v1357 = vor.u32 %v1355, %v1356
        %vm1358 = vcmp.lt.s32.totalorder %v1339, 1
        %vm1359 = vcmp.lt.s32.totalorder %v1339, 2
        %vm1360 = vcmp.lt.s32.totalorder %v1339, 3
        %vm1361 = vcmp.lt.s32.totalorder %v1339, 4
        %v1362 = vsel %vm1358, %v1342, %v1345
        %v1363 = vsel %vm1361, %v1351, 2102212464
        %v1364 = vsel %vm1360, %v1348, %v1363
        %v1365 = vsel %vm1359, %v1362, %v1364
        %v1366 = vsel %vm1358, %v1345, %v1348
        %v1367 = vsel %vm1361, %v1354, 920167782
        %v1368 = vsel %vm1360, %v1351, %v1367
        %v1369 = vsel %vm1359, %v1366, %v1368
        %v1370 = vsel %vm1358, %v1348, %v1351
        %v1371 = vsel %vm1361, %v1357, 1326507024
        %v1372 = vsel %vm1360, %v1354, %v1371
        %v1373 = vsel %vm1359, %v1370, %v1372
        %v1374 = vshll.u32 %v1334, 8
        %v1375 = vmul.u32.u64.compose %v1374, %v1373
        %v1376 = vextract.low.u32 %v1375
        %v1377 = vextract.high.u32 %v1375
        %v1378 = vmul.u32.u64.compose %v1374, %v1369
        %v1379 = vextract.low.u32 %v1378
        %v1380 = vextract.high.u32 %v1378
        %v1381 = vmul.u32 %v1374, %v1365
        %v1382 = vadd.s32 %v1377, %v1379
        %vm1383 = vc.u32 %v1377, %v1379
        %v1384 = vadd.s32 %v1380, 1
        %v1385 = vsel %vm1383, %v1384, %v1380
        %v1386 = vadd.s32 %v1381, %v1385
        %v1387 = vadd.s32 %v1386, 536870912
        %v1388 = vshrl.u32 %v1387, 30
        %v1389 = vshll.u32 %v1388, 30
        %v1390 = vsub.s32 %v1386, %v1389
        %vm1391 = vcmp.lt.s32.totalorder %v1390, 0
        %v1392 = vsub.s32 0, %v1390
        %v1393 = vsel %vm1391, %v1392, %v1390
        %v1394 = vclz %v1393
        %v1395 = vsub.s32 %v1394, 2
        %vm1396 = vcmp.gt.s32.totalorder 0, %v1395
        %v1397 = vsel %vm1396, 0, %v1395
        %v1398 = vsub.s32 32, %v1397
        %v1399 = vshll.u32 %v1390, %v1397
        %v1400 = vshrl.u32 %v1382, %v1398
        %v1401 = vor.u32 %v1399, %v1400
        %v1402 = vsub.s32 4294967266, %v1397
        %v1403 = vadd.s32 %v1402, 127
        %v1404 = vshll.u32 %v1403, 23
        %v1405 = vor.u32 4788187, %v1404
        %v1406 = vand.u32 2147483647, %v1405
        %v1408 = vcvt.s32.f32 %v1401
        %v1409 = vmul.f32 %v1408, %v1406
        %v1410 = vxor.u32 %v1409, 2147483648
        %v1411 = vsel %vm1328, %v1410, %v1409
        %v1412 = vsub.s32 4, %v1388
        %v1413 = vsel %vm1328, %v1412, %v1388
        %v1414 = vsel %vm1327, %v377, %v1411
        %v1415 = vsel %vm1327, 0, %v1413
        %v1416 = vcosq.f32.pop %v1414
        %v1417 = vsinq.f32.pop %v1414
        %vm1418 = vweird.f32 %v377
        %v1419 = vadd.s32 %v1415, 3
        %v1420 = vand.u32 %v1419, 3
        %vm1421 = vcmp.lt.s32.totalorder %v1420, 2
        %vm1422 = vcmp.eq.s32.totalorder %v1420, 0
        %v1423 = vxor.u32 %v1417, 2147483648
        %v1424 = vsel %vm1422, %v1416, %v1423
        %vm1425 = vcmp.eq.s32.totalorder %v1420, 2
        %v1426 = vxor.u32 %v1416, 2147483648
        %v1427 = vsel %vm1425, %v1426, %v1417
        %v1428 = vsel %vm1421, %v1424, %v1427
        %v1429 = vsel %vm1418, nan, %v1428
        %v1430 = vand.u32 2147483647, %v378
        %vm1431 = vcmp.le.f32.partialorder %v1430, 0.7853982
        %vm1432 = vcmp.lt.s32.totalorder %v378, 0
        %v1433 = vand.u32 %v378, 2139095040
        %v1434 = vshrl.u32 %v1433, 23
        %v1435 = vsub.s32 %v1434, 127
        %v1436 = vand.u32 2147483647, %v378
        %v1437 = vand.u32 %v1436, 8388607
        %v1438 = vor.u32 %v1437, 8388608
        %v1439 = vsub.s32 0, %v1438
        %v1440 = vadd.s32 %v1435, 1
        %vm1441 = vcmp.gt.s32.totalorder %v1440, 0
        %v1442 = vsel %vm1441, %v1440, 0
        %v1443 = vshrl.u32 %v1442, 5
        %v1444 = vand.u32 %v1442, 31
        %v1445 = vsub.s32 32, %v1444
        %v1446 = vshrl.u32 683565275, %v1445
        %v1447 = vshll.u32 683565275, %v1444
        %v1448 = vshrl.u32 2475754826, %v1445
        %v1449 = vor.u32 %v1447, %v1448
        %v1450 = vshll.u32 2475754826, %v1444
        %v1451 = vshrl.u32 2131351028, %v1445
        %v1452 = vor.u32 %v1450, %v1451
        %v1453 = vshll.u32 2131351028, %v1444
        %v1454 = vshrl.u32 2102212464, %v1445
        %v1455 = vor.u32 %v1453, %v1454
        %v1456 = vshll.u32 2102212464, %v1444
        %v1457 = vshrl.u32 920167782, %v1445
        %v1458 = vor.u32 %v1456, %v1457
        %v1459 = vshll.u32 920167782, %v1444
        %v1460 = vshrl.u32 1326507024, %v1445
        %v1461 = vor.u32 %v1459, %v1460
        %vm1462 = vcmp.lt.s32.totalorder %v1443, 1
        %vm1463 = vcmp.lt.s32.totalorder %v1443, 2
        %vm1464 = vcmp.lt.s32.totalorder %v1443, 3
        %vm1465 = vcmp.lt.s32.totalorder %v1443, 4
        %v1466 = vsel %vm1462, %v1446, %v1449
        %v1467 = vsel %vm1465, %v1455, 2102212464
        %v1468 = vsel %vm1464, %v1452, %v1467
        %v1469 = vsel %vm1463, %v1466, %v1468
        %v1470 = vsel %vm1462, %v1449, %v1452
        %v1471 = vsel %vm1465, %v1458, 920167782
        %v1472 = vsel %vm1464, %v1455, %v1471
        %v1473 = vsel %vm1463, %v1470, %v1472
        %v1474 = vsel %vm1462, %v1452, %v1455
        %v1475 = vsel %vm1465, %v1461, 1326507024
        %v1476 = vsel %vm1464, %v1458, %v1475
        %v1477 = vsel %vm1463, %v1474, %v1476
        %v1478 = vshll.u32 %v1438, 8
        %v1479 = vmul.u32.u64.compose %v1478, %v1477
        %v1480 = vextract.low.u32 %v1479
        %v1481 = vextract.high.u32 %v1479
        %v1482 = vmul.u32.u64.compose %v1478, %v1473
        %v1483 = vextract.low.u32 %v1482
        %v1484 = vextract.high.u32 %v1482
        %v1485 = vmul.u32 %v1478, %v1469
        %v1486 = vadd.s32 %v1481, %v1483
        %vm1487 = vc.u32 %v1481, %v1483
        %v1488 = vadd.s32 %v1484, 1
        %v1489 = vsel %vm1487, %v1488, %v1484
        %v1490 = vadd.s32 %v1485, %v1489
        %v1491 = vadd.s32 %v1490, 536870912
        %v1492 = vshrl.u32 %v1491, 30
        %v1493 = vshll.u32 %v1492, 30
        %v1494 = vsub.s32 %v1490, %v1493
        %vm1495 = vcmp.lt.s32.totalorder %v1494, 0
        %v1496 = vsub.s32 0, %v1494
        %v1497 = vsel %vm1495, %v1496, %v1494
        %v1498 = vclz %v1497
        %v1499 = vsub.s32 %v1498, 2
        %vm1500 = vcmp.gt.s32.totalorder 0, %v1499
        %v1501 = vsel %vm1500, 0, %v1499
        %v1502 = vsub.s32 32, %v1501
        %v1503 = vshll.u32 %v1494, %v1501
        %v1504 = vshrl.u32 %v1486, %v1502
        %v1505 = vor.u32 %v1503, %v1504
        %v1506 = vsub.s32 4294967266, %v1501
        %v1507 = vadd.s32 %v1506, 127
        %v1508 = vshll.u32 %v1507, 23
        %v1509 = vor.u32 4788187, %v1508
        %v1510 = vand.u32 2147483647, %v1509
        %v1512 = vcvt.s32.f32 %v1505
        %v1513 = vmul.f32 %v1512, %v1510
        %v1514 = vxor.u32 %v1513, 2147483648
        %v1515 = vsel %vm1432, %v1514, %v1513
        %v1516 = vsub.s32 4, %v1492
        %v1517 = vsel %vm1432, %v1516, %v1492
        %v1518 = vsel %vm1431, %v378, %v1515
        %v1519 = vsel %vm1431, 0, %v1517
        %v1520 = vcosq.f32.pop %v1518
        %v1521 = vsinq.f32.pop %v1518
        %vm1522 = vweird.f32 %v378
        %v1523 = vadd.s32 %v1519, 3
        %v1524 = vand.u32 %v1523, 3
        %vm1525 = vcmp.lt.s32.totalorder %v1524, 2
        %vm1526 = vcmp.eq.s32.totalorder %v1524, 0
        %v1527 = vxor.u32 %v1521, 2147483648
        %v1528 = vsel %vm1526, %v1520, %v1527
        %vm1529 = vcmp.eq.s32.totalorder %v1524, 2
        %v1530 = vxor.u32 %v1520, 2147483648
        %v1531 = vsel %vm1529, %v1530, %v1521
        %v1532 = vsel %vm1525, %v1528, %v1531
        %v1533 = vsel %vm1522, nan, %v1532
        %v1534 = vand.u32 2147483647, %v379
        %vm1535 = vcmp.le.f32.partialorder %v1534, 0.7853982
        %vm1536 = vcmp.lt.s32.totalorder %v379, 0
        %v1537 = vand.u32 %v379, 2139095040
        %v1538 = vshrl.u32 %v1537, 23
        %v1539 = vsub.s32 %v1538, 127
        %v1540 = vand.u32 2147483647, %v379
        %v1541 = vand.u32 %v1540, 8388607
        %v1542 = vor.u32 %v1541, 8388608
        %v1543 = vsub.s32 0, %v1542
        %v1544 = vadd.s32 %v1539, 1
        %vm1545 = vcmp.gt.s32.totalorder %v1544, 0
        %v1546 = vsel %vm1545, %v1544, 0
        %v1547 = vshrl.u32 %v1546, 5
        %v1548 = vand.u32 %v1546, 31
        %v1549 = vsub.s32 32, %v1548
        %v1550 = vshrl.u32 683565275, %v1549
        %v1551 = vshll.u32 683565275, %v1548
        %v1552 = vshrl.u32 2475754826, %v1549
        %v1553 = vor.u32 %v1551, %v1552
        %v1554 = vshll.u32 2475754826, %v1548
        %v1555 = vshrl.u32 2131351028, %v1549
        %v1556 = vor.u32 %v1554, %v1555
        %v1557 = vshll.u32 2131351028, %v1548
        %v1558 = vshrl.u32 2102212464, %v1549
        %v1559 = vor.u32 %v1557, %v1558
        %v1560 = vshll.u32 2102212464, %v1548
        %v1561 = vshrl.u32 920167782, %v1549
        %v1562 = vor.u32 %v1560, %v1561
        %v1563 = vshll.u32 920167782, %v1548
        %v1564 = vshrl.u32 1326507024, %v1549
        %v1565 = vor.u32 %v1563, %v1564
        %vm1566 = vcmp.lt.s32.totalorder %v1547, 1
        %vm1567 = vcmp.lt.s32.totalorder %v1547, 2
        %vm1568 = vcmp.lt.s32.totalorder %v1547, 3
        %vm1569 = vcmp.lt.s32.totalorder %v1547, 4
        %v1570 = vsel %vm1566, %v1550, %v1553
        %v1571 = vsel %vm1569, %v1559, 2102212464
        %v1572 = vsel %vm1568, %v1556, %v1571
        %v1573 = vsel %vm1567, %v1570, %v1572
        %v1574 = vsel %vm1566, %v1553, %v1556
        %v1575 = vsel %vm1569, %v1562, 920167782
        %v1576 = vsel %vm1568, %v1559, %v1575
        %v1577 = vsel %vm1567, %v1574, %v1576
        %v1578 = vsel %vm1566, %v1556, %v1559
        %v1579 = vsel %vm1569, %v1565, 1326507024
        %v1580 = vsel %vm1568, %v1562, %v1579
        %v1581 = vsel %vm1567, %v1578, %v1580
        %v1582 = vshll.u32 %v1542, 8
        %v1583 = vmul.u32.u64.compose %v1582, %v1581
        %v1584 = vextract.low.u32 %v1583
        %v1585 = vextract.high.u32 %v1583
        %v1586 = vmul.u32.u64.compose %v1582, %v1577
        %v1587 = vextract.low.u32 %v1586
        %v1588 = vextract.high.u32 %v1586
        %v1589 = vmul.u32 %v1582, %v1573
        %v1590 = vadd.s32 %v1585, %v1587
        %vm1591 = vc.u32 %v1585, %v1587
        %v1592 = vadd.s32 %v1588, 1
        %v1593 = vsel %vm1591, %v1592, %v1588
        %v1594 = vadd.s32 %v1589, %v1593
        %v1595 = vadd.s32 %v1594, 536870912
        %v1596 = vshrl.u32 %v1595, 30
        %v1597 = vshll.u32 %v1596, 30
        %v1598 = vsub.s32 %v1594, %v1597
        %vm1599 = vcmp.lt.s32.totalorder %v1598, 0
        %v1600 = vsub.s32 0, %v1598
        %v1601 = vsel %vm1599, %v1600, %v1598
        %v1602 = vclz %v1601
        %v1603 = vsub.s32 %v1602, 2
        %vm1604 = vcmp.gt.s32.totalorder 0, %v1603
        %v1605 = vsel %vm1604, 0, %v1603
        %v1606 = vsub.s32 32, %v1605
        %v1607 = vshll.u32 %v1598, %v1605
        %v1608 = vshrl.u32 %v1590, %v1606
        %v1609 = vor.u32 %v1607, %v1608
        %v1610 = vsub.s32 4294967266, %v1605
        %v1611 = vadd.s32 %v1610, 127
        %v1612 = vshll.u32 %v1611, 23
        %v1613 = vor.u32 4788187, %v1612
        %v1614 = vand.u32 2147483647, %v1613
        %v1616 = vcvt.s32.f32 %v1609
        %v1617 = vmul.f32 %v1616, %v1614
        %v1618 = vxor.u32 %v1617, 2147483648
        %v1619 = vsel %vm1536, %v1618, %v1617
        %v1620 = vsub.s32 4, %v1596
        %v1621 = vsel %vm1536, %v1620, %v1596
        %v1622 = vsel %vm1535, %v379, %v1619
        %v1623 = vsel %vm1535, 0, %v1621
        %v1624 = vcosq.f32.pop %v1622
        %v1625 = vsinq.f32.pop %v1622
        %vm1626 = vweird.f32 %v379
        %v1627 = vadd.s32 %v1623, 3
        %v1628 = vand.u32 %v1627, 3
        %vm1629 = vcmp.lt.s32.totalorder %v1628, 2
        %vm1630 = vcmp.eq.s32.totalorder %v1628, 0
        %v1631 = vxor.u32 %v1625, 2147483648
        %v1632 = vsel %vm1630, %v1624, %v1631
        %vm1633 = vcmp.eq.s32.totalorder %v1628, 2
        %v1634 = vxor.u32 %v1624, 2147483648
        %v1635 = vsel %vm1633, %v1634, %v1625
        %v1636 = vsel %vm1629, %v1632, %v1635
        %v1637 = vsel %vm1626, nan, %v1636
        %v1638 = vand.u32 2147483647, %v380
        %vm1639 = vcmp.le.f32.partialorder %v1638, 0.7853982
        %vm1640 = vcmp.lt.s32.totalorder %v380, 0
        %v1641 = vand.u32 %v380, 2139095040
        %v1642 = vshrl.u32 %v1641, 23
        %v1643 = vsub.s32 %v1642, 127
        %v1644 = vand.u32 2147483647, %v380
        %v1645 = vand.u32 %v1644, 8388607
        %v1646 = vor.u32 %v1645, 8388608
        %v1647 = vsub.s32 0, %v1646
        %v1648 = vadd.s32 %v1643, 1
        %vm1649 = vcmp.gt.s32.totalorder %v1648, 0
        %v1650 = vsel %vm1649, %v1648, 0
        %v1651 = vshrl.u32 %v1650, 5
        %v1652 = vand.u32 %v1650, 31
        %v1653 = vsub.s32 32, %v1652
        %v1654 = vshrl.u32 683565275, %v1653
        %v1655 = vshll.u32 683565275, %v1652
        %v1656 = vshrl.u32 2475754826, %v1653
        %v1657 = vor.u32 %v1655, %v1656
        %v1658 = vshll.u32 2475754826, %v1652
        %v1659 = vshrl.u32 2131351028, %v1653
        %v1660 = vor.u32 %v1658, %v1659
        %v1661 = vshll.u32 2131351028, %v1652
        %v1662 = vshrl.u32 2102212464, %v1653
        %v1663 = vor.u32 %v1661, %v1662
        %v1664 = vshll.u32 2102212464, %v1652
        %v1665 = vshrl.u32 920167782, %v1653
        %v1666 = vor.u32 %v1664, %v1665
        %v1667 = vshll.u32 920167782, %v1652
        %v1668 = vshrl.u32 1326507024, %v1653
        %v1669 = vor.u32 %v1667, %v1668
        %vm1670 = vcmp.lt.s32.totalorder %v1651, 1
        %vm1671 = vcmp.lt.s32.totalorder %v1651, 2
        %vm1672 = vcmp.lt.s32.totalorder %v1651, 3
        %vm1673 = vcmp.lt.s32.totalorder %v1651, 4
        %v1674 = vsel %vm1670, %v1654, %v1657
        %v1675 = vsel %vm1673, %v1663, 2102212464
        %v1676 = vsel %vm1672, %v1660, %v1675
        %v1677 = vsel %vm1671, %v1674, %v1676
        %v1678 = vsel %vm1670, %v1657, %v1660
        %v1679 = vsel %vm1673, %v1666, 920167782
        %v1680 = vsel %vm1672, %v1663, %v1679
        %v1681 = vsel %vm1671, %v1678, %v1680
        %v1682 = vsel %vm1670, %v1660, %v1663
        %v1683 = vsel %vm1673, %v1669, 1326507024
        %v1684 = vsel %vm1672, %v1666, %v1683
        %v1685 = vsel %vm1671, %v1682, %v1684
        %v1686 = vshll.u32 %v1646, 8
        %v1687 = vmul.u32.u64.compose %v1686, %v1685
        %v1688 = vextract.low.u32 %v1687
        %v1689 = vextract.high.u32 %v1687
        %v1690 = vmul.u32.u64.compose %v1686, %v1681
        %v1691 = vextract.low.u32 %v1690
        %v1692 = vextract.high.u32 %v1690
        %v1693 = vmul.u32 %v1686, %v1677
        %v1694 = vadd.s32 %v1689, %v1691
        %vm1695 = vc.u32 %v1689, %v1691
        %v1696 = vadd.s32 %v1692, 1
        %v1697 = vsel %vm1695, %v1696, %v1692
        %v1698 = vadd.s32 %v1693, %v1697
        %v1699 = vadd.s32 %v1698, 536870912
        %v1700 = vshrl.u32 %v1699, 30
        %v1701 = vshll.u32 %v1700, 30
        %v1702 = vsub.s32 %v1698, %v1701
        %vm1703 = vcmp.lt.s32.totalorder %v1702, 0
        %v1704 = vsub.s32 0, %v1702
        %v1705 = vsel %vm1703, %v1704, %v1702
        %v1706 = vclz %v1705
        %v1707 = vsub.s32 %v1706, 2
        %vm1708 = vcmp.gt.s32.totalorder 0, %v1707
        %v1709 = vsel %vm1708, 0, %v1707
        %v1710 = vsub.s32 32, %v1709
        %v1711 = vshll.u32 %v1702, %v1709
        %v1712 = vshrl.u32 %v1694, %v1710
        %v1713 = vor.u32 %v1711, %v1712
        %v1714 = vsub.s32 4294967266, %v1709
        %v1715 = vadd.s32 %v1714, 127
        %v1716 = vshll.u32 %v1715, 23
        %v1717 = vor.u32 4788187, %v1716
        %v1718 = vand.u32 2147483647, %v1717
        %v1720 = vcvt.s32.f32 %v1713
        %v1721 = vmul.f32 %v1720, %v1718
        %v1722 = vxor.u32 %v1721, 2147483648
        %v1723 = vsel %vm1640, %v1722, %v1721
        %v1724 = vsub.s32 4, %v1700
        %v1725 = vsel %vm1640, %v1724, %v1700
        %v1726 = vsel %vm1639, %v380, %v1723
        %v1727 = vsel %vm1639, 0, %v1725
        %v1728 = vcosq.f32.pop %v1726
        %v1729 = vsinq.f32.pop %v1726
        %vm1730 = vweird.f32 %v380
        %v1731 = vadd.s32 %v1727, 3
        %v1732 = vand.u32 %v1731, 3
        %vm1733 = vcmp.lt.s32.totalorder %v1732, 2
        %vm1734 = vcmp.eq.s32.totalorder %v1732, 0
        %v1735 = vxor.u32 %v1729, 2147483648
        %v1736 = vsel %vm1734, %v1728, %v1735
        %vm1737 = vcmp.eq.s32.totalorder %v1732, 2
        %v1738 = vxor.u32 %v1728, 2147483648
        %v1739 = vsel %vm1737, %v1738, %v1729
        %v1740 = vsel %vm1733, %v1736, %v1739
        %v1741 = vsel %vm1730, nan, %v1740
        %v1742 = vand.u32 2147483647, %v381
        %vm1743 = vcmp.le.f32.partialorder %v1742, 0.7853982
        %vm1744 = vcmp.lt.s32.totalorder %v381, 0
        %v1745 = vand.u32 %v381, 2139095040
        %v1746 = vshrl.u32 %v1745, 23
        %v1747 = vsub.s32 %v1746, 127
        %v1748 = vand.u32 2147483647, %v381
        %v1749 = vand.u32 %v1748, 8388607
        %v1750 = vor.u32 %v1749, 8388608
        %v1751 = vsub.s32 0, %v1750
        %v1752 = vadd.s32 %v1747, 1
        %vm1753 = vcmp.gt.s32.totalorder %v1752, 0
        %v1754 = vsel %vm1753, %v1752, 0
        %v1755 = vshrl.u32 %v1754, 5
        %v1756 = vand.u32 %v1754, 31
        %v1757 = vsub.s32 32, %v1756
        %v1758 = vshrl.u32 683565275, %v1757
        %v1759 = vshll.u32 683565275, %v1756
        %v1760 = vshrl.u32 2475754826, %v1757
        %v1761 = vor.u32 %v1759, %v1760
        %v1762 = vshll.u32 2475754826, %v1756
        %v1763 = vshrl.u32 2131351028, %v1757
        %v1764 = vor.u32 %v1762, %v1763
        %v1765 = vshll.u32 2131351028, %v1756
        %v1766 = vshrl.u32 2102212464, %v1757
        %v1767 = vor.u32 %v1765, %v1766
        %v1768 = vshll.u32 2102212464, %v1756
        %v1769 = vshrl.u32 920167782, %v1757
        %v1770 = vor.u32 %v1768, %v1769
        %v1771 = vshll.u32 920167782, %v1756
        %v1772 = vshrl.u32 1326507024, %v1757
        %v1773 = vor.u32 %v1771, %v1772
        %vm1774 = vcmp.lt.s32.totalorder %v1755, 1
        %vm1775 = vcmp.lt.s32.totalorder %v1755, 2
        %vm1776 = vcmp.lt.s32.totalorder %v1755, 3
        %vm1777 = vcmp.lt.s32.totalorder %v1755, 4
        %v1778 = vsel %vm1774, %v1758, %v1761
        %v1779 = vsel %vm1777, %v1767, 2102212464
        %v1780 = vsel %vm1776, %v1764, %v1779
        %v1781 = vsel %vm1775, %v1778, %v1780
        %v1782 = vsel %vm1774, %v1761, %v1764
        %v1783 = vsel %vm1777, %v1770, 920167782
        %v1784 = vsel %vm1776, %v1767, %v1783
        %v1785 = vsel %vm1775, %v1782, %v1784
        %v1786 = vsel %vm1774, %v1764, %v1767
        %v1787 = vsel %vm1777, %v1773, 1326507024
        %v1788 = vsel %vm1776, %v1770, %v1787
        %v1789 = vsel %vm1775, %v1786, %v1788
        %v1790 = vshll.u32 %v1750, 8
        %v1791 = vmul.u32.u64.compose %v1790, %v1789
        %v1792 = vextract.low.u32 %v1791
        %v1793 = vextract.high.u32 %v1791
        %v1794 = vmul.u32.u64.compose %v1790, %v1785
        %v1795 = vextract.low.u32 %v1794
        %v1796 = vextract.high.u32 %v1794
        %v1797 = vmul.u32 %v1790, %v1781
        %v1798 = vadd.s32 %v1793, %v1795
        %vm1799 = vc.u32 %v1793, %v1795
        %v1800 = vadd.s32 %v1796, 1
        %v1801 = vsel %vm1799, %v1800, %v1796
        %v1802 = vadd.s32 %v1797, %v1801
        %v1803 = vadd.s32 %v1802, 536870912
        %v1804 = vshrl.u32 %v1803, 30
        %v1805 = vshll.u32 %v1804, 30
        %v1806 = vsub.s32 %v1802, %v1805
        %vm1807 = vcmp.lt.s32.totalorder %v1806, 0
        %v1808 = vsub.s32 0, %v1806
        %v1809 = vsel %vm1807, %v1808, %v1806
        %v1810 = vclz %v1809
        %v1811 = vsub.s32 %v1810, 2
        %vm1812 = vcmp.gt.s32.totalorder 0, %v1811
        %v1813 = vsel %vm1812, 0, %v1811
        %v1814 = vsub.s32 32, %v1813
        %v1815 = vshll.u32 %v1806, %v1813
        %v1816 = vshrl.u32 %v1798, %v1814
        %v1817 = vor.u32 %v1815, %v1816
        %v1818 = vsub.s32 4294967266, %v1813
        %v1819 = vadd.s32 %v1818, 127
        %v1820 = vshll.u32 %v1819, 23
        %v1821 = vor.u32 4788187, %v1820
        %v1822 = vand.u32 2147483647, %v1821
        %v1824 = vcvt.s32.f32 %v1817
        %v1825 = vmul.f32 %v1824, %v1822
        %v1826 = vxor.u32 %v1825, 2147483648
        %v1827 = vsel %vm1744, %v1826, %v1825
        %v1828 = vsub.s32 4, %v1804
        %v1829 = vsel %vm1744, %v1828, %v1804
        %v1830 = vsel %vm1743, %v381, %v1827
        %v1831 = vsel %vm1743, 0, %v1829
        %v1832 = vcosq.f32.pop %v1830
        %v1833 = vsinq.f32.pop %v1830
        %vm1834 = vweird.f32 %v381
        %v1835 = vadd.s32 %v1831, 3
        %v1836 = vand.u32 %v1835, 3
        %vm1837 = vcmp.lt.s32.totalorder %v1836, 2
        %vm1838 = vcmp.eq.s32.totalorder %v1836, 0
        %v1839 = vxor.u32 %v1833, 2147483648
        %v1840 = vsel %vm1838, %v1832, %v1839
        %vm1841 = vcmp.eq.s32.totalorder %v1836, 2
        %v1842 = vxor.u32 %v1832, 2147483648
        %v1843 = vsel %vm1841, %v1842, %v1833
        %v1844 = vsel %vm1837, %v1840, %v1843
        %v1845 = vsel %vm1834, nan, %v1844
        %v1846 = vand.u32 2147483647, %v382
        %vm1847 = vcmp.le.f32.partialorder %v1846, 0.7853982
        %vm1848 = vcmp.lt.s32.totalorder %v382, 0
        %v1849 = vand.u32 %v382, 2139095040
        %v1850 = vshrl.u32 %v1849, 23
        %v1851 = vsub.s32 %v1850, 127
        %v1852 = vand.u32 2147483647, %v382
        %v1853 = vand.u32 %v1852, 8388607
        %v1854 = vor.u32 %v1853, 8388608
        %v1855 = vsub.s32 0, %v1854
        %v1856 = vadd.s32 %v1851, 1
        %vm1857 = vcmp.gt.s32.totalorder %v1856, 0
        %v1858 = vsel %vm1857, %v1856, 0
        %v1859 = vshrl.u32 %v1858, 5
        %v1860 = vand.u32 %v1858, 31
        %v1861 = vsub.s32 32, %v1860
        %v1862 = vshrl.u32 683565275, %v1861
        %v1863 = vshll.u32 683565275, %v1860
        %v1864 = vshrl.u32 2475754826, %v1861
        %v1865 = vor.u32 %v1863, %v1864
        %v1866 = vshll.u32 2475754826, %v1860
        %v1867 = vshrl.u32 2131351028, %v1861
        %v1868 = vor.u32 %v1866, %v1867
        %v1869 = vshll.u32 2131351028, %v1860
        %v1870 = vshrl.u32 2102212464, %v1861
        %v1871 = vor.u32 %v1869, %v1870
        %v1872 = vshll.u32 2102212464, %v1860
        %v1873 = vshrl.u32 920167782, %v1861
        %v1874 = vor.u32 %v1872, %v1873
        %v1875 = vshll.u32 920167782, %v1860
        %v1876 = vshrl.u32 1326507024, %v1861
        %v1877 = vor.u32 %v1875, %v1876
        %vm1878 = vcmp.lt.s32.totalorder %v1859, 1
        %vm1879 = vcmp.lt.s32.totalorder %v1859, 2
        %vm1880 = vcmp.lt.s32.totalorder %v1859, 3
        %vm1881 = vcmp.lt.s32.totalorder %v1859, 4
        %v1882 = vsel %vm1878, %v1862, %v1865
        %v1883 = vsel %vm1881, %v1871, 2102212464
        %v1884 = vsel %vm1880, %v1868, %v1883
        %v1885 = vsel %vm1879, %v1882, %v1884
        %v1886 = vsel %vm1878, %v1865, %v1868
        %v1887 = vsel %vm1881, %v1874, 920167782
        %v1888 = vsel %vm1880, %v1871, %v1887
        %v1889 = vsel %vm1879, %v1886, %v1888
        %v1890 = vsel %vm1878, %v1868, %v1871
        %v1891 = vsel %vm1881, %v1877, 1326507024
        %v1892 = vsel %vm1880, %v1874, %v1891
        %v1893 = vsel %vm1879, %v1890, %v1892
        %v1894 = vshll.u32 %v1854, 8
        %v1895 = vmul.u32.u64.compose %v1894, %v1893
        %v1896 = vextract.low.u32 %v1895
        %v1897 = vextract.high.u32 %v1895
        %v1898 = vmul.u32.u64.compose %v1894, %v1889
        %v1899 = vextract.low.u32 %v1898
        %v1900 = vextract.high.u32 %v1898
        %v1901 = vmul.u32 %v1894, %v1885
        %v1902 = vadd.s32 %v1897, %v1899
        %vm1903 = vc.u32 %v1897, %v1899
        %v1904 = vadd.s32 %v1900, 1
        %v1905 = vsel %vm1903, %v1904, %v1900
        %v1906 = vadd.s32 %v1901, %v1905
        %v1907 = vadd.s32 %v1906, 536870912
        %v1908 = vshrl.u32 %v1907, 30
        %v1909 = vshll.u32 %v1908, 30
        %v1910 = vsub.s32 %v1906, %v1909
        %vm1911 = vcmp.lt.s32.totalorder %v1910, 0
        %v1912 = vsub.s32 0, %v1910
        %v1913 = vsel %vm1911, %v1912, %v1910
        %v1914 = vclz %v1913
        %v1915 = vsub.s32 %v1914, 2
        %vm1916 = vcmp.gt.s32.totalorder 0, %v1915
        %v1917 = vsel %vm1916, 0, %v1915
        %v1918 = vsub.s32 32, %v1917
        %v1919 = vshll.u32 %v1910, %v1917
        %v1920 = vshrl.u32 %v1902, %v1918
        %v1921 = vor.u32 %v1919, %v1920
        %v1922 = vsub.s32 4294967266, %v1917
        %v1923 = vadd.s32 %v1922, 127
        %v1924 = vshll.u32 %v1923, 23
        %v1925 = vor.u32 4788187, %v1924
        %v1926 = vand.u32 2147483647, %v1925
        %v1928 = vcvt.s32.f32 %v1921
        %v1929 = vmul.f32 %v1928, %v1926
        %v1930 = vxor.u32 %v1929, 2147483648
        %v1931 = vsel %vm1848, %v1930, %v1929
        %v1932 = vsub.s32 4, %v1908
        %v1933 = vsel %vm1848, %v1932, %v1908
        %v1934 = vsel %vm1847, %v382, %v1931
        %v1935 = vsel %vm1847, 0, %v1933
        %v1936 = vcosq.f32.pop %v1934
        %v1937 = vsinq.f32.pop %v1934
        %vm1938 = vweird.f32 %v382
        %v1939 = vadd.s32 %v1935, 3
        %v1940 = vand.u32 %v1939, 3
        %vm1941 = vcmp.lt.s32.totalorder %v1940, 2
        %vm1942 = vcmp.eq.s32.totalorder %v1940, 0
        %v1943 = vxor.u32 %v1937, 2147483648
        %v1944 = vsel %vm1942, %v1936, %v1943
        %vm1945 = vcmp.eq.s32.totalorder %v1940, 2
        %v1946 = vxor.u32 %v1936, 2147483648
        %v1947 = vsel %vm1945, %v1946, %v1937
        %v1948 = vsel %vm1941, %v1944, %v1947
        %v1949 = vsel %vm1938, nan, %v1948
        %v1950 = vand.u32 2147483647, %v383
        %vm1951 = vcmp.le.f32.partialorder %v1950, 0.7853982
        %vm1952 = vcmp.lt.s32.totalorder %v383, 0
        %v1953 = vand.u32 %v383, 2139095040
        %v1954 = vshrl.u32 %v1953, 23
        %v1955 = vsub.s32 %v1954, 127
        %v1956 = vand.u32 2147483647, %v383
        %v1957 = vand.u32 %v1956, 8388607
        %v1958 = vor.u32 %v1957, 8388608
        %v1959 = vsub.s32 0, %v1958
        %v1960 = vadd.s32 %v1955, 1
        %vm1961 = vcmp.gt.s32.totalorder %v1960, 0
        %v1962 = vsel %vm1961, %v1960, 0
        %v1963 = vshrl.u32 %v1962, 5
        %v1964 = vand.u32 %v1962, 31
        %v1965 = vsub.s32 32, %v1964
        %v1966 = vshrl.u32 683565275, %v1965
        %v1967 = vshll.u32 683565275, %v1964
        %v1968 = vshrl.u32 2475754826, %v1965
        %v1969 = vor.u32 %v1967, %v1968
        %v1970 = vshll.u32 2475754826, %v1964
        %v1971 = vshrl.u32 2131351028, %v1965
        %v1972 = vor.u32 %v1970, %v1971
        %v1973 = vshll.u32 2131351028, %v1964
        %v1974 = vshrl.u32 2102212464, %v1965
        %v1975 = vor.u32 %v1973, %v1974
        %v1976 = vshll.u32 2102212464, %v1964
        %v1977 = vshrl.u32 920167782, %v1965
        %v1978 = vor.u32 %v1976, %v1977
        %v1979 = vshll.u32 920167782, %v1964
        %v1980 = vshrl.u32 1326507024, %v1965
        %v1981 = vor.u32 %v1979, %v1980
        %vm1982 = vcmp.lt.s32.totalorder %v1963, 1
        %vm1983 = vcmp.lt.s32.totalorder %v1963, 2
        %vm1984 = vcmp.lt.s32.totalorder %v1963, 3
        %vm1985 = vcmp.lt.s32.totalorder %v1963, 4
        %v1986 = vsel %vm1982, %v1966, %v1969
        %v1987 = vsel %vm1985, %v1975, 2102212464
        %v1988 = vsel %vm1984, %v1972, %v1987
        %v1989 = vsel %vm1983, %v1986, %v1988
        %v1990 = vsel %vm1982, %v1969, %v1972
        %v1991 = vsel %vm1985, %v1978, 920167782
        %v1992 = vsel %vm1984, %v1975, %v1991
        %v1993 = vsel %vm1983, %v1990, %v1992
        %v1994 = vsel %vm1982, %v1972, %v1975
        %v1995 = vsel %vm1985, %v1981, 1326507024
        %v1996 = vsel %vm1984, %v1978, %v1995
        %v1997 = vsel %vm1983, %v1994, %v1996
        %v1998 = vshll.u32 %v1958, 8
        %v1999 = vmul.u32.u64.compose %v1998, %v1997
        %v2000 = vextract.low.u32 %v1999
        %v2001 = vextract.high.u32 %v1999
        %v2002 = vmul.u32.u64.compose %v1998, %v1993
        %v2003 = vextract.low.u32 %v2002
        %v2004 = vextract.high.u32 %v2002
        %v2005 = vmul.u32 %v1998, %v1989
        %v2006 = vadd.s32 %v2001, %v2003
        %vm2007 = vc.u32 %v2001, %v2003
        %v2008 = vadd.s32 %v2004, 1
        %v2009 = vsel %vm2007, %v2008, %v2004
        %v2010 = vadd.s32 %v2005, %v2009
        %v2011 = vadd.s32 %v2010, 536870912
        %v2012 = vshrl.u32 %v2011, 30
        %v2013 = vshll.u32 %v2012, 30
        %v2014 = vsub.s32 %v2010, %v2013
        %vm2015 = vcmp.lt.s32.totalorder %v2014, 0
        %v2016 = vsub.s32 0, %v2014
        %v2017 = vsel %vm2015, %v2016, %v2014
        %v2018 = vclz %v2017
        %v2019 = vsub.s32 %v2018, 2
        %vm2020 = vcmp.gt.s32.totalorder 0, %v2019
        %v2021 = vsel %vm2020, 0, %v2019
        %v2022 = vsub.s32 32, %v2021
        %v2023 = vshll.u32 %v2014, %v2021
        %v2024 = vshrl.u32 %v2006, %v2022
        %v2025 = vor.u32 %v2023, %v2024
        %v2026 = vsub.s32 4294967266, %v2021
        %v2027 = vadd.s32 %v2026, 127
        %v2028 = vshll.u32 %v2027, 23
        %v2029 = vor.u32 4788187, %v2028
        %v2030 = vand.u32 2147483647, %v2029
        %v2032 = vcvt.s32.f32 %v2025
        %v2033 = vmul.f32 %v2032, %v2030
        %v2034 = vxor.u32 %v2033, 2147483648
        %v2035 = vsel %vm1952, %v2034, %v2033
        %v2036 = vsub.s32 4, %v2012
        %v2037 = vsel %vm1952, %v2036, %v2012
        %v2038 = vsel %vm1951, %v383, %v2035
        %v2039 = vsel %vm1951, 0, %v2037
        %v2040 = vcosq.f32.pop %v2038
        %v2041 = vsinq.f32.pop %v2038
        %vm2042 = vweird.f32 %v383
        %v2043 = vadd.s32 %v2039, 3
        %v2044 = vand.u32 %v2043, 3
        %vm2045 = vcmp.lt.s32.totalorder %v2044, 2
        %vm2046 = vcmp.eq.s32.totalorder %v2044, 0
        %v2047 = vxor.u32 %v2041, 2147483648
        %v2048 = vsel %vm2046, %v2040, %v2047
        %vm2049 = vcmp.eq.s32.totalorder %v2044, 2
        %v2050 = vxor.u32 %v2040, 2147483648
        %v2051 = vsel %vm2049, %v2050, %v2041
        %v2052 = vsel %vm2045, %v2048, %v2051
        %v2053 = vsel %vm2042, nan, %v2052
        %v2054 = vand.u32 2147483647, %v384
        %vm2055 = vcmp.le.f32.partialorder %v2054, 0.7853982
        %vm2056 = vcmp.lt.s32.totalorder %v384, 0
        %v2057 = vand.u32 %v384, 2139095040
        %v2058 = vshrl.u32 %v2057, 23
        %v2059 = vsub.s32 %v2058, 127
        %v2060 = vand.u32 2147483647, %v384
        %v2061 = vand.u32 %v2060, 8388607
        %v2062 = vor.u32 %v2061, 8388608
        %v2063 = vsub.s32 0, %v2062
        %v2064 = vadd.s32 %v2059, 1
        %vm2065 = vcmp.gt.s32.totalorder %v2064, 0
        %v2066 = vsel %vm2065, %v2064, 0
        %v2067 = vshrl.u32 %v2066, 5
        %v2068 = vand.u32 %v2066, 31
        %v2069 = vsub.s32 32, %v2068
        %v2070 = vshrl.u32 683565275, %v2069
        %v2071 = vshll.u32 683565275, %v2068
        %v2072 = vshrl.u32 2475754826, %v2069
        %v2073 = vor.u32 %v2071, %v2072
        %v2074 = vshll.u32 2475754826, %v2068
        %v2075 = vshrl.u32 2131351028, %v2069
        %v2076 = vor.u32 %v2074, %v2075
        %v2077 = vshll.u32 2131351028, %v2068
        %v2078 = vshrl.u32 2102212464, %v2069
        %v2079 = vor.u32 %v2077, %v2078
        %v2080 = vshll.u32 2102212464, %v2068
        %v2081 = vshrl.u32 920167782, %v2069
        %v2082 = vor.u32 %v2080, %v2081
        %v2083 = vshll.u32 920167782, %v2068
        %v2084 = vshrl.u32 1326507024, %v2069
        %v2085 = vor.u32 %v2083, %v2084
        %vm2086 = vcmp.lt.s32.totalorder %v2067, 1
        %vm2087 = vcmp.lt.s32.totalorder %v2067, 2
        %vm2088 = vcmp.lt.s32.totalorder %v2067, 3
        %vm2089 = vcmp.lt.s32.totalorder %v2067, 4
        %v2090 = vsel %vm2086, %v2070, %v2073
        %v2091 = vsel %vm2089, %v2079, 2102212464
        %v2092 = vsel %vm2088, %v2076, %v2091
        %v2093 = vsel %vm2087, %v2090, %v2092
        %v2094 = vsel %vm2086, %v2073, %v2076
        %v2095 = vsel %vm2089, %v2082, 920167782
        %v2096 = vsel %vm2088, %v2079, %v2095
        %v2097 = vsel %vm2087, %v2094, %v2096
        %v2098 = vsel %vm2086, %v2076, %v2079
        %v2099 = vsel %vm2089, %v2085, 1326507024
        %v2100 = vsel %vm2088, %v2082, %v2099
        %v2101 = vsel %vm2087, %v2098, %v2100
        %v2102 = vshll.u32 %v2062, 8
        %v2103 = vmul.u32.u64.compose %v2102, %v2101
        %v2104 = vextract.low.u32 %v2103
        %v2105 = vextract.high.u32 %v2103
        %v2106 = vmul.u32.u64.compose %v2102, %v2097
        %v2107 = vextract.low.u32 %v2106
        %v2108 = vextract.high.u32 %v2106
        %v2109 = vmul.u32 %v2102, %v2093
        %v2110 = vadd.s32 %v2105, %v2107
        %vm2111 = vc.u32 %v2105, %v2107
        %v2112 = vadd.s32 %v2108, 1
        %v2113 = vsel %vm2111, %v2112, %v2108
        %v2114 = vadd.s32 %v2109, %v2113
        %v2115 = vadd.s32 %v2114, 536870912
        %v2116 = vshrl.u32 %v2115, 30
        %v2117 = vshll.u32 %v2116, 30
        %v2118 = vsub.s32 %v2114, %v2117
        %vm2119 = vcmp.lt.s32.totalorder %v2118, 0
        %v2120 = vsub.s32 0, %v2118
        %v2121 = vsel %vm2119, %v2120, %v2118
        %v2122 = vclz %v2121
        %v2123 = vsub.s32 %v2122, 2
        %vm2124 = vcmp.gt.s32.totalorder 0, %v2123
        %v2125 = vsel %vm2124, 0, %v2123
        %v2126 = vsub.s32 32, %v2125
        %v2127 = vshll.u32 %v2118, %v2125
        %v2128 = vshrl.u32 %v2110, %v2126
        %v2129 = vor.u32 %v2127, %v2128
        %v2130 = vsub.s32 4294967266, %v2125
        %v2131 = vadd.s32 %v2130, 127
        %v2132 = vshll.u32 %v2131, 23
        %v2133 = vor.u32 4788187, %v2132
        %v2134 = vand.u32 2147483647, %v2133
        %v2136 = vcvt.s32.f32 %v2129
        %v2137 = vmul.f32 %v2136, %v2134
        %v2138 = vxor.u32 %v2137, 2147483648
        %v2139 = vsel %vm2056, %v2138, %v2137
        %v2140 = vsub.s32 4, %v2116
        %v2141 = vsel %vm2056, %v2140, %v2116
        %v2142 = vsel %vm2055, %v384, %v2139
        %v2143 = vsel %vm2055, 0, %v2141
        %v2144 = vcosq.f32.pop %v2142
        %v2145 = vsinq.f32.pop %v2142
        %vm2146 = vweird.f32 %v384
        %v2147 = vadd.s32 %v2143, 3
        %v2148 = vand.u32 %v2147, 3
        %vm2149 = vcmp.lt.s32.totalorder %v2148, 2
        %vm2150 = vcmp.eq.s32.totalorder %v2148, 0
        %v2151 = vxor.u32 %v2145, 2147483648
        %v2152 = vsel %vm2150, %v2144, %v2151
        %vm2153 = vcmp.eq.s32.totalorder %v2148, 2
        %v2154 = vxor.u32 %v2144, 2147483648
        %v2155 = vsel %vm2153, %v2154, %v2145
        %v2156 = vsel %vm2149, %v2152, %v2155
        %v2157 = vsel %vm2146, nan, %v2156
        %v2158 = vand.u32 2147483647, %v385
        %vm2159 = vcmp.le.f32.partialorder %v2158, 0.7853982
        %vm2160 = vcmp.lt.s32.totalorder %v385, 0
        %v2161 = vand.u32 %v385, 2139095040
        %v2162 = vshrl.u32 %v2161, 23
        %v2163 = vsub.s32 %v2162, 127
        %v2164 = vand.u32 2147483647, %v385
        %v2165 = vand.u32 %v2164, 8388607
        %v2166 = vor.u32 %v2165, 8388608
        %v2167 = vsub.s32 0, %v2166
        %v2168 = vadd.s32 %v2163, 1
        %vm2169 = vcmp.gt.s32.totalorder %v2168, 0
        %v2170 = vsel %vm2169, %v2168, 0
        %v2171 = vshrl.u32 %v2170, 5
        %v2172 = vand.u32 %v2170, 31
        %v2173 = vsub.s32 32, %v2172
        %v2174 = vshrl.u32 683565275, %v2173
        %v2175 = vshll.u32 683565275, %v2172
        %v2176 = vshrl.u32 2475754826, %v2173
        %v2177 = vor.u32 %v2175, %v2176
        %v2178 = vshll.u32 2475754826, %v2172
        %v2179 = vshrl.u32 2131351028, %v2173
        %v2180 = vor.u32 %v2178, %v2179
        %v2181 = vshll.u32 2131351028, %v2172
        %v2182 = vshrl.u32 2102212464, %v2173
        %v2183 = vor.u32 %v2181, %v2182
        %v2184 = vshll.u32 2102212464, %v2172
        %v2185 = vshrl.u32 920167782, %v2173
        %v2186 = vor.u32 %v2184, %v2185
        %v2187 = vshll.u32 920167782, %v2172
        %v2188 = vshrl.u32 1326507024, %v2173
        %v2189 = vor.u32 %v2187, %v2188
        %vm2190 = vcmp.lt.s32.totalorder %v2171, 1
        %vm2191 = vcmp.lt.s32.totalorder %v2171, 2
        %vm2192 = vcmp.lt.s32.totalorder %v2171, 3
        %vm2193 = vcmp.lt.s32.totalorder %v2171, 4
        %v2194 = vsel %vm2190, %v2174, %v2177
        %v2195 = vsel %vm2193, %v2183, 2102212464
        %v2196 = vsel %vm2192, %v2180, %v2195
        %v2197 = vsel %vm2191, %v2194, %v2196
        %v2198 = vsel %vm2190, %v2177, %v2180
        %v2199 = vsel %vm2193, %v2186, 920167782
        %v2200 = vsel %vm2192, %v2183, %v2199
        %v2201 = vsel %vm2191, %v2198, %v2200
        %v2202 = vsel %vm2190, %v2180, %v2183
        %v2203 = vsel %vm2193, %v2189, 1326507024
        %v2204 = vsel %vm2192, %v2186, %v2203
        %v2205 = vsel %vm2191, %v2202, %v2204
        %v2206 = vshll.u32 %v2166, 8
        %v2207 = vmul.u32.u64.compose %v2206, %v2205
        %v2208 = vextract.low.u32 %v2207
        %v2209 = vextract.high.u32 %v2207
        %v2210 = vmul.u32.u64.compose %v2206, %v2201
        %v2211 = vextract.low.u32 %v2210
        %v2212 = vextract.high.u32 %v2210
        %v2213 = vmul.u32 %v2206, %v2197
        %v2214 = vadd.s32 %v2209, %v2211
        %vm2215 = vc.u32 %v2209, %v2211
        %v2216 = vadd.s32 %v2212, 1
        %v2217 = vsel %vm2215, %v2216, %v2212
        %v2218 = vadd.s32 %v2213, %v2217
        %v2219 = vadd.s32 %v2218, 536870912
        %v2220 = vshrl.u32 %v2219, 30
        %v2221 = vshll.u32 %v2220, 30
        %v2222 = vsub.s32 %v2218, %v2221
        %vm2223 = vcmp.lt.s32.totalorder %v2222, 0
        %v2224 = vsub.s32 0, %v2222
        %v2225 = vsel %vm2223, %v2224, %v2222
        %v2226 = vclz %v2225
        %v2227 = vsub.s32 %v2226, 2
        %vm2228 = vcmp.gt.s32.totalorder 0, %v2227
        %v2229 = vsel %vm2228, 0, %v2227
        %v2230 = vsub.s32 32, %v2229
        %v2231 = vshll.u32 %v2222, %v2229
        %v2232 = vshrl.u32 %v2214, %v2230
        %v2233 = vor.u32 %v2231, %v2232
        %v2234 = vsub.s32 4294967266, %v2229
        %v2235 = vadd.s32 %v2234, 127
        %v2236 = vshll.u32 %v2235, 23
        %v2237 = vor.u32 4788187, %v2236
        %v2238 = vand.u32 2147483647, %v2237
        %v2240 = vcvt.s32.f32 %v2233
        %v2241 = vmul.f32 %v2240, %v2238
        %v2242 = vxor.u32 %v2241, 2147483648
        %v2243 = vsel %vm2160, %v2242, %v2241
        %v2244 = vsub.s32 4, %v2220
        %v2245 = vsel %vm2160, %v2244, %v2220
        %v2246 = vsel %vm2159, %v385, %v2243
        %v2247 = vsel %vm2159, 0, %v2245
        %v2248 = vcosq.f32.pop %v2246
        %v2249 = vsinq.f32.pop %v2246
        %vm2250 = vweird.f32 %v385
        %v2251 = vadd.s32 %v2247, 3
        %v2252 = vand.u32 %v2251, 3
        %vm2253 = vcmp.lt.s32.totalorder %v2252, 2
        %vm2254 = vcmp.eq.s32.totalorder %v2252, 0
        %v2255 = vxor.u32 %v2249, 2147483648
        %v2256 = vsel %vm2254, %v2248, %v2255
        %vm2257 = vcmp.eq.s32.totalorder %v2252, 2
        %v2258 = vxor.u32 %v2248, 2147483648
        %v2259 = vsel %vm2257, %v2258, %v2249
        %v2260 = vsel %vm2253, %v2256, %v2259
        %v2261 = vsel %vm2250, nan, %v2260
        %v2262 = vand.u32 2147483647, %v386
        %vm2263 = vcmp.le.f32.partialorder %v2262, 0.7853982
        %vm2264 = vcmp.lt.s32.totalorder %v386, 0
        %v2265 = vand.u32 %v386, 2139095040
        %v2266 = vshrl.u32 %v2265, 23
        %v2267 = vsub.s32 %v2266, 127
        %v2268 = vand.u32 2147483647, %v386
        %v2269 = vand.u32 %v2268, 8388607
        %v2270 = vor.u32 %v2269, 8388608
        %v2271 = vsub.s32 0, %v2270
        %v2272 = vadd.s32 %v2267, 1
        %vm2273 = vcmp.gt.s32.totalorder %v2272, 0
        %v2274 = vsel %vm2273, %v2272, 0
        %v2275 = vshrl.u32 %v2274, 5
        %v2276 = vand.u32 %v2274, 31
        %v2277 = vsub.s32 32, %v2276
        %v2278 = vshrl.u32 683565275, %v2277
        %v2279 = vshll.u32 683565275, %v2276
        %v2280 = vshrl.u32 2475754826, %v2277
        %v2281 = vor.u32 %v2279, %v2280
        %v2282 = vshll.u32 2475754826, %v2276
        %v2283 = vshrl.u32 2131351028, %v2277
        %v2284 = vor.u32 %v2282, %v2283
        %v2285 = vshll.u32 2131351028, %v2276
        %v2286 = vshrl.u32 2102212464, %v2277
        %v2287 = vor.u32 %v2285, %v2286
        %v2288 = vshll.u32 2102212464, %v2276
        %v2289 = vshrl.u32 920167782, %v2277
        %v2290 = vor.u32 %v2288, %v2289
        %v2291 = vshll.u32 920167782, %v2276
        %v2292 = vshrl.u32 1326507024, %v2277
        %v2293 = vor.u32 %v2291, %v2292
        %vm2294 = vcmp.lt.s32.totalorder %v2275, 1
        %vm2295 = vcmp.lt.s32.totalorder %v2275, 2
        %vm2296 = vcmp.lt.s32.totalorder %v2275, 3
        %vm2297 = vcmp.lt.s32.totalorder %v2275, 4
        %v2298 = vsel %vm2294, %v2278, %v2281
        %v2299 = vsel %vm2297, %v2287, 2102212464
        %v2300 = vsel %vm2296, %v2284, %v2299
        %v2301 = vsel %vm2295, %v2298, %v2300
        %v2302 = vsel %vm2294, %v2281, %v2284
        %v2303 = vsel %vm2297, %v2290, 920167782
        %v2304 = vsel %vm2296, %v2287, %v2303
        %v2305 = vsel %vm2295, %v2302, %v2304
        %v2306 = vsel %vm2294, %v2284, %v2287
        %v2307 = vsel %vm2297, %v2293, 1326507024
        %v2308 = vsel %vm2296, %v2290, %v2307
        %v2309 = vsel %vm2295, %v2306, %v2308
        %v2310 = vshll.u32 %v2270, 8
        %v2311 = vmul.u32.u64.compose %v2310, %v2309
        %v2312 = vextract.low.u32 %v2311
        %v2313 = vextract.high.u32 %v2311
        %v2314 = vmul.u32.u64.compose %v2310, %v2305
        %v2315 = vextract.low.u32 %v2314
        %v2316 = vextract.high.u32 %v2314
        %v2317 = vmul.u32 %v2310, %v2301
        %v2318 = vadd.s32 %v2313, %v2315
        %vm2319 = vc.u32 %v2313, %v2315
        %v2320 = vadd.s32 %v2316, 1
        %v2321 = vsel %vm2319, %v2320, %v2316
        %v2322 = vadd.s32 %v2317, %v2321
        %v2323 = vadd.s32 %v2322, 536870912
        %v2324 = vshrl.u32 %v2323, 30
        %v2325 = vshll.u32 %v2324, 30
        %v2326 = vsub.s32 %v2322, %v2325
        %vm2327 = vcmp.lt.s32.totalorder %v2326, 0
        %v2328 = vsub.s32 0, %v2326
        %v2329 = vsel %vm2327, %v2328, %v2326
        %v2330 = vclz %v2329
        %v2331 = vsub.s32 %v2330, 2
        %vm2332 = vcmp.gt.s32.totalorder 0, %v2331
        %v2333 = vsel %vm2332, 0, %v2331
        %v2334 = vsub.s32 32, %v2333
        %v2335 = vshll.u32 %v2326, %v2333
        %v2336 = vshrl.u32 %v2318, %v2334
        %v2337 = vor.u32 %v2335, %v2336
        %v2338 = vsub.s32 4294967266, %v2333
        %v2339 = vadd.s32 %v2338, 127
        %v2340 = vshll.u32 %v2339, 23
        %v2341 = vor.u32 4788187, %v2340
        %v2342 = vand.u32 2147483647, %v2341
        %v2344 = vcvt.s32.f32 %v2337
        %v2345 = vmul.f32 %v2344, %v2342
        %v2346 = vxor.u32 %v2345, 2147483648
        %v2347 = vsel %vm2264, %v2346, %v2345
        %v2348 = vsub.s32 4, %v2324
        %v2349 = vsel %vm2264, %v2348, %v2324
        %v2350 = vsel %vm2263, %v386, %v2347
        %v2351 = vsel %vm2263, 0, %v2349
        %v2352 = vcosq.f32.pop %v2350
        %v2353 = vsinq.f32.pop %v2350
        %vm2354 = vweird.f32 %v386
        %v2355 = vadd.s32 %v2351, 3
        %v2356 = vand.u32 %v2355, 3
        %vm2357 = vcmp.lt.s32.totalorder %v2356, 2
        %vm2358 = vcmp.eq.s32.totalorder %v2356, 0
        %v2359 = vxor.u32 %v2353, 2147483648
        %v2360 = vsel %vm2358, %v2352, %v2359
        %vm2361 = vcmp.eq.s32.totalorder %v2356, 2
        %v2362 = vxor.u32 %v2352, 2147483648
        %v2363 = vsel %vm2361, %v2362, %v2353
        %v2364 = vsel %vm2357, %v2360, %v2363
        %v2365 = vsel %vm2354, nan, %v2364
        %v2366 = vand.u32 2147483647, %v387
        %vm2367 = vcmp.le.f32.partialorder %v2366, 0.7853982
        %vm2368 = vcmp.lt.s32.totalorder %v387, 0
        %v2369 = vand.u32 %v387, 2139095040
        %v2370 = vshrl.u32 %v2369, 23
        %v2371 = vsub.s32 %v2370, 127
        %v2372 = vand.u32 2147483647, %v387
        %v2373 = vand.u32 %v2372, 8388607
        %v2374 = vor.u32 %v2373, 8388608
        %v2375 = vsub.s32 0, %v2374
        %v2376 = vadd.s32 %v2371, 1
        %vm2377 = vcmp.gt.s32.totalorder %v2376, 0
        %v2378 = vsel %vm2377, %v2376, 0
        %v2379 = vshrl.u32 %v2378, 5
        %v2380 = vand.u32 %v2378, 31
        %v2381 = vsub.s32 32, %v2380
        %v2382 = vshrl.u32 683565275, %v2381
        %v2383 = vshll.u32 683565275, %v2380
        %v2384 = vshrl.u32 2475754826, %v2381
        %v2385 = vor.u32 %v2383, %v2384
        %v2386 = vshll.u32 2475754826, %v2380
        %v2387 = vshrl.u32 2131351028, %v2381
        %v2388 = vor.u32 %v2386, %v2387
        %v2389 = vshll.u32 2131351028, %v2380
        %v2390 = vshrl.u32 2102212464, %v2381
        %v2391 = vor.u32 %v2389, %v2390
        %v2392 = vshll.u32 2102212464, %v2380
        %v2393 = vshrl.u32 920167782, %v2381
        %v2394 = vor.u32 %v2392, %v2393
        %v2395 = vshll.u32 920167782, %v2380
        %v2396 = vshrl.u32 1326507024, %v2381
        %v2397 = vor.u32 %v2395, %v2396
        %vm2398 = vcmp.lt.s32.totalorder %v2379, 1
        %vm2399 = vcmp.lt.s32.totalorder %v2379, 2
        %vm2400 = vcmp.lt.s32.totalorder %v2379, 3
        %vm2401 = vcmp.lt.s32.totalorder %v2379, 4
        %v2402 = vsel %vm2398, %v2382, %v2385
        %v2403 = vsel %vm2401, %v2391, 2102212464
        %v2404 = vsel %vm2400, %v2388, %v2403
        %v2405 = vsel %vm2399, %v2402, %v2404
        %v2406 = vsel %vm2398, %v2385, %v2388
        %v2407 = vsel %vm2401, %v2394, 920167782
        %v2408 = vsel %vm2400, %v2391, %v2407
        %v2409 = vsel %vm2399, %v2406, %v2408
        %v2410 = vsel %vm2398, %v2388, %v2391
        %v2411 = vsel %vm2401, %v2397, 1326507024
        %v2412 = vsel %vm2400, %v2394, %v2411
        %v2413 = vsel %vm2399, %v2410, %v2412
        %v2414 = vshll.u32 %v2374, 8
        %v2415 = vmul.u32.u64.compose %v2414, %v2413
        %v2416 = vextract.low.u32 %v2415
        %v2417 = vextract.high.u32 %v2415
        %v2418 = vmul.u32.u64.compose %v2414, %v2409
        %v2419 = vextract.low.u32 %v2418
        %v2420 = vextract.high.u32 %v2418
        %v2421 = vmul.u32 %v2414, %v2405
        %v2422 = vadd.s32 %v2417, %v2419
        %vm2423 = vc.u32 %v2417, %v2419
        %v2424 = vadd.s32 %v2420, 1
        %v2425 = vsel %vm2423, %v2424, %v2420
        %v2426 = vadd.s32 %v2421, %v2425
        %v2427 = vadd.s32 %v2426, 536870912
        %v2428 = vshrl.u32 %v2427, 30
        %v2429 = vshll.u32 %v2428, 30
        %v2430 = vsub.s32 %v2426, %v2429
        %vm2431 = vcmp.lt.s32.totalorder %v2430, 0
        %v2432 = vsub.s32 0, %v2430
        %v2433 = vsel %vm2431, %v2432, %v2430
        %v2434 = vclz %v2433
        %v2435 = vsub.s32 %v2434, 2
        %vm2436 = vcmp.gt.s32.totalorder 0, %v2435
        %v2437 = vsel %vm2436, 0, %v2435
        %v2438 = vsub.s32 32, %v2437
        %v2439 = vshll.u32 %v2430, %v2437
        %v2440 = vshrl.u32 %v2422, %v2438
        %v2441 = vor.u32 %v2439, %v2440
        %v2442 = vsub.s32 4294967266, %v2437
        %v2443 = vadd.s32 %v2442, 127
        %v2444 = vshll.u32 %v2443, 23
        %v2445 = vor.u32 4788187, %v2444
        %v2446 = vand.u32 2147483647, %v2445
        %v2448 = vcvt.s32.f32 %v2441
        %v2449 = vmul.f32 %v2448, %v2446
        %v2450 = vxor.u32 %v2449, 2147483648
        %v2451 = vsel %vm2368, %v2450, %v2449
        %v2452 = vsub.s32 4, %v2428
        %v2453 = vsel %vm2368, %v2452, %v2428
        %v2454 = vsel %vm2367, %v387, %v2451
        %v2455 = vsel %vm2367, 0, %v2453
        %v2456 = vcosq.f32.pop %v2454
        %v2457 = vsinq.f32.pop %v2454
        %vm2458 = vweird.f32 %v387
        %v2459 = vadd.s32 %v2455, 3
        %v2460 = vand.u32 %v2459, 3
        %vm2461 = vcmp.lt.s32.totalorder %v2460, 2
        %vm2462 = vcmp.eq.s32.totalorder %v2460, 0
        %v2463 = vxor.u32 %v2457, 2147483648
        %v2464 = vsel %vm2462, %v2456, %v2463
        %vm2465 = vcmp.eq.s32.totalorder %v2460, 2
        %v2466 = vxor.u32 %v2456, 2147483648
        %v2467 = vsel %vm2465, %v2466, %v2457
        %v2468 = vsel %vm2461, %v2464, %v2467
        %v2469 = vsel %vm2458, nan, %v2468
        %v2470 = vand.u32 2147483647, %v388
        %vm2471 = vcmp.le.f32.partialorder %v2470, 0.7853982
        %vm2472 = vcmp.lt.s32.totalorder %v388, 0
        %v2473 = vand.u32 %v388, 2139095040
        %v2474 = vshrl.u32 %v2473, 23
        %v2475 = vsub.s32 %v2474, 127
        %v2476 = vand.u32 2147483647, %v388
        %v2477 = vand.u32 %v2476, 8388607
        %v2478 = vor.u32 %v2477, 8388608
        %v2479 = vsub.s32 0, %v2478
        %v2480 = vadd.s32 %v2475, 1
        %vm2481 = vcmp.gt.s32.totalorder %v2480, 0
        %v2482 = vsel %vm2481, %v2480, 0
        %v2483 = vshrl.u32 %v2482, 5
        %v2484 = vand.u32 %v2482, 31
        %v2485 = vsub.s32 32, %v2484
        %v2486 = vshrl.u32 683565275, %v2485
        %v2487 = vshll.u32 683565275, %v2484
        %v2488 = vshrl.u32 2475754826, %v2485
        %v2489 = vor.u32 %v2487, %v2488
        %v2490 = vshll.u32 2475754826, %v2484
        %v2491 = vshrl.u32 2131351028, %v2485
        %v2492 = vor.u32 %v2490, %v2491
        %v2493 = vshll.u32 2131351028, %v2484
        %v2494 = vshrl.u32 2102212464, %v2485
        %v2495 = vor.u32 %v2493, %v2494
        %v2496 = vshll.u32 2102212464, %v2484
        %v2497 = vshrl.u32 920167782, %v2485
        %v2498 = vor.u32 %v2496, %v2497
        %v2499 = vshll.u32 920167782, %v2484
        %v2500 = vshrl.u32 1326507024, %v2485
        %v2501 = vor.u32 %v2499, %v2500
        %vm2502 = vcmp.lt.s32.totalorder %v2483, 1
        %vm2503 = vcmp.lt.s32.totalorder %v2483, 2
        %vm2504 = vcmp.lt.s32.totalorder %v2483, 3
        %vm2505 = vcmp.lt.s32.totalorder %v2483, 4
        %v2506 = vsel %vm2502, %v2486, %v2489
        %v2507 = vsel %vm2505, %v2495, 2102212464
        %v2508 = vsel %vm2504, %v2492, %v2507
        %v2509 = vsel %vm2503, %v2506, %v2508
        %v2510 = vsel %vm2502, %v2489, %v2492
        %v2511 = vsel %vm2505, %v2498, 920167782
        %v2512 = vsel %vm2504, %v2495, %v2511
        %v2513 = vsel %vm2503, %v2510, %v2512
        %v2514 = vsel %vm2502, %v2492, %v2495
        %v2515 = vsel %vm2505, %v2501, 1326507024
        %v2516 = vsel %vm2504, %v2498, %v2515
        %v2517 = vsel %vm2503, %v2514, %v2516
        %v2518 = vshll.u32 %v2478, 8
        %v2519 = vmul.u32.u64.compose %v2518, %v2517
        %v2520 = vextract.low.u32 %v2519
        %v2521 = vextract.high.u32 %v2519
        %v2522 = vmul.u32.u64.compose %v2518, %v2513
        %v2523 = vextract.low.u32 %v2522
        %v2524 = vextract.high.u32 %v2522
        %v2525 = vmul.u32 %v2518, %v2509
        %v2526 = vadd.s32 %v2521, %v2523
        %vm2527 = vc.u32 %v2521, %v2523
        %v2528 = vadd.s32 %v2524, 1
        %v2529 = vsel %vm2527, %v2528, %v2524
        %v2530 = vadd.s32 %v2525, %v2529
        %v2531 = vadd.s32 %v2530, 536870912
        %v2532 = vshrl.u32 %v2531, 30
        %v2533 = vshll.u32 %v2532, 30
        %v2534 = vsub.s32 %v2530, %v2533
        %vm2535 = vcmp.lt.s32.totalorder %v2534, 0
        %v2536 = vsub.s32 0, %v2534
        %v2537 = vsel %vm2535, %v2536, %v2534
        %v2538 = vclz %v2537
        %v2539 = vsub.s32 %v2538, 2
        %vm2540 = vcmp.gt.s32.totalorder 0, %v2539
        %v2541 = vsel %vm2540, 0, %v2539
        %v2542 = vsub.s32 32, %v2541
        %v2543 = vshll.u32 %v2534, %v2541
        %v2544 = vshrl.u32 %v2526, %v2542
        %v2545 = vor.u32 %v2543, %v2544
        %v2546 = vsub.s32 4294967266, %v2541
        %v2547 = vadd.s32 %v2546, 127
        %v2548 = vshll.u32 %v2547, 23
        %v2549 = vor.u32 4788187, %v2548
        %v2550 = vand.u32 2147483647, %v2549
        %v2552 = vcvt.s32.f32 %v2545
        %v2553 = vmul.f32 %v2552, %v2550
        %v2554 = vxor.u32 %v2553, 2147483648
        %v2555 = vsel %vm2472, %v2554, %v2553
        %v2556 = vsub.s32 4, %v2532
        %v2557 = vsel %vm2472, %v2556, %v2532
        %v2558 = vsel %vm2471, %v388, %v2555
        %v2559 = vsel %vm2471, 0, %v2557
        %v2560 = vcosq.f32.pop %v2558
        %v2561 = vsinq.f32.pop %v2558
        %vm2562 = vweird.f32 %v388
        %v2563 = vadd.s32 %v2559, 3
        %v2564 = vand.u32 %v2563, 3
        %vm2565 = vcmp.lt.s32.totalorder %v2564, 2
        %vm2566 = vcmp.eq.s32.totalorder %v2564, 0
        %v2567 = vxor.u32 %v2561, 2147483648
        %v2568 = vsel %vm2566, %v2560, %v2567
        %vm2569 = vcmp.eq.s32.totalorder %v2564, 2
        %v2570 = vxor.u32 %v2560, 2147483648
        %v2571 = vsel %vm2569, %v2570, %v2561
        %v2572 = vsel %vm2565, %v2568, %v2571
        %v2573 = vsel %vm2562, nan, %v2572
        %v2574 = vand.u32 2147483647, %v389
        %vm2575 = vcmp.le.f32.partialorder %v2574, 0.7853982
        %vm2576 = vcmp.lt.s32.totalorder %v389, 0
        %v2577 = vand.u32 %v389, 2139095040
        %v2578 = vshrl.u32 %v2577, 23
        %v2579 = vsub.s32 %v2578, 127
        %v2580 = vand.u32 2147483647, %v389
        %v2581 = vand.u32 %v2580, 8388607
        %v2582 = vor.u32 %v2581, 8388608
        %v2583 = vsub.s32 0, %v2582
        %v2584 = vadd.s32 %v2579, 1
        %vm2585 = vcmp.gt.s32.totalorder %v2584, 0
        %v2586 = vsel %vm2585, %v2584, 0
        %v2587 = vshrl.u32 %v2586, 5
        %v2588 = vand.u32 %v2586, 31
        %v2589 = vsub.s32 32, %v2588
        %v2590 = vshrl.u32 683565275, %v2589
        %v2591 = vshll.u32 683565275, %v2588
        %v2592 = vshrl.u32 2475754826, %v2589
        %v2593 = vor.u32 %v2591, %v2592
        %v2594 = vshll.u32 2475754826, %v2588
        %v2595 = vshrl.u32 2131351028, %v2589
        %v2596 = vor.u32 %v2594, %v2595
        %v2597 = vshll.u32 2131351028, %v2588
        %v2598 = vshrl.u32 2102212464, %v2589
        %v2599 = vor.u32 %v2597, %v2598
        %v2600 = vshll.u32 2102212464, %v2588
        %v2601 = vshrl.u32 920167782, %v2589
        %v2602 = vor.u32 %v2600, %v2601
        %v2603 = vshll.u32 920167782, %v2588
        %v2604 = vshrl.u32 1326507024, %v2589
        %v2605 = vor.u32 %v2603, %v2604
        %vm2606 = vcmp.lt.s32.totalorder %v2587, 1
        %vm2607 = vcmp.lt.s32.totalorder %v2587, 2
        %vm2608 = vcmp.lt.s32.totalorder %v2587, 3
        %vm2609 = vcmp.lt.s32.totalorder %v2587, 4
        %v2610 = vsel %vm2606, %v2590, %v2593
        %v2611 = vsel %vm2609, %v2599, 2102212464
        %v2612 = vsel %vm2608, %v2596, %v2611
        %v2613 = vsel %vm2607, %v2610, %v2612
        %v2614 = vsel %vm2606, %v2593, %v2596
        %v2615 = vsel %vm2609, %v2602, 920167782
        %v2616 = vsel %vm2608, %v2599, %v2615
        %v2617 = vsel %vm2607, %v2614, %v2616
        %v2618 = vsel %vm2606, %v2596, %v2599
        %v2619 = vsel %vm2609, %v2605, 1326507024
        %v2620 = vsel %vm2608, %v2602, %v2619
        %v2621 = vsel %vm2607, %v2618, %v2620
        %v2622 = vshll.u32 %v2582, 8
        %v2623 = vmul.u32.u64.compose %v2622, %v2621
        %v2624 = vextract.low.u32 %v2623
        %v2625 = vextract.high.u32 %v2623
        %v2626 = vmul.u32.u64.compose %v2622, %v2617
        %v2627 = vextract.low.u32 %v2626
        %v2628 = vextract.high.u32 %v2626
        %v2629 = vmul.u32 %v2622, %v2613
        %v2630 = vadd.s32 %v2625, %v2627
        %vm2631 = vc.u32 %v2625, %v2627
        %v2632 = vadd.s32 %v2628, 1
        %v2633 = vsel %vm2631, %v2632, %v2628
        %v2634 = vadd.s32 %v2629, %v2633
        %v2635 = vadd.s32 %v2634, 536870912
        %v2636 = vshrl.u32 %v2635, 30
        %v2637 = vshll.u32 %v2636, 30
        %v2638 = vsub.s32 %v2634, %v2637
        %vm2639 = vcmp.lt.s32.totalorder %v2638, 0
        %v2640 = vsub.s32 0, %v2638
        %v2641 = vsel %vm2639, %v2640, %v2638
        %v2642 = vclz %v2641
        %v2643 = vsub.s32 %v2642, 2
        %vm2644 = vcmp.gt.s32.totalorder 0, %v2643
        %v2645 = vsel %vm2644, 0, %v2643
        %v2646 = vsub.s32 32, %v2645
        %v2647 = vshll.u32 %v2638, %v2645
        %v2648 = vshrl.u32 %v2630, %v2646
        %v2649 = vor.u32 %v2647, %v2648
        %v2650 = vsub.s32 4294967266, %v2645
        %v2651 = vadd.s32 %v2650, 127
        %v2652 = vshll.u32 %v2651, 23
        %v2653 = vor.u32 4788187, %v2652
        %v2654 = vand.u32 2147483647, %v2653
        %v2656 = vcvt.s32.f32 %v2649
        %v2657 = vmul.f32 %v2656, %v2654
        %v2658 = vxor.u32 %v2657, 2147483648
        %v2659 = vsel %vm2576, %v2658, %v2657
        %v2660 = vsub.s32 4, %v2636
        %v2661 = vsel %vm2576, %v2660, %v2636
        %v2662 = vsel %vm2575, %v389, %v2659
        %v2663 = vsel %vm2575, 0, %v2661
        %v2664 = vcosq.f32.pop %v2662
        %v2665 = vsinq.f32.pop %v2662
        %vm2666 = vweird.f32 %v389
        %v2667 = vadd.s32 %v2663, 3
        %v2668 = vand.u32 %v2667, 3
        %vm2669 = vcmp.lt.s32.totalorder %v2668, 2
        %vm2670 = vcmp.eq.s32.totalorder %v2668, 0
        %v2671 = vxor.u32 %v2665, 2147483648
        %v2672 = vsel %vm2670, %v2664, %v2671
        %vm2673 = vcmp.eq.s32.totalorder %v2668, 2
        %v2674 = vxor.u32 %v2664, 2147483648
        %v2675 = vsel %vm2673, %v2674, %v2665
        %v2676 = vsel %vm2669, %v2672, %v2675
        %v2677 = vsel %vm2666, nan, %v2676
        %v2678 = vand.u32 2147483647, %v390
        %vm2679 = vcmp.le.f32.partialorder %v2678, 0.7853982
        %vm2680 = vcmp.lt.s32.totalorder %v390, 0
        %v2681 = vand.u32 %v390, 2139095040
        %v2682 = vshrl.u32 %v2681, 23
        %v2683 = vsub.s32 %v2682, 127
        %v2684 = vand.u32 2147483647, %v390
        %v2685 = vand.u32 %v2684, 8388607
        %v2686 = vor.u32 %v2685, 8388608
        %v2687 = vsub.s32 0, %v2686
        %v2688 = vadd.s32 %v2683, 1
        %vm2689 = vcmp.gt.s32.totalorder %v2688, 0
        %v2690 = vsel %vm2689, %v2688, 0
        %v2691 = vshrl.u32 %v2690, 5
        %v2692 = vand.u32 %v2690, 31
        %v2693 = vsub.s32 32, %v2692
        %v2694 = vshrl.u32 683565275, %v2693
        %v2695 = vshll.u32 683565275, %v2692
        %v2696 = vshrl.u32 2475754826, %v2693
        %v2697 = vor.u32 %v2695, %v2696
        %v2698 = vshll.u32 2475754826, %v2692
        %v2699 = vshrl.u32 2131351028, %v2693
        %v2700 = vor.u32 %v2698, %v2699
        %v2701 = vshll.u32 2131351028, %v2692
        %v2702 = vshrl.u32 2102212464, %v2693
        %v2703 = vor.u32 %v2701, %v2702
        %v2704 = vshll.u32 2102212464, %v2692
        %v2705 = vshrl.u32 920167782, %v2693
        %v2706 = vor.u32 %v2704, %v2705
        %v2707 = vshll.u32 920167782, %v2692
        %v2708 = vshrl.u32 1326507024, %v2693
        %v2709 = vor.u32 %v2707, %v2708
        %vm2710 = vcmp.lt.s32.totalorder %v2691, 1
        %vm2711 = vcmp.lt.s32.totalorder %v2691, 2
        %vm2712 = vcmp.lt.s32.totalorder %v2691, 3
        %vm2713 = vcmp.lt.s32.totalorder %v2691, 4
        %v2714 = vsel %vm2710, %v2694, %v2697
        %v2715 = vsel %vm2713, %v2703, 2102212464
        %v2716 = vsel %vm2712, %v2700, %v2715
        %v2717 = vsel %vm2711, %v2714, %v2716
        %v2718 = vsel %vm2710, %v2697, %v2700
        %v2719 = vsel %vm2713, %v2706, 920167782
        %v2720 = vsel %vm2712, %v2703, %v2719
        %v2721 = vsel %vm2711, %v2718, %v2720
        %v2722 = vsel %vm2710, %v2700, %v2703
        %v2723 = vsel %vm2713, %v2709, 1326507024
        %v2724 = vsel %vm2712, %v2706, %v2723
        %v2725 = vsel %vm2711, %v2722, %v2724
        %v2726 = vshll.u32 %v2686, 8
        %v2727 = vmul.u32.u64.compose %v2726, %v2725
        %v2728 = vextract.low.u32 %v2727
        %v2729 = vextract.high.u32 %v2727
        %v2730 = vmul.u32.u64.compose %v2726, %v2721
        %v2731 = vextract.low.u32 %v2730
        %v2732 = vextract.high.u32 %v2730
        %v2733 = vmul.u32 %v2726, %v2717
        %v2734 = vadd.s32 %v2729, %v2731
        %vm2735 = vc.u32 %v2729, %v2731
        %v2736 = vadd.s32 %v2732, 1
        %v2737 = vsel %vm2735, %v2736, %v2732
        %v2738 = vadd.s32 %v2733, %v2737
        %v2739 = vadd.s32 %v2738, 536870912
        %v2740 = vshrl.u32 %v2739, 30
        %v2741 = vshll.u32 %v2740, 30
        %v2742 = vsub.s32 %v2738, %v2741
        %vm2743 = vcmp.lt.s32.totalorder %v2742, 0
        %v2744 = vsub.s32 0, %v2742
        %v2745 = vsel %vm2743, %v2744, %v2742
        %v2746 = vclz %v2745
        %v2747 = vsub.s32 %v2746, 2
        %vm2748 = vcmp.gt.s32.totalorder 0, %v2747
        %v2749 = vsel %vm2748, 0, %v2747
        %v2750 = vsub.s32 32, %v2749
        %v2751 = vshll.u32 %v2742, %v2749
        %v2752 = vshrl.u32 %v2734, %v2750
        %v2753 = vor.u32 %v2751, %v2752
        %v2754 = vsub.s32 4294967266, %v2749
        %v2755 = vadd.s32 %v2754, 127
        %v2756 = vshll.u32 %v2755, 23
        %v2757 = vor.u32 4788187, %v2756
        %v2758 = vand.u32 2147483647, %v2757
        %v2760 = vcvt.s32.f32 %v2753
        %v2761 = vmul.f32 %v2760, %v2758
        %v2762 = vxor.u32 %v2761, 2147483648
        %v2763 = vsel %vm2680, %v2762, %v2761
        %v2764 = vsub.s32 4, %v2740
        %v2765 = vsel %vm2680, %v2764, %v2740
        %v2766 = vsel %vm2679, %v390, %v2763
        %v2767 = vsel %vm2679, 0, %v2765
        %v2768 = vcosq.f32.pop %v2766
        %v2769 = vsinq.f32.pop %v2766
        %vm2770 = vweird.f32 %v390
        %v2771 = vadd.s32 %v2767, 3
        %v2772 = vand.u32 %v2771, 3
        %vm2773 = vcmp.lt.s32.totalorder %v2772, 2
        %vm2774 = vcmp.eq.s32.totalorder %v2772, 0
        %v2775 = vxor.u32 %v2769, 2147483648
        %v2776 = vsel %vm2774, %v2768, %v2775
        %vm2777 = vcmp.eq.s32.totalorder %v2772, 2
        %v2778 = vxor.u32 %v2768, 2147483648
        %v2779 = vsel %vm2777, %v2778, %v2769
        %v2780 = vsel %vm2773, %v2776, %v2779
        %v2781 = vsel %vm2770, nan, %v2780
        %v2782 = vand.u32 2147483647, %v391
        %vm2783 = vcmp.le.f32.partialorder %v2782, 0.7853982
        %vm2784 = vcmp.lt.s32.totalorder %v391, 0
        %v2785 = vand.u32 %v391, 2139095040
        %v2786 = vshrl.u32 %v2785, 23
        %v2787 = vsub.s32 %v2786, 127
        %v2788 = vand.u32 2147483647, %v391
        %v2789 = vand.u32 %v2788, 8388607
        %v2790 = vor.u32 %v2789, 8388608
        %v2791 = vsub.s32 0, %v2790
        %v2792 = vadd.s32 %v2787, 1
        %vm2793 = vcmp.gt.s32.totalorder %v2792, 0
        %v2794 = vsel %vm2793, %v2792, 0
        %v2795 = vshrl.u32 %v2794, 5
        %v2796 = vand.u32 %v2794, 31
        %v2797 = vsub.s32 32, %v2796
        %v2798 = vshrl.u32 683565275, %v2797
        %v2799 = vshll.u32 683565275, %v2796
        %v2800 = vshrl.u32 2475754826, %v2797
        %v2801 = vor.u32 %v2799, %v2800
        %v2802 = vshll.u32 2475754826, %v2796
        %v2803 = vshrl.u32 2131351028, %v2797
        %v2804 = vor.u32 %v2802, %v2803
        %v2805 = vshll.u32 2131351028, %v2796
        %v2806 = vshrl.u32 2102212464, %v2797
        %v2807 = vor.u32 %v2805, %v2806
        %v2808 = vshll.u32 2102212464, %v2796
        %v2809 = vshrl.u32 920167782, %v2797
        %v2810 = vor.u32 %v2808, %v2809
        %v2811 = vshll.u32 920167782, %v2796
        %v2812 = vshrl.u32 1326507024, %v2797
        %v2813 = vor.u32 %v2811, %v2812
        %vm2814 = vcmp.lt.s32.totalorder %v2795, 1
        %vm2815 = vcmp.lt.s32.totalorder %v2795, 2
        %vm2816 = vcmp.lt.s32.totalorder %v2795, 3
        %vm2817 = vcmp.lt.s32.totalorder %v2795, 4
        %v2818 = vsel %vm2814, %v2798, %v2801
        %v2819 = vsel %vm2817, %v2807, 2102212464
        %v2820 = vsel %vm2816, %v2804, %v2819
        %v2821 = vsel %vm2815, %v2818, %v2820
        %v2822 = vsel %vm2814, %v2801, %v2804
        %v2823 = vsel %vm2817, %v2810, 920167782
        %v2824 = vsel %vm2816, %v2807, %v2823
        %v2825 = vsel %vm2815, %v2822, %v2824
        %v2826 = vsel %vm2814, %v2804, %v2807
        %v2827 = vsel %vm2817, %v2813, 1326507024
        %v2828 = vsel %vm2816, %v2810, %v2827
        %v2829 = vsel %vm2815, %v2826, %v2828
        %v2830 = vshll.u32 %v2790, 8
        %v2831 = vmul.u32.u64.compose %v2830, %v2829
        %v2832 = vextract.low.u32 %v2831
        %v2833 = vextract.high.u32 %v2831
        %v2834 = vmul.u32.u64.compose %v2830, %v2825
        %v2835 = vextract.low.u32 %v2834
        %v2836 = vextract.high.u32 %v2834
        %v2837 = vmul.u32 %v2830, %v2821
        %v2838 = vadd.s32 %v2833, %v2835
        %vm2839 = vc.u32 %v2833, %v2835
        %v2840 = vadd.s32 %v2836, 1
        %v2841 = vsel %vm2839, %v2840, %v2836
        %v2842 = vadd.s32 %v2837, %v2841
        %v2843 = vadd.s32 %v2842, 536870912
        %v2844 = vshrl.u32 %v2843, 30
        %v2845 = vshll.u32 %v2844, 30
        %v2846 = vsub.s32 %v2842, %v2845
        %vm2847 = vcmp.lt.s32.totalorder %v2846, 0
        %v2848 = vsub.s32 0, %v2846
        %v2849 = vsel %vm2847, %v2848, %v2846
        %v2850 = vclz %v2849
        %v2851 = vsub.s32 %v2850, 2
        %vm2852 = vcmp.gt.s32.totalorder 0, %v2851
        %v2853 = vsel %vm2852, 0, %v2851
        %v2854 = vsub.s32 32, %v2853
        %v2855 = vshll.u32 %v2846, %v2853
        %v2856 = vshrl.u32 %v2838, %v2854
        %v2857 = vor.u32 %v2855, %v2856
        %v2858 = vsub.s32 4294967266, %v2853
        %v2859 = vadd.s32 %v2858, 127
        %v2860 = vshll.u32 %v2859, 23
        %v2861 = vor.u32 4788187, %v2860
        %v2862 = vand.u32 2147483647, %v2861
        %v2864 = vcvt.s32.f32 %v2857
        %v2865 = vmul.f32 %v2864, %v2862
        %v2866 = vxor.u32 %v2865, 2147483648
        %v2867 = vsel %vm2784, %v2866, %v2865
        %v2868 = vsub.s32 4, %v2844
        %v2869 = vsel %vm2784, %v2868, %v2844
        %v2870 = vsel %vm2783, %v391, %v2867
        %v2871 = vsel %vm2783, 0, %v2869
        %v2872 = vcosq.f32.pop %v2870
        %v2873 = vsinq.f32.pop %v2870
        %vm2874 = vweird.f32 %v391
        %v2875 = vadd.s32 %v2871, 3
        %v2876 = vand.u32 %v2875, 3
        %vm2877 = vcmp.lt.s32.totalorder %v2876, 2
        %vm2878 = vcmp.eq.s32.totalorder %v2876, 0
        %v2879 = vxor.u32 %v2873, 2147483648
        %v2880 = vsel %vm2878, %v2872, %v2879
        %vm2881 = vcmp.eq.s32.totalorder %v2876, 2
        %v2882 = vxor.u32 %v2872, 2147483648
        %v2883 = vsel %vm2881, %v2882, %v2873
        %v2884 = vsel %vm2877, %v2880, %v2883
        %v2885 = vsel %vm2874, nan, %v2884
        %v2886 = vand.u32 2147483647, %v392
        %vm2887 = vcmp.le.f32.partialorder %v2886, 0.7853982
        %vm2888 = vcmp.lt.s32.totalorder %v392, 0
        %v2889 = vand.u32 %v392, 2139095040
        %v2890 = vshrl.u32 %v2889, 23
        %v2891 = vsub.s32 %v2890, 127
        %v2892 = vand.u32 2147483647, %v392
        %v2893 = vand.u32 %v2892, 8388607
        %v2894 = vor.u32 %v2893, 8388608
        %v2895 = vsub.s32 0, %v2894
        %v2896 = vadd.s32 %v2891, 1
        %vm2897 = vcmp.gt.s32.totalorder %v2896, 0
        %v2898 = vsel %vm2897, %v2896, 0
        %v2899 = vshrl.u32 %v2898, 5
        %v2900 = vand.u32 %v2898, 31
        %v2901 = vsub.s32 32, %v2900
        %v2902 = vshrl.u32 683565275, %v2901
        %v2903 = vshll.u32 683565275, %v2900
        %v2904 = vshrl.u32 2475754826, %v2901
        %v2905 = vor.u32 %v2903, %v2904
        %v2906 = vshll.u32 2475754826, %v2900
        %v2907 = vshrl.u32 2131351028, %v2901
        %v2908 = vor.u32 %v2906, %v2907
        %v2909 = vshll.u32 2131351028, %v2900
        %v2910 = vshrl.u32 2102212464, %v2901
        %v2911 = vor.u32 %v2909, %v2910
        %v2912 = vshll.u32 2102212464, %v2900
        %v2913 = vshrl.u32 920167782, %v2901
        %v2914 = vor.u32 %v2912, %v2913
        %v2915 = vshll.u32 920167782, %v2900
        %v2916 = vshrl.u32 1326507024, %v2901
        %v2917 = vor.u32 %v2915, %v2916
        %vm2918 = vcmp.lt.s32.totalorder %v2899, 1
        %vm2919 = vcmp.lt.s32.totalorder %v2899, 2
        %vm2920 = vcmp.lt.s32.totalorder %v2899, 3
        %vm2921 = vcmp.lt.s32.totalorder %v2899, 4
        %v2922 = vsel %vm2918, %v2902, %v2905
        %v2923 = vsel %vm2921, %v2911, 2102212464
        %v2924 = vsel %vm2920, %v2908, %v2923
        %v2925 = vsel %vm2919, %v2922, %v2924
        %v2926 = vsel %vm2918, %v2905, %v2908
        %v2927 = vsel %vm2921, %v2914, 920167782
        %v2928 = vsel %vm2920, %v2911, %v2927
        %v2929 = vsel %vm2919, %v2926, %v2928
        %v2930 = vsel %vm2918, %v2908, %v2911
        %v2931 = vsel %vm2921, %v2917, 1326507024
        %v2932 = vsel %vm2920, %v2914, %v2931
        %v2933 = vsel %vm2919, %v2930, %v2932
        %v2934 = vshll.u32 %v2894, 8
        %v2935 = vmul.u32.u64.compose %v2934, %v2933
        %v2936 = vextract.low.u32 %v2935
        %v2937 = vextract.high.u32 %v2935
        %v2938 = vmul.u32.u64.compose %v2934, %v2929
        %v2939 = vextract.low.u32 %v2938
        %v2940 = vextract.high.u32 %v2938
        %v2941 = vmul.u32 %v2934, %v2925
        %v2942 = vadd.s32 %v2937, %v2939
        %vm2943 = vc.u32 %v2937, %v2939
        %v2944 = vadd.s32 %v2940, 1
        %v2945 = vsel %vm2943, %v2944, %v2940
        %v2946 = vadd.s32 %v2941, %v2945
        %v2947 = vadd.s32 %v2946, 536870912
        %v2948 = vshrl.u32 %v2947, 30
        %v2949 = vshll.u32 %v2948, 30
        %v2950 = vsub.s32 %v2946, %v2949
        %vm2951 = vcmp.lt.s32.totalorder %v2950, 0
        %v2952 = vsub.s32 0, %v2950
        %v2953 = vsel %vm2951, %v2952, %v2950
        %v2954 = vclz %v2953
        %v2955 = vsub.s32 %v2954, 2
        %vm2956 = vcmp.gt.s32.totalorder 0, %v2955
        %v2957 = vsel %vm2956, 0, %v2955
        %v2958 = vsub.s32 32, %v2957
        %v2959 = vshll.u32 %v2950, %v2957
        %v2960 = vshrl.u32 %v2942, %v2958
        %v2961 = vor.u32 %v2959, %v2960
        %v2962 = vsub.s32 4294967266, %v2957
        %v2963 = vadd.s32 %v2962, 127
        %v2964 = vshll.u32 %v2963, 23
        %v2965 = vor.u32 4788187, %v2964
        %v2966 = vand.u32 2147483647, %v2965
        %v2968 = vcvt.s32.f32 %v2961
        %v2969 = vmul.f32 %v2968, %v2966
        %v2970 = vxor.u32 %v2969, 2147483648
        %v2971 = vsel %vm2888, %v2970, %v2969
        %v2972 = vsub.s32 4, %v2948
        %v2973 = vsel %vm2888, %v2972, %v2948
        %v2974 = vsel %vm2887, %v392, %v2971
        %v2975 = vsel %vm2887, 0, %v2973
        %v2976 = vcosq.f32.pop %v2974
        %v2977 = vsinq.f32.pop %v2974
        %vm2978 = vweird.f32 %v392
        %v2979 = vadd.s32 %v2975, 3
        %v2980 = vand.u32 %v2979, 3
        %vm2981 = vcmp.lt.s32.totalorder %v2980, 2
        %vm2982 = vcmp.eq.s32.totalorder %v2980, 0
        %v2983 = vxor.u32 %v2977, 2147483648
        %v2984 = vsel %vm2982, %v2976, %v2983
        %vm2985 = vcmp.eq.s32.totalorder %v2980, 2
        %v2986 = vxor.u32 %v2976, 2147483648
        %v2987 = vsel %vm2985, %v2986, %v2977
        %v2988 = vsel %vm2981, %v2984, %v2987
        %v2989 = vsel %vm2978, nan, %v2988
        %v2990 = vand.u32 2147483647, %v369
        %vm2991 = vcmp.le.f32.partialorder %v2990, 0.7853982
        %vm2992 = vcmp.lt.s32.totalorder %v369, 0
        %v2993 = vand.u32 %v369, 2139095040
        %v2994 = vshrl.u32 %v2993, 23
        %v2995 = vsub.s32 %v2994, 127
        %v2996 = vand.u32 2147483647, %v369
        %v2997 = vand.u32 %v2996, 8388607
        %v2998 = vor.u32 %v2997, 8388608
        %v2999 = vsub.s32 0, %v2998
        %v3000 = vadd.s32 %v2995, 1
        %vm3001 = vcmp.gt.s32.totalorder %v3000, 0
        %v3002 = vsel %vm3001, %v3000, 0
        %v3003 = vshrl.u32 %v3002, 5
        %v3004 = vand.u32 %v3002, 31
        %v3005 = vsub.s32 32, %v3004
        %v3006 = vshrl.u32 683565275, %v3005
        %v3007 = vshll.u32 683565275, %v3004
        %v3008 = vshrl.u32 2475754826, %v3005
        %v3009 = vor.u32 %v3007, %v3008
        %v3010 = vshll.u32 2475754826, %v3004
        %v3011 = vshrl.u32 2131351028, %v3005
        %v3012 = vor.u32 %v3010, %v3011
        %v3013 = vshll.u32 2131351028, %v3004
        %v3014 = vshrl.u32 2102212464, %v3005
        %v3015 = vor.u32 %v3013, %v3014
        %v3016 = vshll.u32 2102212464, %v3004
        %v3017 = vshrl.u32 920167782, %v3005
        %v3018 = vor.u32 %v3016, %v3017
        %v3019 = vshll.u32 920167782, %v3004
        %v3020 = vshrl.u32 1326507024, %v3005
        %v3021 = vor.u32 %v3019, %v3020
        %vm3022 = vcmp.lt.s32.totalorder %v3003, 1
        %vm3023 = vcmp.lt.s32.totalorder %v3003, 2
        %vm3024 = vcmp.lt.s32.totalorder %v3003, 3
        %vm3025 = vcmp.lt.s32.totalorder %v3003, 4
        %v3026 = vsel %vm3022, %v3006, %v3009
        %v3027 = vsel %vm3025, %v3015, 2102212464
        %v3028 = vsel %vm3024, %v3012, %v3027
        %v3029 = vsel %vm3023, %v3026, %v3028
        %v3030 = vsel %vm3022, %v3009, %v3012
        %v3031 = vsel %vm3025, %v3018, 920167782
        %v3032 = vsel %vm3024, %v3015, %v3031
        %v3033 = vsel %vm3023, %v3030, %v3032
        %v3034 = vsel %vm3022, %v3012, %v3015
        %v3035 = vsel %vm3025, %v3021, 1326507024
        %v3036 = vsel %vm3024, %v3018, %v3035
        %v3037 = vsel %vm3023, %v3034, %v3036
        %v3038 = vshll.u32 %v2998, 8
        %v3039 = vmul.u32.u64.compose %v3038, %v3037
        %v3040 = vextract.low.u32 %v3039
        %v3041 = vextract.high.u32 %v3039
        %v3042 = vmul.u32.u64.compose %v3038, %v3033
        %v3043 = vextract.low.u32 %v3042
        %v3044 = vextract.high.u32 %v3042
        %v3045 = vmul.u32 %v3038, %v3029
        %v3046 = vadd.s32 %v3041, %v3043
        %vm3047 = vc.u32 %v3041, %v3043
        %v3048 = vadd.s32 %v3044, 1
        %v3049 = vsel %vm3047, %v3048, %v3044
        %v3050 = vadd.s32 %v3045, %v3049
        %v3051 = vadd.s32 %v3050, 536870912
        %v3052 = vshrl.u32 %v3051, 30
        %v3053 = vshll.u32 %v3052, 30
        %v3054 = vsub.s32 %v3050, %v3053
        %vm3055 = vcmp.lt.s32.totalorder %v3054, 0
        %v3056 = vsub.s32 0, %v3054
        %v3057 = vsel %vm3055, %v3056, %v3054
        %v3058 = vclz %v3057
        %v3059 = vsub.s32 %v3058, 2
        %vm3060 = vcmp.gt.s32.totalorder 0, %v3059
        %v3061 = vsel %vm3060, 0, %v3059
        %v3062 = vsub.s32 32, %v3061
        %v3063 = vshll.u32 %v3054, %v3061
        %v3064 = vshrl.u32 %v3046, %v3062
        %v3065 = vor.u32 %v3063, %v3064
        %v3066 = vsub.s32 4294967266, %v3061
        %v3067 = vadd.s32 %v3066, 127
        %v3068 = vshll.u32 %v3067, 23
        %v3069 = vor.u32 4788187, %v3068
        %v3070 = vand.u32 2147483647, %v3069
        %v3072 = vcvt.s32.f32 %v3065
        %v3073 = vmul.f32 %v3072, %v3070
        %v3074 = vxor.u32 %v3073, 2147483648
        %v3075 = vsel %vm2992, %v3074, %v3073
        %v3076 = vsub.s32 4, %v3052
        %v3077 = vsel %vm2992, %v3076, %v3052
        %v3078 = vsel %vm2991, %v369, %v3075
        %v3079 = vsel %vm2991, 0, %v3077
        %v3080 = vcosq.f32.pop %v3078
        %v3081 = vsinq.f32.pop %v3078
        %vm3082 = vweird.f32 %v369
        %v3083 = vand.u32 %v3079, 3
        %vm3084 = vcmp.lt.s32.totalorder %v3083, 2
        %vm3085 = vcmp.eq.s32.totalorder %v3083, 0
        %v3086 = vxor.u32 %v3081, 2147483648
        %v3087 = vsel %vm3085, %v3080, %v3086
        %vm3088 = vcmp.eq.s32.totalorder %v3083, 2
        %v3089 = vxor.u32 %v3080, 2147483648
        %v3090 = vsel %vm3088, %v3089, %v3081
        %v3091 = vsel %vm3084, %v3087, %v3090
        %v3092 = vsel %vm3082, nan, %v3091
        %v3093 = vand.u32 2147483647, %v370
        %vm3094 = vcmp.le.f32.partialorder %v3093, 0.7853982
        %vm3095 = vcmp.lt.s32.totalorder %v370, 0
        %v3096 = vand.u32 %v370, 2139095040
        %v3097 = vshrl.u32 %v3096, 23
        %v3098 = vsub.s32 %v3097, 127
        %v3099 = vand.u32 2147483647, %v370
        %v3100 = vand.u32 %v3099, 8388607
        %v3101 = vor.u32 %v3100, 8388608
        %v3102 = vsub.s32 0, %v3101
        %v3103 = vadd.s32 %v3098, 1
        %vm3104 = vcmp.gt.s32.totalorder %v3103, 0
        %v3105 = vsel %vm3104, %v3103, 0
        %v3106 = vshrl.u32 %v3105, 5
        %v3107 = vand.u32 %v3105, 31
        %v3108 = vsub.s32 32, %v3107
        %v3109 = vshrl.u32 683565275, %v3108
        %v3110 = vshll.u32 683565275, %v3107
        %v3111 = vshrl.u32 2475754826, %v3108
        %v3112 = vor.u32 %v3110, %v3111
        %v3113 = vshll.u32 2475754826, %v3107
        %v3114 = vshrl.u32 2131351028, %v3108
        %v3115 = vor.u32 %v3113, %v3114
        %v3116 = vshll.u32 2131351028, %v3107
        %v3117 = vshrl.u32 2102212464, %v3108
        %v3118 = vor.u32 %v3116, %v3117
        %v3119 = vshll.u32 2102212464, %v3107
        %v3120 = vshrl.u32 920167782, %v3108
        %v3121 = vor.u32 %v3119, %v3120
        %v3122 = vshll.u32 920167782, %v3107
        %v3123 = vshrl.u32 1326507024, %v3108
        %v3124 = vor.u32 %v3122, %v3123
        %vm3125 = vcmp.lt.s32.totalorder %v3106, 1
        %vm3126 = vcmp.lt.s32.totalorder %v3106, 2
        %vm3127 = vcmp.lt.s32.totalorder %v3106, 3
        %vm3128 = vcmp.lt.s32.totalorder %v3106, 4
        %v3129 = vsel %vm3125, %v3109, %v3112
        %v3130 = vsel %vm3128, %v3118, 2102212464
        %v3131 = vsel %vm3127, %v3115, %v3130
        %v3132 = vsel %vm3126, %v3129, %v3131
        %v3133 = vsel %vm3125, %v3112, %v3115
        %v3134 = vsel %vm3128, %v3121, 920167782
        %v3135 = vsel %vm3127, %v3118, %v3134
        %v3136 = vsel %vm3126, %v3133, %v3135
        %v3137 = vsel %vm3125, %v3115, %v3118
        %v3138 = vsel %vm3128, %v3124, 1326507024
        %v3139 = vsel %vm3127, %v3121, %v3138
        %v3140 = vsel %vm3126, %v3137, %v3139
        %v3141 = vshll.u32 %v3101, 8
        %v3142 = vmul.u32.u64.compose %v3141, %v3140
        %v3143 = vextract.low.u32 %v3142
        %v3144 = vextract.high.u32 %v3142
        %v3145 = vmul.u32.u64.compose %v3141, %v3136
        %v3146 = vextract.low.u32 %v3145
        %v3147 = vextract.high.u32 %v3145
        %v3148 = vmul.u32 %v3141, %v3132
        %v3149 = vadd.s32 %v3144, %v3146
        %vm3150 = vc.u32 %v3144, %v3146
        %v3151 = vadd.s32 %v3147, 1
        %v3152 = vsel %vm3150, %v3151, %v3147
        %v3153 = vadd.s32 %v3148, %v3152
        %v3154 = vadd.s32 %v3153, 536870912
        %v3155 = vshrl.u32 %v3154, 30
        %v3156 = vshll.u32 %v3155, 30
        %v3157 = vsub.s32 %v3153, %v3156
        %vm3158 = vcmp.lt.s32.totalorder %v3157, 0
        %v3159 = vsub.s32 0, %v3157
        %v3160 = vsel %vm3158, %v3159, %v3157
        %v3161 = vclz %v3160
        %v3162 = vsub.s32 %v3161, 2
        %vm3163 = vcmp.gt.s32.totalorder 0, %v3162
        %v3164 = vsel %vm3163, 0, %v3162
        %v3165 = vsub.s32 32, %v3164
        %v3166 = vshll.u32 %v3157, %v3164
        %v3167 = vshrl.u32 %v3149, %v3165
        %v3168 = vor.u32 %v3166, %v3167
        %v3169 = vsub.s32 4294967266, %v3164
        %v3170 = vadd.s32 %v3169, 127
        %v3171 = vshll.u32 %v3170, 23
        %v3172 = vor.u32 4788187, %v3171
        %v3173 = vand.u32 2147483647, %v3172
        %v3175 = vcvt.s32.f32 %v3168
        %v3176 = vmul.f32 %v3175, %v3173
        %v3177 = vxor.u32 %v3176, 2147483648
        %v3178 = vsel %vm3095, %v3177, %v3176
        %v3179 = vsub.s32 4, %v3155
        %v3180 = vsel %vm3095, %v3179, %v3155
        %v3181 = vsel %vm3094, %v370, %v3178
        %v3182 = vsel %vm3094, 0, %v3180
        %v3183 = vcosq.f32.pop %v3181
        %v3184 = vsinq.f32.pop %v3181
        %vm3185 = vweird.f32 %v370
        %v3186 = vand.u32 %v3182, 3
        %vm3187 = vcmp.lt.s32.totalorder %v3186, 2
        %vm3188 = vcmp.eq.s32.totalorder %v3186, 0
        %v3189 = vxor.u32 %v3184, 2147483648
        %v3190 = vsel %vm3188, %v3183, %v3189
        %vm3191 = vcmp.eq.s32.totalorder %v3186, 2
        %v3192 = vxor.u32 %v3183, 2147483648
        %v3193 = vsel %vm3191, %v3192, %v3184
        %v3194 = vsel %vm3187, %v3190, %v3193
        %v3195 = vsel %vm3185, nan, %v3194
        %v3196 = vand.u32 2147483647, %v371
        %vm3197 = vcmp.le.f32.partialorder %v3196, 0.7853982
        %vm3198 = vcmp.lt.s32.totalorder %v371, 0
        %v3199 = vand.u32 %v371, 2139095040
        %v3200 = vshrl.u32 %v3199, 23
        %v3201 = vsub.s32 %v3200, 127
        %v3202 = vand.u32 2147483647, %v371
        %v3203 = vand.u32 %v3202, 8388607
        %v3204 = vor.u32 %v3203, 8388608
        %v3205 = vsub.s32 0, %v3204
        %v3206 = vadd.s32 %v3201, 1
        %vm3207 = vcmp.gt.s32.totalorder %v3206, 0
        %v3208 = vsel %vm3207, %v3206, 0
        %v3209 = vshrl.u32 %v3208, 5
        %v3210 = vand.u32 %v3208, 31
        %v3211 = vsub.s32 32, %v3210
        %v3212 = vshrl.u32 683565275, %v3211
        %v3213 = vshll.u32 683565275, %v3210
        %v3214 = vshrl.u32 2475754826, %v3211
        %v3215 = vor.u32 %v3213, %v3214
        %v3216 = vshll.u32 2475754826, %v3210
        %v3217 = vshrl.u32 2131351028, %v3211
        %v3218 = vor.u32 %v3216, %v3217
        %v3219 = vshll.u32 2131351028, %v3210
        %v3220 = vshrl.u32 2102212464, %v3211
        %v3221 = vor.u32 %v3219, %v3220
        %v3222 = vshll.u32 2102212464, %v3210
        %v3223 = vshrl.u32 920167782, %v3211
        %v3224 = vor.u32 %v3222, %v3223
        %v3225 = vshll.u32 920167782, %v3210
        %v3226 = vshrl.u32 1326507024, %v3211
        %v3227 = vor.u32 %v3225, %v3226
        %vm3228 = vcmp.lt.s32.totalorder %v3209, 1
        %vm3229 = vcmp.lt.s32.totalorder %v3209, 2
        %vm3230 = vcmp.lt.s32.totalorder %v3209, 3
        %vm3231 = vcmp.lt.s32.totalorder %v3209, 4
        %v3232 = vsel %vm3228, %v3212, %v3215
        %v3233 = vsel %vm3231, %v3221, 2102212464
        %v3234 = vsel %vm3230, %v3218, %v3233
        %v3235 = vsel %vm3229, %v3232, %v3234
        %v3236 = vsel %vm3228, %v3215, %v3218
        %v3237 = vsel %vm3231, %v3224, 920167782
        %v3238 = vsel %vm3230, %v3221, %v3237
        %v3239 = vsel %vm3229, %v3236, %v3238
        %v3240 = vsel %vm3228, %v3218, %v3221
        %v3241 = vsel %vm3231, %v3227, 1326507024
        %v3242 = vsel %vm3230, %v3224, %v3241
        %v3243 = vsel %vm3229, %v3240, %v3242
        %v3244 = vshll.u32 %v3204, 8
        %v3245 = vmul.u32.u64.compose %v3244, %v3243
        %v3246 = vextract.low.u32 %v3245
        %v3247 = vextract.high.u32 %v3245
        %v3248 = vmul.u32.u64.compose %v3244, %v3239
        %v3249 = vextract.low.u32 %v3248
        %v3250 = vextract.high.u32 %v3248
        %v3251 = vmul.u32 %v3244, %v3235
        %v3252 = vadd.s32 %v3247, %v3249
        %vm3253 = vc.u32 %v3247, %v3249
        %v3254 = vadd.s32 %v3250, 1
        %v3255 = vsel %vm3253, %v3254, %v3250
        %v3256 = vadd.s32 %v3251, %v3255
        %v3257 = vadd.s32 %v3256, 536870912
        %v3258 = vshrl.u32 %v3257, 30
        %v3259 = vshll.u32 %v3258, 30
        %v3260 = vsub.s32 %v3256, %v3259
        %vm3261 = vcmp.lt.s32.totalorder %v3260, 0
        %v3262 = vsub.s32 0, %v3260
        %v3263 = vsel %vm3261, %v3262, %v3260
        %v3264 = vclz %v3263
        %v3265 = vsub.s32 %v3264, 2
        %vm3266 = vcmp.gt.s32.totalorder 0, %v3265
        %v3267 = vsel %vm3266, 0, %v3265
        %v3268 = vsub.s32 32, %v3267
        %v3269 = vshll.u32 %v3260, %v3267
        %v3270 = vshrl.u32 %v3252, %v3268
        %v3271 = vor.u32 %v3269, %v3270
        %v3272 = vsub.s32 4294967266, %v3267
        %v3273 = vadd.s32 %v3272, 127
        %v3274 = vshll.u32 %v3273, 23
        %v3275 = vor.u32 4788187, %v3274
        %v3276 = vand.u32 2147483647, %v3275
        %v3278 = vcvt.s32.f32 %v3271
        %v3279 = vmul.f32 %v3278, %v3276
        %v3280 = vxor.u32 %v3279, 2147483648
        %v3281 = vsel %vm3198, %v3280, %v3279
        %v3282 = vsub.s32 4, %v3258
        %v3283 = vsel %vm3198, %v3282, %v3258
        %v3284 = vsel %vm3197, %v371, %v3281
        %v3285 = vsel %vm3197, 0, %v3283
        %v3286 = vcosq.f32.pop %v3284
        %v3287 = vsinq.f32.pop %v3284
        %vm3288 = vweird.f32 %v371
        %v3289 = vand.u32 %v3285, 3
        %vm3290 = vcmp.lt.s32.totalorder %v3289, 2
        %vm3291 = vcmp.eq.s32.totalorder %v3289, 0
        %v3292 = vxor.u32 %v3287, 2147483648
        %v3293 = vsel %vm3291, %v3286, %v3292
        %vm3294 = vcmp.eq.s32.totalorder %v3289, 2
        %v3295 = vxor.u32 %v3286, 2147483648
        %v3296 = vsel %vm3294, %v3295, %v3287
        %v3297 = vsel %vm3290, %v3293, %v3296
        %v3298 = vsel %vm3288, nan, %v3297
        %v3299 = vand.u32 2147483647, %v372
        %vm3300 = vcmp.le.f32.partialorder %v3299, 0.7853982
        %vm3301 = vcmp.lt.s32.totalorder %v372, 0
        %v3302 = vand.u32 %v372, 2139095040
        %v3303 = vshrl.u32 %v3302, 23
        %v3304 = vsub.s32 %v3303, 127
        %v3305 = vand.u32 2147483647, %v372
        %v3306 = vand.u32 %v3305, 8388607
        %v3307 = vor.u32 %v3306, 8388608
        %v3308 = vsub.s32 0, %v3307
        %v3309 = vadd.s32 %v3304, 1
        %vm3310 = vcmp.gt.s32.totalorder %v3309, 0
        %v3311 = vsel %vm3310, %v3309, 0
        %v3312 = vshrl.u32 %v3311, 5
        %v3313 = vand.u32 %v3311, 31
        %v3314 = vsub.s32 32, %v3313
        %v3315 = vshrl.u32 683565275, %v3314
        %v3316 = vshll.u32 683565275, %v3313
        %v3317 = vshrl.u32 2475754826, %v3314
        %v3318 = vor.u32 %v3316, %v3317
        %v3319 = vshll.u32 2475754826, %v3313
        %v3320 = vshrl.u32 2131351028, %v3314
        %v3321 = vor.u32 %v3319, %v3320
        %v3322 = vshll.u32 2131351028, %v3313
        %v3323 = vshrl.u32 2102212464, %v3314
        %v3324 = vor.u32 %v3322, %v3323
        %v3325 = vshll.u32 2102212464, %v3313
        %v3326 = vshrl.u32 920167782, %v3314
        %v3327 = vor.u32 %v3325, %v3326
        %v3328 = vshll.u32 920167782, %v3313
        %v3329 = vshrl.u32 1326507024, %v3314
        %v3330 = vor.u32 %v3328, %v3329
        %vm3331 = vcmp.lt.s32.totalorder %v3312, 1
        %vm3332 = vcmp.lt.s32.totalorder %v3312, 2
        %vm3333 = vcmp.lt.s32.totalorder %v3312, 3
        %vm3334 = vcmp.lt.s32.totalorder %v3312, 4
        %v3335 = vsel %vm3331, %v3315, %v3318
        %v3336 = vsel %vm3334, %v3324, 2102212464
        %v3337 = vsel %vm3333, %v3321, %v3336
        %v3338 = vsel %vm3332, %v3335, %v3337
        %v3339 = vsel %vm3331, %v3318, %v3321
        %v3340 = vsel %vm3334, %v3327, 920167782
        %v3341 = vsel %vm3333, %v3324, %v3340
        %v3342 = vsel %vm3332, %v3339, %v3341
        %v3343 = vsel %vm3331, %v3321, %v3324
        %v3344 = vsel %vm3334, %v3330, 1326507024
        %v3345 = vsel %vm3333, %v3327, %v3344
        %v3346 = vsel %vm3332, %v3343, %v3345
        %v3347 = vshll.u32 %v3307, 8
        %v3348 = vmul.u32.u64.compose %v3347, %v3346
        %v3349 = vextract.low.u32 %v3348
        %v3350 = vextract.high.u32 %v3348
        %v3351 = vmul.u32.u64.compose %v3347, %v3342
        %v3352 = vextract.low.u32 %v3351
        %v3353 = vextract.high.u32 %v3351
        %v3354 = vmul.u32 %v3347, %v3338
        %v3355 = vadd.s32 %v3350, %v3352
        %vm3356 = vc.u32 %v3350, %v3352
        %v3357 = vadd.s32 %v3353, 1
        %v3358 = vsel %vm3356, %v3357, %v3353
        %v3359 = vadd.s32 %v3354, %v3358
        %v3360 = vadd.s32 %v3359, 536870912
        %v3361 = vshrl.u32 %v3360, 30
        %v3362 = vshll.u32 %v3361, 30
        %v3363 = vsub.s32 %v3359, %v3362
        %vm3364 = vcmp.lt.s32.totalorder %v3363, 0
        %v3365 = vsub.s32 0, %v3363
        %v3366 = vsel %vm3364, %v3365, %v3363
        %v3367 = vclz %v3366
        %v3368 = vsub.s32 %v3367, 2
        %vm3369 = vcmp.gt.s32.totalorder 0, %v3368
        %v3370 = vsel %vm3369, 0, %v3368
        %v3371 = vsub.s32 32, %v3370
        %v3372 = vshll.u32 %v3363, %v3370
        %v3373 = vshrl.u32 %v3355, %v3371
        %v3374 = vor.u32 %v3372, %v3373
        %v3375 = vsub.s32 4294967266, %v3370
        %v3376 = vadd.s32 %v3375, 127
        %v3377 = vshll.u32 %v3376, 23
        %v3378 = vor.u32 4788187, %v3377
        %v3379 = vand.u32 2147483647, %v3378
        %v3381 = vcvt.s32.f32 %v3374
        %v3382 = vmul.f32 %v3381, %v3379
        %v3383 = vxor.u32 %v3382, 2147483648
        %v3384 = vsel %vm3301, %v3383, %v3382
        %v3385 = vsub.s32 4, %v3361
        %v3386 = vsel %vm3301, %v3385, %v3361
        %v3387 = vsel %vm3300, %v372, %v3384
        %v3388 = vsel %vm3300, 0, %v3386
        %v3389 = vcosq.f32.pop %v3387
        %v3390 = vsinq.f32.pop %v3387
        %vm3391 = vweird.f32 %v372
        %v3392 = vand.u32 %v3388, 3
        %vm3393 = vcmp.lt.s32.totalorder %v3392, 2
        %vm3394 = vcmp.eq.s32.totalorder %v3392, 0
        %v3395 = vxor.u32 %v3390, 2147483648
        %v3396 = vsel %vm3394, %v3389, %v3395
        %vm3397 = vcmp.eq.s32.totalorder %v3392, 2
        %v3398 = vxor.u32 %v3389, 2147483648
        %v3399 = vsel %vm3397, %v3398, %v3390
        %v3400 = vsel %vm3393, %v3396, %v3399
        %v3401 = vsel %vm3391, nan, %v3400
        %v3402 = vand.u32 2147483647, %v373
        %vm3403 = vcmp.le.f32.partialorder %v3402, 0.7853982
        %vm3404 = vcmp.lt.s32.totalorder %v373, 0
        %v3405 = vand.u32 %v373, 2139095040
        %v3406 = vshrl.u32 %v3405, 23
        %v3407 = vsub.s32 %v3406, 127
        %v3408 = vand.u32 2147483647, %v373
        %v3409 = vand.u32 %v3408, 8388607
        %v3410 = vor.u32 %v3409, 8388608
        %v3411 = vsub.s32 0, %v3410
        %v3412 = vadd.s32 %v3407, 1
        %vm3413 = vcmp.gt.s32.totalorder %v3412, 0
        %v3414 = vsel %vm3413, %v3412, 0
        %v3415 = vshrl.u32 %v3414, 5
        %v3416 = vand.u32 %v3414, 31
        %v3417 = vsub.s32 32, %v3416
        %v3418 = vshrl.u32 683565275, %v3417
        %v3419 = vshll.u32 683565275, %v3416
        %v3420 = vshrl.u32 2475754826, %v3417
        %v3421 = vor.u32 %v3419, %v3420
        %v3422 = vshll.u32 2475754826, %v3416
        %v3423 = vshrl.u32 2131351028, %v3417
        %v3424 = vor.u32 %v3422, %v3423
        %v3425 = vshll.u32 2131351028, %v3416
        %v3426 = vshrl.u32 2102212464, %v3417
        %v3427 = vor.u32 %v3425, %v3426
        %v3428 = vshll.u32 2102212464, %v3416
        %v3429 = vshrl.u32 920167782, %v3417
        %v3430 = vor.u32 %v3428, %v3429
        %v3431 = vshll.u32 920167782, %v3416
        %v3432 = vshrl.u32 1326507024, %v3417
        %v3433 = vor.u32 %v3431, %v3432
        %vm3434 = vcmp.lt.s32.totalorder %v3415, 1
        %vm3435 = vcmp.lt.s32.totalorder %v3415, 2
        %vm3436 = vcmp.lt.s32.totalorder %v3415, 3
        %vm3437 = vcmp.lt.s32.totalorder %v3415, 4
        %v3438 = vsel %vm3434, %v3418, %v3421
        %v3439 = vsel %vm3437, %v3427, 2102212464
        %v3440 = vsel %vm3436, %v3424, %v3439
        %v3441 = vsel %vm3435, %v3438, %v3440
        %v3442 = vsel %vm3434, %v3421, %v3424
        %v3443 = vsel %vm3437, %v3430, 920167782
        %v3444 = vsel %vm3436, %v3427, %v3443
        %v3445 = vsel %vm3435, %v3442, %v3444
        %v3446 = vsel %vm3434, %v3424, %v3427
        %v3447 = vsel %vm3437, %v3433, 1326507024
        %v3448 = vsel %vm3436, %v3430, %v3447
        %v3449 = vsel %vm3435, %v3446, %v3448
        %v3450 = vshll.u32 %v3410, 8
        %v3451 = vmul.u32.u64.compose %v3450, %v3449
        %v3452 = vextract.low.u32 %v3451
        %v3453 = vextract.high.u32 %v3451
        %v3454 = vmul.u32.u64.compose %v3450, %v3445
        %v3455 = vextract.low.u32 %v3454
        %v3456 = vextract.high.u32 %v3454
        %v3457 = vmul.u32 %v3450, %v3441
        %v3458 = vadd.s32 %v3453, %v3455
        %vm3459 = vc.u32 %v3453, %v3455
        %v3460 = vadd.s32 %v3456, 1
        %v3461 = vsel %vm3459, %v3460, %v3456
        %v3462 = vadd.s32 %v3457, %v3461
        %v3463 = vadd.s32 %v3462, 536870912
        %v3464 = vshrl.u32 %v3463, 30
        %v3465 = vshll.u32 %v3464, 30
        %v3466 = vsub.s32 %v3462, %v3465
        %vm3467 = vcmp.lt.s32.totalorder %v3466, 0
        %v3468 = vsub.s32 0, %v3466
        %v3469 = vsel %vm3467, %v3468, %v3466
        %v3470 = vclz %v3469
        %v3471 = vsub.s32 %v3470, 2
        %vm3472 = vcmp.gt.s32.totalorder 0, %v3471
        %v3473 = vsel %vm3472, 0, %v3471
        %v3474 = vsub.s32 32, %v3473
        %v3475 = vshll.u32 %v3466, %v3473
        %v3476 = vshrl.u32 %v3458, %v3474
        %v3477 = vor.u32 %v3475, %v3476
        %v3478 = vsub.s32 4294967266, %v3473
        %v3479 = vadd.s32 %v3478, 127
        %v3480 = vshll.u32 %v3479, 23
        %v3481 = vor.u32 4788187, %v3480
        %v3482 = vand.u32 2147483647, %v3481
        %v3484 = vcvt.s32.f32 %v3477
        %v3485 = vmul.f32 %v3484, %v3482
        %v3486 = vxor.u32 %v3485, 2147483648
        %v3487 = vsel %vm3404, %v3486, %v3485
        %v3488 = vsub.s32 4, %v3464
        %v3489 = vsel %vm3404, %v3488, %v3464
        %v3490 = vsel %vm3403, %v373, %v3487
        %v3491 = vsel %vm3403, 0, %v3489
        %v3492 = vcosq.f32.pop %v3490
        %v3493 = vsinq.f32.pop %v3490
        %vm3494 = vweird.f32 %v373
        %v3495 = vand.u32 %v3491, 3
        %vm3496 = vcmp.lt.s32.totalorder %v3495, 2
        %vm3497 = vcmp.eq.s32.totalorder %v3495, 0
        %v3498 = vxor.u32 %v3493, 2147483648
        %v3499 = vsel %vm3497, %v3492, %v3498
        %vm3500 = vcmp.eq.s32.totalorder %v3495, 2
        %v3501 = vxor.u32 %v3492, 2147483648
        %v3502 = vsel %vm3500, %v3501, %v3493
        %v3503 = vsel %vm3496, %v3499, %v3502
        %v3504 = vsel %vm3494, nan, %v3503
        %v3505 = vand.u32 2147483647, %v374
        %vm3506 = vcmp.le.f32.partialorder %v3505, 0.7853982
        %vm3507 = vcmp.lt.s32.totalorder %v374, 0
        %v3508 = vand.u32 %v374, 2139095040
        %v3509 = vshrl.u32 %v3508, 23
        %v3510 = vsub.s32 %v3509, 127
        %v3511 = vand.u32 2147483647, %v374
        %v3512 = vand.u32 %v3511, 8388607
        %v3513 = vor.u32 %v3512, 8388608
        %v3514 = vsub.s32 0, %v3513
        %v3515 = vadd.s32 %v3510, 1
        %vm3516 = vcmp.gt.s32.totalorder %v3515, 0
        %v3517 = vsel %vm3516, %v3515, 0
        %v3518 = vshrl.u32 %v3517, 5
        %v3519 = vand.u32 %v3517, 31
        %v3520 = vsub.s32 32, %v3519
        %v3521 = vshrl.u32 683565275, %v3520
        %v3522 = vshll.u32 683565275, %v3519
        %v3523 = vshrl.u32 2475754826, %v3520
        %v3524 = vor.u32 %v3522, %v3523
        %v3525 = vshll.u32 2475754826, %v3519
        %v3526 = vshrl.u32 2131351028, %v3520
        %v3527 = vor.u32 %v3525, %v3526
        %v3528 = vshll.u32 2131351028, %v3519
        %v3529 = vshrl.u32 2102212464, %v3520
        %v3530 = vor.u32 %v3528, %v3529
        %v3531 = vshll.u32 2102212464, %v3519
        %v3532 = vshrl.u32 920167782, %v3520
        %v3533 = vor.u32 %v3531, %v3532
        %v3534 = vshll.u32 920167782, %v3519
        %v3535 = vshrl.u32 1326507024, %v3520
        %v3536 = vor.u32 %v3534, %v3535
        %vm3537 = vcmp.lt.s32.totalorder %v3518, 1
        %vm3538 = vcmp.lt.s32.totalorder %v3518, 2
        %vm3539 = vcmp.lt.s32.totalorder %v3518, 3
        %vm3540 = vcmp.lt.s32.totalorder %v3518, 4
        %v3541 = vsel %vm3537, %v3521, %v3524
        %v3542 = vsel %vm3540, %v3530, 2102212464
        %v3543 = vsel %vm3539, %v3527, %v3542
        %v3544 = vsel %vm3538, %v3541, %v3543
        %v3545 = vsel %vm3537, %v3524, %v3527
        %v3546 = vsel %vm3540, %v3533, 920167782
        %v3547 = vsel %vm3539, %v3530, %v3546
        %v3548 = vsel %vm3538, %v3545, %v3547
        %v3549 = vsel %vm3537, %v3527, %v3530
        %v3550 = vsel %vm3540, %v3536, 1326507024
        %v3551 = vsel %vm3539, %v3533, %v3550
        %v3552 = vsel %vm3538, %v3549, %v3551
        %v3553 = vshll.u32 %v3513, 8
        %v3554 = vmul.u32.u64.compose %v3553, %v3552
        %v3555 = vextract.low.u32 %v3554
        %v3556 = vextract.high.u32 %v3554
        %v3557 = vmul.u32.u64.compose %v3553, %v3548
        %v3558 = vextract.low.u32 %v3557
        %v3559 = vextract.high.u32 %v3557
        %v3560 = vmul.u32 %v3553, %v3544
        %v3561 = vadd.s32 %v3556, %v3558
        %vm3562 = vc.u32 %v3556, %v3558
        %v3563 = vadd.s32 %v3559, 1
        %v3564 = vsel %vm3562, %v3563, %v3559
        %v3565 = vadd.s32 %v3560, %v3564
        %v3566 = vadd.s32 %v3565, 536870912
        %v3567 = vshrl.u32 %v3566, 30
        %v3568 = vshll.u32 %v3567, 30
        %v3569 = vsub.s32 %v3565, %v3568
        %vm3570 = vcmp.lt.s32.totalorder %v3569, 0
        %v3571 = vsub.s32 0, %v3569
        %v3572 = vsel %vm3570, %v3571, %v3569
        %v3573 = vclz %v3572
        %v3574 = vsub.s32 %v3573, 2
        %vm3575 = vcmp.gt.s32.totalorder 0, %v3574
        %v3576 = vsel %vm3575, 0, %v3574
        %v3577 = vsub.s32 32, %v3576
        %v3578 = vshll.u32 %v3569, %v3576
        %v3579 = vshrl.u32 %v3561, %v3577
        %v3580 = vor.u32 %v3578, %v3579
        %v3581 = vsub.s32 4294967266, %v3576
        %v3582 = vadd.s32 %v3581, 127
        %v3583 = vshll.u32 %v3582, 23
        %v3584 = vor.u32 4788187, %v3583
        %v3585 = vand.u32 2147483647, %v3584
        %v3587 = vcvt.s32.f32 %v3580
        %v3588 = vmul.f32 %v3587, %v3585
        %v3589 = vxor.u32 %v3588, 2147483648
        %v3590 = vsel %vm3507, %v3589, %v3588
        %v3591 = vsub.s32 4, %v3567
        %v3592 = vsel %vm3507, %v3591, %v3567
        %v3593 = vsel %vm3506, %v374, %v3590
        %v3594 = vsel %vm3506, 0, %v3592
        %v3595 = vcosq.f32.pop %v3593
        %v3596 = vsinq.f32.pop %v3593
        %vm3597 = vweird.f32 %v374
        %v3598 = vand.u32 %v3594, 3
        %vm3599 = vcmp.lt.s32.totalorder %v3598, 2
        %vm3600 = vcmp.eq.s32.totalorder %v3598, 0
        %v3601 = vxor.u32 %v3596, 2147483648
        %v3602 = vsel %vm3600, %v3595, %v3601
        %vm3603 = vcmp.eq.s32.totalorder %v3598, 2
        %v3604 = vxor.u32 %v3595, 2147483648
        %v3605 = vsel %vm3603, %v3604, %v3596
        %v3606 = vsel %vm3599, %v3602, %v3605
        %v3607 = vsel %vm3597, nan, %v3606
        %v3608 = vand.u32 2147483647, %v375
        %vm3609 = vcmp.le.f32.partialorder %v3608, 0.7853982
        %vm3610 = vcmp.lt.s32.totalorder %v375, 0
        %v3611 = vand.u32 %v375, 2139095040
        %v3612 = vshrl.u32 %v3611, 23
        %v3613 = vsub.s32 %v3612, 127
        %v3614 = vand.u32 2147483647, %v375
        %v3615 = vand.u32 %v3614, 8388607
        %v3616 = vor.u32 %v3615, 8388608
        %v3617 = vsub.s32 0, %v3616
        %v3618 = vadd.s32 %v3613, 1
        %vm3619 = vcmp.gt.s32.totalorder %v3618, 0
        %v3620 = vsel %vm3619, %v3618, 0
        %v3621 = vshrl.u32 %v3620, 5
        %v3622 = vand.u32 %v3620, 31
        %v3623 = vsub.s32 32, %v3622
        %v3624 = vshrl.u32 683565275, %v3623
        %v3625 = vshll.u32 683565275, %v3622
        %v3626 = vshrl.u32 2475754826, %v3623
        %v3627 = vor.u32 %v3625, %v3626
        %v3628 = vshll.u32 2475754826, %v3622
        %v3629 = vshrl.u32 2131351028, %v3623
        %v3630 = vor.u32 %v3628, %v3629
        %v3631 = vshll.u32 2131351028, %v3622
        %v3632 = vshrl.u32 2102212464, %v3623
        %v3633 = vor.u32 %v3631, %v3632
        %v3634 = vshll.u32 2102212464, %v3622
        %v3635 = vshrl.u32 920167782, %v3623
        %v3636 = vor.u32 %v3634, %v3635
        %v3637 = vshll.u32 920167782, %v3622
        %v3638 = vshrl.u32 1326507024, %v3623
        %v3639 = vor.u32 %v3637, %v3638
        %vm3640 = vcmp.lt.s32.totalorder %v3621, 1
        %vm3641 = vcmp.lt.s32.totalorder %v3621, 2
        %vm3642 = vcmp.lt.s32.totalorder %v3621, 3
        %vm3643 = vcmp.lt.s32.totalorder %v3621, 4
        %v3644 = vsel %vm3640, %v3624, %v3627
        %v3645 = vsel %vm3643, %v3633, 2102212464
        %v3646 = vsel %vm3642, %v3630, %v3645
        %v3647 = vsel %vm3641, %v3644, %v3646
        %v3648 = vsel %vm3640, %v3627, %v3630
        %v3649 = vsel %vm3643, %v3636, 920167782
        %v3650 = vsel %vm3642, %v3633, %v3649
        %v3651 = vsel %vm3641, %v3648, %v3650
        %v3652 = vsel %vm3640, %v3630, %v3633
        %v3653 = vsel %vm3643, %v3639, 1326507024
        %v3654 = vsel %vm3642, %v3636, %v3653
        %v3655 = vsel %vm3641, %v3652, %v3654
        %v3656 = vshll.u32 %v3616, 8
        %v3657 = vmul.u32.u64.compose %v3656, %v3655
        %v3658 = vextract.low.u32 %v3657
        %v3659 = vextract.high.u32 %v3657
        %v3660 = vmul.u32.u64.compose %v3656, %v3651
        %v3661 = vextract.low.u32 %v3660
        %v3662 = vextract.high.u32 %v3660
        %v3663 = vmul.u32 %v3656, %v3647
        %v3664 = vadd.s32 %v3659, %v3661
        %vm3665 = vc.u32 %v3659, %v3661
        %v3666 = vadd.s32 %v3662, 1
        %v3667 = vsel %vm3665, %v3666, %v3662
        %v3668 = vadd.s32 %v3663, %v3667
        %v3669 = vadd.s32 %v3668, 536870912
        %v3670 = vshrl.u32 %v3669, 30
        %v3671 = vshll.u32 %v3670, 30
        %v3672 = vsub.s32 %v3668, %v3671
        %vm3673 = vcmp.lt.s32.totalorder %v3672, 0
        %v3674 = vsub.s32 0, %v3672
        %v3675 = vsel %vm3673, %v3674, %v3672
        %v3676 = vclz %v3675
        %v3677 = vsub.s32 %v3676, 2
        %vm3678 = vcmp.gt.s32.totalorder 0, %v3677
        %v3679 = vsel %vm3678, 0, %v3677
        %v3680 = vsub.s32 32, %v3679
        %v3681 = vshll.u32 %v3672, %v3679
        %v3682 = vshrl.u32 %v3664, %v3680
        %v3683 = vor.u32 %v3681, %v3682
        %v3684 = vsub.s32 4294967266, %v3679
        %v3685 = vadd.s32 %v3684, 127
        %v3686 = vshll.u32 %v3685, 23
        %v3687 = vor.u32 4788187, %v3686
        %v3688 = vand.u32 2147483647, %v3687
        %v3690 = vcvt.s32.f32 %v3683
        %v3691 = vmul.f32 %v3690, %v3688
        %v3692 = vxor.u32 %v3691, 2147483648
        %v3693 = vsel %vm3610, %v3692, %v3691
        %v3694 = vsub.s32 4, %v3670
        %v3695 = vsel %vm3610, %v3694, %v3670
        %v3696 = vsel %vm3609, %v375, %v3693
        %v3697 = vsel %vm3609, 0, %v3695
        %v3698 = vcosq.f32.pop %v3696
        %v3699 = vsinq.f32.pop %v3696
        %vm3700 = vweird.f32 %v375
        %v3701 = vand.u32 %v3697, 3
        %vm3702 = vcmp.lt.s32.totalorder %v3701, 2
        %vm3703 = vcmp.eq.s32.totalorder %v3701, 0
        %v3704 = vxor.u32 %v3699, 2147483648
        %v3705 = vsel %vm3703, %v3698, %v3704
        %vm3706 = vcmp.eq.s32.totalorder %v3701, 2
        %v3707 = vxor.u32 %v3698, 2147483648
        %v3708 = vsel %vm3706, %v3707, %v3699
        %v3709 = vsel %vm3702, %v3705, %v3708
        %v3710 = vsel %vm3700, nan, %v3709
        %v3711 = vand.u32 2147483647, %v376
        %vm3712 = vcmp.le.f32.partialorder %v3711, 0.7853982
        %vm3713 = vcmp.lt.s32.totalorder %v376, 0
        %v3714 = vand.u32 %v376, 2139095040
        %v3715 = vshrl.u32 %v3714, 23
        %v3716 = vsub.s32 %v3715, 127
        %v3717 = vand.u32 2147483647, %v376
        %v3718 = vand.u32 %v3717, 8388607
        %v3719 = vor.u32 %v3718, 8388608
        %v3720 = vsub.s32 0, %v3719
        %v3721 = vadd.s32 %v3716, 1
        %vm3722 = vcmp.gt.s32.totalorder %v3721, 0
        %v3723 = vsel %vm3722, %v3721, 0
        %v3724 = vshrl.u32 %v3723, 5
        %v3725 = vand.u32 %v3723, 31
        %v3726 = vsub.s32 32, %v3725
        %v3727 = vshrl.u32 683565275, %v3726
        %v3728 = vshll.u32 683565275, %v3725
        %v3729 = vshrl.u32 2475754826, %v3726
        %v3730 = vor.u32 %v3728, %v3729
        %v3731 = vshll.u32 2475754826, %v3725
        %v3732 = vshrl.u32 2131351028, %v3726
        %v3733 = vor.u32 %v3731, %v3732
        %v3734 = vshll.u32 2131351028, %v3725
        %v3735 = vshrl.u32 2102212464, %v3726
        %v3736 = vor.u32 %v3734, %v3735
        %v3737 = vshll.u32 2102212464, %v3725
        %v3738 = vshrl.u32 920167782, %v3726
        %v3739 = vor.u32 %v3737, %v3738
        %v3740 = vshll.u32 920167782, %v3725
        %v3741 = vshrl.u32 1326507024, %v3726
        %v3742 = vor.u32 %v3740, %v3741
        %vm3743 = vcmp.lt.s32.totalorder %v3724, 1
        %vm3744 = vcmp.lt.s32.totalorder %v3724, 2
        %vm3745 = vcmp.lt.s32.totalorder %v3724, 3
        %vm3746 = vcmp.lt.s32.totalorder %v3724, 4
        %v3747 = vsel %vm3743, %v3727, %v3730
        %v3748 = vsel %vm3746, %v3736, 2102212464
        %v3749 = vsel %vm3745, %v3733, %v3748
        %v3750 = vsel %vm3744, %v3747, %v3749
        %v3751 = vsel %vm3743, %v3730, %v3733
        %v3752 = vsel %vm3746, %v3739, 920167782
        %v3753 = vsel %vm3745, %v3736, %v3752
        %v3754 = vsel %vm3744, %v3751, %v3753
        %v3755 = vsel %vm3743, %v3733, %v3736
        %v3756 = vsel %vm3746, %v3742, 1326507024
        %v3757 = vsel %vm3745, %v3739, %v3756
        %v3758 = vsel %vm3744, %v3755, %v3757
        %v3759 = vshll.u32 %v3719, 8
        %v3760 = vmul.u32.u64.compose %v3759, %v3758
        %v3761 = vextract.low.u32 %v3760
        %v3762 = vextract.high.u32 %v3760
        %v3763 = vmul.u32.u64.compose %v3759, %v3754
        %v3764 = vextract.low.u32 %v3763
        %v3765 = vextract.high.u32 %v3763
        %v3766 = vmul.u32 %v3759, %v3750
        %v3767 = vadd.s32 %v3762, %v3764
        %vm3768 = vc.u32 %v3762, %v3764
        %v3769 = vadd.s32 %v3765, 1
        %v3770 = vsel %vm3768, %v3769, %v3765
        %v3771 = vadd.s32 %v3766, %v3770
        %v3772 = vadd.s32 %v3771, 536870912
        %v3773 = vshrl.u32 %v3772, 30
        %v3774 = vshll.u32 %v3773, 30
        %v3775 = vsub.s32 %v3771, %v3774
        %vm3776 = vcmp.lt.s32.totalorder %v3775, 0
        %v3777 = vsub.s32 0, %v3775
        %v3778 = vsel %vm3776, %v3777, %v3775
        %v3779 = vclz %v3778
        %v3780 = vsub.s32 %v3779, 2
        %vm3781 = vcmp.gt.s32.totalorder 0, %v3780
        %v3782 = vsel %vm3781, 0, %v3780
        %v3783 = vsub.s32 32, %v3782
        %v3784 = vshll.u32 %v3775, %v3782
        %v3785 = vshrl.u32 %v3767, %v3783
        %v3786 = vor.u32 %v3784, %v3785
        %v3787 = vsub.s32 4294967266, %v3782
        %v3788 = vadd.s32 %v3787, 127
        %v3789 = vshll.u32 %v3788, 23
        %v3790 = vor.u32 4788187, %v3789
        %v3791 = vand.u32 2147483647, %v3790
        %v3793 = vcvt.s32.f32 %v3786
        %v3794 = vmul.f32 %v3793, %v3791
        %v3795 = vxor.u32 %v3794, 2147483648
        %v3796 = vsel %vm3713, %v3795, %v3794
        %v3797 = vsub.s32 4, %v3773
        %v3798 = vsel %vm3713, %v3797, %v3773
        %v3799 = vsel %vm3712, %v376, %v3796
        %v3800 = vsel %vm3712, 0, %v3798
        %v3801 = vcosq.f32.pop %v3799
        %v3802 = vsinq.f32.pop %v3799
        %vm3803 = vweird.f32 %v376
        %v3804 = vand.u32 %v3800, 3
        %vm3805 = vcmp.lt.s32.totalorder %v3804, 2
        %vm3806 = vcmp.eq.s32.totalorder %v3804, 0
        %v3807 = vxor.u32 %v3802, 2147483648
        %v3808 = vsel %vm3806, %v3801, %v3807
        %vm3809 = vcmp.eq.s32.totalorder %v3804, 2
        %v3810 = vxor.u32 %v3801, 2147483648
        %v3811 = vsel %vm3809, %v3810, %v3802
        %v3812 = vsel %vm3805, %v3808, %v3811
        %v3813 = vsel %vm3803, nan, %v3812
        %v3814 = vand.u32 2147483647, %v377
        %vm3815 = vcmp.le.f32.partialorder %v3814, 0.7853982
        %vm3816 = vcmp.lt.s32.totalorder %v377, 0
        %v3817 = vand.u32 %v377, 2139095040
        %v3818 = vshrl.u32 %v3817, 23
        %v3819 = vsub.s32 %v3818, 127
        %v3820 = vand.u32 2147483647, %v377
        %v3821 = vand.u32 %v3820, 8388607
        %v3822 = vor.u32 %v3821, 8388608
        %v3823 = vsub.s32 0, %v3822
        %v3824 = vadd.s32 %v3819, 1
        %vm3825 = vcmp.gt.s32.totalorder %v3824, 0
        %v3826 = vsel %vm3825, %v3824, 0
        %v3827 = vshrl.u32 %v3826, 5
        %v3828 = vand.u32 %v3826, 31
        %v3829 = vsub.s32 32, %v3828
        %v3830 = vshrl.u32 683565275, %v3829
        %v3831 = vshll.u32 683565275, %v3828
        %v3832 = vshrl.u32 2475754826, %v3829
        %v3833 = vor.u32 %v3831, %v3832
        %v3834 = vshll.u32 2475754826, %v3828
        %v3835 = vshrl.u32 2131351028, %v3829
        %v3836 = vor.u32 %v3834, %v3835
        %v3837 = vshll.u32 2131351028, %v3828
        %v3838 = vshrl.u32 2102212464, %v3829
        %v3839 = vor.u32 %v3837, %v3838
        %v3840 = vshll.u32 2102212464, %v3828
        %v3841 = vshrl.u32 920167782, %v3829
        %v3842 = vor.u32 %v3840, %v3841
        %v3843 = vshll.u32 920167782, %v3828
        %v3844 = vshrl.u32 1326507024, %v3829
        %v3845 = vor.u32 %v3843, %v3844
        %vm3846 = vcmp.lt.s32.totalorder %v3827, 1
        %vm3847 = vcmp.lt.s32.totalorder %v3827, 2
        %vm3848 = vcmp.lt.s32.totalorder %v3827, 3
        %vm3849 = vcmp.lt.s32.totalorder %v3827, 4
        %v3850 = vsel %vm3846, %v3830, %v3833
        %v3851 = vsel %vm3849, %v3839, 2102212464
        %v3852 = vsel %vm3848, %v3836, %v3851
        %v3853 = vsel %vm3847, %v3850, %v3852
        %v3854 = vsel %vm3846, %v3833, %v3836
        %v3855 = vsel %vm3849, %v3842, 920167782
        %v3856 = vsel %vm3848, %v3839, %v3855
        %v3857 = vsel %vm3847, %v3854, %v3856
        %v3858 = vsel %vm3846, %v3836, %v3839
        %v3859 = vsel %vm3849, %v3845, 1326507024
        %v3860 = vsel %vm3848, %v3842, %v3859
        %v3861 = vsel %vm3847, %v3858, %v3860
        %v3862 = vshll.u32 %v3822, 8
        %v3863 = vmul.u32.u64.compose %v3862, %v3861
        %v3864 = vextract.low.u32 %v3863
        %v3865 = vextract.high.u32 %v3863
        %v3866 = vmul.u32.u64.compose %v3862, %v3857
        %v3867 = vextract.low.u32 %v3866
        %v3868 = vextract.high.u32 %v3866
        %v3869 = vmul.u32 %v3862, %v3853
        %v3870 = vadd.s32 %v3865, %v3867
        %vm3871 = vc.u32 %v3865, %v3867
        %v3872 = vadd.s32 %v3868, 1
        %v3873 = vsel %vm3871, %v3872, %v3868
        %v3874 = vadd.s32 %v3869, %v3873
        %v3875 = vadd.s32 %v3874, 536870912
        %v3876 = vshrl.u32 %v3875, 30
        %v3877 = vshll.u32 %v3876, 30
        %v3878 = vsub.s32 %v3874, %v3877
        %vm3879 = vcmp.lt.s32.totalorder %v3878, 0
        %v3880 = vsub.s32 0, %v3878
        %v3881 = vsel %vm3879, %v3880, %v3878
        %v3882 = vclz %v3881
        %v3883 = vsub.s32 %v3882, 2
        %vm3884 = vcmp.gt.s32.totalorder 0, %v3883
        %v3885 = vsel %vm3884, 0, %v3883
        %v3886 = vsub.s32 32, %v3885
        %v3887 = vshll.u32 %v3878, %v3885
        %v3888 = vshrl.u32 %v3870, %v3886
        %v3889 = vor.u32 %v3887, %v3888
        %v3890 = vsub.s32 4294967266, %v3885
        %v3891 = vadd.s32 %v3890, 127
        %v3892 = vshll.u32 %v3891, 23
        %v3893 = vor.u32 4788187, %v3892
        %v3894 = vand.u32 2147483647, %v3893
        %v3896 = vcvt.s32.f32 %v3889
        %v3897 = vmul.f32 %v3896, %v3894
        %v3898 = vxor.u32 %v3897, 2147483648
        %v3899 = vsel %vm3816, %v3898, %v3897
        %v3900 = vsub.s32 4, %v3876
        %v3901 = vsel %vm3816, %v3900, %v3876
        %v3902 = vsel %vm3815, %v377, %v3899
        %v3903 = vsel %vm3815, 0, %v3901
        %v3904 = vcosq.f32.pop %v3902
        %v3905 = vsinq.f32.pop %v3902
        %vm3906 = vweird.f32 %v377
        %v3907 = vand.u32 %v3903, 3
        %vm3908 = vcmp.lt.s32.totalorder %v3907, 2
        %vm3909 = vcmp.eq.s32.totalorder %v3907, 0
        %v3910 = vxor.u32 %v3905, 2147483648
        %v3911 = vsel %vm3909, %v3904, %v3910
        %vm3912 = vcmp.eq.s32.totalorder %v3907, 2
        %v3913 = vxor.u32 %v3904, 2147483648
        %v3914 = vsel %vm3912, %v3913, %v3905
        %v3915 = vsel %vm3908, %v3911, %v3914
        %v3916 = vsel %vm3906, nan, %v3915
        %v3917 = vand.u32 2147483647, %v378
        %vm3918 = vcmp.le.f32.partialorder %v3917, 0.7853982
        %vm3919 = vcmp.lt.s32.totalorder %v378, 0
        %v3920 = vand.u32 %v378, 2139095040
        %v3921 = vshrl.u32 %v3920, 23
        %v3922 = vsub.s32 %v3921, 127
        %v3923 = vand.u32 2147483647, %v378
        %v3924 = vand.u32 %v3923, 8388607
        %v3925 = vor.u32 %v3924, 8388608
        %v3926 = vsub.s32 0, %v3925
        %v3927 = vadd.s32 %v3922, 1
        %vm3928 = vcmp.gt.s32.totalorder %v3927, 0
        %v3929 = vsel %vm3928, %v3927, 0
        %v3930 = vshrl.u32 %v3929, 5
        %v3931 = vand.u32 %v3929, 31
        %v3932 = vsub.s32 32, %v3931
        %v3933 = vshrl.u32 683565275, %v3932
        %v3934 = vshll.u32 683565275, %v3931
        %v3935 = vshrl.u32 2475754826, %v3932
        %v3936 = vor.u32 %v3934, %v3935
        %v3937 = vshll.u32 2475754826, %v3931
        %v3938 = vshrl.u32 2131351028, %v3932
        %v3939 = vor.u32 %v3937, %v3938
        %v3940 = vshll.u32 2131351028, %v3931
        %v3941 = vshrl.u32 2102212464, %v3932
        %v3942 = vor.u32 %v3940, %v3941
        %v3943 = vshll.u32 2102212464, %v3931
        %v3944 = vshrl.u32 920167782, %v3932
        %v3945 = vor.u32 %v3943, %v3944
        %v3946 = vshll.u32 920167782, %v3931
        %v3947 = vshrl.u32 1326507024, %v3932
        %v3948 = vor.u32 %v3946, %v3947
        %vm3949 = vcmp.lt.s32.totalorder %v3930, 1
        %vm3950 = vcmp.lt.s32.totalorder %v3930, 2
        %vm3951 = vcmp.lt.s32.totalorder %v3930, 3
        %vm3952 = vcmp.lt.s32.totalorder %v3930, 4
        %v3953 = vsel %vm3949, %v3933, %v3936
        %v3954 = vsel %vm3952, %v3942, 2102212464
        %v3955 = vsel %vm3951, %v3939, %v3954
        %v3956 = vsel %vm3950, %v3953, %v3955
        %v3957 = vsel %vm3949, %v3936, %v3939
        %v3958 = vsel %vm3952, %v3945, 920167782
        %v3959 = vsel %vm3951, %v3942, %v3958
        %v3960 = vsel %vm3950, %v3957, %v3959
        %v3961 = vsel %vm3949, %v3939, %v3942
        %v3962 = vsel %vm3952, %v3948, 1326507024
        %v3963 = vsel %vm3951, %v3945, %v3962
        %v3964 = vsel %vm3950, %v3961, %v3963
        %v3965 = vshll.u32 %v3925, 8
        %v3966 = vmul.u32.u64.compose %v3965, %v3964
        %v3967 = vextract.low.u32 %v3966
        %v3968 = vextract.high.u32 %v3966
        %v3969 = vmul.u32.u64.compose %v3965, %v3960
        %v3970 = vextract.low.u32 %v3969
        %v3971 = vextract.high.u32 %v3969
        %v3972 = vmul.u32 %v3965, %v3956
        %v3973 = vadd.s32 %v3968, %v3970
        %vm3974 = vc.u32 %v3968, %v3970
        %v3975 = vadd.s32 %v3971, 1
        %v3976 = vsel %vm3974, %v3975, %v3971
        %v3977 = vadd.s32 %v3972, %v3976
        %v3978 = vadd.s32 %v3977, 536870912
        %v3979 = vshrl.u32 %v3978, 30
        %v3980 = vshll.u32 %v3979, 30
        %v3981 = vsub.s32 %v3977, %v3980
        %vm3982 = vcmp.lt.s32.totalorder %v3981, 0
        %v3983 = vsub.s32 0, %v3981
        %v3984 = vsel %vm3982, %v3983, %v3981
        %v3985 = vclz %v3984
        %v3986 = vsub.s32 %v3985, 2
        %vm3987 = vcmp.gt.s32.totalorder 0, %v3986
        %v3988 = vsel %vm3987, 0, %v3986
        %v3989 = vsub.s32 32, %v3988
        %v3990 = vshll.u32 %v3981, %v3988
        %v3991 = vshrl.u32 %v3973, %v3989
        %v3992 = vor.u32 %v3990, %v3991
        %v3993 = vsub.s32 4294967266, %v3988
        %v3994 = vadd.s32 %v3993, 127
        %v3995 = vshll.u32 %v3994, 23
        %v3996 = vor.u32 4788187, %v3995
        %v3997 = vand.u32 2147483647, %v3996
        %v3999 = vcvt.s32.f32 %v3992
        %v4000 = vmul.f32 %v3999, %v3997
        %v4001 = vxor.u32 %v4000, 2147483648
        %v4002 = vsel %vm3919, %v4001, %v4000
        %v4003 = vsub.s32 4, %v3979
        %v4004 = vsel %vm3919, %v4003, %v3979
        %v4005 = vsel %vm3918, %v378, %v4002
        %v4006 = vsel %vm3918, 0, %v4004
        %v4007 = vcosq.f32.pop %v4005
        %v4008 = vsinq.f32.pop %v4005
        %vm4009 = vweird.f32 %v378
        %v4010 = vand.u32 %v4006, 3
        %vm4011 = vcmp.lt.s32.totalorder %v4010, 2
        %vm4012 = vcmp.eq.s32.totalorder %v4010, 0
        %v4013 = vxor.u32 %v4008, 2147483648
        %v4014 = vsel %vm4012, %v4007, %v4013
        %vm4015 = vcmp.eq.s32.totalorder %v4010, 2
        %v4016 = vxor.u32 %v4007, 2147483648
        %v4017 = vsel %vm4015, %v4016, %v4008
        %v4018 = vsel %vm4011, %v4014, %v4017
        %v4019 = vsel %vm4009, nan, %v4018
        %v4020 = vand.u32 2147483647, %v379
        %vm4021 = vcmp.le.f32.partialorder %v4020, 0.7853982
        %vm4022 = vcmp.lt.s32.totalorder %v379, 0
        %v4023 = vand.u32 %v379, 2139095040
        %v4024 = vshrl.u32 %v4023, 23
        %v4025 = vsub.s32 %v4024, 127
        %v4026 = vand.u32 2147483647, %v379
        %v4027 = vand.u32 %v4026, 8388607
        %v4028 = vor.u32 %v4027, 8388608
        %v4029 = vsub.s32 0, %v4028
        %v4030 = vadd.s32 %v4025, 1
        %vm4031 = vcmp.gt.s32.totalorder %v4030, 0
        %v4032 = vsel %vm4031, %v4030, 0
        %v4033 = vshrl.u32 %v4032, 5
        %v4034 = vand.u32 %v4032, 31
        %v4035 = vsub.s32 32, %v4034
        %v4036 = vshrl.u32 683565275, %v4035
        %v4037 = vshll.u32 683565275, %v4034
        %v4038 = vshrl.u32 2475754826, %v4035
        %v4039 = vor.u32 %v4037, %v4038
        %v4040 = vshll.u32 2475754826, %v4034
        %v4041 = vshrl.u32 2131351028, %v4035
        %v4042 = vor.u32 %v4040, %v4041
        %v4043 = vshll.u32 2131351028, %v4034
        %v4044 = vshrl.u32 2102212464, %v4035
        %v4045 = vor.u32 %v4043, %v4044
        %v4046 = vshll.u32 2102212464, %v4034
        %v4047 = vshrl.u32 920167782, %v4035
        %v4048 = vor.u32 %v4046, %v4047
        %v4049 = vshll.u32 920167782, %v4034
        %v4050 = vshrl.u32 1326507024, %v4035
        %v4051 = vor.u32 %v4049, %v4050
        %vm4052 = vcmp.lt.s32.totalorder %v4033, 1
        %vm4053 = vcmp.lt.s32.totalorder %v4033, 2
        %vm4054 = vcmp.lt.s32.totalorder %v4033, 3
        %vm4055 = vcmp.lt.s32.totalorder %v4033, 4
        %v4056 = vsel %vm4052, %v4036, %v4039
        %v4057 = vsel %vm4055, %v4045, 2102212464
        %v4058 = vsel %vm4054, %v4042, %v4057
        %v4059 = vsel %vm4053, %v4056, %v4058
        %v4060 = vsel %vm4052, %v4039, %v4042
        %v4061 = vsel %vm4055, %v4048, 920167782
        %v4062 = vsel %vm4054, %v4045, %v4061
        %v4063 = vsel %vm4053, %v4060, %v4062
        %v4064 = vsel %vm4052, %v4042, %v4045
        %v4065 = vsel %vm4055, %v4051, 1326507024
        %v4066 = vsel %vm4054, %v4048, %v4065
        %v4067 = vsel %vm4053, %v4064, %v4066
        %v4068 = vshll.u32 %v4028, 8
        %v4069 = vmul.u32.u64.compose %v4068, %v4067
        %v4070 = vextract.low.u32 %v4069
        %v4071 = vextract.high.u32 %v4069
        %v4072 = vmul.u32.u64.compose %v4068, %v4063
        %v4073 = vextract.low.u32 %v4072
        %v4074 = vextract.high.u32 %v4072
        %v4075 = vmul.u32 %v4068, %v4059
        %v4076 = vadd.s32 %v4071, %v4073
        %vm4077 = vc.u32 %v4071, %v4073
        %v4078 = vadd.s32 %v4074, 1
        %v4079 = vsel %vm4077, %v4078, %v4074
        %v4080 = vadd.s32 %v4075, %v4079
        %v4081 = vadd.s32 %v4080, 536870912
        %v4082 = vshrl.u32 %v4081, 30
        %v4083 = vshll.u32 %v4082, 30
        %v4084 = vsub.s32 %v4080, %v4083
        %vm4085 = vcmp.lt.s32.totalorder %v4084, 0
        %v4086 = vsub.s32 0, %v4084
        %v4087 = vsel %vm4085, %v4086, %v4084
        %v4088 = vclz %v4087
        %v4089 = vsub.s32 %v4088, 2
        %vm4090 = vcmp.gt.s32.totalorder 0, %v4089
        %v4091 = vsel %vm4090, 0, %v4089
        %v4092 = vsub.s32 32, %v4091
        %v4093 = vshll.u32 %v4084, %v4091
        %v4094 = vshrl.u32 %v4076, %v4092
        %v4095 = vor.u32 %v4093, %v4094
        %v4096 = vsub.s32 4294967266, %v4091
        %v4097 = vadd.s32 %v4096, 127
        %v4098 = vshll.u32 %v4097, 23
        %v4099 = vor.u32 4788187, %v4098
        %v4100 = vand.u32 2147483647, %v4099
        %v4102 = vcvt.s32.f32 %v4095
        %v4103 = vmul.f32 %v4102, %v4100
        %v4104 = vxor.u32 %v4103, 2147483648
        %v4105 = vsel %vm4022, %v4104, %v4103
        %v4106 = vsub.s32 4, %v4082
        %v4107 = vsel %vm4022, %v4106, %v4082
        %v4108 = vsel %vm4021, %v379, %v4105
        %v4109 = vsel %vm4021, 0, %v4107
        %v4110 = vcosq.f32.pop %v4108
        %v4111 = vsinq.f32.pop %v4108
        %vm4112 = vweird.f32 %v379
        %v4113 = vand.u32 %v4109, 3
        %vm4114 = vcmp.lt.s32.totalorder %v4113, 2
        %vm4115 = vcmp.eq.s32.totalorder %v4113, 0
        %v4116 = vxor.u32 %v4111, 2147483648
        %v4117 = vsel %vm4115, %v4110, %v4116
        %vm4118 = vcmp.eq.s32.totalorder %v4113, 2
        %v4119 = vxor.u32 %v4110, 2147483648
        %v4120 = vsel %vm4118, %v4119, %v4111
        %v4121 = vsel %vm4114, %v4117, %v4120
        %v4122 = vsel %vm4112, nan, %v4121
        %v4123 = vand.u32 2147483647, %v380
        %vm4124 = vcmp.le.f32.partialorder %v4123, 0.7853982
        %vm4125 = vcmp.lt.s32.totalorder %v380, 0
        %v4126 = vand.u32 %v380, 2139095040
        %v4127 = vshrl.u32 %v4126, 23
        %v4128 = vsub.s32 %v4127, 127
        %v4129 = vand.u32 2147483647, %v380
        %v4130 = vand.u32 %v4129, 8388607
        %v4131 = vor.u32 %v4130, 8388608
        %v4132 = vsub.s32 0, %v4131
        %v4133 = vadd.s32 %v4128, 1
        %vm4134 = vcmp.gt.s32.totalorder %v4133, 0
        %v4135 = vsel %vm4134, %v4133, 0
        %v4136 = vshrl.u32 %v4135, 5
        %v4137 = vand.u32 %v4135, 31
        %v4138 = vsub.s32 32, %v4137
        %v4139 = vshrl.u32 683565275, %v4138
        %v4140 = vshll.u32 683565275, %v4137
        %v4141 = vshrl.u32 2475754826, %v4138
        %v4142 = vor.u32 %v4140, %v4141
        %v4143 = vshll.u32 2475754826, %v4137
        %v4144 = vshrl.u32 2131351028, %v4138
        %v4145 = vor.u32 %v4143, %v4144
        %v4146 = vshll.u32 2131351028, %v4137
        %v4147 = vshrl.u32 2102212464, %v4138
        %v4148 = vor.u32 %v4146, %v4147
        %v4149 = vshll.u32 2102212464, %v4137
        %v4150 = vshrl.u32 920167782, %v4138
        %v4151 = vor.u32 %v4149, %v4150
        %v4152 = vshll.u32 920167782, %v4137
        %v4153 = vshrl.u32 1326507024, %v4138
        %v4154 = vor.u32 %v4152, %v4153
        %vm4155 = vcmp.lt.s32.totalorder %v4136, 1
        %vm4156 = vcmp.lt.s32.totalorder %v4136, 2
        %vm4157 = vcmp.lt.s32.totalorder %v4136, 3
        %vm4158 = vcmp.lt.s32.totalorder %v4136, 4
        %v4159 = vsel %vm4155, %v4139, %v4142
        %v4160 = vsel %vm4158, %v4148, 2102212464
        %v4161 = vsel %vm4157, %v4145, %v4160
        %v4162 = vsel %vm4156, %v4159, %v4161
        %v4163 = vsel %vm4155, %v4142, %v4145
        %v4164 = vsel %vm4158, %v4151, 920167782
        %v4165 = vsel %vm4157, %v4148, %v4164
        %v4166 = vsel %vm4156, %v4163, %v4165
        %v4167 = vsel %vm4155, %v4145, %v4148
        %v4168 = vsel %vm4158, %v4154, 1326507024
        %v4169 = vsel %vm4157, %v4151, %v4168
        %v4170 = vsel %vm4156, %v4167, %v4169
        %v4171 = vshll.u32 %v4131, 8
        %v4172 = vmul.u32.u64.compose %v4171, %v4170
        %v4173 = vextract.low.u32 %v4172
        %v4174 = vextract.high.u32 %v4172
        %v4175 = vmul.u32.u64.compose %v4171, %v4166
        %v4176 = vextract.low.u32 %v4175
        %v4177 = vextract.high.u32 %v4175
        %v4178 = vmul.u32 %v4171, %v4162
        %v4179 = vadd.s32 %v4174, %v4176
        %vm4180 = vc.u32 %v4174, %v4176
        %v4181 = vadd.s32 %v4177, 1
        %v4182 = vsel %vm4180, %v4181, %v4177
        %v4183 = vadd.s32 %v4178, %v4182
        %v4184 = vadd.s32 %v4183, 536870912
        %v4185 = vshrl.u32 %v4184, 30
        %v4186 = vshll.u32 %v4185, 30
        %v4187 = vsub.s32 %v4183, %v4186
        %vm4188 = vcmp.lt.s32.totalorder %v4187, 0
        %v4189 = vsub.s32 0, %v4187
        %v4190 = vsel %vm4188, %v4189, %v4187
        %v4191 = vclz %v4190
        %v4192 = vsub.s32 %v4191, 2
        %vm4193 = vcmp.gt.s32.totalorder 0, %v4192
        %v4194 = vsel %vm4193, 0, %v4192
        %v4195 = vsub.s32 32, %v4194
        %v4196 = vshll.u32 %v4187, %v4194
        %v4197 = vshrl.u32 %v4179, %v4195
        %v4198 = vor.u32 %v4196, %v4197
        %v4199 = vsub.s32 4294967266, %v4194
        %v4200 = vadd.s32 %v4199, 127
        %v4201 = vshll.u32 %v4200, 23
        %v4202 = vor.u32 4788187, %v4201
        %v4203 = vand.u32 2147483647, %v4202
        %v4205 = vcvt.s32.f32 %v4198
        %v4206 = vmul.f32 %v4205, %v4203
        %v4207 = vxor.u32 %v4206, 2147483648
        %v4208 = vsel %vm4125, %v4207, %v4206
        %v4209 = vsub.s32 4, %v4185
        %v4210 = vsel %vm4125, %v4209, %v4185
        %v4211 = vsel %vm4124, %v380, %v4208
        %v4212 = vsel %vm4124, 0, %v4210
        %v4213 = vcosq.f32.pop %v4211
        %v4214 = vsinq.f32.pop %v4211
        %vm4215 = vweird.f32 %v380
        %v4216 = vand.u32 %v4212, 3
        %vm4217 = vcmp.lt.s32.totalorder %v4216, 2
        %vm4218 = vcmp.eq.s32.totalorder %v4216, 0
        %v4219 = vxor.u32 %v4214, 2147483648
        %v4220 = vsel %vm4218, %v4213, %v4219
        %vm4221 = vcmp.eq.s32.totalorder %v4216, 2
        %v4222 = vxor.u32 %v4213, 2147483648
        %v4223 = vsel %vm4221, %v4222, %v4214
        %v4224 = vsel %vm4217, %v4220, %v4223
        %v4225 = vsel %vm4215, nan, %v4224
        %v4226 = vand.u32 2147483647, %v381
        %vm4227 = vcmp.le.f32.partialorder %v4226, 0.7853982
        %vm4228 = vcmp.lt.s32.totalorder %v381, 0
        %v4229 = vand.u32 %v381, 2139095040
        %v4230 = vshrl.u32 %v4229, 23
        %v4231 = vsub.s32 %v4230, 127
        %v4232 = vand.u32 2147483647, %v381
        %v4233 = vand.u32 %v4232, 8388607
        %v4234 = vor.u32 %v4233, 8388608
        %v4235 = vsub.s32 0, %v4234
        %v4236 = vadd.s32 %v4231, 1
        %vm4237 = vcmp.gt.s32.totalorder %v4236, 0
        %v4238 = vsel %vm4237, %v4236, 0
        %v4239 = vshrl.u32 %v4238, 5
        %v4240 = vand.u32 %v4238, 31
        %v4241 = vsub.s32 32, %v4240
        %v4242 = vshrl.u32 683565275, %v4241
        %v4243 = vshll.u32 683565275, %v4240
        %v4244 = vshrl.u32 2475754826, %v4241
        %v4245 = vor.u32 %v4243, %v4244
        %v4246 = vshll.u32 2475754826, %v4240
        %v4247 = vshrl.u32 2131351028, %v4241
        %v4248 = vor.u32 %v4246, %v4247
        %v4249 = vshll.u32 2131351028, %v4240
        %v4250 = vshrl.u32 2102212464, %v4241
        %v4251 = vor.u32 %v4249, %v4250
        %v4252 = vshll.u32 2102212464, %v4240
        %v4253 = vshrl.u32 920167782, %v4241
        %v4254 = vor.u32 %v4252, %v4253
        %v4255 = vshll.u32 920167782, %v4240
        %v4256 = vshrl.u32 1326507024, %v4241
        %v4257 = vor.u32 %v4255, %v4256
        %vm4258 = vcmp.lt.s32.totalorder %v4239, 1
        %vm4259 = vcmp.lt.s32.totalorder %v4239, 2
        %vm4260 = vcmp.lt.s32.totalorder %v4239, 3
        %vm4261 = vcmp.lt.s32.totalorder %v4239, 4
        %v4262 = vsel %vm4258, %v4242, %v4245
        %v4263 = vsel %vm4261, %v4251, 2102212464
        %v4264 = vsel %vm4260, %v4248, %v4263
        %v4265 = vsel %vm4259, %v4262, %v4264
        %v4266 = vsel %vm4258, %v4245, %v4248
        %v4267 = vsel %vm4261, %v4254, 920167782
        %v4268 = vsel %vm4260, %v4251, %v4267
        %v4269 = vsel %vm4259, %v4266, %v4268
        %v4270 = vsel %vm4258, %v4248, %v4251
        %v4271 = vsel %vm4261, %v4257, 1326507024
        %v4272 = vsel %vm4260, %v4254, %v4271
        %v4273 = vsel %vm4259, %v4270, %v4272
        %v4274 = vshll.u32 %v4234, 8
        %v4275 = vmul.u32.u64.compose %v4274, %v4273
        %v4276 = vextract.low.u32 %v4275
        %v4277 = vextract.high.u32 %v4275
        %v4278 = vmul.u32.u64.compose %v4274, %v4269
        %v4279 = vextract.low.u32 %v4278
        %v4280 = vextract.high.u32 %v4278
        %v4281 = vmul.u32 %v4274, %v4265
        %v4282 = vadd.s32 %v4277, %v4279
        %vm4283 = vc.u32 %v4277, %v4279
        %v4284 = vadd.s32 %v4280, 1
        %v4285 = vsel %vm4283, %v4284, %v4280
        %v4286 = vadd.s32 %v4281, %v4285
        %v4287 = vadd.s32 %v4286, 536870912
        %v4288 = vshrl.u32 %v4287, 30
        %v4289 = vshll.u32 %v4288, 30
        %v4290 = vsub.s32 %v4286, %v4289
        %vm4291 = vcmp.lt.s32.totalorder %v4290, 0
        %v4292 = vsub.s32 0, %v4290
        %v4293 = vsel %vm4291, %v4292, %v4290
        %v4294 = vclz %v4293
        %v4295 = vsub.s32 %v4294, 2
        %vm4296 = vcmp.gt.s32.totalorder 0, %v4295
        %v4297 = vsel %vm4296, 0, %v4295
        %v4298 = vsub.s32 32, %v4297
        %v4299 = vshll.u32 %v4290, %v4297
        %v4300 = vshrl.u32 %v4282, %v4298
        %v4301 = vor.u32 %v4299, %v4300
        %v4302 = vsub.s32 4294967266, %v4297
        %v4303 = vadd.s32 %v4302, 127
        %v4304 = vshll.u32 %v4303, 23
        %v4305 = vor.u32 4788187, %v4304
        %v4306 = vand.u32 2147483647, %v4305
        %v4308 = vcvt.s32.f32 %v4301
        %v4309 = vmul.f32 %v4308, %v4306
        %v4310 = vxor.u32 %v4309, 2147483648
        %v4311 = vsel %vm4228, %v4310, %v4309
        %v4312 = vsub.s32 4, %v4288
        %v4313 = vsel %vm4228, %v4312, %v4288
        %v4314 = vsel %vm4227, %v381, %v4311
        %v4315 = vsel %vm4227, 0, %v4313
        %v4316 = vcosq.f32.pop %v4314
        %v4317 = vsinq.f32.pop %v4314
        %vm4318 = vweird.f32 %v381
        %v4319 = vand.u32 %v4315, 3
        %vm4320 = vcmp.lt.s32.totalorder %v4319, 2
        %vm4321 = vcmp.eq.s32.totalorder %v4319, 0
        %v4322 = vxor.u32 %v4317, 2147483648
        %v4323 = vsel %vm4321, %v4316, %v4322
        %vm4324 = vcmp.eq.s32.totalorder %v4319, 2
        %v4325 = vxor.u32 %v4316, 2147483648
        %v4326 = vsel %vm4324, %v4325, %v4317
        %v4327 = vsel %vm4320, %v4323, %v4326
        %v4328 = vsel %vm4318, nan, %v4327
        %v4329 = vand.u32 2147483647, %v382
        %vm4330 = vcmp.le.f32.partialorder %v4329, 0.7853982
        %vm4331 = vcmp.lt.s32.totalorder %v382, 0
        %v4332 = vand.u32 %v382, 2139095040
        %v4333 = vshrl.u32 %v4332, 23
        %v4334 = vsub.s32 %v4333, 127
        %v4335 = vand.u32 2147483647, %v382
        %v4336 = vand.u32 %v4335, 8388607
        %v4337 = vor.u32 %v4336, 8388608
        %v4338 = vsub.s32 0, %v4337
        %v4339 = vadd.s32 %v4334, 1
        %vm4340 = vcmp.gt.s32.totalorder %v4339, 0
        %v4341 = vsel %vm4340, %v4339, 0
        %v4342 = vshrl.u32 %v4341, 5
        %v4343 = vand.u32 %v4341, 31
        %v4344 = vsub.s32 32, %v4343
        %v4345 = vshrl.u32 683565275, %v4344
        %v4346 = vshll.u32 683565275, %v4343
        %v4347 = vshrl.u32 2475754826, %v4344
        %v4348 = vor.u32 %v4346, %v4347
        %v4349 = vshll.u32 2475754826, %v4343
        %v4350 = vshrl.u32 2131351028, %v4344
        %v4351 = vor.u32 %v4349, %v4350
        %v4352 = vshll.u32 2131351028, %v4343
        %v4353 = vshrl.u32 2102212464, %v4344
        %v4354 = vor.u32 %v4352, %v4353
        %v4355 = vshll.u32 2102212464, %v4343
        %v4356 = vshrl.u32 920167782, %v4344
        %v4357 = vor.u32 %v4355, %v4356
        %v4358 = vshll.u32 920167782, %v4343
        %v4359 = vshrl.u32 1326507024, %v4344
        %v4360 = vor.u32 %v4358, %v4359
        %vm4361 = vcmp.lt.s32.totalorder %v4342, 1
        %vm4362 = vcmp.lt.s32.totalorder %v4342, 2
        %vm4363 = vcmp.lt.s32.totalorder %v4342, 3
        %vm4364 = vcmp.lt.s32.totalorder %v4342, 4
        %v4365 = vsel %vm4361, %v4345, %v4348
        %v4366 = vsel %vm4364, %v4354, 2102212464
        %v4367 = vsel %vm4363, %v4351, %v4366
        %v4368 = vsel %vm4362, %v4365, %v4367
        %v4369 = vsel %vm4361, %v4348, %v4351
        %v4370 = vsel %vm4364, %v4357, 920167782
        %v4371 = vsel %vm4363, %v4354, %v4370
        %v4372 = vsel %vm4362, %v4369, %v4371
        %v4373 = vsel %vm4361, %v4351, %v4354
        %v4374 = vsel %vm4364, %v4360, 1326507024
        %v4375 = vsel %vm4363, %v4357, %v4374
        %v4376 = vsel %vm4362, %v4373, %v4375
        %v4377 = vshll.u32 %v4337, 8
        %v4378 = vmul.u32.u64.compose %v4377, %v4376
        %v4379 = vextract.low.u32 %v4378
        %v4380 = vextract.high.u32 %v4378
        %v4381 = vmul.u32.u64.compose %v4377, %v4372
        %v4382 = vextract.low.u32 %v4381
        %v4383 = vextract.high.u32 %v4381
        %v4384 = vmul.u32 %v4377, %v4368
        %v4385 = vadd.s32 %v4380, %v4382
        %vm4386 = vc.u32 %v4380, %v4382
        %v4387 = vadd.s32 %v4383, 1
        %v4388 = vsel %vm4386, %v4387, %v4383
        %v4389 = vadd.s32 %v4384, %v4388
        %v4390 = vadd.s32 %v4389, 536870912
        %v4391 = vshrl.u32 %v4390, 30
        %v4392 = vshll.u32 %v4391, 30
        %v4393 = vsub.s32 %v4389, %v4392
        %vm4394 = vcmp.lt.s32.totalorder %v4393, 0
        %v4395 = vsub.s32 0, %v4393
        %v4396 = vsel %vm4394, %v4395, %v4393
        %v4397 = vclz %v4396
        %v4398 = vsub.s32 %v4397, 2
        %vm4399 = vcmp.gt.s32.totalorder 0, %v4398
        %v4400 = vsel %vm4399, 0, %v4398
        %v4401 = vsub.s32 32, %v4400
        %v4402 = vshll.u32 %v4393, %v4400
        %v4403 = vshrl.u32 %v4385, %v4401
        %v4404 = vor.u32 %v4402, %v4403
        %v4405 = vsub.s32 4294967266, %v4400
        %v4406 = vadd.s32 %v4405, 127
        %v4407 = vshll.u32 %v4406, 23
        %v4408 = vor.u32 4788187, %v4407
        %v4409 = vand.u32 2147483647, %v4408
        %v4411 = vcvt.s32.f32 %v4404
        %v4412 = vmul.f32 %v4411, %v4409
        %v4413 = vxor.u32 %v4412, 2147483648
        %v4414 = vsel %vm4331, %v4413, %v4412
        %v4415 = vsub.s32 4, %v4391
        %v4416 = vsel %vm4331, %v4415, %v4391
        %v4417 = vsel %vm4330, %v382, %v4414
        %v4418 = vsel %vm4330, 0, %v4416
        %v4419 = vcosq.f32.pop %v4417
        %v4420 = vsinq.f32.pop %v4417
        %vm4421 = vweird.f32 %v382
        %v4422 = vand.u32 %v4418, 3
        %vm4423 = vcmp.lt.s32.totalorder %v4422, 2
        %vm4424 = vcmp.eq.s32.totalorder %v4422, 0
        %v4425 = vxor.u32 %v4420, 2147483648
        %v4426 = vsel %vm4424, %v4419, %v4425
        %vm4427 = vcmp.eq.s32.totalorder %v4422, 2
        %v4428 = vxor.u32 %v4419, 2147483648
        %v4429 = vsel %vm4427, %v4428, %v4420
        %v4430 = vsel %vm4423, %v4426, %v4429
        %v4431 = vsel %vm4421, nan, %v4430
        %v4432 = vand.u32 2147483647, %v383
        %vm4433 = vcmp.le.f32.partialorder %v4432, 0.7853982
        %vm4434 = vcmp.lt.s32.totalorder %v383, 0
        %v4435 = vand.u32 %v383, 2139095040
        %v4436 = vshrl.u32 %v4435, 23
        %v4437 = vsub.s32 %v4436, 127
        %v4438 = vand.u32 2147483647, %v383
        %v4439 = vand.u32 %v4438, 8388607
        %v4440 = vor.u32 %v4439, 8388608
        %v4441 = vsub.s32 0, %v4440
        %v4442 = vadd.s32 %v4437, 1
        %vm4443 = vcmp.gt.s32.totalorder %v4442, 0
        %v4444 = vsel %vm4443, %v4442, 0
        %v4445 = vshrl.u32 %v4444, 5
        %v4446 = vand.u32 %v4444, 31
        %v4447 = vsub.s32 32, %v4446
        %v4448 = vshrl.u32 683565275, %v4447
        %v4449 = vshll.u32 683565275, %v4446
        %v4450 = vshrl.u32 2475754826, %v4447
        %v4451 = vor.u32 %v4449, %v4450
        %v4452 = vshll.u32 2475754826, %v4446
        %v4453 = vshrl.u32 2131351028, %v4447
        %v4454 = vor.u32 %v4452, %v4453
        %v4455 = vshll.u32 2131351028, %v4446
        %v4456 = vshrl.u32 2102212464, %v4447
        %v4457 = vor.u32 %v4455, %v4456
        %v4458 = vshll.u32 2102212464, %v4446
        %v4459 = vshrl.u32 920167782, %v4447
        %v4460 = vor.u32 %v4458, %v4459
        %v4461 = vshll.u32 920167782, %v4446
        %v4462 = vshrl.u32 1326507024, %v4447
        %v4463 = vor.u32 %v4461, %v4462
        %vm4464 = vcmp.lt.s32.totalorder %v4445, 1
        %vm4465 = vcmp.lt.s32.totalorder %v4445, 2
        %vm4466 = vcmp.lt.s32.totalorder %v4445, 3
        %vm4467 = vcmp.lt.s32.totalorder %v4445, 4
        %v4468 = vsel %vm4464, %v4448, %v4451
        %v4469 = vsel %vm4467, %v4457, 2102212464
        %v4470 = vsel %vm4466, %v4454, %v4469
        %v4471 = vsel %vm4465, %v4468, %v4470
        %v4472 = vsel %vm4464, %v4451, %v4454
        %v4473 = vsel %vm4467, %v4460, 920167782
        %v4474 = vsel %vm4466, %v4457, %v4473
        %v4475 = vsel %vm4465, %v4472, %v4474
        %v4476 = vsel %vm4464, %v4454, %v4457
        %v4477 = vsel %vm4467, %v4463, 1326507024
        %v4478 = vsel %vm4466, %v4460, %v4477
        %v4479 = vsel %vm4465, %v4476, %v4478
        %v4480 = vshll.u32 %v4440, 8
        %v4481 = vmul.u32.u64.compose %v4480, %v4479
        %v4482 = vextract.low.u32 %v4481
        %v4483 = vextract.high.u32 %v4481
        %v4484 = vmul.u32.u64.compose %v4480, %v4475
        %v4485 = vextract.low.u32 %v4484
        %v4486 = vextract.high.u32 %v4484
        %v4487 = vmul.u32 %v4480, %v4471
        %v4488 = vadd.s32 %v4483, %v4485
        %vm4489 = vc.u32 %v4483, %v4485
        %v4490 = vadd.s32 %v4486, 1
        %v4491 = vsel %vm4489, %v4490, %v4486
        %v4492 = vadd.s32 %v4487, %v4491
        %v4493 = vadd.s32 %v4492, 536870912
        %v4494 = vshrl.u32 %v4493, 30
        %v4495 = vshll.u32 %v4494, 30
        %v4496 = vsub.s32 %v4492, %v4495
        %vm4497 = vcmp.lt.s32.totalorder %v4496, 0
        %v4498 = vsub.s32 0, %v4496
        %v4499 = vsel %vm4497, %v4498, %v4496
        %v4500 = vclz %v4499
        %v4501 = vsub.s32 %v4500, 2
        %vm4502 = vcmp.gt.s32.totalorder 0, %v4501
        %v4503 = vsel %vm4502, 0, %v4501
        %v4504 = vsub.s32 32, %v4503
        %v4505 = vshll.u32 %v4496, %v4503
        %v4506 = vshrl.u32 %v4488, %v4504
        %v4507 = vor.u32 %v4505, %v4506
        %v4508 = vsub.s32 4294967266, %v4503
        %v4509 = vadd.s32 %v4508, 127
        %v4510 = vshll.u32 %v4509, 23
        %v4511 = vor.u32 4788187, %v4510
        %v4512 = vand.u32 2147483647, %v4511
        %v4514 = vcvt.s32.f32 %v4507
        %v4515 = vmul.f32 %v4514, %v4512
        %v4516 = vxor.u32 %v4515, 2147483648
        %v4517 = vsel %vm4434, %v4516, %v4515
        %v4518 = vsub.s32 4, %v4494
        %v4519 = vsel %vm4434, %v4518, %v4494
        %v4520 = vsel %vm4433, %v383, %v4517
        %v4521 = vsel %vm4433, 0, %v4519
        %v4522 = vcosq.f32.pop %v4520
        %v4523 = vsinq.f32.pop %v4520
        %vm4524 = vweird.f32 %v383
        %v4525 = vand.u32 %v4521, 3
        %vm4526 = vcmp.lt.s32.totalorder %v4525, 2
        %vm4527 = vcmp.eq.s32.totalorder %v4525, 0
        %v4528 = vxor.u32 %v4523, 2147483648
        %v4529 = vsel %vm4527, %v4522, %v4528
        %vm4530 = vcmp.eq.s32.totalorder %v4525, 2
        %v4531 = vxor.u32 %v4522, 2147483648
        %v4532 = vsel %vm4530, %v4531, %v4523
        %v4533 = vsel %vm4526, %v4529, %v4532
        %v4534 = vsel %vm4524, nan, %v4533
        %v4535 = vand.u32 2147483647, %v384
        %vm4536 = vcmp.le.f32.partialorder %v4535, 0.7853982
        %vm4537 = vcmp.lt.s32.totalorder %v384, 0
        %v4538 = vand.u32 %v384, 2139095040
        %v4539 = vshrl.u32 %v4538, 23
        %v4540 = vsub.s32 %v4539, 127
        %v4541 = vand.u32 2147483647, %v384
        %v4542 = vand.u32 %v4541, 8388607
        %v4543 = vor.u32 %v4542, 8388608
        %v4544 = vsub.s32 0, %v4543
        %v4545 = vadd.s32 %v4540, 1
        %vm4546 = vcmp.gt.s32.totalorder %v4545, 0
        %v4547 = vsel %vm4546, %v4545, 0
        %v4548 = vshrl.u32 %v4547, 5
        %v4549 = vand.u32 %v4547, 31
        %v4550 = vsub.s32 32, %v4549
        %v4551 = vshrl.u32 683565275, %v4550
        %v4552 = vshll.u32 683565275, %v4549
        %v4553 = vshrl.u32 2475754826, %v4550
        %v4554 = vor.u32 %v4552, %v4553
        %v4555 = vshll.u32 2475754826, %v4549
        %v4556 = vshrl.u32 2131351028, %v4550
        %v4557 = vor.u32 %v4555, %v4556
        %v4558 = vshll.u32 2131351028, %v4549
        %v4559 = vshrl.u32 2102212464, %v4550
        %v4560 = vor.u32 %v4558, %v4559
        %v4561 = vshll.u32 2102212464, %v4549
        %v4562 = vshrl.u32 920167782, %v4550
        %v4563 = vor.u32 %v4561, %v4562
        %v4564 = vshll.u32 920167782, %v4549
        %v4565 = vshrl.u32 1326507024, %v4550
        %v4566 = vor.u32 %v4564, %v4565
        %vm4567 = vcmp.lt.s32.totalorder %v4548, 1
        %vm4568 = vcmp.lt.s32.totalorder %v4548, 2
        %vm4569 = vcmp.lt.s32.totalorder %v4548, 3
        %vm4570 = vcmp.lt.s32.totalorder %v4548, 4
        %v4571 = vsel %vm4567, %v4551, %v4554
        %v4572 = vsel %vm4570, %v4560, 2102212464
        %v4573 = vsel %vm4569, %v4557, %v4572
        %v4574 = vsel %vm4568, %v4571, %v4573
        %v4575 = vsel %vm4567, %v4554, %v4557
        %v4576 = vsel %vm4570, %v4563, 920167782
        %v4577 = vsel %vm4569, %v4560, %v4576
        %v4578 = vsel %vm4568, %v4575, %v4577
        %v4579 = vsel %vm4567, %v4557, %v4560
        %v4580 = vsel %vm4570, %v4566, 1326507024
        %v4581 = vsel %vm4569, %v4563, %v4580
        %v4582 = vsel %vm4568, %v4579, %v4581
        %v4583 = vshll.u32 %v4543, 8
        %v4584 = vmul.u32.u64.compose %v4583, %v4582
        %v4585 = vextract.low.u32 %v4584
        %v4586 = vextract.high.u32 %v4584
        %v4587 = vmul.u32.u64.compose %v4583, %v4578
        %v4588 = vextract.low.u32 %v4587
        %v4589 = vextract.high.u32 %v4587
        %v4590 = vmul.u32 %v4583, %v4574
        %v4591 = vadd.s32 %v4586, %v4588
        %vm4592 = vc.u32 %v4586, %v4588
        %v4593 = vadd.s32 %v4589, 1
        %v4594 = vsel %vm4592, %v4593, %v4589
        %v4595 = vadd.s32 %v4590, %v4594
        %v4596 = vadd.s32 %v4595, 536870912
        %v4597 = vshrl.u32 %v4596, 30
        %v4598 = vshll.u32 %v4597, 30
        %v4599 = vsub.s32 %v4595, %v4598
        %vm4600 = vcmp.lt.s32.totalorder %v4599, 0
        %v4601 = vsub.s32 0, %v4599
        %v4602 = vsel %vm4600, %v4601, %v4599
        %v4603 = vclz %v4602
        %v4604 = vsub.s32 %v4603, 2
        %vm4605 = vcmp.gt.s32.totalorder 0, %v4604
        %v4606 = vsel %vm4605, 0, %v4604
        %v4607 = vsub.s32 32, %v4606
        %v4608 = vshll.u32 %v4599, %v4606
        %v4609 = vshrl.u32 %v4591, %v4607
        %v4610 = vor.u32 %v4608, %v4609
        %v4611 = vsub.s32 4294967266, %v4606
        %v4612 = vadd.s32 %v4611, 127
        %v4613 = vshll.u32 %v4612, 23
        %v4614 = vor.u32 4788187, %v4613
        %v4615 = vand.u32 2147483647, %v4614
        %v4617 = vcvt.s32.f32 %v4610
        %v4618 = vmul.f32 %v4617, %v4615
        %v4619 = vxor.u32 %v4618, 2147483648
        %v4620 = vsel %vm4537, %v4619, %v4618
        %v4621 = vsub.s32 4, %v4597
        %v4622 = vsel %vm4537, %v4621, %v4597
        %v4623 = vsel %vm4536, %v384, %v4620
        %v4624 = vsel %vm4536, 0, %v4622
        %v4625 = vcosq.f32.pop %v4623
        %v4626 = vsinq.f32.pop %v4623
        %vm4627 = vweird.f32 %v384
        %v4628 = vand.u32 %v4624, 3
        %vm4629 = vcmp.lt.s32.totalorder %v4628, 2
        %vm4630 = vcmp.eq.s32.totalorder %v4628, 0
        %v4631 = vxor.u32 %v4626, 2147483648
        %v4632 = vsel %vm4630, %v4625, %v4631
        %vm4633 = vcmp.eq.s32.totalorder %v4628, 2
        %v4634 = vxor.u32 %v4625, 2147483648
        %v4635 = vsel %vm4633, %v4634, %v4626
        %v4636 = vsel %vm4629, %v4632, %v4635
        %v4637 = vsel %vm4627, nan, %v4636
        %v4638 = vand.u32 2147483647, %v385
        %vm4639 = vcmp.le.f32.partialorder %v4638, 0.7853982
        %vm4640 = vcmp.lt.s32.totalorder %v385, 0
        %v4641 = vand.u32 %v385, 2139095040
        %v4642 = vshrl.u32 %v4641, 23
        %v4643 = vsub.s32 %v4642, 127
        %v4644 = vand.u32 2147483647, %v385
        %v4645 = vand.u32 %v4644, 8388607
        %v4646 = vor.u32 %v4645, 8388608
        %v4647 = vsub.s32 0, %v4646
        %v4648 = vadd.s32 %v4643, 1
        %vm4649 = vcmp.gt.s32.totalorder %v4648, 0
        %v4650 = vsel %vm4649, %v4648, 0
        %v4651 = vshrl.u32 %v4650, 5
        %v4652 = vand.u32 %v4650, 31
        %v4653 = vsub.s32 32, %v4652
        %v4654 = vshrl.u32 683565275, %v4653
        %v4655 = vshll.u32 683565275, %v4652
        %v4656 = vshrl.u32 2475754826, %v4653
        %v4657 = vor.u32 %v4655, %v4656
        %v4658 = vshll.u32 2475754826, %v4652
        %v4659 = vshrl.u32 2131351028, %v4653
        %v4660 = vor.u32 %v4658, %v4659
        %v4661 = vshll.u32 2131351028, %v4652
        %v4662 = vshrl.u32 2102212464, %v4653
        %v4663 = vor.u32 %v4661, %v4662
        %v4664 = vshll.u32 2102212464, %v4652
        %v4665 = vshrl.u32 920167782, %v4653
        %v4666 = vor.u32 %v4664, %v4665
        %v4667 = vshll.u32 920167782, %v4652
        %v4668 = vshrl.u32 1326507024, %v4653
        %v4669 = vor.u32 %v4667, %v4668
        %vm4670 = vcmp.lt.s32.totalorder %v4651, 1
        %vm4671 = vcmp.lt.s32.totalorder %v4651, 2
        %vm4672 = vcmp.lt.s32.totalorder %v4651, 3
        %vm4673 = vcmp.lt.s32.totalorder %v4651, 4
        %v4674 = vsel %vm4670, %v4654, %v4657
        %v4675 = vsel %vm4673, %v4663, 2102212464
        %v4676 = vsel %vm4672, %v4660, %v4675
        %v4677 = vsel %vm4671, %v4674, %v4676
        %v4678 = vsel %vm4670, %v4657, %v4660
        %v4679 = vsel %vm4673, %v4666, 920167782
        %v4680 = vsel %vm4672, %v4663, %v4679
        %v4681 = vsel %vm4671, %v4678, %v4680
        %v4682 = vsel %vm4670, %v4660, %v4663
        %v4683 = vsel %vm4673, %v4669, 1326507024
        %v4684 = vsel %vm4672, %v4666, %v4683
        %v4685 = vsel %vm4671, %v4682, %v4684
        %v4686 = vshll.u32 %v4646, 8
        %v4687 = vmul.u32.u64.compose %v4686, %v4685
        %v4688 = vextract.low.u32 %v4687
        %v4689 = vextract.high.u32 %v4687
        %v4690 = vmul.u32.u64.compose %v4686, %v4681
        %v4691 = vextract.low.u32 %v4690
        %v4692 = vextract.high.u32 %v4690
        %v4693 = vmul.u32 %v4686, %v4677
        %v4694 = vadd.s32 %v4689, %v4691
        %vm4695 = vc.u32 %v4689, %v4691
        %v4696 = vadd.s32 %v4692, 1
        %v4697 = vsel %vm4695, %v4696, %v4692
        %v4698 = vadd.s32 %v4693, %v4697
        %v4699 = vadd.s32 %v4698, 536870912
        %v4700 = vshrl.u32 %v4699, 30
        %v4701 = vshll.u32 %v4700, 30
        %v4702 = vsub.s32 %v4698, %v4701
        %vm4703 = vcmp.lt.s32.totalorder %v4702, 0
        %v4704 = vsub.s32 0, %v4702
        %v4705 = vsel %vm4703, %v4704, %v4702
        %v4706 = vclz %v4705
        %v4707 = vsub.s32 %v4706, 2
        %vm4708 = vcmp.gt.s32.totalorder 0, %v4707
        %v4709 = vsel %vm4708, 0, %v4707
        %v4710 = vsub.s32 32, %v4709
        %v4711 = vshll.u32 %v4702, %v4709
        %v4712 = vshrl.u32 %v4694, %v4710
        %v4713 = vor.u32 %v4711, %v4712
        %v4714 = vsub.s32 4294967266, %v4709
        %v4715 = vadd.s32 %v4714, 127
        %v4716 = vshll.u32 %v4715, 23
        %v4717 = vor.u32 4788187, %v4716
        %v4718 = vand.u32 2147483647, %v4717
        %v4720 = vcvt.s32.f32 %v4713
        %v4721 = vmul.f32 %v4720, %v4718
        %v4722 = vxor.u32 %v4721, 2147483648
        %v4723 = vsel %vm4640, %v4722, %v4721
        %v4724 = vsub.s32 4, %v4700
        %v4725 = vsel %vm4640, %v4724, %v4700
        %v4726 = vsel %vm4639, %v385, %v4723
        %v4727 = vsel %vm4639, 0, %v4725
        %v4728 = vcosq.f32.pop %v4726
        %v4729 = vsinq.f32.pop %v4726
        %vm4730 = vweird.f32 %v385
        %v4731 = vand.u32 %v4727, 3
        %vm4732 = vcmp.lt.s32.totalorder %v4731, 2
        %vm4733 = vcmp.eq.s32.totalorder %v4731, 0
        %v4734 = vxor.u32 %v4729, 2147483648
        %v4735 = vsel %vm4733, %v4728, %v4734
        %vm4736 = vcmp.eq.s32.totalorder %v4731, 2
        %v4737 = vxor.u32 %v4728, 2147483648
        %v4738 = vsel %vm4736, %v4737, %v4729
        %v4739 = vsel %vm4732, %v4735, %v4738
        %v4740 = vsel %vm4730, nan, %v4739
        %v4741 = vand.u32 2147483647, %v386
        %vm4742 = vcmp.le.f32.partialorder %v4741, 0.7853982
        %vm4743 = vcmp.lt.s32.totalorder %v386, 0
        %v4744 = vand.u32 %v386, 2139095040
        %v4745 = vshrl.u32 %v4744, 23
        %v4746 = vsub.s32 %v4745, 127
        %v4747 = vand.u32 2147483647, %v386
        %v4748 = vand.u32 %v4747, 8388607
        %v4749 = vor.u32 %v4748, 8388608
        %v4750 = vsub.s32 0, %v4749
        %v4751 = vadd.s32 %v4746, 1
        %vm4752 = vcmp.gt.s32.totalorder %v4751, 0
        %v4753 = vsel %vm4752, %v4751, 0
        %v4754 = vshrl.u32 %v4753, 5
        %v4755 = vand.u32 %v4753, 31
        %v4756 = vsub.s32 32, %v4755
        %v4757 = vshrl.u32 683565275, %v4756
        %v4758 = vshll.u32 683565275, %v4755
        %v4759 = vshrl.u32 2475754826, %v4756
        %v4760 = vor.u32 %v4758, %v4759
        %v4761 = vshll.u32 2475754826, %v4755
        %v4762 = vshrl.u32 2131351028, %v4756
        %v4763 = vor.u32 %v4761, %v4762
        %v4764 = vshll.u32 2131351028, %v4755
        %v4765 = vshrl.u32 2102212464, %v4756
        %v4766 = vor.u32 %v4764, %v4765
        %v4767 = vshll.u32 2102212464, %v4755
        %v4768 = vshrl.u32 920167782, %v4756
        %v4769 = vor.u32 %v4767, %v4768
        %v4770 = vshll.u32 920167782, %v4755
        %v4771 = vshrl.u32 1326507024, %v4756
        %v4772 = vor.u32 %v4770, %v4771
        %vm4773 = vcmp.lt.s32.totalorder %v4754, 1
        %vm4774 = vcmp.lt.s32.totalorder %v4754, 2
        %vm4775 = vcmp.lt.s32.totalorder %v4754, 3
        %vm4776 = vcmp.lt.s32.totalorder %v4754, 4
        %v4777 = vsel %vm4773, %v4757, %v4760
        %v4778 = vsel %vm4776, %v4766, 2102212464
        %v4779 = vsel %vm4775, %v4763, %v4778
        %v4780 = vsel %vm4774, %v4777, %v4779
        %v4781 = vsel %vm4773, %v4760, %v4763
        %v4782 = vsel %vm4776, %v4769, 920167782
        %v4783 = vsel %vm4775, %v4766, %v4782
        %v4784 = vsel %vm4774, %v4781, %v4783
        %v4785 = vsel %vm4773, %v4763, %v4766
        %v4786 = vsel %vm4776, %v4772, 1326507024
        %v4787 = vsel %vm4775, %v4769, %v4786
        %v4788 = vsel %vm4774, %v4785, %v4787
        %v4789 = vshll.u32 %v4749, 8
        %v4790 = vmul.u32.u64.compose %v4789, %v4788
        %v4791 = vextract.low.u32 %v4790
        %v4792 = vextract.high.u32 %v4790
        %v4793 = vmul.u32.u64.compose %v4789, %v4784
        %v4794 = vextract.low.u32 %v4793
        %v4795 = vextract.high.u32 %v4793
        %v4796 = vmul.u32 %v4789, %v4780
        %v4797 = vadd.s32 %v4792, %v4794
        %vm4798 = vc.u32 %v4792, %v4794
        %v4799 = vadd.s32 %v4795, 1
        %v4800 = vsel %vm4798, %v4799, %v4795
        %v4801 = vadd.s32 %v4796, %v4800
        %v4802 = vadd.s32 %v4801, 536870912
        %v4803 = vshrl.u32 %v4802, 30
        %v4804 = vshll.u32 %v4803, 30
        %v4805 = vsub.s32 %v4801, %v4804
        %vm4806 = vcmp.lt.s32.totalorder %v4805, 0
        %v4807 = vsub.s32 0, %v4805
        %v4808 = vsel %vm4806, %v4807, %v4805
        %v4809 = vclz %v4808
        %v4810 = vsub.s32 %v4809, 2
        %vm4811 = vcmp.gt.s32.totalorder 0, %v4810
        %v4812 = vsel %vm4811, 0, %v4810
        %v4813 = vsub.s32 32, %v4812
        %v4814 = vshll.u32 %v4805, %v4812
        %v4815 = vshrl.u32 %v4797, %v4813
        %v4816 = vor.u32 %v4814, %v4815
        %v4817 = vsub.s32 4294967266, %v4812
        %v4818 = vadd.s32 %v4817, 127
        %v4819 = vshll.u32 %v4818, 23
        %v4820 = vor.u32 4788187, %v4819
        %v4821 = vand.u32 2147483647, %v4820
        %v4823 = vcvt.s32.f32 %v4816
        %v4824 = vmul.f32 %v4823, %v4821
        %v4825 = vxor.u32 %v4824, 2147483648
        %v4826 = vsel %vm4743, %v4825, %v4824
        %v4827 = vsub.s32 4, %v4803
        %v4828 = vsel %vm4743, %v4827, %v4803
        %v4829 = vsel %vm4742, %v386, %v4826
        %v4830 = vsel %vm4742, 0, %v4828
        %v4831 = vcosq.f32.pop %v4829
        %v4832 = vsinq.f32.pop %v4829
        %vm4833 = vweird.f32 %v386
        %v4834 = vand.u32 %v4830, 3
        %vm4835 = vcmp.lt.s32.totalorder %v4834, 2
        %vm4836 = vcmp.eq.s32.totalorder %v4834, 0
        %v4837 = vxor.u32 %v4832, 2147483648
        %v4838 = vsel %vm4836, %v4831, %v4837
        %vm4839 = vcmp.eq.s32.totalorder %v4834, 2
        %v4840 = vxor.u32 %v4831, 2147483648
        %v4841 = vsel %vm4839, %v4840, %v4832
        %v4842 = vsel %vm4835, %v4838, %v4841
        %v4843 = vsel %vm4833, nan, %v4842
        %v4844 = vand.u32 2147483647, %v387
        %vm4845 = vcmp.le.f32.partialorder %v4844, 0.7853982
        %vm4846 = vcmp.lt.s32.totalorder %v387, 0
        %v4847 = vand.u32 %v387, 2139095040
        %v4848 = vshrl.u32 %v4847, 23
        %v4849 = vsub.s32 %v4848, 127
        %v4850 = vand.u32 2147483647, %v387
        %v4851 = vand.u32 %v4850, 8388607
        %v4852 = vor.u32 %v4851, 8388608
        %v4853 = vsub.s32 0, %v4852
        %v4854 = vadd.s32 %v4849, 1
        %vm4855 = vcmp.gt.s32.totalorder %v4854, 0
        %v4856 = vsel %vm4855, %v4854, 0
        %v4857 = vshrl.u32 %v4856, 5
        %v4858 = vand.u32 %v4856, 31
        %v4859 = vsub.s32 32, %v4858
        %v4860 = vshrl.u32 683565275, %v4859
        %v4861 = vshll.u32 683565275, %v4858
        %v4862 = vshrl.u32 2475754826, %v4859
        %v4863 = vor.u32 %v4861, %v4862
        %v4864 = vshll.u32 2475754826, %v4858
        %v4865 = vshrl.u32 2131351028, %v4859
        %v4866 = vor.u32 %v4864, %v4865
        %v4867 = vshll.u32 2131351028, %v4858
        %v4868 = vshrl.u32 2102212464, %v4859
        %v4869 = vor.u32 %v4867, %v4868
        %v4870 = vshll.u32 2102212464, %v4858
        %v4871 = vshrl.u32 920167782, %v4859
        %v4872 = vor.u32 %v4870, %v4871
        %v4873 = vshll.u32 920167782, %v4858
        %v4874 = vshrl.u32 1326507024, %v4859
        %v4875 = vor.u32 %v4873, %v4874
        %vm4876 = vcmp.lt.s32.totalorder %v4857, 1
        %vm4877 = vcmp.lt.s32.totalorder %v4857, 2
        %vm4878 = vcmp.lt.s32.totalorder %v4857, 3
        %vm4879 = vcmp.lt.s32.totalorder %v4857, 4
        %v4880 = vsel %vm4876, %v4860, %v4863
        %v4881 = vsel %vm4879, %v4869, 2102212464
        %v4882 = vsel %vm4878, %v4866, %v4881
        %v4883 = vsel %vm4877, %v4880, %v4882
        %v4884 = vsel %vm4876, %v4863, %v4866
        %v4885 = vsel %vm4879, %v4872, 920167782
        %v4886 = vsel %vm4878, %v4869, %v4885
        %v4887 = vsel %vm4877, %v4884, %v4886
        %v4888 = vsel %vm4876, %v4866, %v4869
        %v4889 = vsel %vm4879, %v4875, 1326507024
        %v4890 = vsel %vm4878, %v4872, %v4889
        %v4891 = vsel %vm4877, %v4888, %v4890
        %v4892 = vshll.u32 %v4852, 8
        %v4893 = vmul.u32.u64.compose %v4892, %v4891
        %v4894 = vextract.low.u32 %v4893
        %v4895 = vextract.high.u32 %v4893
        %v4896 = vmul.u32.u64.compose %v4892, %v4887
        %v4897 = vextract.low.u32 %v4896
        %v4898 = vextract.high.u32 %v4896
        %v4899 = vmul.u32 %v4892, %v4883
        %v4900 = vadd.s32 %v4895, %v4897
        %vm4901 = vc.u32 %v4895, %v4897
        %v4902 = vadd.s32 %v4898, 1
        %v4903 = vsel %vm4901, %v4902, %v4898
        %v4904 = vadd.s32 %v4899, %v4903
        %v4905 = vadd.s32 %v4904, 536870912
        %v4906 = vshrl.u32 %v4905, 30
        %v4907 = vshll.u32 %v4906, 30
        %v4908 = vsub.s32 %v4904, %v4907
        %vm4909 = vcmp.lt.s32.totalorder %v4908, 0
        %v4910 = vsub.s32 0, %v4908
        %v4911 = vsel %vm4909, %v4910, %v4908
        %v4912 = vclz %v4911
        %v4913 = vsub.s32 %v4912, 2
        %vm4914 = vcmp.gt.s32.totalorder 0, %v4913
        %v4915 = vsel %vm4914, 0, %v4913
        %v4916 = vsub.s32 32, %v4915
        %v4917 = vshll.u32 %v4908, %v4915
        %v4918 = vshrl.u32 %v4900, %v4916
        %v4919 = vor.u32 %v4917, %v4918
        %v4920 = vsub.s32 4294967266, %v4915
        %v4921 = vadd.s32 %v4920, 127
        %v4922 = vshll.u32 %v4921, 23
        %v4923 = vor.u32 4788187, %v4922
        %v4924 = vand.u32 2147483647, %v4923
        %v4926 = vcvt.s32.f32 %v4919
        %v4927 = vmul.f32 %v4926, %v4924
        %v4928 = vxor.u32 %v4927, 2147483648
        %v4929 = vsel %vm4846, %v4928, %v4927
        %v4930 = vsub.s32 4, %v4906
        %v4931 = vsel %vm4846, %v4930, %v4906
        %v4932 = vsel %vm4845, %v387, %v4929
        %v4933 = vsel %vm4845, 0, %v4931
        %v4934 = vcosq.f32.pop %v4932
        %v4935 = vsinq.f32.pop %v4932
        %vm4936 = vweird.f32 %v387
        %v4937 = vand.u32 %v4933, 3
        %vm4938 = vcmp.lt.s32.totalorder %v4937, 2
        %vm4939 = vcmp.eq.s32.totalorder %v4937, 0
        %v4940 = vxor.u32 %v4935, 2147483648
        %v4941 = vsel %vm4939, %v4934, %v4940
        %vm4942 = vcmp.eq.s32.totalorder %v4937, 2
        %v4943 = vxor.u32 %v4934, 2147483648
        %v4944 = vsel %vm4942, %v4943, %v4935
        %v4945 = vsel %vm4938, %v4941, %v4944
        %v4946 = vsel %vm4936, nan, %v4945
        %v4947 = vand.u32 2147483647, %v388
        %vm4948 = vcmp.le.f32.partialorder %v4947, 0.7853982
        %vm4949 = vcmp.lt.s32.totalorder %v388, 0
        %v4950 = vand.u32 %v388, 2139095040
        %v4951 = vshrl.u32 %v4950, 23
        %v4952 = vsub.s32 %v4951, 127
        %v4953 = vand.u32 2147483647, %v388
        %v4954 = vand.u32 %v4953, 8388607
        %v4955 = vor.u32 %v4954, 8388608
        %v4956 = vsub.s32 0, %v4955
        %v4957 = vadd.s32 %v4952, 1
        %vm4958 = vcmp.gt.s32.totalorder %v4957, 0
        %v4959 = vsel %vm4958, %v4957, 0
        %v4960 = vshrl.u32 %v4959, 5
        %v4961 = vand.u32 %v4959, 31
        %v4962 = vsub.s32 32, %v4961
        %v4963 = vshrl.u32 683565275, %v4962
        %v4964 = vshll.u32 683565275, %v4961
        %v4965 = vshrl.u32 2475754826, %v4962
        %v4966 = vor.u32 %v4964, %v4965
        %v4967 = vshll.u32 2475754826, %v4961
        %v4968 = vshrl.u32 2131351028, %v4962
        %v4969 = vor.u32 %v4967, %v4968
        %v4970 = vshll.u32 2131351028, %v4961
        %v4971 = vshrl.u32 2102212464, %v4962
        %v4972 = vor.u32 %v4970, %v4971
        %v4973 = vshll.u32 2102212464, %v4961
        %v4974 = vshrl.u32 920167782, %v4962
        %v4975 = vor.u32 %v4973, %v4974
        %v4976 = vshll.u32 920167782, %v4961
        %v4977 = vshrl.u32 1326507024, %v4962
        %v4978 = vor.u32 %v4976, %v4977
        %vm4979 = vcmp.lt.s32.totalorder %v4960, 1
        %vm4980 = vcmp.lt.s32.totalorder %v4960, 2
        %vm4981 = vcmp.lt.s32.totalorder %v4960, 3
        %vm4982 = vcmp.lt.s32.totalorder %v4960, 4
        %v4983 = vsel %vm4979, %v4963, %v4966
        %v4984 = vsel %vm4982, %v4972, 2102212464
        %v4985 = vsel %vm4981, %v4969, %v4984
        %v4986 = vsel %vm4980, %v4983, %v4985
        %v4987 = vsel %vm4979, %v4966, %v4969
        %v4988 = vsel %vm4982, %v4975, 920167782
        %v4989 = vsel %vm4981, %v4972, %v4988
        %v4990 = vsel %vm4980, %v4987, %v4989
        %v4991 = vsel %vm4979, %v4969, %v4972
        %v4992 = vsel %vm4982, %v4978, 1326507024
        %v4993 = vsel %vm4981, %v4975, %v4992
        %v4994 = vsel %vm4980, %v4991, %v4993
        %v4995 = vshll.u32 %v4955, 8
        %v4996 = vmul.u32.u64.compose %v4995, %v4994
        %v4997 = vextract.low.u32 %v4996
        %v4998 = vextract.high.u32 %v4996
        %v4999 = vmul.u32.u64.compose %v4995, %v4990
        %v5000 = vextract.low.u32 %v4999
        %v5001 = vextract.high.u32 %v4999
        %v5002 = vmul.u32 %v4995, %v4986
        %v5003 = vadd.s32 %v4998, %v5000
        %vm5004 = vc.u32 %v4998, %v5000
        %v5005 = vadd.s32 %v5001, 1
        %v5006 = vsel %vm5004, %v5005, %v5001
        %v5007 = vadd.s32 %v5002, %v5006
        %v5008 = vadd.s32 %v5007, 536870912
        %v5009 = vshrl.u32 %v5008, 30
        %v5010 = vshll.u32 %v5009, 30
        %v5011 = vsub.s32 %v5007, %v5010
        %vm5012 = vcmp.lt.s32.totalorder %v5011, 0
        %v5013 = vsub.s32 0, %v5011
        %v5014 = vsel %vm5012, %v5013, %v5011
        %v5015 = vclz %v5014
        %v5016 = vsub.s32 %v5015, 2
        %vm5017 = vcmp.gt.s32.totalorder 0, %v5016
        %v5018 = vsel %vm5017, 0, %v5016
        %v5019 = vsub.s32 32, %v5018
        %v5020 = vshll.u32 %v5011, %v5018
        %v5021 = vshrl.u32 %v5003, %v5019
        %v5022 = vor.u32 %v5020, %v5021
        %v5023 = vsub.s32 4294967266, %v5018
        %v5024 = vadd.s32 %v5023, 127
        %v5025 = vshll.u32 %v5024, 23
        %v5026 = vor.u32 4788187, %v5025
        %v5027 = vand.u32 2147483647, %v5026
        %v5029 = vcvt.s32.f32 %v5022
        %v5030 = vmul.f32 %v5029, %v5027
        %v5031 = vxor.u32 %v5030, 2147483648
        %v5032 = vsel %vm4949, %v5031, %v5030
        %v5033 = vsub.s32 4, %v5009
        %v5034 = vsel %vm4949, %v5033, %v5009
        %v5035 = vsel %vm4948, %v388, %v5032
        %v5036 = vsel %vm4948, 0, %v5034
        %v5037 = vcosq.f32.pop %v5035
        %v5038 = vsinq.f32.pop %v5035
        %vm5039 = vweird.f32 %v388
        %v5040 = vand.u32 %v5036, 3
        %vm5041 = vcmp.lt.s32.totalorder %v5040, 2
        %vm5042 = vcmp.eq.s32.totalorder %v5040, 0
        %v5043 = vxor.u32 %v5038, 2147483648
        %v5044 = vsel %vm5042, %v5037, %v5043
        %vm5045 = vcmp.eq.s32.totalorder %v5040, 2
        %v5046 = vxor.u32 %v5037, 2147483648
        %v5047 = vsel %vm5045, %v5046, %v5038
        %v5048 = vsel %vm5041, %v5044, %v5047
        %v5049 = vsel %vm5039, nan, %v5048
        %v5050 = vand.u32 2147483647, %v389
        %vm5051 = vcmp.le.f32.partialorder %v5050, 0.7853982
        %vm5052 = vcmp.lt.s32.totalorder %v389, 0
        %v5053 = vand.u32 %v389, 2139095040
        %v5054 = vshrl.u32 %v5053, 23
        %v5055 = vsub.s32 %v5054, 127
        %v5056 = vand.u32 2147483647, %v389
        %v5057 = vand.u32 %v5056, 8388607
        %v5058 = vor.u32 %v5057, 8388608
        %v5059 = vsub.s32 0, %v5058
        %v5060 = vadd.s32 %v5055, 1
        %vm5061 = vcmp.gt.s32.totalorder %v5060, 0
        %v5062 = vsel %vm5061, %v5060, 0
        %v5063 = vshrl.u32 %v5062, 5
        %v5064 = vand.u32 %v5062, 31
        %v5065 = vsub.s32 32, %v5064
        %v5066 = vshrl.u32 683565275, %v5065
        %v5067 = vshll.u32 683565275, %v5064
        %v5068 = vshrl.u32 2475754826, %v5065
        %v5069 = vor.u32 %v5067, %v5068
        %v5070 = vshll.u32 2475754826, %v5064
        %v5071 = vshrl.u32 2131351028, %v5065
        %v5072 = vor.u32 %v5070, %v5071
        %v5073 = vshll.u32 2131351028, %v5064
        %v5074 = vshrl.u32 2102212464, %v5065
        %v5075 = vor.u32 %v5073, %v5074
        %v5076 = vshll.u32 2102212464, %v5064
        %v5077 = vshrl.u32 920167782, %v5065
        %v5078 = vor.u32 %v5076, %v5077
        %v5079 = vshll.u32 920167782, %v5064
        %v5080 = vshrl.u32 1326507024, %v5065
        %v5081 = vor.u32 %v5079, %v5080
        %vm5082 = vcmp.lt.s32.totalorder %v5063, 1
        %vm5083 = vcmp.lt.s32.totalorder %v5063, 2
        %vm5084 = vcmp.lt.s32.totalorder %v5063, 3
        %vm5085 = vcmp.lt.s32.totalorder %v5063, 4
        %v5086 = vsel %vm5082, %v5066, %v5069
        %v5087 = vsel %vm5085, %v5075, 2102212464
        %v5088 = vsel %vm5084, %v5072, %v5087
        %v5089 = vsel %vm5083, %v5086, %v5088
        %v5090 = vsel %vm5082, %v5069, %v5072
        %v5091 = vsel %vm5085, %v5078, 920167782
        %v5092 = vsel %vm5084, %v5075, %v5091
        %v5093 = vsel %vm5083, %v5090, %v5092
        %v5094 = vsel %vm5082, %v5072, %v5075
        %v5095 = vsel %vm5085, %v5081, 1326507024
        %v5096 = vsel %vm5084, %v5078, %v5095
        %v5097 = vsel %vm5083, %v5094, %v5096
        %v5098 = vshll.u32 %v5058, 8
        %v5099 = vmul.u32.u64.compose %v5098, %v5097
        %v5100 = vextract.low.u32 %v5099
        %v5101 = vextract.high.u32 %v5099
        %v5102 = vmul.u32.u64.compose %v5098, %v5093
        %v5103 = vextract.low.u32 %v5102
        %v5104 = vextract.high.u32 %v5102
        %v5105 = vmul.u32 %v5098, %v5089
        %v5106 = vadd.s32 %v5101, %v5103
        %vm5107 = vc.u32 %v5101, %v5103
        %v5108 = vadd.s32 %v5104, 1
        %v5109 = vsel %vm5107, %v5108, %v5104
        %v5110 = vadd.s32 %v5105, %v5109
        %v5111 = vadd.s32 %v5110, 536870912
        %v5112 = vshrl.u32 %v5111, 30
        %v5113 = vshll.u32 %v5112, 30
        %v5114 = vsub.s32 %v5110, %v5113
        %vm5115 = vcmp.lt.s32.totalorder %v5114, 0
        %v5116 = vsub.s32 0, %v5114
        %v5117 = vsel %vm5115, %v5116, %v5114
        %v5118 = vclz %v5117
        %v5119 = vsub.s32 %v5118, 2
        %vm5120 = vcmp.gt.s32.totalorder 0, %v5119
        %v5121 = vsel %vm5120, 0, %v5119
        %v5122 = vsub.s32 32, %v5121
        %v5123 = vshll.u32 %v5114, %v5121
        %v5124 = vshrl.u32 %v5106, %v5122
        %v5125 = vor.u32 %v5123, %v5124
        %v5126 = vsub.s32 4294967266, %v5121
        %v5127 = vadd.s32 %v5126, 127
        %v5128 = vshll.u32 %v5127, 23
        %v5129 = vor.u32 4788187, %v5128
        %v5130 = vand.u32 2147483647, %v5129
        %v5132 = vcvt.s32.f32 %v5125
        %v5133 = vmul.f32 %v5132, %v5130
        %v5134 = vxor.u32 %v5133, 2147483648
        %v5135 = vsel %vm5052, %v5134, %v5133
        %v5136 = vsub.s32 4, %v5112
        %v5137 = vsel %vm5052, %v5136, %v5112
        %v5138 = vsel %vm5051, %v389, %v5135
        %v5139 = vsel %vm5051, 0, %v5137
        %v5140 = vcosq.f32.pop %v5138
        %v5141 = vsinq.f32.pop %v5138
        %vm5142 = vweird.f32 %v389
        %v5143 = vand.u32 %v5139, 3
        %vm5144 = vcmp.lt.s32.totalorder %v5143, 2
        %vm5145 = vcmp.eq.s32.totalorder %v5143, 0
        %v5146 = vxor.u32 %v5141, 2147483648
        %v5147 = vsel %vm5145, %v5140, %v5146
        %vm5148 = vcmp.eq.s32.totalorder %v5143, 2
        %v5149 = vxor.u32 %v5140, 2147483648
        %v5150 = vsel %vm5148, %v5149, %v5141
        %v5151 = vsel %vm5144, %v5147, %v5150
        %v5152 = vsel %vm5142, nan, %v5151
        %v5153 = vand.u32 2147483647, %v390
        %vm5154 = vcmp.le.f32.partialorder %v5153, 0.7853982
        %vm5155 = vcmp.lt.s32.totalorder %v390, 0
        %v5156 = vand.u32 %v390, 2139095040
        %v5157 = vshrl.u32 %v5156, 23
        %v5158 = vsub.s32 %v5157, 127
        %v5159 = vand.u32 2147483647, %v390
        %v5160 = vand.u32 %v5159, 8388607
        %v5161 = vor.u32 %v5160, 8388608
        %v5162 = vsub.s32 0, %v5161
        %v5163 = vadd.s32 %v5158, 1
        %vm5164 = vcmp.gt.s32.totalorder %v5163, 0
        %v5165 = vsel %vm5164, %v5163, 0
        %v5166 = vshrl.u32 %v5165, 5
        %v5167 = vand.u32 %v5165, 31
        %v5168 = vsub.s32 32, %v5167
        %v5169 = vshrl.u32 683565275, %v5168
        %v5170 = vshll.u32 683565275, %v5167
        %v5171 = vshrl.u32 2475754826, %v5168
        %v5172 = vor.u32 %v5170, %v5171
        %v5173 = vshll.u32 2475754826, %v5167
        %v5174 = vshrl.u32 2131351028, %v5168
        %v5175 = vor.u32 %v5173, %v5174
        %v5176 = vshll.u32 2131351028, %v5167
        %v5177 = vshrl.u32 2102212464, %v5168
        %v5178 = vor.u32 %v5176, %v5177
        %v5179 = vshll.u32 2102212464, %v5167
        %v5180 = vshrl.u32 920167782, %v5168
        %v5181 = vor.u32 %v5179, %v5180
        %v5182 = vshll.u32 920167782, %v5167
        %v5183 = vshrl.u32 1326507024, %v5168
        %v5184 = vor.u32 %v5182, %v5183
        %vm5185 = vcmp.lt.s32.totalorder %v5166, 1
        %vm5186 = vcmp.lt.s32.totalorder %v5166, 2
        %vm5187 = vcmp.lt.s32.totalorder %v5166, 3
        %vm5188 = vcmp.lt.s32.totalorder %v5166, 4
        %v5189 = vsel %vm5185, %v5169, %v5172
        %v5190 = vsel %vm5188, %v5178, 2102212464
        %v5191 = vsel %vm5187, %v5175, %v5190
        %v5192 = vsel %vm5186, %v5189, %v5191
        %v5193 = vsel %vm5185, %v5172, %v5175
        %v5194 = vsel %vm5188, %v5181, 920167782
        %v5195 = vsel %vm5187, %v5178, %v5194
        %v5196 = vsel %vm5186, %v5193, %v5195
        %v5197 = vsel %vm5185, %v5175, %v5178
        %v5198 = vsel %vm5188, %v5184, 1326507024
        %v5199 = vsel %vm5187, %v5181, %v5198
        %v5200 = vsel %vm5186, %v5197, %v5199
        %v5201 = vshll.u32 %v5161, 8
        %v5202 = vmul.u32.u64.compose %v5201, %v5200
        %v5203 = vextract.low.u32 %v5202
        %v5204 = vextract.high.u32 %v5202
        %v5205 = vmul.u32.u64.compose %v5201, %v5196
        %v5206 = vextract.low.u32 %v5205
        %v5207 = vextract.high.u32 %v5205
        %v5208 = vmul.u32 %v5201, %v5192
        %v5209 = vadd.s32 %v5204, %v5206
        %vm5210 = vc.u32 %v5204, %v5206
        %v5211 = vadd.s32 %v5207, 1
        %v5212 = vsel %vm5210, %v5211, %v5207
        %v5213 = vadd.s32 %v5208, %v5212
        %v5214 = vadd.s32 %v5213, 536870912
        %v5215 = vshrl.u32 %v5214, 30
        %v5216 = vshll.u32 %v5215, 30
        %v5217 = vsub.s32 %v5213, %v5216
        %vm5218 = vcmp.lt.s32.totalorder %v5217, 0
        %v5219 = vsub.s32 0, %v5217
        %v5220 = vsel %vm5218, %v5219, %v5217
        %v5221 = vclz %v5220
        %v5222 = vsub.s32 %v5221, 2
        %vm5223 = vcmp.gt.s32.totalorder 0, %v5222
        %v5224 = vsel %vm5223, 0, %v5222
        %v5225 = vsub.s32 32, %v5224
        %v5226 = vshll.u32 %v5217, %v5224
        %v5227 = vshrl.u32 %v5209, %v5225
        %v5228 = vor.u32 %v5226, %v5227
        %v5229 = vsub.s32 4294967266, %v5224
        %v5230 = vadd.s32 %v5229, 127
        %v5231 = vshll.u32 %v5230, 23
        %v5232 = vor.u32 4788187, %v5231
        %v5233 = vand.u32 2147483647, %v5232
        %v5235 = vcvt.s32.f32 %v5228
        %v5236 = vmul.f32 %v5235, %v5233
        %v5237 = vxor.u32 %v5236, 2147483648
        %v5238 = vsel %vm5155, %v5237, %v5236
        %v5239 = vsub.s32 4, %v5215
        %v5240 = vsel %vm5155, %v5239, %v5215
        %v5241 = vsel %vm5154, %v390, %v5238
        %v5242 = vsel %vm5154, 0, %v5240
        %v5243 = vcosq.f32.pop %v5241
        %v5244 = vsinq.f32.pop %v5241
        %vm5245 = vweird.f32 %v390
        %v5246 = vand.u32 %v5242, 3
        %vm5247 = vcmp.lt.s32.totalorder %v5246, 2
        %vm5248 = vcmp.eq.s32.totalorder %v5246, 0
        %v5249 = vxor.u32 %v5244, 2147483648
        %v5250 = vsel %vm5248, %v5243, %v5249
        %vm5251 = vcmp.eq.s32.totalorder %v5246, 2
        %v5252 = vxor.u32 %v5243, 2147483648
        %v5253 = vsel %vm5251, %v5252, %v5244
        %v5254 = vsel %vm5247, %v5250, %v5253
        %v5255 = vsel %vm5245, nan, %v5254
        %v5256 = vand.u32 2147483647, %v391
        %vm5257 = vcmp.le.f32.partialorder %v5256, 0.7853982
        %vm5258 = vcmp.lt.s32.totalorder %v391, 0
        %v5259 = vand.u32 %v391, 2139095040
        %v5260 = vshrl.u32 %v5259, 23
        %v5261 = vsub.s32 %v5260, 127
        %v5262 = vand.u32 2147483647, %v391
        %v5263 = vand.u32 %v5262, 8388607
        %v5264 = vor.u32 %v5263, 8388608
        %v5265 = vsub.s32 0, %v5264
        %v5266 = vadd.s32 %v5261, 1
        %vm5267 = vcmp.gt.s32.totalorder %v5266, 0
        %v5268 = vsel %vm5267, %v5266, 0
        %v5269 = vshrl.u32 %v5268, 5
        %v5270 = vand.u32 %v5268, 31
        %v5271 = vsub.s32 32, %v5270
        %v5272 = vshrl.u32 683565275, %v5271
        %v5273 = vshll.u32 683565275, %v5270
        %v5274 = vshrl.u32 2475754826, %v5271
        %v5275 = vor.u32 %v5273, %v5274
        %v5276 = vshll.u32 2475754826, %v5270
        %v5277 = vshrl.u32 2131351028, %v5271
        %v5278 = vor.u32 %v5276, %v5277
        %v5279 = vshll.u32 2131351028, %v5270
        %v5280 = vshrl.u32 2102212464, %v5271
        %v5281 = vor.u32 %v5279, %v5280
        %v5282 = vshll.u32 2102212464, %v5270
        %v5283 = vshrl.u32 920167782, %v5271
        %v5284 = vor.u32 %v5282, %v5283
        %v5285 = vshll.u32 920167782, %v5270
        %v5286 = vshrl.u32 1326507024, %v5271
        %v5287 = vor.u32 %v5285, %v5286
        %vm5288 = vcmp.lt.s32.totalorder %v5269, 1
        %vm5289 = vcmp.lt.s32.totalorder %v5269, 2
        %vm5290 = vcmp.lt.s32.totalorder %v5269, 3
        %vm5291 = vcmp.lt.s32.totalorder %v5269, 4
        %v5292 = vsel %vm5288, %v5272, %v5275
        %v5293 = vsel %vm5291, %v5281, 2102212464
        %v5294 = vsel %vm5290, %v5278, %v5293
        %v5295 = vsel %vm5289, %v5292, %v5294
        %v5296 = vsel %vm5288, %v5275, %v5278
        %v5297 = vsel %vm5291, %v5284, 920167782
        %v5298 = vsel %vm5290, %v5281, %v5297
        %v5299 = vsel %vm5289, %v5296, %v5298
        %v5300 = vsel %vm5288, %v5278, %v5281
        %v5301 = vsel %vm5291, %v5287, 1326507024
        %v5302 = vsel %vm5290, %v5284, %v5301
        %v5303 = vsel %vm5289, %v5300, %v5302
        %v5304 = vshll.u32 %v5264, 8
        %v5305 = vmul.u32.u64.compose %v5304, %v5303
        %v5306 = vextract.low.u32 %v5305
        %v5307 = vextract.high.u32 %v5305
        %v5308 = vmul.u32.u64.compose %v5304, %v5299
        %v5309 = vextract.low.u32 %v5308
        %v5310 = vextract.high.u32 %v5308
        %v5311 = vmul.u32 %v5304, %v5295
        %v5312 = vadd.s32 %v5307, %v5309
        %vm5313 = vc.u32 %v5307, %v5309
        %v5314 = vadd.s32 %v5310, 1
        %v5315 = vsel %vm5313, %v5314, %v5310
        %v5316 = vadd.s32 %v5311, %v5315
        %v5317 = vadd.s32 %v5316, 536870912
        %v5318 = vshrl.u32 %v5317, 30
        %v5319 = vshll.u32 %v5318, 30
        %v5320 = vsub.s32 %v5316, %v5319
        %vm5321 = vcmp.lt.s32.totalorder %v5320, 0
        %v5322 = vsub.s32 0, %v5320
        %v5323 = vsel %vm5321, %v5322, %v5320
        %v5324 = vclz %v5323
        %v5325 = vsub.s32 %v5324, 2
        %vm5326 = vcmp.gt.s32.totalorder 0, %v5325
        %v5327 = vsel %vm5326, 0, %v5325
        %v5328 = vsub.s32 32, %v5327
        %v5329 = vshll.u32 %v5320, %v5327
        %v5330 = vshrl.u32 %v5312, %v5328
        %v5331 = vor.u32 %v5329, %v5330
        %v5332 = vsub.s32 4294967266, %v5327
        %v5333 = vadd.s32 %v5332, 127
        %v5334 = vshll.u32 %v5333, 23
        %v5335 = vor.u32 4788187, %v5334
        %v5336 = vand.u32 2147483647, %v5335
        %v5338 = vcvt.s32.f32 %v5331
        %v5339 = vmul.f32 %v5338, %v5336
        %v5340 = vxor.u32 %v5339, 2147483648
        %v5341 = vsel %vm5258, %v5340, %v5339
        %v5342 = vsub.s32 4, %v5318
        %v5343 = vsel %vm5258, %v5342, %v5318
        %v5344 = vsel %vm5257, %v391, %v5341
        %v5345 = vsel %vm5257, 0, %v5343
        %v5346 = vcosq.f32.pop %v5344
        %v5347 = vsinq.f32.pop %v5344
        %vm5348 = vweird.f32 %v391
        %v5349 = vand.u32 %v5345, 3
        %vm5350 = vcmp.lt.s32.totalorder %v5349, 2
        %vm5351 = vcmp.eq.s32.totalorder %v5349, 0
        %v5352 = vxor.u32 %v5347, 2147483648
        %v5353 = vsel %vm5351, %v5346, %v5352
        %vm5354 = vcmp.eq.s32.totalorder %v5349, 2
        %v5355 = vxor.u32 %v5346, 2147483648
        %v5356 = vsel %vm5354, %v5355, %v5347
        %v5357 = vsel %vm5350, %v5353, %v5356
        %v5358 = vsel %vm5348, nan, %v5357
        %v5359 = vand.u32 2147483647, %v392
        %vm5360 = vcmp.le.f32.partialorder %v5359, 0.7853982
        %vm5361 = vcmp.lt.s32.totalorder %v392, 0
        %v5362 = vand.u32 %v392, 2139095040
        %v5363 = vshrl.u32 %v5362, 23
        %v5364 = vsub.s32 %v5363, 127
        %v5365 = vand.u32 2147483647, %v392
        %v5366 = vand.u32 %v5365, 8388607
        %v5367 = vor.u32 %v5366, 8388608
        %v5368 = vsub.s32 0, %v5367
        %v5369 = vadd.s32 %v5364, 1
        %vm5370 = vcmp.gt.s32.totalorder %v5369, 0
        %v5371 = vsel %vm5370, %v5369, 0
        %v5372 = vshrl.u32 %v5371, 5
        %v5373 = vand.u32 %v5371, 31
        %v5374 = vsub.s32 32, %v5373
        %v5375 = vshrl.u32 683565275, %v5374
        %v5376 = vshll.u32 683565275, %v5373
        %v5377 = vshrl.u32 2475754826, %v5374
        %v5378 = vor.u32 %v5376, %v5377
        %v5379 = vshll.u32 2475754826, %v5373
        %v5380 = vshrl.u32 2131351028, %v5374
        %v5381 = vor.u32 %v5379, %v5380
        %v5382 = vshll.u32 2131351028, %v5373
        %v5383 = vshrl.u32 2102212464, %v5374
        %v5384 = vor.u32 %v5382, %v5383
        %v5385 = vshll.u32 2102212464, %v5373
        %v5386 = vshrl.u32 920167782, %v5374
        %v5387 = vor.u32 %v5385, %v5386
        %v5388 = vshll.u32 920167782, %v5373
        %v5389 = vshrl.u32 1326507024, %v5374
        %v5390 = vor.u32 %v5388, %v5389
        %vm5391 = vcmp.lt.s32.totalorder %v5372, 1
        %vm5392 = vcmp.lt.s32.totalorder %v5372, 2
        %vm5393 = vcmp.lt.s32.totalorder %v5372, 3
        %vm5394 = vcmp.lt.s32.totalorder %v5372, 4
        %v5395 = vsel %vm5391, %v5375, %v5378
        %v5396 = vsel %vm5394, %v5384, 2102212464
        %v5397 = vsel %vm5393, %v5381, %v5396
        %v5398 = vsel %vm5392, %v5395, %v5397
        %v5399 = vsel %vm5391, %v5378, %v5381
        %v5400 = vsel %vm5394, %v5387, 920167782
        %v5401 = vsel %vm5393, %v5384, %v5400
        %v5402 = vsel %vm5392, %v5399, %v5401
        %v5403 = vsel %vm5391, %v5381, %v5384
        %v5404 = vsel %vm5394, %v5390, 1326507024
        %v5405 = vsel %vm5393, %v5387, %v5404
        %v5406 = vsel %vm5392, %v5403, %v5405
        %v5407 = vshll.u32 %v5367, 8
        %v5408 = vmul.u32.u64.compose %v5407, %v5406
        %v5409 = vextract.low.u32 %v5408
        %v5410 = vextract.high.u32 %v5408
        %v5411 = vmul.u32.u64.compose %v5407, %v5402
        %v5412 = vextract.low.u32 %v5411
        %v5413 = vextract.high.u32 %v5411
        %v5414 = vmul.u32 %v5407, %v5398
        %v5415 = vadd.s32 %v5410, %v5412
        %vm5416 = vc.u32 %v5410, %v5412
        %v5417 = vadd.s32 %v5413, 1
        %v5418 = vsel %vm5416, %v5417, %v5413
        %v5419 = vadd.s32 %v5414, %v5418
        %v5420 = vadd.s32 %v5419, 536870912
        %v5421 = vshrl.u32 %v5420, 30
        %v5422 = vshll.u32 %v5421, 30
        %v5423 = vsub.s32 %v5419, %v5422
        %vm5424 = vcmp.lt.s32.totalorder %v5423, 0
        %v5425 = vsub.s32 0, %v5423
        %v5426 = vsel %vm5424, %v5425, %v5423
        %v5427 = vclz %v5426
        %v5428 = vsub.s32 %v5427, 2
        %vm5429 = vcmp.gt.s32.totalorder 0, %v5428
        %v5430 = vsel %vm5429, 0, %v5428
        %v5431 = vsub.s32 32, %v5430
        %v5432 = vshll.u32 %v5423, %v5430
        %v5433 = vshrl.u32 %v5415, %v5431
        %v5434 = vor.u32 %v5432, %v5433
        %v5435 = vsub.s32 4294967266, %v5430
        %v5436 = vadd.s32 %v5435, 127
        %v5437 = vshll.u32 %v5436, 23
        %v5438 = vor.u32 4788187, %v5437
        %v5439 = vand.u32 2147483647, %v5438
        %v5441 = vcvt.s32.f32 %v5434
        %v5442 = vmul.f32 %v5441, %v5439
        %v5443 = vxor.u32 %v5442, 2147483648
        %v5444 = vsel %vm5361, %v5443, %v5442
        %v5445 = vsub.s32 4, %v5421
        %v5446 = vsel %vm5361, %v5445, %v5421
        %v5447 = vsel %vm5360, %v392, %v5444
        %v5448 = vsel %vm5360, 0, %v5446
        %v5449 = vcosq.f32.pop %v5447
        %v5450 = vsinq.f32.pop %v5447
        %vm5451 = vweird.f32 %v392
        %v5452 = vand.u32 %v5448, 3
        %vm5453 = vcmp.lt.s32.totalorder %v5452, 2
        %vm5454 = vcmp.eq.s32.totalorder %v5452, 0
        %v5455 = vxor.u32 %v5450, 2147483648
        %v5456 = vsel %vm5454, %v5449, %v5455
        %vm5457 = vcmp.eq.s32.totalorder %v5452, 2
        %v5458 = vxor.u32 %v5449, 2147483648
        %v5459 = vsel %vm5457, %v5458, %v5450
        %v5460 = vsel %vm5453, %v5456, %v5459
        %v5461 = vsel %vm5451, nan, %v5460
        %v5462 = vmul.f32 %v597, %v470
        %v5463 = vmul.f32 %v701, %v471
        %v5464 = vmul.f32 %v805, %v472
        %v5465 = vmul.f32 %v909, %v473
        %v5466 = vmul.f32 %v1013, %v474
        %v5467 = vmul.f32 %v1117, %v475
        %v5468 = vmul.f32 %v1221, %v476
        %v5469 = vmul.f32 %v1325, %v477
        %v5470 = vmul.f32 %v1429, %v478
        %v5471 = vmul.f32 %v1533, %v479
        %v5472 = vmul.f32 %v1637, %v480
        %v5473 = vmul.f32 %v1741, %v481
        %v5474 = vmul.f32 %v1845, %v482
        %v5475 = vmul.f32 %v1949, %v483
        %v5476 = vmul.f32 %v2053, %v484
        %v5477 = vmul.f32 %v2157, %v485
        %v5478 = vmul.f32 %v2261, %v486
        %v5479 = vmul.f32 %v2365, %v487
        %v5480 = vmul.f32 %v2469, %v488
        %v5481 = vmul.f32 %v2573, %v489
        %v5482 = vmul.f32 %v2677, %v490
        %v5483 = vmul.f32 %v2781, %v491
        %v5484 = vmul.f32 %v2885, %v492
        %v5485 = vmul.f32 %v2989, %v493
        %v5486 = vsub.f32 %v5462, %v3092
        %v5487 = vsub.f32 %v5463, %v3195
        %v5488 = vsub.f32 %v5464, %v3298
        %v5489 = vsub.f32 %v5465, %v3401
        %v5490 = vsub.f32 %v5466, %v3504
        %v5491 = vsub.f32 %v5467, %v3607
        %v5492 = vsub.f32 %v5468, %v3710
        %v5493 = vsub.f32 %v5469, %v3813
        %v5494 = vsub.f32 %v5470, %v3916
        %v5495 = vsub.f32 %v5471, %v4019
        %v5496 = vsub.f32 %v5472, %v4122
        %v5497 = vsub.f32 %v5473, %v4225
        %v5498 = vsub.f32 %v5474, %v4328
        %v5499 = vsub.f32 %v5475, %v4431
        %v5500 = vsub.f32 %v5476, %v4534
        %v5501 = vsub.f32 %v5477, %v4637
        %v5502 = vsub.f32 %v5478, %v4740
        %v5503 = vsub.f32 %v5479, %v4843
        %v5504 = vsub.f32 %v5480, %v4946
        %v5505 = vsub.f32 %v5481, %v5049
        %v5506 = vsub.f32 %v5482, %v5152
        %v5507 = vsub.f32 %v5483, %v5255
        %v5508 = vsub.f32 %v5484, %v5358
        %v5509 = vsub.f32 %v5485, %v5461
        %v5510 = vmul.f32 %v5486, %v470
        %v5511 = vmul.f32 %v5487, %v471
        %v5512 = vmul.f32 %v5488, %v472
        %v5513 = vmul.f32 %v5489, %v473
        %v5514 = vmul.f32 %v5490, %v474
        %v5515 = vmul.f32 %v5491, %v475
        %v5516 = vmul.f32 %v5492, %v476
        %v5517 = vmul.f32 %v5493, %v477
        %v5518 = vmul.f32 %v5494, %v478
        %v5519 = vmul.f32 %v5495, %v479
        %v5520 = vmul.f32 %v5496, %v480
        %v5521 = vmul.f32 %v5497, %v481
        %v5522 = vmul.f32 %v5498, %v482
        %v5523 = vmul.f32 %v5499, %v483
        %v5524 = vmul.f32 %v5500, %v484
        %v5525 = vmul.f32 %v5501, %v485
        %v5526 = vmul.f32 %v5502, %v486
        %v5527 = vmul.f32 %v5503, %v487
        %v5528 = vmul.f32 %v5504, %v488
        %v5529 = vmul.f32 %v5505, %v489
        %v5530 = vmul.f32 %v5506, %v490
        %v5531 = vmul.f32 %v5507, %v491
        %v5532 = vmul.f32 %v5508, %v492
        %v5533 = vmul.f32 %v5509, %v493
        %v5534 = vmul.f32 %v470, 3.0
        %v5535 = vmul.f32 %v471, 3.0
        %v5536 = vmul.f32 %v472, 3.0
        %v5537 = vmul.f32 %v473, 3.0
        %v5538 = vmul.f32 %v474, 3.0
        %v5539 = vmul.f32 %v475, 3.0
        %v5540 = vmul.f32 %v476, 3.0
        %v5541 = vmul.f32 %v477, 3.0
        %v5542 = vmul.f32 %v478, 3.0
        %v5543 = vmul.f32 %v479, 3.0
        %v5544 = vmul.f32 %v480, 3.0
        %v5545 = vmul.f32 %v481, 3.0
        %v5546 = vmul.f32 %v482, 3.0
        %v5547 = vmul.f32 %v483, 3.0
        %v5548 = vmul.f32 %v484, 3.0
        %v5549 = vmul.f32 %v485, 3.0
        %v5550 = vmul.f32 %v486, 3.0
        %v5551 = vmul.f32 %v487, 3.0
        %v5552 = vmul.f32 %v488, 3.0
        %v5553 = vmul.f32 %v489, 3.0
        %v5554 = vmul.f32 %v490, 3.0
        %v5555 = vmul.f32 %v491, 3.0
        %v5556 = vmul.f32 %v492, 3.0
        %v5557 = vmul.f32 %v493, 3.0
        %v5558 = vmul.f32 %v5534, %v5510
        %v5559 = vmul.f32 %v5535, %v5511
        %v5560 = vmul.f32 %v5536, %v5512
        %v5561 = vmul.f32 %v5537, %v5513
        %v5562 = vmul.f32 %v5538, %v5514
        %v5563 = vmul.f32 %v5539, %v5515
        %v5564 = vmul.f32 %v5540, %v5516
        %v5565 = vmul.f32 %v5541, %v5517
        %v5566 = vmul.f32 %v5542, %v5518
        %v5567 = vmul.f32 %v5543, %v5519
        %v5568 = vmul.f32 %v5544, %v5520
        %v5569 = vmul.f32 %v5545, %v5521
        %v5570 = vmul.f32 %v5546, %v5522
        %v5571 = vmul.f32 %v5547, %v5523
        %v5572 = vmul.f32 %v5548, %v5524
        %v5573 = vmul.f32 %v5549, %v5525
        %v5574 = vmul.f32 %v5550, %v5526
        %v5575 = vmul.f32 %v5551, %v5527
        %v5576 = vmul.f32 %v5552, %v5528
        %v5577 = vmul.f32 %v5553, %v5529
        %v5578 = vmul.f32 %v5554, %v5530
        %v5579 = vmul.f32 %v5555, %v5531
        %v5580 = vmul.f32 %v5556, %v5532
        %v5581 = vmul.f32 %v5557, %v5533
        %v5582 = vsub.f32 %v5558, %v5462
        %v5583 = vsub.f32 %v5559, %v5463
        %v5584 = vsub.f32 %v5560, %v5464
        %v5585 = vsub.f32 %v5561, %v5465
        %v5586 = vsub.f32 %v5562, %v5466
        %v5587 = vsub.f32 %v5563, %v5467
        %v5588 = vsub.f32 %v5564, %v5468
        %v5589 = vsub.f32 %v5565, %v5469
        %v5590 = vsub.f32 %v5566, %v5470
        %v5591 = vsub.f32 %v5567, %v5471
        %v5592 = vsub.f32 %v5568, %v5472
        %v5593 = vsub.f32 %v5569, %v5473
        %v5594 = vsub.f32 %v5570, %v5474
        %v5595 = vsub.f32 %v5571, %v5475
        %v5596 = vsub.f32 %v5572, %v5476
        %v5597 = vsub.f32 %v5573, %v5477
        %v5598 = vsub.f32 %v5574, %v5478
        %v5599 = vsub.f32 %v5575, %v5479
        %v5600 = vsub.f32 %v5576, %v5480
        %v5601 = vsub.f32 %v5577, %v5481
        %v5602 = vsub.f32 %v5578, %v5482
        %v5603 = vsub.f32 %v5579, %v5483
        %v5604 = vsub.f32 %v5580, %v5484
        %v5605 = vsub.f32 %v5581, %v5485
        %v5606 = vmul.f32 %v470, 5.0
        %v5607 = vmul.f32 %v471, 5.0
        %v5608 = vmul.f32 %v472, 5.0
        %v5609 = vmul.f32 %v473, 5.0
        %v5610 = vmul.f32 %v474, 5.0
        %v5611 = vmul.f32 %v475, 5.0
        %v5612 = vmul.f32 %v476, 5.0
        %v5613 = vmul.f32 %v477, 5.0
        %v5614 = vmul.f32 %v478, 5.0
        %v5615 = vmul.f32 %v479, 5.0
        %v5616 = vmul.f32 %v480, 5.0
        %v5617 = vmul.f32 %v481, 5.0
        %v5618 = vmul.f32 %v482, 5.0
        %v5619 = vmul.f32 %v483, 5.0
        %v5620 = vmul.f32 %v484, 5.0
        %v5621 = vmul.f32 %v485, 5.0
        %v5622 = vmul.f32 %v486, 5.0
        %v5623 = vmul.f32 %v487, 5.0
        %v5624 = vmul.f32 %v488, 5.0
        %v5625 = vmul.f32 %v489, 5.0
        %v5626 = vmul.f32 %v490, 5.0
        %v5627 = vmul.f32 %v491, 5.0
        %v5628 = vmul.f32 %v492, 5.0
        %v5629 = vmul.f32 %v493, 5.0
        %v5630 = vmul.f32 %v5606, %v5582
        %v5631 = vmul.f32 %v5607, %v5583
        %v5632 = vmul.f32 %v5608, %v5584
        %v5633 = vmul.f32 %v5609, %v5585
        %v5634 = vmul.f32 %v5610, %v5586
        %v5635 = vmul.f32 %v5611, %v5587
        %v5636 = vmul.f32 %v5612, %v5588
        %v5637 = vmul.f32 %v5613, %v5589
        %v5638 = vmul.f32 %v5614, %v5590
        %v5639 = vmul.f32 %v5615, %v5591
        %v5640 = vmul.f32 %v5616, %v5592
        %v5641 = vmul.f32 %v5617, %v5593
        %v5642 = vmul.f32 %v5618, %v5594
        %v5643 = vmul.f32 %v5619, %v5595
        %v5644 = vmul.f32 %v5620, %v5596
        %v5645 = vmul.f32 %v5621, %v5597
        %v5646 = vmul.f32 %v5622, %v5598
        %v5647 = vmul.f32 %v5623, %v5599
        %v5648 = vmul.f32 %v5624, %v5600
        %v5649 = vmul.f32 %v5625, %v5601
        %v5650 = vmul.f32 %v5626, %v5602
        %v5651 = vmul.f32 %v5627, %v5603
        %v5652 = vmul.f32 %v5628, %v5604
        %v5653 = vmul.f32 %v5629, %v5605
        %v5654 = vsub.f32 %v5630, %v5510
        %v5655 = vsub.f32 %v5631, %v5511
        %v5656 = vsub.f32 %v5632, %v5512
        %v5657 = vsub.f32 %v5633, %v5513
        %v5658 = vsub.f32 %v5634, %v5514
        %v5659 = vsub.f32 %v5635, %v5515
        %v5660 = vsub.f32 %v5636, %v5516
        %v5661 = vsub.f32 %v5637, %v5517
        %v5662 = vsub.f32 %v5638, %v5518
        %v5663 = vsub.f32 %v5639, %v5519
        %v5664 = vsub.f32 %v5640, %v5520
        %v5665 = vsub.f32 %v5641, %v5521
        %v5666 = vsub.f32 %v5642, %v5522
        %v5667 = vsub.f32 %v5643, %v5523
        %v5668 = vsub.f32 %v5644, %v5524
        %v5669 = vsub.f32 %v5645, %v5525
        %v5670 = vsub.f32 %v5646, %v5526
        %v5671 = vsub.f32 %v5647, %v5527
        %v5672 = vsub.f32 %v5648, %v5528
        %v5673 = vsub.f32 %v5649, %v5529
        %v5674 = vsub.f32 %v5650, %v5530
        %v5675 = vsub.f32 %v5651, %v5531
        %v5676 = vsub.f32 %v5652, %v5532
        %v5677 = vsub.f32 %v5653, %v5533
        %5678 = vset.pattern.permute.xlu0 16
        %5679 = vperm.xlu0 %5678, %v180
        %v5680 = vpop.permute.xlu0 %5679
        %5682 = vset.pattern.permute.xlu0 16
        %5683 = vperm.xlu0 %5682, %v181
        %v5684 = vpop.permute.xlu0 %5683
        %5686 = vset.pattern.permute.xlu0 16
        %5687 = vperm.xlu0 %5686, %v182
        %v5688 = vpop.permute.xlu0 %5687
        %v5690 = vmul.f32 %v393, %v5680
        %v5691 = vmul.f32 %v394, %v5680
        %v5692 = vmul.f32 %v395, %v5680
        %v5693 = vmul.f32 %v396, %v5680
        %v5694 = vmul.f32 %v397, %v5680
        %v5695 = vmul.f32 %v398, %v5680
        %v5696 = vmul.f32 %v399, %v5680
        %v5697 = vmul.f32 %v400, %v5680
        %v5698 = vmul.f32 %v401, %v5684
        %v5699 = vmul.f32 %v402, %v5684
        %v5700 = vmul.f32 %v403, %v5684
        %v5701 = vmul.f32 %v404, %v5684
        %v5702 = vmul.f32 %v405, %v5684
        %v5703 = vmul.f32 %v406, %v5684
        %v5704 = vmul.f32 %v407, %v5684
        %v5705 = vmul.f32 %v408, %v5684
        %v5706 = vmul.f32 %v409, %v5688
        %v5707 = vmul.f32 %v410, %v5688
        %v5708 = vmul.f32 %v411, %v5688
        %v5709 = vmul.f32 %v412, %v5688
        %v5710 = vmul.f32 %v413, %v5688
        %v5711 = vmul.f32 %v414, %v5688
        %v5712 = vmul.f32 %v415, %v5688
        %v5713 = vmul.f32 %v416, %v5688
        %5714 = vset.pattern.permute.xlu0 15
        %5715 = vperm.xlu0 %5714, %v180
        %v5716 = vpop.permute.xlu0 %5715
        %5718 = vset.pattern.permute.xlu0 15
        %5719 = vperm.xlu0 %5718, %v181
        %v5720 = vpop.permute.xlu0 %5719
        %5722 = vset.pattern.permute.xlu0 15
        %5723 = vperm.xlu0 %5722, %v182
        %v5724 = vpop.permute.xlu0 %5723
        %v5726 = vadd.f32 %v5716, %v5690
        %v5727 = vadd.f32 %v5716, %v5691
        %v5728 = vadd.f32 %v5716, %v5692
        %v5729 = vadd.f32 %v5716, %v5693
        %v5730 = vadd.f32 %v5716, %v5694
        %v5731 = vadd.f32 %v5716, %v5695
        %v5732 = vadd.f32 %v5716, %v5696
        %v5733 = vadd.f32 %v5716, %v5697
        %v5734 = vadd.f32 %v5720, %v5698
        %v5735 = vadd.f32 %v5720, %v5699
        %v5736 = vadd.f32 %v5720, %v5700
        %v5737 = vadd.f32 %v5720, %v5701
        %v5738 = vadd.f32 %v5720, %v5702
        %v5739 = vadd.f32 %v5720, %v5703
        %v5740 = vadd.f32 %v5720, %v5704
        %v5741 = vadd.f32 %v5720, %v5705
        %v5742 = vadd.f32 %v5724, %v5706
        %v5743 = vadd.f32 %v5724, %v5707
        %v5744 = vadd.f32 %v5724, %v5708
        %v5745 = vadd.f32 %v5724, %v5709
        %v5746 = vadd.f32 %v5724, %v5710
        %v5747 = vadd.f32 %v5724, %v5711
        %v5748 = vadd.f32 %v5724, %v5712
        %v5749 = vadd.f32 %v5724, %v5713
        %v5750 = vmul.f32 %v393, %v5726
        %v5751 = vmul.f32 %v394, %v5727
        %v5752 = vmul.f32 %v395, %v5728
        %v5753 = vmul.f32 %v396, %v5729
        %v5754 = vmul.f32 %v397, %v5730
        %v5755 = vmul.f32 %v398, %v5731
        %v5756 = vmul.f32 %v399, %v5732
        %v5757 = vmul.f32 %v400, %v5733
        %v5758 = vmul.f32 %v401, %v5734
        %v5759 = vmul.f32 %v402, %v5735
        %v5760 = vmul.f32 %v403, %v5736
        %v5761 = vmul.f32 %v404, %v5737
        %v5762 = vmul.f32 %v405, %v5738
        %v5763 = vmul.f32 %v406, %v5739
        %v5764 = vmul.f32 %v407, %v5740
        %v5765 = vmul.f32 %v408, %v5741
        %v5766 = vmul.f32 %v409, %v5742
        %v5767 = vmul.f32 %v410, %v5743
        %v5768 = vmul.f32 %v411, %v5744
        %v5769 = vmul.f32 %v412, %v5745
        %v5770 = vmul.f32 %v413, %v5746
        %v5771 = vmul.f32 %v414, %v5747
        %v5772 = vmul.f32 %v415, %v5748
        %v5773 = vmul.f32 %v416, %v5749
        %5774 = vset.pattern.permute.xlu0 14
        %5775 = vperm.xlu0 %5774, %v180
        %v5776 = vpop.permute.xlu0 %5775
        %5778 = vset.pattern.permute.xlu0 14
        %5779 = vperm.xlu0 %5778, %v181
        %v5780 = vpop.permute.xlu0 %5779
        %5782 = vset.pattern.permute.xlu0 14
        %5783 = vperm.xlu0 %5782, %v182
        %v5784 = vpop.permute.xlu0 %5783
        %v5786 = vadd.f32 %v5776, %v5750
        %v5787 = vadd.f32 %v5776, %v5751
        %v5788 = vadd.f32 %v5776, %v5752
        %v5789 = vadd.f32 %v5776, %v5753
        %v5790 = vadd.f32 %v5776, %v5754
        %v5791 = vadd.f32 %v5776, %v5755
        %v5792 = vadd.f32 %v5776, %v5756
        %v5793 = vadd.f32 %v5776, %v5757
        %v5794 = vadd.f32 %v5780, %v5758
        %v5795 = vadd.f32 %v5780, %v5759
        %v5796 = vadd.f32 %v5780, %v5760
        %v5797 = vadd.f32 %v5780, %v5761
        %v5798 = vadd.f32 %v5780, %v5762
        %v5799 = vadd.f32 %v5780, %v5763
        %v5800 = vadd.f32 %v5780, %v5764
        %v5801 = vadd.f32 %v5780, %v5765
        %v5802 = vadd.f32 %v5784, %v5766
        %v5803 = vadd.f32 %v5784, %v5767
        %v5804 = vadd.f32 %v5784, %v5768
        %v5805 = vadd.f32 %v5784, %v5769
        %v5806 = vadd.f32 %v5784, %v5770
        %v5807 = vadd.f32 %v5784, %v5771
        %v5808 = vadd.f32 %v5784, %v5772
        %v5809 = vadd.f32 %v5784, %v5773
        %v5810 = vmul.f32 %v393, %v5786
        %v5811 = vmul.f32 %v394, %v5787
        %v5812 = vmul.f32 %v395, %v5788
        %v5813 = vmul.f32 %v396, %v5789
        %v5814 = vmul.f32 %v397, %v5790
        %v5815 = vmul.f32 %v398, %v5791
        %v5816 = vmul.f32 %v399, %v5792
        %v5817 = vmul.f32 %v400, %v5793
        %v5818 = vmul.f32 %v401, %v5794
        %v5819 = vmul.f32 %v402, %v5795
        %v5820 = vmul.f32 %v403, %v5796
        %v5821 = vmul.f32 %v404, %v5797
        %v5822 = vmul.f32 %v405, %v5798
        %v5823 = vmul.f32 %v406, %v5799
        %v5824 = vmul.f32 %v407, %v5800
        %v5825 = vmul.f32 %v408, %v5801
        %v5826 = vmul.f32 %v409, %v5802
        %v5827 = vmul.f32 %v410, %v5803
        %v5828 = vmul.f32 %v411, %v5804
        %v5829 = vmul.f32 %v412, %v5805
        %v5830 = vmul.f32 %v413, %v5806
        %v5831 = vmul.f32 %v414, %v5807
        %v5832 = vmul.f32 %v415, %v5808
        %v5833 = vmul.f32 %v416, %v5809
        %5834 = vset.pattern.permute.xlu0 13
        %5835 = vperm.xlu0 %5834, %v180
        %v5836 = vpop.permute.xlu0 %5835
        %5838 = vset.pattern.permute.xlu0 13
        %5839 = vperm.xlu0 %5838, %v181
        %v5840 = vpop.permute.xlu0 %5839
        %5842 = vset.pattern.permute.xlu0 13
        %5843 = vperm.xlu0 %5842, %v182
        %v5844 = vpop.permute.xlu0 %5843
        %v5846 = vadd.f32 %v5836, %v5810
        %v5847 = vadd.f32 %v5836, %v5811
        %v5848 = vadd.f32 %v5836, %v5812
        %v5849 = vadd.f32 %v5836, %v5813
        %v5850 = vadd.f32 %v5836, %v5814
        %v5851 = vadd.f32 %v5836, %v5815
        %v5852 = vadd.f32 %v5836, %v5816
        %v5853 = vadd.f32 %v5836, %v5817
        %v5854 = vadd.f32 %v5840, %v5818
        %v5855 = vadd.f32 %v5840, %v5819
        %v5856 = vadd.f32 %v5840, %v5820
        %v5857 = vadd.f32 %v5840, %v5821
        %v5858 = vadd.f32 %v5840, %v5822
        %v5859 = vadd.f32 %v5840, %v5823
        %v5860 = vadd.f32 %v5840, %v5824
        %v5861 = vadd.f32 %v5840, %v5825
        %v5862 = vadd.f32 %v5844, %v5826
        %v5863 = vadd.f32 %v5844, %v5827
        %v5864 = vadd.f32 %v5844, %v5828
        %v5865 = vadd.f32 %v5844, %v5829
        %v5866 = vadd.f32 %v5844, %v5830
        %v5867 = vadd.f32 %v5844, %v5831
        %v5868 = vadd.f32 %v5844, %v5832
        %v5869 = vadd.f32 %v5844, %v5833
        %v5870 = vmul.f32 %v393, %v5846
        %v5871 = vmul.f32 %v394, %v5847
        %v5872 = vmul.f32 %v395, %v5848
        %v5873 = vmul.f32 %v396, %v5849
        %v5874 = vmul.f32 %v397, %v5850
        %v5875 = vmul.f32 %v398, %v5851
        %v5876 = vmul.f32 %v399, %v5852
        %v5877 = vmul.f32 %v400, %v5853
        %v5878 = vmul.f32 %v401, %v5854
        %v5879 = vmul.f32 %v402, %v5855
        %v5880 = vmul.f32 %v403, %v5856
        %v5881 = vmul.f32 %v404, %v5857
        %v5882 = vmul.f32 %v405, %v5858
        %v5883 = vmul.f32 %v406, %v5859
        %v5884 = vmul.f32 %v407, %v5860
        %v5885 = vmul.f32 %v408, %v5861
        %v5886 = vmul.f32 %v409, %v5862
        %v5887 = vmul.f32 %v410, %v5863
        %v5888 = vmul.f32 %v411, %v5864
        %v5889 = vmul.f32 %v412, %v5865
        %v5890 = vmul.f32 %v413, %v5866
        %v5891 = vmul.f32 %v414, %v5867
        %v5892 = vmul.f32 %v415, %v5868
        %v5893 = vmul.f32 %v416, %v5869
        %5894 = vset.pattern.permute.xlu0 12
        %5895 = vperm.xlu0 %5894, %v180
        %v5896 = vpop.permute.xlu0 %5895
        %5898 = vset.pattern.permute.xlu0 12
        %5899 = vperm.xlu0 %5898, %v181
        %v5900 = vpop.permute.xlu0 %5899
        %5902 = vset.pattern.permute.xlu0 12
        %5903 = vperm.xlu0 %5902, %v182
        %v5904 = vpop.permute.xlu0 %5903
        %v5906 = vadd.f32 %v5896, %v5870
        %v5907 = vadd.f32 %v5896, %v5871
        %v5908 = vadd.f32 %v5896, %v5872
        %v5909 = vadd.f32 %v5896, %v5873
        %v5910 = vadd.f32 %v5896, %v5874
        %v5911 = vadd.f32 %v5896, %v5875
        %v5912 = vadd.f32 %v5896, %v5876
        %v5913 = vadd.f32 %v5896, %v5877
        %v5914 = vadd.f32 %v5900, %v5878
        %v5915 = vadd.f32 %v5900, %v5879
        %v5916 = vadd.f32 %v5900, %v5880
        %v5917 = vadd.f32 %v5900, %v5881
        %v5918 = vadd.f32 %v5900, %v5882
        %v5919 = vadd.f32 %v5900, %v5883
        %v5920 = vadd.f32 %v5900, %v5884
        %v5921 = vadd.f32 %v5900, %v5885
        %v5922 = vadd.f32 %v5904, %v5886
        %v5923 = vadd.f32 %v5904, %v5887
        %v5924 = vadd.f32 %v5904, %v5888
        %v5925 = vadd.f32 %v5904, %v5889
        %v5926 = vadd.f32 %v5904, %v5890
        %v5927 = vadd.f32 %v5904, %v5891
        %v5928 = vadd.f32 %v5904, %v5892
        %v5929 = vadd.f32 %v5904, %v5893
        %v5930 = vmul.f32 %v393, %v5906
        %v5931 = vmul.f32 %v394, %v5907
        %v5932 = vmul.f32 %v395, %v5908
        %v5933 = vmul.f32 %v396, %v5909
        %v5934 = vmul.f32 %v397, %v5910
        %v5935 = vmul.f32 %v398, %v5911
        %v5936 = vmul.f32 %v399, %v5912
        %v5937 = vmul.f32 %v400, %v5913
        %v5938 = vmul.f32 %v401, %v5914
        %v5939 = vmul.f32 %v402, %v5915
        %v5940 = vmul.f32 %v403, %v5916
        %v5941 = vmul.f32 %v404, %v5917
        %v5942 = vmul.f32 %v405, %v5918
        %v5943 = vmul.f32 %v406, %v5919
        %v5944 = vmul.f32 %v407, %v5920
        %v5945 = vmul.f32 %v408, %v5921
        %v5946 = vmul.f32 %v409, %v5922
        %v5947 = vmul.f32 %v410, %v5923
        %v5948 = vmul.f32 %v411, %v5924
        %v5949 = vmul.f32 %v412, %v5925
        %v5950 = vmul.f32 %v413, %v5926
        %v5951 = vmul.f32 %v414, %v5927
        %v5952 = vmul.f32 %v415, %v5928
        %v5953 = vmul.f32 %v416, %v5929
        %5954 = vset.pattern.permute.xlu0 11
        %5955 = vperm.xlu0 %5954, %v180
        %v5956 = vpop.permute.xlu0 %5955
        %5958 = vset.pattern.permute.xlu0 11
        %5959 = vperm.xlu0 %5958, %v181
        %v5960 = vpop.permute.xlu0 %5959
        %5962 = vset.pattern.permute.xlu0 11
        %5963 = vperm.xlu0 %5962, %v182
        %v5964 = vpop.permute.xlu0 %5963
        %v5966 = vadd.f32 %v5956, %v5930
        %v5967 = vadd.f32 %v5956, %v5931
        %v5968 = vadd.f32 %v5956, %v5932
        %v5969 = vadd.f32 %v5956, %v5933
        %v5970 = vadd.f32 %v5956, %v5934
        %v5971 = vadd.f32 %v5956, %v5935
        %v5972 = vadd.f32 %v5956, %v5936
        %v5973 = vadd.f32 %v5956, %v5937
        %v5974 = vadd.f32 %v5960, %v5938
        %v5975 = vadd.f32 %v5960, %v5939
        %v5976 = vadd.f32 %v5960, %v5940
        %v5977 = vadd.f32 %v5960, %v5941
        %v5978 = vadd.f32 %v5960, %v5942
        %v5979 = vadd.f32 %v5960, %v5943
        %v5980 = vadd.f32 %v5960, %v5944
        %v5981 = vadd.f32 %v5960, %v5945
        %v5982 = vadd.f32 %v5964, %v5946
        %v5983 = vadd.f32 %v5964, %v5947
        %v5984 = vadd.f32 %v5964, %v5948
        %v5985 = vadd.f32 %v5964, %v5949
        %v5986 = vadd.f32 %v5964, %v5950
        %v5987 = vadd.f32 %v5964, %v5951
        %v5988 = vadd.f32 %v5964, %v5952
        %v5989 = vadd.f32 %v5964, %v5953
        %v5990 = vmul.f32 %v393, %v5966
        %v5991 = vmul.f32 %v394, %v5967
        %v5992 = vmul.f32 %v395, %v5968
        %v5993 = vmul.f32 %v396, %v5969
        %v5994 = vmul.f32 %v397, %v5970
        %v5995 = vmul.f32 %v398, %v5971
        %v5996 = vmul.f32 %v399, %v5972
        %v5997 = vmul.f32 %v400, %v5973
        %v5998 = vmul.f32 %v401, %v5974
        %v5999 = vmul.f32 %v402, %v5975
        %v6000 = vmul.f32 %v403, %v5976
        %v6001 = vmul.f32 %v404, %v5977
        %v6002 = vmul.f32 %v405, %v5978
        %v6003 = vmul.f32 %v406, %v5979
        %v6004 = vmul.f32 %v407, %v5980
        %v6005 = vmul.f32 %v408, %v5981
        %v6006 = vmul.f32 %v409, %v5982
        %v6007 = vmul.f32 %v410, %v5983
        %v6008 = vmul.f32 %v411, %v5984
        %v6009 = vmul.f32 %v412, %v5985
        %v6010 = vmul.f32 %v413, %v5986
        %v6011 = vmul.f32 %v414, %v5987
        %v6012 = vmul.f32 %v415, %v5988
        %v6013 = vmul.f32 %v416, %v5989
        %6014 = vset.pattern.permute.xlu0 10
        %6015 = vperm.xlu0 %6014, %v180
        %v6016 = vpop.permute.xlu0 %6015
        %6018 = vset.pattern.permute.xlu0 10
        %6019 = vperm.xlu0 %6018, %v181
        %v6020 = vpop.permute.xlu0 %6019
        %6022 = vset.pattern.permute.xlu0 10
        %6023 = vperm.xlu0 %6022, %v182
        %v6024 = vpop.permute.xlu0 %6023
        %v6026 = vadd.f32 %v6016, %v5990
        %v6027 = vadd.f32 %v6016, %v5991
        %v6028 = vadd.f32 %v6016, %v5992
        %v6029 = vadd.f32 %v6016, %v5993
        %v6030 = vadd.f32 %v6016, %v5994
        %v6031 = vadd.f32 %v6016, %v5995
        %v6032 = vadd.f32 %v6016, %v5996
        %v6033 = vadd.f32 %v6016, %v5997
        %v6034 = vadd.f32 %v6020, %v5998
        %v6035 = vadd.f32 %v6020, %v5999
        %v6036 = vadd.f32 %v6020, %v6000
        %v6037 = vadd.f32 %v6020, %v6001
        %v6038 = vadd.f32 %v6020, %v6002
        %v6039 = vadd.f32 %v6020, %v6003
        %v6040 = vadd.f32 %v6020, %v6004
        %v6041 = vadd.f32 %v6020, %v6005
        %v6042 = vadd.f32 %v6024, %v6006
        %v6043 = vadd.f32 %v6024, %v6007
        %v6044 = vadd.f32 %v6024, %v6008
        %v6045 = vadd.f32 %v6024, %v6009
        %v6046 = vadd.f32 %v6024, %v6010
        %v6047 = vadd.f32 %v6024, %v6011
        %v6048 = vadd.f32 %v6024, %v6012
        %v6049 = vadd.f32 %v6024, %v6013
        %v6050 = vmul.f32 %v393, %v6026
        %v6051 = vmul.f32 %v394, %v6027
        %v6052 = vmul.f32 %v395, %v6028
        %v6053 = vmul.f32 %v396, %v6029
        %v6054 = vmul.f32 %v397, %v6030
        %v6055 = vmul.f32 %v398, %v6031
        %v6056 = vmul.f32 %v399, %v6032
        %v6057 = vmul.f32 %v400, %v6033
        %v6058 = vmul.f32 %v401, %v6034
        %v6059 = vmul.f32 %v402, %v6035
        %v6060 = vmul.f32 %v403, %v6036
        %v6061 = vmul.f32 %v404, %v6037
        %v6062 = vmul.f32 %v405, %v6038
        %v6063 = vmul.f32 %v406, %v6039
        %v6064 = vmul.f32 %v407, %v6040
        %v6065 = vmul.f32 %v408, %v6041
        %v6066 = vmul.f32 %v409, %v6042
        %v6067 = vmul.f32 %v410, %v6043
        %v6068 = vmul.f32 %v411, %v6044
        %v6069 = vmul.f32 %v412, %v6045
        %v6070 = vmul.f32 %v413, %v6046
        %v6071 = vmul.f32 %v414, %v6047
        %v6072 = vmul.f32 %v415, %v6048
        %v6073 = vmul.f32 %v416, %v6049
        %6074 = vset.pattern.permute.xlu0 9
        %6075 = vperm.xlu0 %6074, %v180
        %v6076 = vpop.permute.xlu0 %6075
        %6078 = vset.pattern.permute.xlu0 9
        %6079 = vperm.xlu0 %6078, %v181
        %v6080 = vpop.permute.xlu0 %6079
        %6082 = vset.pattern.permute.xlu0 9
        %6083 = vperm.xlu0 %6082, %v182
        %v6084 = vpop.permute.xlu0 %6083
        %v6086 = vadd.f32 %v6076, %v6050
        %v6087 = vadd.f32 %v6076, %v6051
        %v6088 = vadd.f32 %v6076, %v6052
        %v6089 = vadd.f32 %v6076, %v6053
        %v6090 = vadd.f32 %v6076, %v6054
        %v6091 = vadd.f32 %v6076, %v6055
        %v6092 = vadd.f32 %v6076, %v6056
        %v6093 = vadd.f32 %v6076, %v6057
        %v6094 = vadd.f32 %v6080, %v6058
        %v6095 = vadd.f32 %v6080, %v6059
        %v6096 = vadd.f32 %v6080, %v6060
        %v6097 = vadd.f32 %v6080, %v6061
        %v6098 = vadd.f32 %v6080, %v6062
        %v6099 = vadd.f32 %v6080, %v6063
        %v6100 = vadd.f32 %v6080, %v6064
        %v6101 = vadd.f32 %v6080, %v6065
        %v6102 = vadd.f32 %v6084, %v6066
        %v6103 = vadd.f32 %v6084, %v6067
        %v6104 = vadd.f32 %v6084, %v6068
        %v6105 = vadd.f32 %v6084, %v6069
        %v6106 = vadd.f32 %v6084, %v6070
        %v6107 = vadd.f32 %v6084, %v6071
        %v6108 = vadd.f32 %v6084, %v6072
        %v6109 = vadd.f32 %v6084, %v6073
        %v6110 = vmul.f32 %v393, %v6086
        %v6111 = vmul.f32 %v394, %v6087
        %v6112 = vmul.f32 %v395, %v6088
        %v6113 = vmul.f32 %v396, %v6089
        %v6114 = vmul.f32 %v397, %v6090
        %v6115 = vmul.f32 %v398, %v6091
        %v6116 = vmul.f32 %v399, %v6092
        %v6117 = vmul.f32 %v400, %v6093
        %v6118 = vmul.f32 %v401, %v6094
        %v6119 = vmul.f32 %v402, %v6095
        %v6120 = vmul.f32 %v403, %v6096
        %v6121 = vmul.f32 %v404, %v6097
        %v6122 = vmul.f32 %v405, %v6098
        %v6123 = vmul.f32 %v406, %v6099
        %v6124 = vmul.f32 %v407, %v6100
        %v6125 = vmul.f32 %v408, %v6101
        %v6126 = vmul.f32 %v409, %v6102
        %v6127 = vmul.f32 %v410, %v6103
        %v6128 = vmul.f32 %v411, %v6104
        %v6129 = vmul.f32 %v412, %v6105
        %v6130 = vmul.f32 %v413, %v6106
        %v6131 = vmul.f32 %v414, %v6107
        %v6132 = vmul.f32 %v415, %v6108
        %v6133 = vmul.f32 %v416, %v6109
        %6134 = vset.pattern.permute.xlu0 8
        %6135 = vperm.xlu0 %6134, %v180
        %v6136 = vpop.permute.xlu0 %6135
        %6138 = vset.pattern.permute.xlu0 8
        %6139 = vperm.xlu0 %6138, %v181
        %v6140 = vpop.permute.xlu0 %6139
        %6142 = vset.pattern.permute.xlu0 8
        %6143 = vperm.xlu0 %6142, %v182
        %v6144 = vpop.permute.xlu0 %6143
        %v6146 = vadd.f32 %v6136, %v6110
        %v6147 = vadd.f32 %v6136, %v6111
        %v6148 = vadd.f32 %v6136, %v6112
        %v6149 = vadd.f32 %v6136, %v6113
        %v6150 = vadd.f32 %v6136, %v6114
        %v6151 = vadd.f32 %v6136, %v6115
        %v6152 = vadd.f32 %v6136, %v6116
        %v6153 = vadd.f32 %v6136, %v6117
        %v6154 = vadd.f32 %v6140, %v6118
        %v6155 = vadd.f32 %v6140, %v6119
        %v6156 = vadd.f32 %v6140, %v6120
        %v6157 = vadd.f32 %v6140, %v6121
        %v6158 = vadd.f32 %v6140, %v6122
        %v6159 = vadd.f32 %v6140, %v6123
        %v6160 = vadd.f32 %v6140, %v6124
        %v6161 = vadd.f32 %v6140, %v6125
        %v6162 = vadd.f32 %v6144, %v6126
        %v6163 = vadd.f32 %v6144, %v6127
        %v6164 = vadd.f32 %v6144, %v6128
        %v6165 = vadd.f32 %v6144, %v6129
        %v6166 = vadd.f32 %v6144, %v6130
        %v6167 = vadd.f32 %v6144, %v6131
        %v6168 = vadd.f32 %v6144, %v6132
        %v6169 = vadd.f32 %v6144, %v6133
        %v6170 = vmul.f32 %v393, %v6146
        %v6171 = vmul.f32 %v394, %v6147
        %v6172 = vmul.f32 %v395, %v6148
        %v6173 = vmul.f32 %v396, %v6149
        %v6174 = vmul.f32 %v397, %v6150
        %v6175 = vmul.f32 %v398, %v6151
        %v6176 = vmul.f32 %v399, %v6152
        %v6177 = vmul.f32 %v400, %v6153
        %v6178 = vmul.f32 %v401, %v6154
        %v6179 = vmul.f32 %v402, %v6155
        %v6180 = vmul.f32 %v403, %v6156
        %v6181 = vmul.f32 %v404, %v6157
        %v6182 = vmul.f32 %v405, %v6158
        %v6183 = vmul.f32 %v406, %v6159
        %v6184 = vmul.f32 %v407, %v6160
        %v6185 = vmul.f32 %v408, %v6161
        %v6186 = vmul.f32 %v409, %v6162
        %v6187 = vmul.f32 %v410, %v6163
        %v6188 = vmul.f32 %v411, %v6164
        %v6189 = vmul.f32 %v412, %v6165
        %v6190 = vmul.f32 %v413, %v6166
        %v6191 = vmul.f32 %v414, %v6167
        %v6192 = vmul.f32 %v415, %v6168
        %v6193 = vmul.f32 %v416, %v6169
        %6194 = vset.pattern.permute.xlu0 7
        %6195 = vperm.xlu0 %6194, %v180
        %v6196 = vpop.permute.xlu0 %6195
        %6198 = vset.pattern.permute.xlu0 7
        %6199 = vperm.xlu0 %6198, %v181
        %v6200 = vpop.permute.xlu0 %6199
        %6202 = vset.pattern.permute.xlu0 7
        %6203 = vperm.xlu0 %6202, %v182
        %v6204 = vpop.permute.xlu0 %6203
        %v6206 = vadd.f32 %v6196, %v6170
        %v6207 = vadd.f32 %v6196, %v6171
        %v6208 = vadd.f32 %v6196, %v6172
        %v6209 = vadd.f32 %v6196, %v6173
        %v6210 = vadd.f32 %v6196, %v6174
        %v6211 = vadd.f32 %v6196, %v6175
        %v6212 = vadd.f32 %v6196, %v6176
        %v6213 = vadd.f32 %v6196, %v6177
        %v6214 = vadd.f32 %v6200, %v6178
        %v6215 = vadd.f32 %v6200, %v6179
        %v6216 = vadd.f32 %v6200, %v6180
        %v6217 = vadd.f32 %v6200, %v6181
        %v6218 = vadd.f32 %v6200, %v6182
        %v6219 = vadd.f32 %v6200, %v6183
        %v6220 = vadd.f32 %v6200, %v6184
        %v6221 = vadd.f32 %v6200, %v6185
        %v6222 = vadd.f32 %v6204, %v6186
        %v6223 = vadd.f32 %v6204, %v6187
        %v6224 = vadd.f32 %v6204, %v6188
        %v6225 = vadd.f32 %v6204, %v6189
        %v6226 = vadd.f32 %v6204, %v6190
        %v6227 = vadd.f32 %v6204, %v6191
        %v6228 = vadd.f32 %v6204, %v6192
        %v6229 = vadd.f32 %v6204, %v6193
        %v6230 = vmul.f32 %v393, %v6206
        %v6231 = vmul.f32 %v394, %v6207
        %v6232 = vmul.f32 %v395, %v6208
        %v6233 = vmul.f32 %v396, %v6209
        %v6234 = vmul.f32 %v397, %v6210
        %v6235 = vmul.f32 %v398, %v6211
        %v6236 = vmul.f32 %v399, %v6212
        %v6237 = vmul.f32 %v400, %v6213
        %v6238 = vmul.f32 %v401, %v6214
        %v6239 = vmul.f32 %v402, %v6215
        %v6240 = vmul.f32 %v403, %v6216
        %v6241 = vmul.f32 %v404, %v6217
        %v6242 = vmul.f32 %v405, %v6218
        %v6243 = vmul.f32 %v406, %v6219
        %v6244 = vmul.f32 %v407, %v6220
        %v6245 = vmul.f32 %v408, %v6221
        %v6246 = vmul.f32 %v409, %v6222
        %v6247 = vmul.f32 %v410, %v6223
        %v6248 = vmul.f32 %v411, %v6224
        %v6249 = vmul.f32 %v412, %v6225
        %v6250 = vmul.f32 %v413, %v6226
        %v6251 = vmul.f32 %v414, %v6227
        %v6252 = vmul.f32 %v415, %v6228
        %v6253 = vmul.f32 %v416, %v6229
        %6254 = vset.pattern.permute.xlu0 6
        %6255 = vperm.xlu0 %6254, %v180
        %v6256 = vpop.permute.xlu0 %6255
        %6258 = vset.pattern.permute.xlu0 6
        %6259 = vperm.xlu0 %6258, %v181
        %v6260 = vpop.permute.xlu0 %6259
        %6262 = vset.pattern.permute.xlu0 6
        %6263 = vperm.xlu0 %6262, %v182
        %v6264 = vpop.permute.xlu0 %6263
        %v6266 = vadd.f32 %v6256, %v6230
        %v6267 = vadd.f32 %v6256, %v6231
        %v6268 = vadd.f32 %v6256, %v6232
        %v6269 = vadd.f32 %v6256, %v6233
        %v6270 = vadd.f32 %v6256, %v6234
        %v6271 = vadd.f32 %v6256, %v6235
        %v6272 = vadd.f32 %v6256, %v6236
        %v6273 = vadd.f32 %v6256, %v6237
        %v6274 = vadd.f32 %v6260, %v6238
        %v6275 = vadd.f32 %v6260, %v6239
        %v6276 = vadd.f32 %v6260, %v6240
        %v6277 = vadd.f32 %v6260, %v6241
        %v6278 = vadd.f32 %v6260, %v6242
        %v6279 = vadd.f32 %v6260, %v6243
        %v6280 = vadd.f32 %v6260, %v6244
        %v6281 = vadd.f32 %v6260, %v6245
        %v6282 = vadd.f32 %v6264, %v6246
        %v6283 = vadd.f32 %v6264, %v6247
        %v6284 = vadd.f32 %v6264, %v6248
        %v6285 = vadd.f32 %v6264, %v6249
        %v6286 = vadd.f32 %v6264, %v6250
        %v6287 = vadd.f32 %v6264, %v6251
        %v6288 = vadd.f32 %v6264, %v6252
        %v6289 = vadd.f32 %v6264, %v6253
        %v6290 = vmul.f32 %v393, %v6266
        %v6291 = vmul.f32 %v394, %v6267
        %v6292 = vmul.f32 %v395, %v6268
        %v6293 = vmul.f32 %v396, %v6269
        %v6294 = vmul.f32 %v397, %v6270
        %v6295 = vmul.f32 %v398, %v6271
        %v6296 = vmul.f32 %v399, %v6272
        %v6297 = vmul.f32 %v400, %v6273
        %v6298 = vmul.f32 %v401, %v6274
        %v6299 = vmul.f32 %v402, %v6275
        %v6300 = vmul.f32 %v403, %v6276
        %v6301 = vmul.f32 %v404, %v6277
        %v6302 = vmul.f32 %v405, %v6278
        %v6303 = vmul.f32 %v406, %v6279
        %v6304 = vmul.f32 %v407, %v6280
        %v6305 = vmul.f32 %v408, %v6281
        %v6306 = vmul.f32 %v409, %v6282
        %v6307 = vmul.f32 %v410, %v6283
        %v6308 = vmul.f32 %v411, %v6284
        %v6309 = vmul.f32 %v412, %v6285
        %v6310 = vmul.f32 %v413, %v6286
        %v6311 = vmul.f32 %v414, %v6287
        %v6312 = vmul.f32 %v415, %v6288
        %v6313 = vmul.f32 %v416, %v6289
        %6314 = vset.pattern.permute.xlu0 5
        %6315 = vperm.xlu0 %6314, %v180
        %v6316 = vpop.permute.xlu0 %6315
        %6318 = vset.pattern.permute.xlu0 5
        %6319 = vperm.xlu0 %6318, %v181
        %v6320 = vpop.permute.xlu0 %6319
        %6322 = vset.pattern.permute.xlu0 5
        %6323 = vperm.xlu0 %6322, %v182
        %v6324 = vpop.permute.xlu0 %6323
        %v6326 = vadd.f32 %v6316, %v6290
        %v6327 = vadd.f32 %v6316, %v6291
        %v6328 = vadd.f32 %v6316, %v6292
        %v6329 = vadd.f32 %v6316, %v6293
        %v6330 = vadd.f32 %v6316, %v6294
        %v6331 = vadd.f32 %v6316, %v6295
        %v6332 = vadd.f32 %v6316, %v6296
        %v6333 = vadd.f32 %v6316, %v6297
        %v6334 = vadd.f32 %v6320, %v6298
        %v6335 = vadd.f32 %v6320, %v6299
        %v6336 = vadd.f32 %v6320, %v6300
        %v6337 = vadd.f32 %v6320, %v6301
        %v6338 = vadd.f32 %v6320, %v6302
        %v6339 = vadd.f32 %v6320, %v6303
        %v6340 = vadd.f32 %v6320, %v6304
        %v6341 = vadd.f32 %v6320, %v6305
        %v6342 = vadd.f32 %v6324, %v6306
        %v6343 = vadd.f32 %v6324, %v6307
        %v6344 = vadd.f32 %v6324, %v6308
        %v6345 = vadd.f32 %v6324, %v6309
        %v6346 = vadd.f32 %v6324, %v6310
        %v6347 = vadd.f32 %v6324, %v6311
        %v6348 = vadd.f32 %v6324, %v6312
        %v6349 = vadd.f32 %v6324, %v6313
        %vm6350 = vcmp.ge.f32.partialorder %v180, 1.0
        %vm6351 = vcmp.ge.f32.partialorder %v181, 1.0
        %vm6352 = vcmp.ge.f32.partialorder %v182, 1.0
        %v6353 = vsel %vm6350, 1, 0
        %v6354 = vsel %vm6351, 1, 0
        %v6355 = vsel %vm6352, 1, 0
        %6356 = vset.pattern.permute.xlu0 4
        %6357 = vperm.xlu0 %6356, %v6353
        %v6358 = vpop.permute.xlu0 %6357
        %6359 = vset.pattern.permute.xlu0 4
        %6360 = vperm.xlu0 %6359, %v6354
        %v6361 = vpop.permute.xlu0 %6360
        %6362 = vset.pattern.permute.xlu0 4
        %6363 = vperm.xlu0 %6362, %v6355
        %v6364 = vpop.permute.xlu0 %6363
        %vm6365 = vcmp.eq.s32.totalorder %v6358, 1
        %vm6366 = vcmp.eq.s32.totalorder %v6361, 1
        %vm6367 = vcmp.eq.s32.totalorder %v6364, 1
        %v6368 = vsel %vm6365, %v369, 1.0
        %v6369 = vsel %vm6365, %v370, 1.0
        %v6370 = vsel %vm6365, %v371, 1.0
        %v6371 = vsel %vm6365, %v372, 1.0
        %v6372 = vsel %vm6365, %v373, 1.0
        %v6373 = vsel %vm6365, %v374, 1.0
        %v6374 = vsel %vm6365, %v375, 1.0
        %v6375 = vsel %vm6365, %v376, 1.0
        %v6376 = vsel %vm6366, %v377, 1.0
        %v6377 = vsel %vm6366, %v378, 1.0
        %v6378 = vsel %vm6366, %v379, 1.0
        %v6379 = vsel %vm6366, %v380, 1.0
        %v6380 = vsel %vm6366, %v381, 1.0
        %v6381 = vsel %vm6366, %v382, 1.0
        %v6382 = vsel %vm6366, %v383, 1.0
        %v6383 = vsel %vm6366, %v384, 1.0
        %v6384 = vsel %vm6367, %v385, 1.0
        %v6385 = vsel %vm6367, %v386, 1.0
        %v6386 = vsel %vm6367, %v387, 1.0
        %v6387 = vsel %vm6367, %v388, 1.0
        %v6388 = vsel %vm6367, %v389, 1.0
        %v6389 = vsel %vm6367, %v390, 1.0
        %v6390 = vsel %vm6367, %v391, 1.0
        %v6391 = vsel %vm6367, %v392, 1.0
        %vm6392 = vcmp.ge.f32.partialorder %v180, 2.0
        %vm6393 = vcmp.ge.f32.partialorder %v181, 2.0
        %vm6394 = vcmp.ge.f32.partialorder %v182, 2.0
        %v6395 = vsel %vm6392, 1, 0
        %v6396 = vsel %vm6393, 1, 0
        %v6397 = vsel %vm6394, 1, 0
        %6398 = vset.pattern.permute.xlu0 4
        %6399 = vperm.xlu0 %6398, %v6395
        %v6400 = vpop.permute.xlu0 %6399
        %6401 = vset.pattern.permute.xlu0 4
        %6402 = vperm.xlu0 %6401, %v6396
        %v6403 = vpop.permute.xlu0 %6402
        %6404 = vset.pattern.permute.xlu0 4
        %6405 = vperm.xlu0 %6404, %v6397
        %v6406 = vpop.permute.xlu0 %6405
        %vm6407 = vcmp.eq.s32.totalorder %v6400, 1
        %vm6408 = vcmp.eq.s32.totalorder %v6403, 1
        %vm6409 = vcmp.eq.s32.totalorder %v6406, 1
        %v6410 = vsel %vm6407, %v393, %v6368
        %v6411 = vsel %vm6407, %v394, %v6369
        %v6412 = vsel %vm6407, %v395, %v6370
        %v6413 = vsel %vm6407, %v396, %v6371
        %v6414 = vsel %vm6407, %v397, %v6372
        %v6415 = vsel %vm6407, %v398, %v6373
        %v6416 = vsel %vm6407, %v399, %v6374
        %v6417 = vsel %vm6407, %v400, %v6375
        %v6418 = vsel %vm6408, %v401, %v6376
        %v6419 = vsel %vm6408, %v402, %v6377
        %v6420 = vsel %vm6408, %v403, %v6378
        %v6421 = vsel %vm6408, %v404, %v6379
        %v6422 = vsel %vm6408, %v405, %v6380
        %v6423 = vsel %vm6408, %v406, %v6381
        %v6424 = vsel %vm6408, %v407, %v6382
        %v6425 = vsel %vm6408, %v408, %v6383
        %v6426 = vsel %vm6409, %v409, %v6384
        %v6427 = vsel %vm6409, %v410, %v6385
        %v6428 = vsel %vm6409, %v411, %v6386
        %v6429 = vsel %vm6409, %v412, %v6387
        %v6430 = vsel %vm6409, %v413, %v6388
        %v6431 = vsel %vm6409, %v414, %v6389
        %v6432 = vsel %vm6409, %v415, %v6390
        %v6433 = vsel %vm6409, %v416, %v6391
        %v6434 = vmul.f32 %v393, %v369
        %v6435 = vmul.f32 %v394, %v370
        %v6436 = vmul.f32 %v395, %v371
        %v6437 = vmul.f32 %v396, %v372
        %v6438 = vmul.f32 %v397, %v373
        %v6439 = vmul.f32 %v398, %v374
        %v6440 = vmul.f32 %v399, %v375
        %v6441 = vmul.f32 %v400, %v376
        %v6442 = vmul.f32 %v401, %v377
        %v6443 = vmul.f32 %v402, %v378
        %v6444 = vmul.f32 %v403, %v379
        %v6445 = vmul.f32 %v404, %v380
        %v6446 = vmul.f32 %v405, %v381
        %v6447 = vmul.f32 %v406, %v382
        %v6448 = vmul.f32 %v407, %v383
        %v6449 = vmul.f32 %v408, %v384
        %v6450 = vmul.f32 %v409, %v385
        %v6451 = vmul.f32 %v410, %v386
        %v6452 = vmul.f32 %v411, %v387
        %v6453 = vmul.f32 %v412, %v388
        %v6454 = vmul.f32 %v413, %v389
        %v6455 = vmul.f32 %v414, %v390
        %v6456 = vmul.f32 %v415, %v391
        %v6457 = vmul.f32 %v416, %v392
        %vm6458 = vcmp.ge.f32.partialorder %v180, 3.0
        %vm6459 = vcmp.ge.f32.partialorder %v181, 3.0
        %vm6460 = vcmp.ge.f32.partialorder %v182, 3.0
        %v6461 = vsel %vm6458, 1, 0
        %v6462 = vsel %vm6459, 1, 0
        %v6463 = vsel %vm6460, 1, 0
        %6464 = vset.pattern.permute.xlu0 4
        %6465 = vperm.xlu0 %6464, %v6461
        %v6466 = vpop.permute.xlu0 %6465
        %6467 = vset.pattern.permute.xlu0 4
        %6468 = vperm.xlu0 %6467, %v6462
        %v6469 = vpop.permute.xlu0 %6468
        %6470 = vset.pattern.permute.xlu0 4
        %6471 = vperm.xlu0 %6470, %v6463
        %v6472 = vpop.permute.xlu0 %6471
        %vm6473 = vcmp.eq.s32.totalorder %v6466, 1
        %vm6474 = vcmp.eq.s32.totalorder %v6469, 1
        %vm6475 = vcmp.eq.s32.totalorder %v6472, 1
        %v6476 = vsel %vm6473, %v6434, %v6410
        %v6477 = vsel %vm6473, %v6435, %v6411
        %v6478 = vsel %vm6473, %v6436, %v6412
        %v6479 = vsel %vm6473, %v6437, %v6413
        %v6480 = vsel %vm6473, %v6438, %v6414
        %v6481 = vsel %vm6473, %v6439, %v6415
        %v6482 = vsel %vm6473, %v6440, %v6416
        %v6483 = vsel %vm6473, %v6441, %v6417
        %v6484 = vsel %vm6474, %v6442, %v6418
        %v6485 = vsel %vm6474, %v6443, %v6419
        %v6486 = vsel %vm6474, %v6444, %v6420
        %v6487 = vsel %vm6474, %v6445, %v6421
        %v6488 = vsel %vm6474, %v6446, %v6422
        %v6489 = vsel %vm6474, %v6447, %v6423
        %v6490 = vsel %vm6474, %v6448, %v6424
        %v6491 = vsel %vm6474, %v6449, %v6425
        %v6492 = vsel %vm6475, %v6450, %v6426
        %v6493 = vsel %vm6475, %v6451, %v6427
        %v6494 = vsel %vm6475, %v6452, %v6428
        %v6495 = vsel %vm6475, %v6453, %v6429
        %v6496 = vsel %vm6475, %v6454, %v6430
        %v6497 = vsel %vm6475, %v6455, %v6431
        %v6498 = vsel %vm6475, %v6456, %v6432
        %v6499 = vsel %vm6475, %v6457, %v6433
        %v6500 = vmul.f32 %v6476, %v6326
        %v6501 = vmul.f32 %v6477, %v6327
        %v6502 = vmul.f32 %v6478, %v6328
        %v6503 = vmul.f32 %v6479, %v6329
        %v6504 = vmul.f32 %v6480, %v6330
        %v6505 = vmul.f32 %v6481, %v6331
        %v6506 = vmul.f32 %v6482, %v6332
        %v6507 = vmul.f32 %v6483, %v6333
        %v6508 = vmul.f32 %v6484, %v6334
        %v6509 = vmul.f32 %v6485, %v6335
        %v6510 = vmul.f32 %v6486, %v6336
        %v6511 = vmul.f32 %v6487, %v6337
        %v6512 = vmul.f32 %v6488, %v6338
        %v6513 = vmul.f32 %v6489, %v6339
        %v6514 = vmul.f32 %v6490, %v6340
        %v6515 = vmul.f32 %v6491, %v6341
        %v6516 = vmul.f32 %v6492, %v6342
        %v6517 = vmul.f32 %v6493, %v6343
        %v6518 = vmul.f32 %v6494, %v6344
        %v6519 = vmul.f32 %v6495, %v6345
        %v6520 = vmul.f32 %v6496, %v6346
        %v6521 = vmul.f32 %v6497, %v6347
        %v6522 = vmul.f32 %v6498, %v6348
        %v6523 = vmul.f32 %v6499, %v6349
        %v6524 = vmul.f32 %v312, 0.7463527
        %vm6525 = vcmp.lt.f32.partialorder %v180, 2.5
        %vm6526 = vcmp.lt.f32.partialorder %v181, 2.5
        %vm6527 = vcmp.lt.f32.partialorder %v182, 2.5
        %v6528 = vsel %vm6525, 1, 0
        %v6529 = vsel %vm6526, 1, 0
        %v6530 = vsel %vm6527, 1, 0
        %6531 = vset.pattern.permute.xlu0 4
        %6532 = vperm.xlu0 %6531, %v6528
        %v6533 = vpop.permute.xlu0 %6532
        %6534 = vset.pattern.permute.xlu0 4
        %6535 = vperm.xlu0 %6534, %v6529
        %v6536 = vpop.permute.xlu0 %6535
        %6537 = vset.pattern.permute.xlu0 4
        %6538 = vperm.xlu0 %6537, %v6530
        %v6539 = vpop.permute.xlu0 %6538
        %vm6540 = vcmp.eq.s32.totalorder %v6533, 1
        %vm6541 = vcmp.eq.s32.totalorder %v6536, 1
        %vm6542 = vcmp.eq.s32.totalorder %v6539, 1
        %v6543 = vsel %vm6540, %v5582, %v5654
        %v6544 = vsel %vm6540, %v5583, %v5655
        %v6545 = vsel %vm6540, %v5584, %v5656
        %v6546 = vsel %vm6540, %v5585, %v5657
        %v6547 = vsel %vm6540, %v5586, %v5658
        %v6548 = vsel %vm6540, %v5587, %v5659
        %v6549 = vsel %vm6540, %v5588, %v5660
        %v6550 = vsel %vm6540, %v5589, %v5661
        %v6551 = vsel %vm6541, %v5590, %v5662
        %v6552 = vsel %vm6541, %v5591, %v5663
        %v6553 = vsel %vm6541, %v5592, %v5664
        %v6554 = vsel %vm6541, %v5593, %v5665
        %v6555 = vsel %vm6541, %v5594, %v5666
        %v6556 = vsel %vm6541, %v5595, %v5667
        %v6557 = vsel %vm6541, %v5596, %v5668
        %v6558 = vsel %vm6541, %v5597, %v5669
        %v6559 = vsel %vm6542, %v5598, %v5670
        %v6560 = vsel %vm6542, %v5599, %v5671
        %v6561 = vsel %vm6542, %v5600, %v5672
        %v6562 = vsel %vm6542, %v5601, %v5673
        %v6563 = vsel %vm6542, %v5602, %v5674
        %v6564 = vsel %vm6542, %v5603, %v5675
        %v6565 = vsel %vm6542, %v5604, %v5676
        %v6566 = vsel %vm6542, %v5605, %v5677
        %v6567 = vmul.f32 %v307, 0.63078314
        %v6569 = vlaneseq
        %v6570 = vshrl.u32 %v6569, 7
        %v6571 = vsub.s32 0, %v6570
        %v6572 = vrot.slane %v6567, %v6571
        %v6573 = vlaneseq
        %v6574 = vshrl.u32 %v6573, 7
        %v6575 = vsub.s32 1, %v6574
        %v6576 = vrot.slane %v6567, %v6575
        %v6577 = vlaneseq
        %v6578 = vshrl.u32 %v6577, 7
        %v6579 = vsub.s32 2, %v6578
        %v6580 = vrot.slane %v6567, %v6579
        %v6581 = vlaneseq
        %v6582 = vshrl.u32 %v6581, 7
        %v6583 = vsub.s32 3, %v6582
        %v6584 = vrot.slane %v6567, %v6583
        %v6585 = vlaneseq
        %v6586 = vshrl.u32 %v6585, 7
        %v6587 = vsub.s32 4, %v6586
        %v6588 = vrot.slane %v6567, %v6587
        %v6589 = vlaneseq
        %v6590 = vshrl.u32 %v6589, 7
        %v6591 = vsub.s32 5, %v6590
        %v6592 = vrot.slane %v6567, %v6591
        %v6593 = vlaneseq
        %v6594 = vshrl.u32 %v6593, 7
        %v6595 = vsub.s32 6, %v6594
        %v6596 = vrot.slane %v6567, %v6595
        %v6597 = vlaneseq
        %v6598 = vshrl.u32 %v6597, 7
        %v6599 = vsub.s32 7, %v6598
        %v6600 = vrot.slane %v6567, %v6599
        %v6610 = vlaneseq
        %v6611 = vshrl.u32 %v6610, 7
        %v6612 = vsub.s32 0, %v6611
        %v6613 = vrot.slane %v6524, %v6612
        %v6614 = vlaneseq
        %v6615 = vshrl.u32 %v6614, 7
        %v6616 = vsub.s32 1, %v6615
        %v6617 = vrot.slane %v6524, %v6616
        %v6618 = vlaneseq
        %v6619 = vshrl.u32 %v6618, 7
        %v6620 = vsub.s32 2, %v6619
        %v6621 = vrot.slane %v6524, %v6620
        %v6622 = vlaneseq
        %v6623 = vshrl.u32 %v6622, 7
        %v6624 = vsub.s32 3, %v6623
        %v6625 = vrot.slane %v6524, %v6624
        %v6626 = vlaneseq
        %v6627 = vshrl.u32 %v6626, 7
        %v6628 = vsub.s32 4, %v6627
        %v6629 = vrot.slane %v6524, %v6628
        %v6630 = vlaneseq
        %v6631 = vshrl.u32 %v6630, 7
        %v6632 = vsub.s32 5, %v6631
        %v6633 = vrot.slane %v6524, %v6632
        %v6634 = vlaneseq
        %v6635 = vshrl.u32 %v6634, 7
        %v6636 = vsub.s32 6, %v6635
        %v6637 = vrot.slane %v6524, %v6636
        %v6638 = vlaneseq
        %v6639 = vshrl.u32 %v6638, 7
        %v6640 = vsub.s32 7, %v6639
        %v6641 = vrot.slane %v6524, %v6640
        %v6650 = vsel %vm6540, %v6572, %v6613
        %v6651 = vsel %vm6540, %v6576, %v6617
        %v6652 = vsel %vm6540, %v6580, %v6621
        %v6653 = vsel %vm6540, %v6584, %v6625
        %v6654 = vsel %vm6540, %v6588, %v6629
        %v6655 = vsel %vm6540, %v6592, %v6633
        %v6656 = vsel %vm6540, %v6596, %v6637
        %v6657 = vsel %vm6540, %v6600, %v6641
        %v6658 = vsel %vm6541, %v6572, %v6613
        %v6659 = vsel %vm6541, %v6576, %v6617
        %v6660 = vsel %vm6541, %v6580, %v6621
        %v6661 = vsel %vm6541, %v6584, %v6625
        %v6662 = vsel %vm6541, %v6588, %v6629
        %v6663 = vsel %vm6541, %v6592, %v6633
        %v6664 = vsel %vm6541, %v6596, %v6637
        %v6665 = vsel %vm6541, %v6600, %v6641
        %v6666 = vsel %vm6542, %v6572, %v6613
        %v6667 = vsel %vm6542, %v6576, %v6617
        %v6668 = vsel %vm6542, %v6580, %v6621
        %v6669 = vsel %vm6542, %v6584, %v6625
        %v6670 = vsel %vm6542, %v6588, %v6629
        %v6671 = vsel %vm6542, %v6592, %v6633
        %v6672 = vsel %vm6542, %v6596, %v6637
        %v6673 = vsel %vm6542, %v6600, %v6641
        %vm6674 = vcmp.lt.f32.partialorder %v180, 1.5
        %vm6675 = vcmp.lt.f32.partialorder %v181, 1.5
        %vm6676 = vcmp.lt.f32.partialorder %v182, 1.5
        %v6677 = vsel %vm6674, 1, 0
        %v6678 = vsel %vm6675, 1, 0
        %v6679 = vsel %vm6676, 1, 0
        %6680 = vset.pattern.permute.xlu0 4
        %6681 = vperm.xlu0 %6680, %v6677
        %v6682 = vpop.permute.xlu0 %6681
        %6683 = vset.pattern.permute.xlu0 4
        %6684 = vperm.xlu0 %6683, %v6678
        %v6685 = vpop.permute.xlu0 %6684
        %6686 = vset.pattern.permute.xlu0 4
        %6687 = vperm.xlu0 %6686, %v6679
        %v6688 = vpop.permute.xlu0 %6687
        %vm6689 = vcmp.eq.s32.totalorder %v6682, 1
        %vm6690 = vcmp.eq.s32.totalorder %v6685, 1
        %vm6691 = vcmp.eq.s32.totalorder %v6688, 1
        %v6692 = vsel %vm6689, %v5510, %v6543
        %v6693 = vsel %vm6689, %v5511, %v6544
        %v6694 = vsel %vm6689, %v5512, %v6545
        %v6695 = vsel %vm6689, %v5513, %v6546
        %v6696 = vsel %vm6689, %v5514, %v6547
        %v6697 = vsel %vm6689, %v5515, %v6548
        %v6698 = vsel %vm6689, %v5516, %v6549
        %v6699 = vsel %vm6689, %v5517, %v6550
        %v6700 = vsel %vm6690, %v5518, %v6551
        %v6701 = vsel %vm6690, %v5519, %v6552
        %v6702 = vsel %vm6690, %v5520, %v6553
        %v6703 = vsel %vm6690, %v5521, %v6554
        %v6704 = vsel %vm6690, %v5522, %v6555
        %v6705 = vsel %vm6690, %v5523, %v6556
        %v6706 = vsel %vm6690, %v5524, %v6557
        %v6707 = vsel %vm6690, %v5525, %v6558
        %v6708 = vsel %vm6691, %v5526, %v6559
        %v6709 = vsel %vm6691, %v5527, %v6560
        %v6710 = vsel %vm6691, %v5528, %v6561
        %v6711 = vsel %vm6691, %v5529, %v6562
        %v6712 = vsel %vm6691, %v5530, %v6563
        %v6713 = vsel %vm6691, %v5531, %v6564
        %v6714 = vsel %vm6691, %v5532, %v6565
        %v6715 = vsel %vm6691, %v5533, %v6566
        %v6716 = vmul.f32 %v303, 0.48860252
        %v6718 = vlaneseq
        %v6719 = vshrl.u32 %v6718, 7
        %v6720 = vsub.s32 0, %v6719
        %v6721 = vrot.slane %v6716, %v6720
        %v6722 = vlaneseq
        %v6723 = vshrl.u32 %v6722, 7
        %v6724 = vsub.s32 1, %v6723
        %v6725 = vrot.slane %v6716, %v6724
        %v6726 = vlaneseq
        %v6727 = vshrl.u32 %v6726, 7
        %v6728 = vsub.s32 2, %v6727
        %v6729 = vrot.slane %v6716, %v6728
        %v6730 = vlaneseq
        %v6731 = vshrl.u32 %v6730, 7
        %v6732 = vsub.s32 3, %v6731
        %v6733 = vrot.slane %v6716, %v6732
        %v6734 = vlaneseq
        %v6735 = vshrl.u32 %v6734, 7
        %v6736 = vsub.s32 4, %v6735
        %v6737 = vrot.slane %v6716, %v6736
        %v6738 = vlaneseq
        %v6739 = vshrl.u32 %v6738, 7
        %v6740 = vsub.s32 5, %v6739
        %v6741 = vrot.slane %v6716, %v6740
        %v6742 = vlaneseq
        %v6743 = vshrl.u32 %v6742, 7
        %v6744 = vsub.s32 6, %v6743
        %v6745 = vrot.slane %v6716, %v6744
        %v6746 = vlaneseq
        %v6747 = vshrl.u32 %v6746, 7
        %v6748 = vsub.s32 7, %v6747
        %v6749 = vrot.slane %v6716, %v6748
        %v6758 = vsel %vm6689, %v6721, %v6650
        %v6759 = vsel %vm6689, %v6725, %v6651
        %v6760 = vsel %vm6689, %v6729, %v6652
        %v6761 = vsel %vm6689, %v6733, %v6653
        %v6762 = vsel %vm6689, %v6737, %v6654
        %v6763 = vsel %vm6689, %v6741, %v6655
        %v6764 = vsel %vm6689, %v6745, %v6656
        %v6765 = vsel %vm6689, %v6749, %v6657
        %v6766 = vsel %vm6690, %v6721, %v6658
        %v6767 = vsel %vm6690, %v6725, %v6659
        %v6768 = vsel %vm6690, %v6729, %v6660
        %v6769 = vsel %vm6690, %v6733, %v6661
        %v6770 = vsel %vm6690, %v6737, %v6662
        %v6771 = vsel %vm6690, %v6741, %v6663
        %v6772 = vsel %vm6690, %v6745, %v6664
        %v6773 = vsel %vm6690, %v6749, %v6665
        %v6774 = vsel %vm6691, %v6721, %v6666
        %v6775 = vsel %vm6691, %v6725, %v6667
        %v6776 = vsel %vm6691, %v6729, %v6668
        %v6777 = vsel %vm6691, %v6733, %v6669
        %v6778 = vsel %vm6691, %v6737, %v6670
        %v6779 = vsel %vm6691, %v6741, %v6671
        %v6780 = vsel %vm6691, %v6745, %v6672
        %v6781 = vsel %vm6691, %v6749, %v6673
        %vm6782 = vcmp.lt.f32.partialorder %v180, 0.5
        %vm6783 = vcmp.lt.f32.partialorder %v181, 0.5
        %vm6784 = vcmp.lt.f32.partialorder %v182, 0.5
        %v6785 = vsel %vm6782, 1, 0
        %v6786 = vsel %vm6783, 1, 0
        %v6787 = vsel %vm6784, 1, 0
        %6788 = vset.pattern.permute.xlu0 4
        %6789 = vperm.xlu0 %6788, %v6785
        %v6790 = vpop.permute.xlu0 %6789
        %6791 = vset.pattern.permute.xlu0 4
        %6792 = vperm.xlu0 %6791, %v6786
        %v6793 = vpop.permute.xlu0 %6792
        %6794 = vset.pattern.permute.xlu0 4
        %6795 = vperm.xlu0 %6794, %v6787
        %v6796 = vpop.permute.xlu0 %6795
        %vm6797 = vcmp.eq.s32.totalorder %v6790, 1
        %vm6798 = vcmp.eq.s32.totalorder %v6793, 1
        %vm6799 = vcmp.eq.s32.totalorder %v6796, 1
        %v6800 = vsel %vm6797, %v5462, %v6692
        %v6801 = vsel %vm6797, %v5463, %v6693
        %v6802 = vsel %vm6797, %v5464, %v6694
        %v6803 = vsel %vm6797, %v5465, %v6695
        %v6804 = vsel %vm6797, %v5466, %v6696
        %v6805 = vsel %vm6797, %v5467, %v6697
        %v6806 = vsel %vm6797, %v5468, %v6698
        %v6807 = vsel %vm6797, %v5469, %v6699
        %v6808 = vsel %vm6798, %v5470, %v6700
        %v6809 = vsel %vm6798, %v5471, %v6701
        %v6810 = vsel %vm6798, %v5472, %v6702
        %v6811 = vsel %vm6798, %v5473, %v6703
        %v6812 = vsel %vm6798, %v5474, %v6704
        %v6813 = vsel %vm6798, %v5475, %v6705
        %v6814 = vsel %vm6798, %v5476, %v6706
        %v6815 = vsel %vm6798, %v5477, %v6707
        %v6816 = vsel %vm6799, %v5478, %v6708
        %v6817 = vsel %vm6799, %v5479, %v6709
        %v6818 = vsel %vm6799, %v5480, %v6710
        %v6819 = vsel %vm6799, %v5481, %v6711
        %v6820 = vsel %vm6799, %v5482, %v6712
        %v6821 = vsel %vm6799, %v5483, %v6713
        %v6822 = vsel %vm6799, %v5484, %v6714
        %v6823 = vsel %vm6799, %v5485, %v6715
        %v6824 = vsel %vm6797, 0.2820948, %v6758
        %v6825 = vsel %vm6797, 0.2820948, %v6759
        %v6826 = vsel %vm6797, 0.2820948, %v6760
        %v6827 = vsel %vm6797, 0.2820948, %v6761
        %v6828 = vsel %vm6797, 0.2820948, %v6762
        %v6829 = vsel %vm6797, 0.2820948, %v6763
        %v6830 = vsel %vm6797, 0.2820948, %v6764
        %v6831 = vsel %vm6797, 0.2820948, %v6765
        %v6832 = vsel %vm6798, 0.2820948, %v6766
        %v6833 = vsel %vm6798, 0.2820948, %v6767
        %v6834 = vsel %vm6798, 0.2820948, %v6768
        %v6835 = vsel %vm6798, 0.2820948, %v6769
        %v6836 = vsel %vm6798, 0.2820948, %v6770
        %v6837 = vsel %vm6798, 0.2820948, %v6771
        %v6838 = vsel %vm6798, 0.2820948, %v6772
        %v6839 = vsel %vm6798, 0.2820948, %v6773
        %v6840 = vsel %vm6799, 0.2820948, %v6774
        %v6841 = vsel %vm6799, 0.2820948, %v6775
        %v6842 = vsel %vm6799, 0.2820948, %v6776
        %v6843 = vsel %vm6799, 0.2820948, %v6777
        %v6844 = vsel %vm6799, 0.2820948, %v6778
        %v6845 = vsel %vm6799, 0.2820948, %v6779
        %v6846 = vsel %vm6799, 0.2820948, %v6780
        %v6847 = vsel %vm6799, 0.2820948, %v6781
        %6848 = vset.pattern.permute.xlu0 3
        %6849 = vperm.xlu0 %6848, %v180
        %v6850 = vpop.permute.xlu0 %6849
        %6852 = vset.pattern.permute.xlu0 3
        %6853 = vperm.xlu0 %6852, %v181
        %v6854 = vpop.permute.xlu0 %6853
        %6856 = vset.pattern.permute.xlu0 3
        %6857 = vperm.xlu0 %6856, %v182
        %v6858 = vpop.permute.xlu0 %6857
        %vm6860 = vcmp.lt.f32.partialorder %v369, %v6850
        %vm6861 = vcmp.lt.f32.partialorder %v370, %v6850
        %vm6862 = vcmp.lt.f32.partialorder %v371, %v6850
        %vm6863 = vcmp.lt.f32.partialorder %v372, %v6850
        %vm6864 = vcmp.lt.f32.partialorder %v373, %v6850
        %vm6865 = vcmp.lt.f32.partialorder %v374, %v6850
        %vm6866 = vcmp.lt.f32.partialorder %v375, %v6850
        %vm6867 = vcmp.lt.f32.partialorder %v376, %v6850
        %vm6868 = vcmp.lt.f32.partialorder %v377, %v6854
        %vm6869 = vcmp.lt.f32.partialorder %v378, %v6854
        %vm6870 = vcmp.lt.f32.partialorder %v379, %v6854
        %vm6871 = vcmp.lt.f32.partialorder %v380, %v6854
        %vm6872 = vcmp.lt.f32.partialorder %v381, %v6854
        %vm6873 = vcmp.lt.f32.partialorder %v382, %v6854
        %vm6874 = vcmp.lt.f32.partialorder %v383, %v6854
        %vm6875 = vcmp.lt.f32.partialorder %v384, %v6854
        %vm6876 = vcmp.lt.f32.partialorder %v385, %v6858
        %vm6877 = vcmp.lt.f32.partialorder %v386, %v6858
        %vm6878 = vcmp.lt.f32.partialorder %v387, %v6858
        %vm6879 = vcmp.lt.f32.partialorder %v388, %v6858
        %vm6880 = vcmp.lt.f32.partialorder %v389, %v6858
        %vm6881 = vcmp.lt.f32.partialorder %v390, %v6858
        %vm6882 = vcmp.lt.f32.partialorder %v391, %v6858
        %vm6883 = vcmp.lt.f32.partialorder %v392, %v6858
        %v6884 = vsel %vm6860, %v6500, %v6800
        %v6885 = vsel %vm6861, %v6501, %v6801
        %v6886 = vsel %vm6862, %v6502, %v6802
        %v6887 = vsel %vm6863, %v6503, %v6803
        %v6888 = vsel %vm6864, %v6504, %v6804
        %v6889 = vsel %vm6865, %v6505, %v6805
        %v6890 = vsel %vm6866, %v6506, %v6806
        %v6891 = vsel %vm6867, %v6507, %v6807
        %v6892 = vsel %vm6868, %v6508, %v6808
        %v6893 = vsel %vm6869, %v6509, %v6809
        %v6894 = vsel %vm6870, %v6510, %v6810
        %v6895 = vsel %vm6871, %v6511, %v6811
        %v6896 = vsel %vm6872, %v6512, %v6812
        %v6897 = vsel %vm6873, %v6513, %v6813
        %v6898 = vsel %vm6874, %v6514, %v6814
        %v6899 = vsel %vm6875, %v6515, %v6815
        %v6900 = vsel %vm6876, %v6516, %v6816
        %v6901 = vsel %vm6877, %v6517, %v6817
        %v6902 = vsel %vm6878, %v6518, %v6818
        %v6903 = vsel %vm6879, %v6519, %v6819
        %v6904 = vsel %vm6880, %v6520, %v6820
        %v6905 = vsel %vm6881, %v6521, %v6821
        %v6906 = vsel %vm6882, %v6522, %v6822
        %v6907 = vsel %vm6883, %v6523, %v6823
        %6908 = vset.pattern.permute.xlu0 2
        %6909 = vperm.xlu0 %6908, %v180
        %v6910 = vpop.permute.xlu0 %6909
        %6912 = vset.pattern.permute.xlu0 2
        %6913 = vperm.xlu0 %6912, %v181
        %v6914 = vpop.permute.xlu0 %6913
        %6916 = vset.pattern.permute.xlu0 2
        %6917 = vperm.xlu0 %6916, %v182
        %v6918 = vpop.permute.xlu0 %6917
        %v6920 = vmul.f32 %v6910, %v6884
        %v6921 = vmul.f32 %v6910, %v6885
        %v6922 = vmul.f32 %v6910, %v6886
        %v6923 = vmul.f32 %v6910, %v6887
        %v6924 = vmul.f32 %v6910, %v6888
        %v6925 = vmul.f32 %v6910, %v6889
        %v6926 = vmul.f32 %v6910, %v6890
        %v6927 = vmul.f32 %v6910, %v6891
        %v6928 = vmul.f32 %v6914, %v6892
        %v6929 = vmul.f32 %v6914, %v6893
        %v6930 = vmul.f32 %v6914, %v6894
        %v6931 = vmul.f32 %v6914, %v6895
        %v6932 = vmul.f32 %v6914, %v6896
        %v6933 = vmul.f32 %v6914, %v6897
        %v6934 = vmul.f32 %v6914, %v6898
        %v6935 = vmul.f32 %v6914, %v6899
        %v6936 = vmul.f32 %v6918, %v6900
        %v6937 = vmul.f32 %v6918, %v6901
        %v6938 = vmul.f32 %v6918, %v6902
        %v6939 = vmul.f32 %v6918, %v6903
        %v6940 = vmul.f32 %v6918, %v6904
        %v6941 = vmul.f32 %v6918, %v6905
        %v6942 = vmul.f32 %v6918, %v6906
        %v6943 = vmul.f32 %v6918, %v6907
        %v6945 = vlaneseq
        %v6946 = vshrl.u32 %v6945, 7
        %v6947 = vsub.s32 0, %v6946
        %v6948 = vrot.slane %v200, %v6947
        %v6949 = vlaneseq
        %v6950 = vshrl.u32 %v6949, 7
        %v6951 = vsub.s32 1, %v6950
        %v6952 = vrot.slane %v200, %v6951
        %v6953 = vlaneseq
        %v6954 = vshrl.u32 %v6953, 7
        %v6955 = vsub.s32 2, %v6954
        %v6956 = vrot.slane %v200, %v6955
        %v6957 = vlaneseq
        %v6958 = vshrl.u32 %v6957, 7
        %v6959 = vsub.s32 3, %v6958
        %v6960 = vrot.slane %v200, %v6959
        %v6961 = vlaneseq
        %v6962 = vshrl.u32 %v6961, 7
        %v6963 = vsub.s32 4, %v6962
        %v6964 = vrot.slane %v200, %v6963
        %v6965 = vlaneseq
        %v6966 = vshrl.u32 %v6965, 7
        %v6967 = vsub.s32 5, %v6966
        %v6968 = vrot.slane %v200, %v6967
        %v6969 = vlaneseq
        %v6970 = vshrl.u32 %v6969, 7
        %v6971 = vsub.s32 6, %v6970
        %v6972 = vrot.slane %v200, %v6971
        %v6973 = vlaneseq
        %v6974 = vshrl.u32 %v6973, 7
        %v6975 = vsub.s32 7, %v6974
        %v6976 = vrot.slane %v200, %v6975
        %v6985 = vmul.f32 %v6920, %v6948
        %v6986 = vmul.f32 %v6921, %v6952
        %v6987 = vmul.f32 %v6922, %v6956
        %v6988 = vmul.f32 %v6923, %v6960
        %v6989 = vmul.f32 %v6924, %v6964
        %v6990 = vmul.f32 %v6925, %v6968
        %v6991 = vmul.f32 %v6926, %v6972
        %v6992 = vmul.f32 %v6927, %v6976
        %v6993 = vmul.f32 %v6928, %v6948
        %v6994 = vmul.f32 %v6929, %v6952
        %v6995 = vmul.f32 %v6930, %v6956
        %v6996 = vmul.f32 %v6931, %v6960
        %v6997 = vmul.f32 %v6932, %v6964
        %v6998 = vmul.f32 %v6933, %v6968
        %v6999 = vmul.f32 %v6934, %v6972
        %v7000 = vmul.f32 %v6935, %v6976
        %v7001 = vmul.f32 %v6936, %v6948
        %v7002 = vmul.f32 %v6937, %v6952
        %v7003 = vmul.f32 %v6938, %v6956
        %v7004 = vmul.f32 %v6939, %v6960
        %v7005 = vmul.f32 %v6940, %v6964
        %v7006 = vmul.f32 %v6941, %v6968
        %v7007 = vmul.f32 %v6942, %v6972
        %v7008 = vmul.f32 %v6943, %v6976
        %v7009 = vmul.f32 %v6985, %v6824
        %v7010 = vmul.f32 %v6986, %v6825
        %v7011 = vmul.f32 %v6987, %v6826
        %v7012 = vmul.f32 %v6988, %v6827
        %v7013 = vmul.f32 %v6989, %v6828
        %v7014 = vmul.f32 %v6990, %v6829
        %v7015 = vmul.f32 %v6991, %v6830
        %v7016 = vmul.f32 %v6992, %v6831
        %v7017 = vmul.f32 %v6993, %v6832
        %v7018 = vmul.f32 %v6994, %v6833
        %v7019 = vmul.f32 %v6995, %v6834
        %v7020 = vmul.f32 %v6996, %v6835
        %v7021 = vmul.f32 %v6997, %v6836
        %v7022 = vmul.f32 %v6998, %v6837
        %v7023 = vmul.f32 %v6999, %v6838
        %v7024 = vmul.f32 %v7000, %v6839
        %v7025 = vmul.f32 %v7001, %v6840
        %v7026 = vmul.f32 %v7002, %v6841
        %v7027 = vmul.f32 %v7003, %v6842
        %v7028 = vmul.f32 %v7004, %v6843
        %v7029 = vmul.f32 %v7005, %v6844
        %v7030 = vmul.f32 %v7006, %v6845
        %v7031 = vmul.f32 %v7007, %v6846
        %v7032 = vmul.f32 %v7008, %v6847
        %7033 = vst [vmem:[%s174] sm:$0xff] %v7009
        %7034 = vst [vmem:[%s174 + $0x8] sm:$0xff] %v7010
        %7035 = vst [vmem:[%s174 + $0x10] sm:$0xff] %v7011
        %7036 = vst [vmem:[%s174 + $0x18] sm:$0xff] %v7012
        %7037 = vst [vmem:[%s174 + $0x20] sm:$0xff] %v7013
        %7038 = vst [vmem:[%s174 + $0x28] sm:$0xff] %v7014
        %7039 = vst [vmem:[%s174 + $0x30] sm:$0xff] %v7015
        %7040 = vst [vmem:[%s174 + $0x38] sm:$0xff] %v7016
        %7041 = vst [vmem:[%s174 + $0x40] sm:$0xff] %v7017
        %7042 = vst [vmem:[%s174 + $0x48] sm:$0xff] %v7018
        %7043 = vst [vmem:[%s174 + $0x50] sm:$0xff] %v7019
        %7044 = vst [vmem:[%s174 + $0x58] sm:$0xff] %v7020
        %7045 = vst [vmem:[%s174 + $0x60] sm:$0xff] %v7021
        %7046 = vst [vmem:[%s174 + $0x68] sm:$0xff] %v7022
        %7047 = vst [vmem:[%s174 + $0x70] sm:$0xff] %v7023
        %7048 = vst [vmem:[%s174 + $0x78] sm:$0xff] %v7024
        %7049 = vst [vmem:[%s174 + $0x80] sm:$0xff] %v7025
        %7050 = vst [vmem:[%s174 + $0x88] sm:$0xff] %v7026
        %7051 = vst [vmem:[%s174 + $0x90] sm:$0xff] %v7027
        %7052 = vst [vmem:[%s174 + $0x98] sm:$0xff] %v7028
        %7053 = vst [vmem:[%s174 + $0xa0] sm:$0xff] %v7029
        %7054 = vst [vmem:[%s174 + $0xa8] sm:$0xff] %v7030
        %7055 = vst [vmem:[%s174 + $0xb0] sm:$0xff] %v7031
        %7056 = vst [vmem:[%s174 + $0xb8] sm:$0xff] %v7032
        %s7057 = sand.u32 %s75, 1
        %s7058 = scalar_lea.sflag [#allocation4], %s7057
        %s7059 = sand.u32 %s75, 1
        %s7060 = smul.addr %s7059, 192
        %s7061 = scalar_lea.vmem [#allocation7], %s7060
        // Predicated region
        $region37: #{tpu_custom_call.1} parent=27 // pred_check
          %p7062 = pneg %p85
        $region38: #{tpu_custom_call.1} parent=27 // pred_check_branch
          %7064 = sbr.rel (%p7062) target = $region40
        $region39: #{tpu_custom_call.1} parent=27 // pred_region
          %s7065 = smul.u32 8, %s20
          %s7067 = ssub.s32 3072, 3072
          %7068 = vsyncadd %s7058, %s7067
          %s7069 = smul.addr %s7065, 128
          %s7070 = scalar_lea.hbm %s2, %s7069
          %s7071 = sshll.u32 %s7061, 4
          %s7072 = int_to_ptr.vmem [resolvable:$true] %s7071
          %7077 = dma.vmem_to_hbm [thread:$0]  %s7072, 3072, %s7070, %s7058, 1024, 2048, 64
        $region40: #{tpu_custom_call.1} parent=27 // pred_fallthru
          _
      $region28: #{tpu_custom_call.1} parent=5 // pred_fallthru
        _
      %p7078 = scmp.le.s32.totalorder 2, %s15
      // Predicated region
      $region41: #{tpu_custom_call.1} parent=5 // pred_check
        %p7079 = pneg %p7078
      $region42: #{tpu_custom_call.1} parent=5 // pred_check_branch
        %7081 = sbr.rel (%p7079) target = $region44
      $region43: #{tpu_custom_call.1} parent=5 // pred_region
        %s7082 = ssub.s32 %s15, 2
        // Predicated region
        $region45: #{tpu_custom_call.1} parent=43 // pred_check
          %p7083 = pneg %p91
        $region46: #{tpu_custom_call.1} parent=43 // pred_check_branch
          %7085 = sbr.rel (%p7083) target = $region48
        $region47: #{tpu_custom_call.1} parent=43 // pred_region
          %s7086 = sand.u32 %s76, 1
          %s7087 = scalar_lea.sflag [#allocation4], %s7086
          %s7088 = sand.u32 %s76, 1
          %s7089 = smul.addr %s7088, 192
          %s7090 = scalar_lea.vmem [#allocation7], %s7089
          %7091 = dma.done %s7087, 3072
        $region48: #{tpu_custom_call.1} parent=43 // pred_fallthru
          _
      $region44: #{tpu_custom_call.1} parent=5 // pred_fallthru
        _
    $region6: #{tpu_custom_call.1} parent=1 // loop_footer
      %s19 = sadd.s32 1, %s15
    $region7: #{tpu_custom_call.1} parent=1 // loop_footer_branch
      %14 = sbr.rel target = $region3
    $region8: #{tpu_custom_call.1} parent=1 // loop_exit
      _
    %7092 = vsyncpa [#allocation3], 1
    %s7093 = scalar_lea.sflag [#allocation3], 1
    %7094 = vsyncpa %s7093, 1
    %7095 = vsyncpa [#allocation6], 1
    %s7096 = scalar_lea.sflag [#allocation6], 1
    %7097 = vsyncpa %s7096, 1
    %7098 = vsyncpa [#allocation4], 1
    %s7099 = scalar_lea.sflag [#allocation4], 1
    %7100 = vsyncpa %s7099, 1

</llo_original>
